<compile_context>
chip_gen: v5e
topology: v5e:2x2
jax: 0.10.0
libtpu: 0.0.40
codegen_flags: <defaults>
</compile_context>

<pallas_src>
import functools

import jax
import jax.numpy as jnp
from jax.experimental import pallas as pl
from jax.experimental.pallas import tpu as pltpu

BN_EPS = 1e-5
SOFTPLUS_THRESHOLD = 20.0  # torch.nn.Softplus default (beta=1, threshold=20)


# --------------------------------------------------------------------------
# small helpers usable both inside the kernel and in the reference
# --------------------------------------------------------------------------
def _maxpool2x2(y):
    """2x2 / stride-2 max pool on (B, H, W, C).

    Uses only leading-dim regrouping, static indexing and stacking so it lowers
    cleanly on TPU (no non-tile-aligned reshapes, no strided value slices).
    """
    b, h, w, c = y.shape
    y = y.reshape(b, h // 2, 2, w, c)            # regroup leading dims only
    y = jnp.maximum(y[:, :, 0], y[:, :, 1])      # pool H   -> (B, H//2, W, C)
    even = jnp.stack([y[:, :, 2 * j, :] for j in range(w // 2)], axis=2)
    odd = jnp.stack([y[:, :, 2 * j + 1, :] for j in range(w // 2)], axis=2)
    return jnp.maximum(even, odd)                # pool W   -> (B, H//2, W//2, C)


def _pick_batch_tile(n, cap=32):
    tb = min(n, cap)
    while n % tb:
        tb -= 1
    return tb


# --------------------------------------------------------------------------
# the fused kernel
# --------------------------------------------------------------------------
def _qzd_fused_kernel(p1_ref, w1_ref, g1_ref, bb1_ref, w2_ref, g2_ref, bb2_ref,
                      wh_ref, bh_ref, out_ref,
                      a1_ref, a2_ref, s1_ref, q1_ref, s2_ref, q2_ref,
                      *, tb, n_total, zd_dim, zp):
    phase = pl.program_id(0)
    bt = pl.program_id(1)
    row0 = bt * tb

    # ---------------- phase 0: conv1 (one lane-dense matmul) + BN1 stats ----
    @pl.when(phase == 0)
    def _phase0():
        @pl.when(bt == 0)
        def _init():
            s1_ref[...] = jnp.zeros_like(s1_ref)
            q1_ref[...] = jnp.zeros_like(q1_ref)
            s2_ref[...] = jnp.zeros_like(s2_ref)
            q2_ref[...] = jnp.zeros_like(q2_ref)

        patches = p1_ref[...].reshape(tb * 576, 128)          # bf16, K padded
        y = jnp.dot(patches, w1_ref[...],
                    preferred_element_type=jnp.float32)       # (tb*576, 32) f32
        # BN stats accumulated from the exact f32 result (before bf16 storage).
        s1_ref[...] += jnp.sum(y, axis=0, keepdims=True)
        q1_ref[...] += jnp.sum(y * y, axis=0, keepdims=True)
        a1_ref[pl.ds(row0, tb), :, :, :] = (
            y.reshape(tb, 24, 24, 32).astype(jnp.bfloat16))

    # ------- phase 1: BN1 + ReLU + pool, conv2 (in-kernel im2col), BN2 stats
    @pl.when(phase == 1)
    def _phase1():
        inv_cnt = 1.0 / float(n_total * 24 * 24)
        mean = s1_ref[...] * inv_cnt
        var = jnp.maximum(q1_ref[...] * inv_cnt - mean * mean, 0.0)
        scale = g1_ref[...] * jax.lax.rsqrt(var + BN_EPS)
        shift = bb1_ref[...] - mean * scale

        y = a1_ref[pl.ds(row0, tb), :, :, :].astype(jnp.float32)  # (tb,24,24,32)
        y = jnp.maximum(y * scale + shift, 0.0)
        h1 = _maxpool2x2(y).astype(jnp.bfloat16)              # (tb,12,12,32)

        # conv2 as 25 accumulated K=32 matmuls on the VMEM-resident activation
        acc = jnp.zeros((tb * 64, 64), jnp.float32)
        for di in range(5):
            for dj in range(5):
                xs = h1[:, di:di + 8, dj:dj + 8, :].reshape(tb * 64, 32)
                acc += jnp.dot(xs, w2_ref[di * 5 + dj, :, :],
                               preferred_element_type=jnp.float32)

        s2_ref[...] += jnp.sum(acc, axis=0, keepdims=True)
        q2_ref[...] += jnp.sum(acc * acc, axis=0, keepdims=True)
        a2_ref[pl.ds(row0, tb), :, :, :] = acc.reshape(tb, 8, 8, 64)

    # ---------------- phase 2: BN2 + ReLU + pool + fused fc11/fc12 heads ----
    @pl.when(phase == 2)
    def _phase2():
        inv_cnt = 1.0 / float(n_total * 8 * 8)
        mean = s2_ref[...] * inv_cnt
        var = jnp.maximum(q2_ref[...] * inv_cnt - mean * mean, 0.0)
        scale = g2_ref[...] * jax.lax.rsqrt(var + BN_EPS)
        shift = bb2_ref[...] - mean * scale

        y = a2_ref[pl.ds(row0, tb), :, :, :]                  # (tb,8,8,64) f32
        y = jnp.maximum(y * scale + shift, 0.0)
        h2 = _maxpool2x2(y)                                   # (tb,4,4,64)

        # fused heads: 16 accumulated (tb,64)x(64,zp) matmuls == (tb,1024)x(1024,zp)
        acc = jnp.zeros((tb, zp), jnp.float32)
        for k in range(16):
            feats = h2[:, k // 4, k % 4, :].astype(jnp.bfloat16)
            acc += jnp.dot(feats, wh_ref[k, :, :],
                           preferred_element_type=jnp.float32)
        pre = acc + bh_ref[...]

        col = jax.lax.broadcasted_iota(jnp.int32, (tb, zp), 1)
        sp = jnp.where(pre > SOFTPLUS_THRESHOLD, pre,
                       jnp.log1p(jnp.exp(jnp.minimum(pre, SOFTPLUS_THRESHOLD))))
        # columns [0, zd) -> loc ; columns [zd, 2*zd) -> softplus + 1e-7
        out_ref[...] = jnp.where(col >= zd_dim, sp + 1e-7, pre)


def _qzd_pallas_call(p1, params, *, n, tb, zd_dim, zp):
    nb = n // tb
    kernel = functools.partial(_qzd_fused_kernel, tb=tb, n_total=n,
                               zd_dim=zd_dim, zp=zp)

    grid_spec = pltpu.PrefetchScalarGridSpec(
        num_scalar_prefetch=0,
        grid=(3, nb),                                  # (phase, batch tile)
        in_specs=[
            # conv1 patches: streamed over batch tiles in phase 0 only; pinned to
            # the LAST tile afterwards so no extra DMA fires at the phase boundary.
            pl.BlockSpec((tb, 576, 128),
                         lambda p, b, _nb=nb: (jnp.where(p == 0, b, _nb - 1), 0, 0)),
            pl.BlockSpec((128, 32), lambda p, b: (0, 0)),         # w1 (resident)
            pl.BlockSpec((1, 32), lambda p, b: (0, 0)),           # gamma1
            pl.BlockSpec((1, 32), lambda p, b: (0, 0)),           # beta1
            pl.BlockSpec((25, 32, 64), lambda p, b: (0, 0, 0)),   # w2 per-tap
            pl.BlockSpec((1, 64), lambda p, b: (0, 0)),           # gamma2
            pl.BlockSpec((1, 64), lambda p, b: (0, 0)),           # beta2
            pl.BlockSpec((16, 64, zp), lambda p, b: (0, 0, 0)),   # fused head W
            pl.BlockSpec((1, zp), lambda p, b: (0, 0)),           # fused head b
        ],
        # lane-dense output; only ever written (and written back) in phase 2
        out_specs=pl.BlockSpec((tb, zp),
                               lambda p, b: (jnp.where(p == 2, b, 0), 0)),
        scratch_shapes=[
            pltpu.VMEM((n, 24, 24, 32), jnp.bfloat16),  # conv1 pre-BN activations
            pltpu.VMEM((n, 8, 8, 64), jnp.float32),     # conv2 pre-BN activations
            pltpu.VMEM((1, 32), jnp.float32),           # BN1 sum
            pltpu.VMEM((1, 32), jnp.float32),           # BN1 sum of squares
            pltpu.VMEM((1, 64), jnp.float32),           # BN2 sum
            pltpu.VMEM((1, 64), jnp.float32),           # BN2 sum of squares
        ],
    )

    flops = 2 * n * (576 * 128 * 32 + 25 * 64 * 32 * 64 + 16 * 64 * zp)
    weight_bytes = (2 * (128 * 32 + 25 * 32 * 64 + 16 * 64 * zp)
                    + 4 * (2 * 32 + 2 * 64 + zp))
    bytes_accessed = n * 576 * 128 * 2 + weight_bytes + n * zp * 4

    return pl.pallas_call(
        kernel,
        out_shape=jax.ShapeDtypeStruct((n, zp), jnp.float32),
        grid_spec=grid_spec,
        compiler_params=pltpu.CompilerParams(
            dimension_semantics=("arbitrary", "arbitrary"),
            vmem_limit_bytes=48 * 1024 * 1024),          # v7x-safe budget
        cost_estimate=pl.CostEstimate(flops=flops,
                                      transcendentals=n * zp,
                                      bytes_accessed=bytes_accessed),
    )(p1, params["w1"], params["g1"], params["b1"], params["w2"],
      params["g2"], params["b2"], params["wh"], params["bh"])


# --------------------------------------------------------------------------
# XLA glue (one-time / tiny): NHWC transpose, conv1 patches (padded 75->128)
# --------------------------------------------------------------------------
def _conv1_patches(x_nhwc):
    n = x_nhwc.shape[0]
    slabs = [x_nhwc[:, di:di + 24, dj:dj + 24, :]
             for di in range(5) for dj in range(5)]
    p = jnp.stack(slabs, axis=-2).reshape(n, 24 * 24, 75)   # (di, dj, c) ordering
    return jnp.pad(p, ((0, 0), (0, 0), (0, 128 - 75)))      # pad K: 75 -> 128


@functools.partial(jax.jit, static_argnums=(2,))
def qzd_forward(x_nchw, params, zd_dim):
    n = x_nchw.shape[0]
    x = jnp.transpose(x_nchw, (0, 2, 3, 1)).astype(jnp.bfloat16)   # NCHW -> NHWC
    p1 = _conv1_patches(x)                                         # (N,576,128) bf16
    zp = params["bh"].shape[1]
    tb = _pick_batch_tile(n)
    out = _qzd_pallas_call(p1, params, n=n, tb=tb, zd_dim=zd_dim, zp=zp)
    return out[:, :zd_dim], out[:, zd_dim:2 * zd_dim]


# --------------------------------------------------------------------------
# parameter init (torch-equivalent layouts, converted once to kernel layouts)
# --------------------------------------------------------------------------
def xavier_uniform(key, shape, fan_in, fan_out):
    bound = (6.0 / (fan_in + fan_out)) ** 0.5
    return jax.random.uniform(key, shape, jnp.float32, -bound, bound)


def init_params(key, zd_dim):
    k1, k2, k3, k4 = jax.random.split(key, 4)
    zp = ((2 * zd_dim + 127) // 128) * 128

    # conv1: torch weight (32,3,5,5) -> matmul layout (kh*kw*cin, cout), K padded to 128
    w1 = xavier_uniform(k1, (5, 5, 3, 32), fan_in=3 * 25, fan_out=32 * 25)
    w1 = jnp.pad(w1.reshape(75, 32), ((0, 128 - 75), (0, 0))).astype(jnp.bfloat16)

    # conv2: torch weight (64,32,5,5) -> per-tap layout (kh*kw, cin, cout)
    w2 = xavier_uniform(k2, (5, 5, 32, 64), fan_in=32 * 25, fan_out=64 * 25)
    w2 = w2.reshape(25, 32, 64).astype(jnp.bfloat16)

    # fc11 / fc12: rows are generated in torch's NCHW-flatten order, then permuted
    # to the kernel's NHWC-flatten order (this replaces the runtime transpose),
    # fused side by side and zero-padded to a lane-dense 128-wide head.
    w11 = xavier_uniform(k3, (1024, zd_dim), fan_in=1024, fan_out=zd_dim)
    w12 = xavier_uniform(k4, (1024, zd_dim), fan_in=1024, fan_out=zd_dim)
    hh = jnp.arange(4)[:, None, None]
    ww = jnp.arange(4)[None, :, None]
    cc = jnp.arange(64)[None, None, :]
    nhwc_to_nchw = (cc * 16 + hh * 4 + ww).reshape(-1)          # (1024,)
    wh = jnp.zeros((1024, zp), jnp.float32)
    wh = wh.at[:, :zd_dim].set(w11[nhwc_to_nchw])
    wh = wh.at[:, zd_dim:2 * zd_dim].set(w12[nhwc_to_nchw])
    wh = wh.reshape(16, 64, zp).astype(jnp.bfloat16)            # 16 K-blocks of 64

    return {
        "w1": w1,
        "g1": jnp.ones((1, 32), jnp.float32),
        "b1": jnp.zeros((1, 32), jnp.float32),
        "w2": w2,
        "g2": jnp.ones((1, 64), jnp.float32),
        "b2": jnp.zeros((1, 64), jnp.float32),
        "wh": wh,
        "bh": jnp.zeros((1, zp), jnp.float32),   # [b11 | b12 | pad], torch zero-init
    }


# --------------------------------------------------------------------------
# pure-JAX f32 reference (training-mode BN), for a sanity check
# --------------------------------------------------------------------------
def _bn_relu_ref(y, gamma, beta):
    mean = jnp.mean(y, axis=(0, 1, 2), keepdims=True)
    var = jnp.mean(jnp.square(y - mean), axis=(0, 1, 2), keepdims=True)
    yn = (y - mean) * jax.lax.rsqrt(var + BN_EPS)
    return jnp.maximum(yn * gamma.reshape(1, 1, 1, -1) + beta.reshape(1, 1, 1, -1), 0.0)


def _pool_ref(y):
    n, h, w, c = y.shape
    return y.reshape(n, h // 2, 2, w // 2, 2, c).max(axis=(2, 4))


def qzd_reference(x_nchw, params, zd_dim):
    x = jnp.transpose(x_nchw, (0, 2, 3, 1)).astype(jnp.float32)
    n = x.shape[0]
    w1 = params["w1"].astype(jnp.float32)[:75]
    slabs = [x[:, di:di + 24, dj:dj + 24, :] for di in range(5) for dj in range(5)]
    p1 = jnp.stack(slabs, axis=-2).reshape(n, 24, 24, 75)
    y = jnp.einsum("nhwk,kc->nhwc", p1, w1)
    y = _pool_ref(_bn_relu_ref(y, params["g1"], params["b1"]))
    w2 = params["w2"].astype(jnp.float32).reshape(25 * 32, 64)
    slabs = [y[:, di:di + 8, dj:dj + 8, :] for di in range(5) for dj in range(5)]
    p2 = jnp.stack(slabs, axis=-2).reshape(n, 8, 8, 25 * 32)
    y = jnp.einsum("nhwk,kc->nhwc", p2, w2)
    y = _pool_ref(_bn_relu_ref(y, params["g2"], params["b2"]))
    h = y.reshape(n, 1024)
    wh = params["wh"].astype(jnp.float32).reshape(1024, -1)
    pre = h @ wh + params["bh"]
    loc = pre[:, :zd_dim]
    s = pre[:, zd_dim:2 * zd_dim]
    scale = jnp.where(s > SOFTPLUS_THRESHOLD, s,
                      jnp.log1p(jnp.exp(jnp.minimum(s, SOFTPLUS_THRESHOLD)))) + 1e-7
    return loc, scale


if __name__ == "__main__":
    key = jax.random.PRNGKey(0)
    k_x, k_p = jax.random.split(key)

    zd_dim = 32
    batch = 2
    # the encoder's 1024-feature flatten implies 28x28 RGB input
    x = jax.random.normal(k_x, (batch, 3, 28, 28), dtype=jnp.float32)
    params = init_params(k_p, zd_dim)

    zd_loc, zd_scale = qzd_forward(x, params, zd_dim)
    jax.block_until_ready((zd_loc, zd_scale))

    assert zd_loc.shape == (batch, zd_dim)
    assert zd_scale.shape == (batch, zd_dim)
    assert bool(jnp.all(zd_scale > 0.0))

    # loose sanity check vs. the f32 reference (kernel uses bf16 matmul operands
    # and bf16 storage of the conv1 pre-BN activations)
    ref_loc, ref_scale = qzd_reference(x, params, zd_dim)
    err = max(float(jnp.max(jnp.abs(zd_loc - ref_loc))),
              float(jnp.max(jnp.abs(zd_scale - ref_scale))))
    assert err < 0.5, f"kernel deviates from reference: max abs err = {err}"

    print("KERNEL_OK")
</pallas_src>

<mosaic_0001>
module attributes {stable_mosaic.version = 11 : i64} {
  func.func @_qzd_fused_kernel(%arg0: i32, %arg1: i32, %arg2: memref<2x576x128xbf16, #tpu.memory_space<vmem>>, %arg3: memref<128x32xbf16, #tpu.memory_space<vmem>>, %arg4: memref<1x32xf32, #tpu.memory_space<vmem>>, %arg5: memref<1x32xf32, #tpu.memory_space<vmem>>, %arg6: memref<25x32x64xbf16, #tpu.memory_space<vmem>>, %arg7: memref<1x64xf32, #tpu.memory_space<vmem>>, %arg8: memref<1x64xf32, #tpu.memory_space<vmem>>, %arg9: memref<16x64x128xbf16, #tpu.memory_space<vmem>>, %arg10: memref<1x128xf32, #tpu.memory_space<vmem>>, %arg11: memref<2x128xf32, #tpu.memory_space<vmem>>, %arg12: memref<2x24x24x32xbf16, #tpu.memory_space<vmem>>, %arg13: memref<2x8x8x64xf32, #tpu.memory_space<vmem>>, %arg14: memref<1x32xf32, #tpu.memory_space<vmem>>, %arg15: memref<1x32xf32, #tpu.memory_space<vmem>>, %arg16: memref<1x64xf32, #tpu.memory_space<vmem>>, %arg17: memref<1x64xf32, #tpu.memory_space<vmem>>) attributes {dimension_semantics = [#tpu.dimension_semantics<arbitrary>, #tpu.dimension_semantics<arbitrary>], iteration_bounds = array<i64: 3, 1>, scalar_prefetch = 0 : i64, scratch_operands = 6 : i64, tpu.core_type = #tpu.core_type<tc>, window_params = [{transform_indices = @transform_0, window_bounds = array<i64: 2, 576, 128>}, {pipeline_mode = #tpu.pipeline_mode<synchronous>, transform_indices = @transform_1, window_bounds = array<i64: 128, 32>}, {pipeline_mode = #tpu.pipeline_mode<synchronous>, transform_indices = @transform_2, window_bounds = array<i64: 1, 32>}, {pipeline_mode = #tpu.pipeline_mode<synchronous>, transform_indices = @transform_3, window_bounds = array<i64: 1, 32>}, {pipeline_mode = #tpu.pipeline_mode<synchronous>, transform_indices = @transform_4, window_bounds = array<i64: 25, 32, 64>}, {pipeline_mode = #tpu.pipeline_mode<synchronous>, transform_indices = @transform_5, window_bounds = array<i64: 1, 64>}, {pipeline_mode = #tpu.pipeline_mode<synchronous>, transform_indices = @transform_6, window_bounds = array<i64: 1, 64>}, {pipeline_mode = #tpu.pipeline_mode<synchronous>, transform_indices = @transform_7, window_bounds = array<i64: 16, 64, 128>}, {pipeline_mode = #tpu.pipeline_mode<synchronous>, transform_indices = @transform_8, window_bounds = array<i64: 1, 128>}, {transform_indices = @transform_9, window_bounds = array<i64: 2, 128>}]} {
    %c2_i32 = arith.constant 2 : i32
    %0 = arith.muli %arg1, %c2_i32 : i32
    %c0_i32 = arith.constant 0 : i32
    %1 = arith.cmpi eq, %arg0, %c0_i32 : i32
    %2 = arith.extui %1 : i1 to i32
    %c0_i32_0 = arith.constant 0 : i32
    %3 = arith.cmpi ne, %2, %c0_i32_0 : i32
    scf.if %3 {
      %c0_i32_4 = arith.constant 0 : i32
      %10 = arith.cmpi eq, %arg1, %c0_i32_4 : i32
      %11 = arith.extui %10 : i1 to i32
      %c0_i32_5 = arith.constant 0 : i32
      %12 = arith.cmpi ne, %11, %c0_i32_5 : i32
      scf.if %12 {
        %cst_23 = arith.constant 0.000000e+00 : f32
        %32 = vector.broadcast %cst_23 : f32 to vector<1x32xf32>
        %c0_24 = arith.constant 0 : index
        %c0_25 = arith.constant 0 : index
        %33 = vector.load %arg14[%c0_24, %c0_25] : memref<1x32xf32, #tpu.memory_space<vmem>>, vector<1x32xf32>
        tpu.vector_store %arg14[%c0_24, %c0_25], %32 {strides = array<i32>} : memref<1x32xf32, #tpu.memory_space<vmem>>, vector<1x32xf32>,
        %cst_26 = arith.constant 0.000000e+00 : f32
        %34 = vector.broadcast %cst_26 : f32 to vector<1x32xf32>
        %c0_27 = arith.constant 0 : index
        %c0_28 = arith.constant 0 : index
        %35 = vector.load %arg15[%c0_27, %c0_28] : memref<1x32xf32, #tpu.memory_space<vmem>>, vector<1x32xf32>
        tpu.vector_store %arg15[%c0_27, %c0_28], %34 {strides = array<i32>} : memref<1x32xf32, #tpu.memory_space<vmem>>, vector<1x32xf32>,
        %cst_29 = arith.constant 0.000000e+00 : f32
        %36 = vector.broadcast %cst_29 : f32 to vector<1x64xf32>
        %c0_30 = arith.constant 0 : index
        %c0_31 = arith.constant 0 : index
        %37 = vector.load %arg16[%c0_30, %c0_31] : memref<1x64xf32, #tpu.memory_space<vmem>>, vector<1x64xf32>
        tpu.vector_store %arg16[%c0_30, %c0_31], %36 {strides = array<i32>} : memref<1x64xf32, #tpu.memory_space<vmem>>, vector<1x64xf32>,
        %cst_32 = arith.constant 0.000000e+00 : f32
        %38 = vector.broadcast %cst_32 : f32 to vector<1x64xf32>
        %c0_33 = arith.constant 0 : index
        %c0_34 = arith.constant 0 : index
        %39 = vector.load %arg17[%c0_33, %c0_34] : memref<1x64xf32, #tpu.memory_space<vmem>>, vector<1x64xf32>
        tpu.vector_store %arg17[%c0_33, %c0_34], %38 {strides = array<i32>} : memref<1x64xf32, #tpu.memory_space<vmem>>, vector<1x64xf32>,
      } else {
      }
      %c0 = arith.constant 0 : index
      %c0_6 = arith.constant 0 : index
      %c0_7 = arith.constant 0 : index
      %13 = vector.load %arg2[%c0, %c0_6, %c0_7] : memref<2x576x128xbf16, #tpu.memory_space<vmem>>, vector<2x576x128xbf16>
      %14 = vector.shape_cast %13 : vector<2x576x128xbf16> to vector<1152x128xbf16>
      %c0_8 = arith.constant 0 : index
      %c0_9 = arith.constant 0 : index
      %15 = vector.load %arg3[%c0_8, %c0_9] : memref<128x32xbf16, #tpu.memory_space<vmem>>, vector<128x32xbf16>
      %cst = arith.constant dense<0.000000e+00> : vector<1152x32xf32>
      %16 = tpu.matmul %14, %15, %cst {dimension_numbers = #tpu.dot_dimension_numbers<[1], [0], [0], [1], [0, 0, 1, 1], [], []>} : vector<1152x128xbf16>, vector<128x32xbf16>, vector<1152x32xf32> -> vector<1152x32xf32>
      %c0_10 = arith.constant 0 : index
      %c0_11 = arith.constant 0 : index
      %17 = vector.load %arg14[%c0_10, %c0_11] : memref<1x32xf32, #tpu.memory_space<vmem>>, vector<1x32xf32>
      %cst_12 = arith.constant dense<0.000000e+00> : vector<32xf32>
      %18 = vector.multi_reduction <add>, %16, %cst_12 [0] : vector<1152x32xf32> to vector<32xf32>
      %19 = vector.shape_cast %18 : vector<32xf32> to vector<1x32xf32>
      %20 = arith.addf %17, %19 : vector<1x32xf32>
      %c0_13 = arith.constant 0 : index
      %c0_14 = arith.constant 0 : index
      %21 = vector.load %arg14[%c0_13, %c0_14] : memref<1x32xf32, #tpu.memory_space<vmem>>, vector<1x32xf32>
      tpu.vector_store %arg14[%c0_13, %c0_14], %20 {strides = array<i32>} : memref<1x32xf32, #tpu.memory_space<vmem>>, vector<1x32xf32>,
      %c0_15 = arith.constant 0 : index
      %c0_16 = arith.constant 0 : index
      %22 = vector.load %arg15[%c0_15, %c0_16] : memref<1x32xf32, #tpu.memory_space<vmem>>, vector<1x32xf32>
      %23 = arith.mulf %16, %16 : vector<1152x32xf32>
      %cst_17 = arith.constant dense<0.000000e+00> : vector<32xf32>
      %24 = vector.multi_reduction <add>, %23, %cst_17 [0] : vector<1152x32xf32> to vector<32xf32>
      %25 = vector.shape_cast %24 : vector<32xf32> to vector<1x32xf32>
      %26 = arith.addf %22, %25 : vector<1x32xf32>
      %c0_18 = arith.constant 0 : index
      %c0_19 = arith.constant 0 : index
      %27 = vector.load %arg15[%c0_18, %c0_19] : memref<1x32xf32, #tpu.memory_space<vmem>>, vector<1x32xf32>
      tpu.vector_store %arg15[%c0_18, %c0_19], %26 {strides = array<i32>} : memref<1x32xf32, #tpu.memory_space<vmem>>, vector<1x32xf32>,
      %28 = vector.shape_cast %16 : vector<1152x32xf32> to vector<2x24x24x32xf32>
      %29 = arith.truncf %28 : vector<2x24x24x32xf32> to vector<2x24x24x32xbf16>
      %30 = arith.index_cast %0 : i32 to index
      %c0_20 = arith.constant 0 : index
      %c0_21 = arith.constant 0 : index
      %c0_22 = arith.constant 0 : index
      %31 = vector.load %arg12[%30, %c0_20, %c0_21, %c0_22] : memref<2x24x24x32xbf16, #tpu.memory_space<vmem>>, vector<2x24x24x32xbf16>
      tpu.vector_store %arg12[%30, %c0_20, %c0_21, %c0_22], %29 {strides = array<i32>} : memref<2x24x24x32xbf16, #tpu.memory_space<vmem>>, vector<2x24x24x32xbf16>,
    } else {
    }
    %c1_i32 = arith.constant 1 : i32
    %4 = arith.cmpi eq, %arg0, %c1_i32 : i32
    %5 = arith.extui %4 : i1 to i32
    %c0_i32_1 = arith.constant 0 : i32
    %6 = arith.cmpi ne, %5, %c0_i32_1 : i32
    scf.if %6 {
      %c0 = arith.constant 0 : index
      %c0_4 = arith.constant 0 : index
      %10 = vector.load %arg14[%c0, %c0_4] : memref<1x32xf32, #tpu.memory_space<vmem>>, vector<1x32xf32>
      %cst = arith.constant 8.68055562E-4 : f32
      %11 = vector.broadcast %cst : f32 to vector<1x32xf32>
      %12 = arith.mulf %10, %11 : vector<1x32xf32>
      %c0_5 = arith.constant 0 : index
      %c0_6 = arith.constant 0 : index
      %13 = vector.load %arg15[%c0_5, %c0_6] : memref<1x32xf32, #tpu.memory_space<vmem>>, vector<1x32xf32>
      %cst_7 = arith.constant 8.68055562E-4 : f32
      %14 = vector.broadcast %cst_7 : f32 to vector<1x32xf32>
      %15 = arith.mulf %13, %14 : vector<1x32xf32>
      %16 = arith.mulf %12, %12 : vector<1x32xf32>
      %17 = arith.subf %15, %16 : vector<1x32xf32>
      %cst_8 = arith.constant 0.000000e+00 : f32
      %18 = vector.broadcast %cst_8 : f32 to vector<1x32xf32>
      %19 = arith.maximumf %17, %18 : vector<1x32xf32>
      %c0_9 = arith.constant 0 : index
      %c0_10 = arith.constant 0 : index
      %20 = vector.load %arg4[%c0_9, %c0_10] : memref<1x32xf32, #tpu.memory_space<vmem>>, vector<1x32xf32>
      %cst_11 = arith.constant 9.99999974E-6 : f32
      %21 = vector.broadcast %cst_11 : f32 to vector<1x32xf32>
      %22 = arith.addf %19, %21 : vector<1x32xf32>
      %23 = math.rsqrt %22 : vector<1x32xf32>
      %24 = arith.mulf %20, %23 : vector<1x32xf32>
      %c0_12 = arith.constant 0 : index
      %c0_13 = arith.constant 0 : index
      %25 = vector.load %arg5[%c0_12, %c0_13] : memref<1x32xf32, #tpu.memory_space<vmem>>, vector<1x32xf32>
      %26 = arith.mulf %12, %24 : vector<1x32xf32>
      %27 = arith.subf %25, %26 : vector<1x32xf32>
      %28 = arith.index_cast %0 : i32 to index
      %c0_14 = arith.constant 0 : index
      %c0_15 = arith.constant 0 : index
      %c0_16 = arith.constant 0 : index
      %29 = vector.load %arg12[%28, %c0_14, %c0_15, %c0_16] : memref<2x24x24x32xbf16, #tpu.memory_space<vmem>>, vector<2x24x24x32xbf16>
      %30 = arith.extf %29 : vector<2x24x24x32xbf16> to vector<2x24x24x32xf32>
      %31 = vector.shape_cast %24 : vector<1x32xf32> to vector<1x1x1x32xf32>
      %32 = vector.broadcast %31 : vector<1x1x1x32xf32> to vector<2x24x24x32xf32>
      %33 = arith.mulf %30, %32 : vector<2x24x24x32xf32>
      %34 = vector.shape_cast %27 : vector<1x32xf32> to vector<1x1x1x32xf32>
      %35 = vector.broadcast %34 : vector<1x1x1x32xf32> to vector<2x24x24x32xf32>
      %36 = arith.addf %33, %35 : vector<2x24x24x32xf32>
      %cst_17 = arith.constant 0.000000e+00 : f32
      %37 = vector.broadcast %cst_17 : f32 to vector<2x24x24x32xf32>
      %38 = arith.maximumf %36, %37 : vector<2x24x24x32xf32>
      %39 = vector.shape_cast %38 : vector<2x24x24x32xf32> to vector<2x12x2x24x32xf32>
      %40 = vector.extract_strided_slice %39 {offsets = [0, 0, 0, 0, 0], sizes = [2, 12, 1, 24, 32], strides = [1, 1, 1, 1, 1]} : vector<2x12x2x24x32xf32> to vector<2x12x1x24x32xf32>
      %41 = vector.shape_cast %40 : vector<2x12x1x24x32xf32> to vector<2x12x24x32xf32>
      %42 = vector.extract_strided_slice %39 {offsets = [0, 0, 1, 0, 0], sizes = [2, 12, 1, 24, 32], strides = [1, 1, 1, 1, 1]} : vector<2x12x2x24x32xf32> to vector<2x12x1x24x32xf32>
      %43 = vector.shape_cast %42 : vector<2x12x1x24x32xf32> to vector<2x12x24x32xf32>
      %44 = arith.maximumf %41, %43 : vector<2x12x24x32xf32>
      %45 = vector.extract_strided_slice %44 {offsets = [0, 0, 0, 0], sizes = [2, 12, 1, 32], strides = [1, 1, 1, 1]} : vector<2x12x24x32xf32> to vector<2x12x1x32xf32>
      %46 = vector.shape_cast %45 : vector<2x12x1x32xf32> to vector<2x12x32xf32>
      %47 = vector.extract_strided_slice %44 {offsets = [0, 0, 2, 0], sizes = [2, 12, 1, 32], strides = [1, 1, 1, 1]} : vector<2x12x24x32xf32> to vector<2x12x1x32xf32>
      %48 = vector.shape_cast %47 : vector<2x12x1x32xf32> to vector<2x12x32xf32>
      %49 = vector.extract_strided_slice %44 {offsets = [0, 0, 4, 0], sizes = [2, 12, 1, 32], strides = [1, 1, 1, 1]} : vector<2x12x24x32xf32> to vector<2x12x1x32xf32>
      %50 = vector.shape_cast %49 : vector<2x12x1x32xf32> to vector<2x12x32xf32>
      %51 = vector.extract_strided_slice %44 {offsets = [0, 0, 6, 0], sizes = [2, 12, 1, 32], strides = [1, 1, 1, 1]} : vector<2x12x24x32xf32> to vector<2x12x1x32xf32>
      %52 = vector.shape_cast %51 : vector<2x12x1x32xf32> to vector<2x12x32xf32>
      %53 = vector.extract_strided_slice %44 {offsets = [0, 0, 8, 0], sizes = [2, 12, 1, 32], strides = [1, 1, 1, 1]} : vector<2x12x24x32xf32> to vector<2x12x1x32xf32>
      %54 = vector.shape_cast %53 : vector<2x12x1x32xf32> to vector<2x12x32xf32>
      %55 = vector.extract_strided_slice %44 {offsets = [0, 0, 10, 0], sizes = [2, 12, 1, 32], strides = [1, 1, 1, 1]} : vector<2x12x24x32xf32> to vector<2x12x1x32xf32>
      %56 = vector.shape_cast %55 : vector<2x12x1x32xf32> to vector<2x12x32xf32>
      %57 = vector.extract_strided_slice %44 {offsets = [0, 0, 12, 0], sizes = [2, 12, 1, 32], strides = [1, 1, 1, 1]} : vector<2x12x24x32xf32> to vector<2x12x1x32xf32>
      %58 = vector.shape_cast %57 : vector<2x12x1x32xf32> to vector<2x12x32xf32>
      %59 = vector.extract_strided_slice %44 {offsets = [0, 0, 14, 0], sizes = [2, 12, 1, 32], strides = [1, 1, 1, 1]} : vector<2x12x24x32xf32> to vector<2x12x1x32xf32>
      %60 = vector.shape_cast %59 : vector<2x12x1x32xf32> to vector<2x12x32xf32>
      %61 = vector.extract_strided_slice %44 {offsets = [0, 0, 16, 0], sizes = [2, 12, 1, 32], strides = [1, 1, 1, 1]} : vector<2x12x24x32xf32> to vector<2x12x1x32xf32>
      %62 = vector.shape_cast %61 : vector<2x12x1x32xf32> to vector<2x12x32xf32>
      %63 = vector.extract_strided_slice %44 {offsets = [0, 0, 18, 0], sizes = [2, 12, 1, 32], strides = [1, 1, 1, 1]} : vector<2x12x24x32xf32> to vector<2x12x1x32xf32>
      %64 = vector.shape_cast %63 : vector<2x12x1x32xf32> to vector<2x12x32xf32>
      %65 = vector.extract_strided_slice %44 {offsets = [0, 0, 20, 0], sizes = [2, 12, 1, 32], strides = [1, 1, 1, 1]} : vector<2x12x24x32xf32> to vector<2x12x1x32xf32>
      %66 = vector.shape_cast %65 : vector<2x12x1x32xf32> to vector<2x12x32xf32>
      %67 = vector.extract_strided_slice %44 {offsets = [0, 0, 22, 0], sizes = [2, 12, 1, 32], strides = [1, 1, 1, 1]} : vector<2x12x24x32xf32> to vector<2x12x1x32xf32>
      %68 = vector.shape_cast %67 : vector<2x12x1x32xf32> to vector<2x12x32xf32>
      %69 = vector.shape_cast %46 : vector<2x12x32xf32> to vector<2x12x1x32xf32>
      %70 = vector.shape_cast %48 : vector<2x12x32xf32> to vector<2x12x1x32xf32>
      %71 = vector.shape_cast %50 : vector<2x12x32xf32> to vector<2x12x1x32xf32>
      %72 = vector.shape_cast %52 : vector<2x12x32xf32> to vector<2x12x1x32xf32>
      %73 = vector.shape_cast %54 : vector<2x12x32xf32> to vector<2x12x1x32xf32>
      %74 = vector.shape_cast %56 : vector<2x12x32xf32> to vector<2x12x1x32xf32>
      %75 = vector.shape_cast %58 : vector<2x12x32xf32> to vector<2x12x1x32xf32>
      %76 = vector.shape_cast %60 : vector<2x12x32xf32> to vector<2x12x1x32xf32>
      %77 = vector.shape_cast %62 : vector<2x12x32xf32> to vector<2x12x1x32xf32>
      %78 = vector.shape_cast %64 : vector<2x12x32xf32> to vector<2x12x1x32xf32>
      %79 = vector.shape_cast %66 : vector<2x12x32xf32> to vector<2x12x1x32xf32>
      %80 = vector.shape_cast %68 : vector<2x12x32xf32> to vector<2x12x1x32xf32>
      %81 = tpu.concatenate %69, %70, %71, %72, %73, %74, %75, %76, %77, %78, %79, %80 in 2 : vector<2x12x1x32xf32>, vector<2x12x1x32xf32>, vector<2x12x1x32xf32>, vector<2x12x1x32xf32>, vector<2x12x1x32xf32>, vector<2x12x1x32xf32>, vector<2x12x1x32xf32>, vector<2x12x1x32xf32>, vector<2x12x1x32xf32>, vector<2x12x1x32xf32>, vector<2x12x1x32xf32>, vector<2x12x1x32xf32> -> vector<2x12x12x32xf32>
      %82 = vector.extract_strided_slice %44 {offsets = [0, 0, 1, 0], sizes = [2, 12, 1, 32], strides = [1, 1, 1, 1]} : vector<2x12x24x32xf32> to vector<2x12x1x32xf32>
      %83 = vector.shape_cast %82 : vector<2x12x1x32xf32> to vector<2x12x32xf32>
      %84 = vector.extract_strided_slice %44 {offsets = [0, 0, 3, 0], sizes = [2, 12, 1, 32], strides = [1, 1, 1, 1]} : vector<2x12x24x32xf32> to vector<2x12x1x32xf32>
      %85 = vector.shape_cast %84 : vector<2x12x1x32xf32> to vector<2x12x32xf32>
      %86 = vector.extract_strided_slice %44 {offsets = [0, 0, 5, 0], sizes = [2, 12, 1, 32], strides = [1, 1, 1, 1]} : vector<2x12x24x32xf32> to vector<2x12x1x32xf32>
      %87 = vector.shape_cast %86 : vector<2x12x1x32xf32> to vector<2x12x32xf32>
      %88 = vector.extract_strided_slice %44 {offsets = [0, 0, 7, 0], sizes = [2, 12, 1, 32], strides = [1, 1, 1, 1]} : vector<2x12x24x32xf32> to vector<2x12x1x32xf32>
      %89 = vector.shape_cast %88 : vector<2x12x1x32xf32> to vector<2x12x32xf32>
      %90 = vector.extract_strided_slice %44 {offsets = [0, 0, 9, 0], sizes = [2, 12, 1, 32], strides = [1, 1, 1, 1]} : vector<2x12x24x32xf32> to vector<2x12x1x32xf32>
      %91 = vector.shape_cast %90 : vector<2x12x1x32xf32> to vector<2x12x32xf32>
      %92 = vector.extract_strided_slice %44 {offsets = [0, 0, 11, 0], sizes = [2, 12, 1, 32], strides = [1, 1, 1, 1]} : vector<2x12x24x32xf32> to vector<2x12x1x32xf32>
      %93 = vector.shape_cast %92 : vector<2x12x1x32xf32> to vector<2x12x32xf32>
      %94 = vector.extract_strided_slice %44 {offsets = [0, 0, 13, 0], sizes = [2, 12, 1, 32], strides = [1, 1, 1, 1]} : vector<2x12x24x32xf32> to vector<2x12x1x32xf32>
      %95 = vector.shape_cast %94 : vector<2x12x1x32xf32> to vector<2x12x32xf32>
      %96 = vector.extract_strided_slice %44 {offsets = [0, 0, 15, 0], sizes = [2, 12, 1, 32], strides = [1, 1, 1, 1]} : vector<2x12x24x32xf32> to vector<2x12x1x32xf32>
      %97 = vector.shape_cast %96 : vector<2x12x1x32xf32> to vector<2x12x32xf32>
      %98 = vector.extract_strided_slice %44 {offsets = [0, 0, 17, 0], sizes = [2, 12, 1, 32], strides = [1, 1, 1, 1]} : vector<2x12x24x32xf32> to vector<2x12x1x32xf32>
      %99 = vector.shape_cast %98 : vector<2x12x1x32xf32> to vector<2x12x32xf32>
      %100 = vector.extract_strided_slice %44 {offsets = [0, 0, 19, 0], sizes = [2, 12, 1, 32], strides = [1, 1, 1, 1]} : vector<2x12x24x32xf32> to vector<2x12x1x32xf32>
      %101 = vector.shape_cast %100 : vector<2x12x1x32xf32> to vector<2x12x32xf32>
      %102 = vector.extract_strided_slice %44 {offsets = [0, 0, 21, 0], sizes = [2, 12, 1, 32], strides = [1, 1, 1, 1]} : vector<2x12x24x32xf32> to vector<2x12x1x32xf32>
      %103 = vector.shape_cast %102 : vector<2x12x1x32xf32> to vector<2x12x32xf32>
      %104 = vector.extract_strided_slice %44 {offsets = [0, 0, 23, 0], sizes = [2, 12, 1, 32], strides = [1, 1, 1, 1]} : vector<2x12x24x32xf32> to vector<2x12x1x32xf32>
      %105 = vector.shape_cast %104 : vector<2x12x1x32xf32> to vector<2x12x32xf32>
      %106 = vector.shape_cast %83 : vector<2x12x32xf32> to vector<2x12x1x32xf32>
      %107 = vector.shape_cast %85 : vector<2x12x32xf32> to vector<2x12x1x32xf32>
      %108 = vector.shape_cast %87 : vector<2x12x32xf32> to vector<2x12x1x32xf32>
      %109 = vector.shape_cast %89 : vector<2x12x32xf32> to vector<2x12x1x32xf32>
      %110 = vector.shape_cast %91 : vector<2x12x32xf32> to vector<2x12x1x32xf32>
      %111 = vector.shape_cast %93 : vector<2x12x32xf32> to vector<2x12x1x32xf32>
      %112 = vector.shape_cast %95 : vector<2x12x32xf32> to vector<2x12x1x32xf32>
      %113 = vector.shape_cast %97 : vector<2x12x32xf32> to vector<2x12x1x32xf32>
      %114 = vector.shape_cast %99 : vector<2x12x32xf32> to vector<2x12x1x32xf32>
      %115 = vector.shape_cast %101 : vector<2x12x32xf32> to vector<2x12x1x32xf32>
      %116 = vector.shape_cast %103 : vector<2x12x32xf32> to vector<2x12x1x32xf32>
      %117 = vector.shape_cast %105 : vector<2x12x32xf32> to vector<2x12x1x32xf32>
      %118 = tpu.concatenate %106, %107, %108, %109, %110, %111, %112, %113, %114, %115, %116, %117 in 2 : vector<2x12x1x32xf32>, vector<2x12x1x32xf32>, vector<2x12x1x32xf32>, vector<2x12x1x32xf32>, vector<2x12x1x32xf32>, vector<2x12x1x32xf32>, vector<2x12x1x32xf32>, vector<2x12x1x32xf32>, vector<2x12x1x32xf32>, vector<2x12x1x32xf32>, vector<2x12x1x32xf32>, vector<2x12x1x32xf32> -> vector<2x12x12x32xf32>
      %119 = arith.maximumf %81, %118 : vector<2x12x12x32xf32>
      %120 = arith.truncf %119 : vector<2x12x12x32xf32> to vector<2x12x12x32xbf16>
      %cst_18 = arith.constant 0.000000e+00 : f32
      %121 = vector.broadcast %cst_18 : f32 to vector<128x64xf32>
      %122 = vector.extract_strided_slice %120 {offsets = [0, 0, 0, 0], sizes = [2, 8, 8, 32], strides = [1, 1, 1, 1]} : vector<2x12x12x32xbf16> to vector<2x8x8x32xbf16>
      %123 = vector.shape_cast %122 : vector<2x8x8x32xbf16> to vector<128x32xbf16>
      %c0_19 = arith.constant 0 : index
      %c0_20 = arith.constant 0 : index
      %c0_21 = arith.constant 0 : index
      %124 = vector.load %arg6[%c0_19, %c0_20, %c0_21] : memref<25x32x64xbf16, #tpu.memory_space<vmem>>, vector<1x32x64xbf16>
      %125 = vector.shape_cast %124 : vector<1x32x64xbf16> to vector<32x64xbf16>
      %cst_22 = arith.constant dense<0.000000e+00> : vector<128x64xf32>
      %126 = tpu.matmul %123, %125, %cst_22 {dimension_numbers = #tpu.dot_dimension_numbers<[1], [0], [0], [1], [0, 0, 1, 1], [], []>} : vector<128x32xbf16>, vector<32x64xbf16>, vector<128x64xf32> -> vector<128x64xf32>
      %127 = arith.addf %121, %126 : vector<128x64xf32>
      %128 = vector.extract_strided_slice %120 {offsets = [0, 0, 1, 0], sizes = [2, 8, 8, 32], strides = [1, 1, 1, 1]} : vector<2x12x12x32xbf16> to vector<2x8x8x32xbf16>
      %129 = vector.shape_cast %128 : vector<2x8x8x32xbf16> to vector<128x32xbf16>
      %c1 = arith.constant 1 : index
      %c0_23 = arith.constant 0 : index
      %c0_24 = arith.constant 0 : index
      %130 = vector.load %arg6[%c1, %c0_23, %c0_24] : memref<25x32x64xbf16, #tpu.memory_space<vmem>>, vector<1x32x64xbf16>
      %131 = vector.shape_cast %130 : vector<1x32x64xbf16> to vector<32x64xbf16>
      %cst_25 = arith.constant dense<0.000000e+00> : vector<128x64xf32>
      %132 = tpu.matmul %129, %131, %cst_25 {dimension_numbers = #tpu.dot_dimension_numbers<[1], [0], [0], [1], [0, 0, 1, 1], [], []>} : vector<128x32xbf16>, vector<32x64xbf16>, vector<128x64xf32> -> vector<128x64xf32>
      %133 = arith.addf %127, %132 : vector<128x64xf32>
      %134 = vector.extract_strided_slice %120 {offsets = [0, 0, 2, 0], sizes = [2, 8, 8, 32], strides = [1, 1, 1, 1]} : vector<2x12x12x32xbf16> to vector<2x8x8x32xbf16>
      %135 = vector.shape_cast %134 : vector<2x8x8x32xbf16> to vector<128x32xbf16>
      %c2 = arith.constant 2 : index
      %c0_26 = arith.constant 0 : index
      %c0_27 = arith.constant 0 : index
      %136 = vector.load %arg6[%c2, %c0_26, %c0_27] : memref<25x32x64xbf16, #tpu.memory_space<vmem>>, vector<1x32x64xbf16>
      %137 = vector.shape_cast %136 : vector<1x32x64xbf16> to vector<32x64xbf16>
      %cst_28 = arith.constant dense<0.000000e+00> : vector<128x64xf32>
      %138 = tpu.matmul %135, %137, %cst_28 {dimension_numbers = #tpu.dot_dimension_numbers<[1], [0], [0], [1], [0, 0, 1, 1], [], []>} : vector<128x32xbf16>, vector<32x64xbf16>, vector<128x64xf32> -> vector<128x64xf32>
      %139 = arith.addf %133, %138 : vector<128x64xf32>
      %140 = vector.extract_strided_slice %120 {offsets = [0, 0, 3, 0], sizes = [2, 8, 8, 32], strides = [1, 1, 1, 1]} : vector<2x12x12x32xbf16> to vector<2x8x8x32xbf16>
      %141 = vector.shape_cast %140 : vector<2x8x8x32xbf16> to vector<128x32xbf16>
      %c3 = arith.constant 3 : index
      %c0_29 = arith.constant 0 : index
      %c0_30 = arith.constant 0 : index
      %142 = vector.load %arg6[%c3, %c0_29, %c0_30] : memref<25x32x64xbf16, #tpu.memory_space<vmem>>, vector<1x32x64xbf16>
      %143 = vector.shape_cast %142 : vector<1x32x64xbf16> to vector<32x64xbf16>
      %cst_31 = arith.constant dense<0.000000e+00> : vector<128x64xf32>
      %144 = tpu.matmul %141, %143, %cst_31 {dimension_numbers = #tpu.dot_dimension_numbers<[1], [0], [0], [1], [0, 0, 1, 1], [], []>} : vector<128x32xbf16>, vector<32x64xbf16>, vector<128x64xf32> -> vector<128x64xf32>
      %145 = arith.addf %139, %144 : vector<128x64xf32>
      %146 = vector.extract_strided_slice %120 {offsets = [0, 0, 4, 0], sizes = [2, 8, 8, 32], strides = [1, 1, 1, 1]} : vector<2x12x12x32xbf16> to vector<2x8x8x32xbf16>
      %147 = vector.shape_cast %146 : vector<2x8x8x32xbf16> to vector<128x32xbf16>
      %c4 = arith.constant 4 : index
      %c0_32 = arith.constant 0 : index
      %c0_33 = arith.constant 0 : index
      %148 = vector.load %arg6[%c4, %c0_32, %c0_33] : memref<25x32x64xbf16, #tpu.memory_space<vmem>>, vector<1x32x64xbf16>
      %149 = vector.shape_cast %148 : vector<1x32x64xbf16> to vector<32x64xbf16>
      %cst_34 = arith.constant dense<0.000000e+00> : vector<128x64xf32>
      %150 = tpu.matmul %147, %149, %cst_34 {dimension_numbers = #tpu.dot_dimension_numbers<[1], [0], [0], [1], [0, 0, 1, 1], [], []>} : vector<128x32xbf16>, vector<32x64xbf16>, vector<128x64xf32> -> vector<128x64xf32>
      %151 = arith.addf %145, %150 : vector<128x64xf32>
      %152 = vector.extract_strided_slice %120 {offsets = [0, 1, 0, 0], sizes = [2, 8, 8, 32], strides = [1, 1, 1, 1]} : vector<2x12x12x32xbf16> to vector<2x8x8x32xbf16>
      %153 = vector.shape_cast %152 : vector<2x8x8x32xbf16> to vector<128x32xbf16>
      %c5 = arith.constant 5 : index
      %c0_35 = arith.constant 0 : index
      %c0_36 = arith.constant 0 : index
      %154 = vector.load %arg6[%c5, %c0_35, %c0_36] : memref<25x32x64xbf16, #tpu.memory_space<vmem>>, vector<1x32x64xbf16>
      %155 = vector.shape_cast %154 : vector<1x32x64xbf16> to vector<32x64xbf16>
      %cst_37 = arith.constant dense<0.000000e+00> : vector<128x64xf32>
      %156 = tpu.matmul %153, %155, %cst_37 {dimension_numbers = #tpu.dot_dimension_numbers<[1], [0], [0], [1], [0, 0, 1, 1], [], []>} : vector<128x32xbf16>, vector<32x64xbf16>, vector<128x64xf32> -> vector<128x64xf32>
      %157 = arith.addf %151, %156 : vector<128x64xf32>
      %158 = vector.extract_strided_slice %120 {offsets = [0, 1, 1, 0], sizes = [2, 8, 8, 32], strides = [1, 1, 1, 1]} : vector<2x12x12x32xbf16> to vector<2x8x8x32xbf16>
      %159 = vector.shape_cast %158 : vector<2x8x8x32xbf16> to vector<128x32xbf16>
      %c6 = arith.constant 6 : index
      %c0_38 = arith.constant 0 : index
      %c0_39 = arith.constant 0 : index
      %160 = vector.load %arg6[%c6, %c0_38, %c0_39] : memref<25x32x64xbf16, #tpu.memory_space<vmem>>, vector<1x32x64xbf16>
      %161 = vector.shape_cast %160 : vector<1x32x64xbf16> to vector<32x64xbf16>
      %cst_40 = arith.constant dense<0.000000e+00> : vector<128x64xf32>
      %162 = tpu.matmul %159, %161, %cst_40 {dimension_numbers = #tpu.dot_dimension_numbers<[1], [0], [0], [1], [0, 0, 1, 1], [], []>} : vector<128x32xbf16>, vector<32x64xbf16>, vector<128x64xf32> -> vector<128x64xf32>
      %163 = arith.addf %157, %162 : vector<128x64xf32>
      %164 = vector.extract_strided_slice %120 {offsets = [0, 1, 2, 0], sizes = [2, 8, 8, 32], strides = [1, 1, 1, 1]} : vector<2x12x12x32xbf16> to vector<2x8x8x32xbf16>
      %165 = vector.shape_cast %164 : vector<2x8x8x32xbf16> to vector<128x32xbf16>
      %c7 = arith.constant 7 : index
      %c0_41 = arith.constant 0 : index
      %c0_42 = arith.constant 0 : index
      %166 = vector.load %arg6[%c7, %c0_41, %c0_42] : memref<25x32x64xbf16, #tpu.memory_space<vmem>>, vector<1x32x64xbf16>
      %167 = vector.shape_cast %166 : vector<1x32x64xbf16> to vector<32x64xbf16>
      %cst_43 = arith.constant dense<0.000000e+00> : vector<128x64xf32>
      %168 = tpu.matmul %165, %167, %cst_43 {dimension_numbers = #tpu.dot_dimension_numbers<[1], [0], [0], [1], [0, 0, 1, 1], [], []>} : vector<128x32xbf16>, vector<32x64xbf16>, vector<128x64xf32> -> vector<128x64xf32>
      %169 = arith.addf %163, %168 : vector<128x64xf32>
      %170 = vector.extract_strided_slice %120 {offsets = [0, 1, 3, 0], sizes = [2, 8, 8, 32], strides = [1, 1, 1, 1]} : vector<2x12x12x32xbf16> to vector<2x8x8x32xbf16>
      %171 = vector.shape_cast %170 : vector<2x8x8x32xbf16> to vector<128x32xbf16>
      %c8 = arith.constant 8 : index
      %c0_44 = arith.constant 0 : index
      %c0_45 = arith.constant 0 : index
      %172 = vector.load %arg6[%c8, %c0_44, %c0_45] : memref<25x32x64xbf16, #tpu.memory_space<vmem>>, vector<1x32x64xbf16>
      %173 = vector.shape_cast %172 : vector<1x32x64xbf16> to vector<32x64xbf16>
      %cst_46 = arith.constant dense<0.000000e+00> : vector<128x64xf32>
      %174 = tpu.matmul %171, %173, %cst_46 {dimension_numbers = #tpu.dot_dimension_numbers<[1], [0], [0], [1], [0, 0, 1, 1], [], []>} : vector<128x32xbf16>, vector<32x64xbf16>, vector<128x64xf32> -> vector<128x64xf32>
      %175 = arith.addf %169, %174 : vector<128x64xf32>
      %176 = vector.extract_strided_slice %120 {offsets = [0, 1, 4, 0], sizes = [2, 8, 8, 32], strides = [1, 1, 1, 1]} : vector<2x12x12x32xbf16> to vector<2x8x8x32xbf16>
      %177 = vector.shape_cast %176 : vector<2x8x8x32xbf16> to vector<128x32xbf16>
      %c9 = arith.constant 9 : index
      %c0_47 = arith.constant 0 : index
      %c0_48 = arith.constant 0 : index
      %178 = vector.load %arg6[%c9, %c0_47, %c0_48] : memref<25x32x64xbf16, #tpu.memory_space<vmem>>, vector<1x32x64xbf16>
      %179 = vector.shape_cast %178 : vector<1x32x64xbf16> to vector<32x64xbf16>
      %cst_49 = arith.constant dense<0.000000e+00> : vector<128x64xf32>
      %180 = tpu.matmul %177, %179, %cst_49 {dimension_numbers = #tpu.dot_dimension_numbers<[1], [0], [0], [1], [0, 0, 1, 1], [], []>} : vector<128x32xbf16>, vector<32x64xbf16>, vector<128x64xf32> -> vector<128x64xf32>
      %181 = arith.addf %175, %180 : vector<128x64xf32>
      %182 = vector.extract_strided_slice %120 {offsets = [0, 2, 0, 0], sizes = [2, 8, 8, 32], strides = [1, 1, 1, 1]} : vector<2x12x12x32xbf16> to vector<2x8x8x32xbf16>
      %183 = vector.shape_cast %182 : vector<2x8x8x32xbf16> to vector<128x32xbf16>
      %c10 = arith.constant 10 : index
      %c0_50 = arith.constant 0 : index
      %c0_51 = arith.constant 0 : index
      %184 = vector.load %arg6[%c10, %c0_50, %c0_51] : memref<25x32x64xbf16, #tpu.memory_space<vmem>>, vector<1x32x64xbf16>
      %185 = vector.shape_cast %184 : vector<1x32x64xbf16> to vector<32x64xbf16>
      %cst_52 = arith.constant dense<0.000000e+00> : vector<128x64xf32>
      %186 = tpu.matmul %183, %185, %cst_52 {dimension_numbers = #tpu.dot_dimension_numbers<[1], [0], [0], [1], [0, 0, 1, 1], [], []>} : vector<128x32xbf16>, vector<32x64xbf16>, vector<128x64xf32> -> vector<128x64xf32>
      %187 = arith.addf %181, %186 : vector<128x64xf32>
      %188 = vector.extract_strided_slice %120 {offsets = [0, 2, 1, 0], sizes = [2, 8, 8, 32], strides = [1, 1, 1, 1]} : vector<2x12x12x32xbf16> to vector<2x8x8x32xbf16>
      %189 = vector.shape_cast %188 : vector<2x8x8x32xbf16> to vector<128x32xbf16>
      %c11 = arith.constant 11 : index
      %c0_53 = arith.constant 0 : index
      %c0_54 = arith.constant 0 : index
      %190 = vector.load %arg6[%c11, %c0_53, %c0_54] : memref<25x32x64xbf16, #tpu.memory_space<vmem>>, vector<1x32x64xbf16>
      %191 = vector.shape_cast %190 : vector<1x32x64xbf16> to vector<32x64xbf16>
      %cst_55 = arith.constant dense<0.000000e+00> : vector<128x64xf32>
      %192 = tpu.matmul %189, %191, %cst_55 {dimension_numbers = #tpu.dot_dimension_numbers<[1], [0], [0], [1], [0, 0, 1, 1], [], []>} : vector<128x32xbf16>, vector<32x64xbf16>, vector<128x64xf32> -> vector<128x64xf32>
      %193 = arith.addf %187, %192 : vector<128x64xf32>
      %194 = vector.extract_strided_slice %120 {offsets = [0, 2, 2, 0], sizes = [2, 8, 8, 32], strides = [1, 1, 1, 1]} : vector<2x12x12x32xbf16> to vector<2x8x8x32xbf16>
      %195 = vector.shape_cast %194 : vector<2x8x8x32xbf16> to vector<128x32xbf16>
      %c12 = arith.constant 12 : index
      %c0_56 = arith.constant 0 : index
      %c0_57 = arith.constant 0 : index
      %196 = vector.load %arg6[%c12, %c0_56, %c0_57] : memref<25x32x64xbf16, #tpu.memory_space<vmem>>, vector<1x32x64xbf16>
      %197 = vector.shape_cast %196 : vector<1x32x64xbf16> to vector<32x64xbf16>
      %cst_58 = arith.constant dense<0.000000e+00> : vector<128x64xf32>
      %198 = tpu.matmul %195, %197, %cst_58 {dimension_numbers = #tpu.dot_dimension_numbers<[1], [0], [0], [1], [0, 0, 1, 1], [], []>} : vector<128x32xbf16>, vector<32x64xbf16>, vector<128x64xf32> -> vector<128x64xf32>
      %199 = arith.addf %193, %198 : vector<128x64xf32>
      %200 = vector.extract_strided_slice %120 {offsets = [0, 2, 3, 0], sizes = [2, 8, 8, 32], strides = [1, 1, 1, 1]} : vector<2x12x12x32xbf16> to vector<2x8x8x32xbf16>
      %201 = vector.shape_cast %200 : vector<2x8x8x32xbf16> to vector<128x32xbf16>
      %c13 = arith.constant 13 : index
      %c0_59 = arith.constant 0 : index
      %c0_60 = arith.constant 0 : index
      %202 = vector.load %arg6[%c13, %c0_59, %c0_60] : memref<25x32x64xbf16, #tpu.memory_space<vmem>>, vector<1x32x64xbf16>
      %203 = vector.shape_cast %202 : vector<1x32x64xbf16> to vector<32x64xbf16>
      %cst_61 = arith.constant dense<0.000000e+00> : vector<128x64xf32>
      %204 = tpu.matmul %201, %203, %cst_61 {dimension_numbers = #tpu.dot_dimension_numbers<[1], [0], [0], [1], [0, 0, 1, 1], [], []>} : vector<128x32xbf16>, vector<32x64xbf16>, vector<128x64xf32> -> vector<128x64xf32>
      %205 = arith.addf %199, %204 : vector<128x64xf32>
      %206 = vector.extract_strided_slice %120 {offsets = [0, 2, 4, 0], sizes = [2, 8, 8, 32], strides = [1, 1, 1, 1]} : vector<2x12x12x32xbf16> to vector<2x8x8x32xbf16>
      %207 = vector.shape_cast %206 : vector<2x8x8x32xbf16> to vector<128x32xbf16>
      %c14 = arith.constant 14 : index
      %c0_62 = arith.constant 0 : index
      %c0_63 = arith.constant 0 : index
      %208 = vector.load %arg6[%c14, %c0_62, %c0_63] : memref<25x32x64xbf16, #tpu.memory_space<vmem>>, vector<1x32x64xbf16>
      %209 = vector.shape_cast %208 : vector<1x32x64xbf16> to vector<32x64xbf16>
      %cst_64 = arith.constant dense<0.000000e+00> : vector<128x64xf32>
      %210 = tpu.matmul %207, %209, %cst_64 {dimension_numbers = #tpu.dot_dimension_numbers<[1], [0], [0], [1], [0, 0, 1, 1], [], []>} : vector<128x32xbf16>, vector<32x64xbf16>, vector<128x64xf32> -> vector<128x64xf32>
      %211 = arith.addf %205, %210 : vector<128x64xf32>
      %212 = vector.extract_strided_slice %120 {offsets = [0, 3, 0, 0], sizes = [2, 8, 8, 32], strides = [1, 1, 1, 1]} : vector<2x12x12x32xbf16> to vector<2x8x8x32xbf16>
      %213 = vector.shape_cast %212 : vector<2x8x8x32xbf16> to vector<128x32xbf16>
      %c15 = arith.constant 15 : index
      %c0_65 = arith.constant 0 : index
      %c0_66 = arith.constant 0 : index
      %214 = vector.load %arg6[%c15, %c0_65, %c0_66] : memref<25x32x64xbf16, #tpu.memory_space<vmem>>, vector<1x32x64xbf16>
      %215 = vector.shape_cast %214 : vector<1x32x64xbf16> to vector<32x64xbf16>
      %cst_67 = arith.constant dense<0.000000e+00> : vector<128x64xf32>
      %216 = tpu.matmul %213, %215, %cst_67 {dimension_numbers = #tpu.dot_dimension_numbers<[1], [0], [0], [1], [0, 0, 1, 1], [], []>} : vector<128x32xbf16>, vector<32x64xbf16>, vector<128x64xf32> -> vector<128x64xf32>
      %217 = arith.addf %211, %216 : vector<128x64xf32>
      %218 = vector.extract_strided_slice %120 {offsets = [0, 3, 1, 0], sizes = [2, 8, 8, 32], strides = [1, 1, 1, 1]} : vector<2x12x12x32xbf16> to vector<2x8x8x32xbf16>
      %219 = vector.shape_cast %218 : vector<2x8x8x32xbf16> to vector<128x32xbf16>
      %c16 = arith.constant 16 : index
      %c0_68 = arith.constant 0 : index
      %c0_69 = arith.constant 0 : index
      %220 = vector.load %arg6[%c16, %c0_68, %c0_69] : memref<25x32x64xbf16, #tpu.memory_space<vmem>>, vector<1x32x64xbf16>
      %221 = vector.shape_cast %220 : vector<1x32x64xbf16> to vector<32x64xbf16>
      %cst_70 = arith.constant dense<0.000000e+00> : vector<128x64xf32>
      %222 = tpu.matmul %219, %221, %cst_70 {dimension_numbers = #tpu.dot_dimension_numbers<[1], [0], [0], [1], [0, 0, 1, 1], [], []>} : vector<128x32xbf16>, vector<32x64xbf16>, vector<128x64xf32> -> vector<128x64xf32>
      %223 = arith.addf %217, %222 : vector<128x64xf32>
      %224 = vector.extract_strided_slice %120 {offsets = [0, 3, 2, 0], sizes = [2, 8, 8, 32], strides = [1, 1, 1, 1]} : vector<2x12x12x32xbf16> to vector<2x8x8x32xbf16>
      %225 = vector.shape_cast %224 : vector<2x8x8x32xbf16> to vector<128x32xbf16>
      %c17 = arith.constant 17 : index
      %c0_71 = arith.constant 0 : index
      %c0_72 = arith.constant 0 : index
      %226 = vector.load %arg6[%c17, %c0_71, %c0_72] : memref<25x32x64xbf16, #tpu.memory_space<vmem>>, vector<1x32x64xbf16>
      %227 = vector.shape_cast %226 : vector<1x32x64xbf16> to vector<32x64xbf16>
      %cst_73 = arith.constant dense<0.000000e+00> : vector<128x64xf32>
      %228 = tpu.matmul %225, %227, %cst_73 {dimension_numbers = #tpu.dot_dimension_numbers<[1], [0], [0], [1], [0, 0, 1, 1], [], []>} : vector<128x32xbf16>, vector<32x64xbf16>, vector<128x64xf32> -> vector<128x64xf32>
      %229 = arith.addf %223, %228 : vector<128x64xf32>
      %230 = vector.extract_strided_slice %120 {offsets = [0, 3, 3, 0], sizes = [2, 8, 8, 32], strides = [1, 1, 1, 1]} : vector<2x12x12x32xbf16> to vector<2x8x8x32xbf16>
      %231 = vector.shape_cast %230 : vector<2x8x8x32xbf16> to vector<128x32xbf16>
      %c18 = arith.constant 18 : index
      %c0_74 = arith.constant 0 : index
      %c0_75 = arith.constant 0 : index
      %232 = vector.load %arg6[%c18, %c0_74, %c0_75] : memref<25x32x64xbf16, #tpu.memory_space<vmem>>, vector<1x32x64xbf16>
      %233 = vector.shape_cast %232 : vector<1x32x64xbf16> to vector<32x64xbf16>
      %cst_76 = arith.constant dense<0.000000e+00> : vector<128x64xf32>
      %234 = tpu.matmul %231, %233, %cst_76 {dimension_numbers = #tpu.dot_dimension_numbers<[1], [0], [0], [1], [0, 0, 1, 1], [], []>} : vector<128x32xbf16>, vector<32x64xbf16>, vector<128x64xf32> -> vector<128x64xf32>
      %235 = arith.addf %229, %234 : vector<128x64xf32>
      %236 = vector.extract_strided_slice %120 {offsets = [0, 3, 4, 0], sizes = [2, 8, 8, 32], strides = [1, 1, 1, 1]} : vector<2x12x12x32xbf16> to vector<2x8x8x32xbf16>
      %237 = vector.shape_cast %236 : vector<2x8x8x32xbf16> to vector<128x32xbf16>
      %c19 = arith.constant 19 : index
      %c0_77 = arith.constant 0 : index
      %c0_78 = arith.constant 0 : index
      %238 = vector.load %arg6[%c19, %c0_77, %c0_78] : memref<25x32x64xbf16, #tpu.memory_space<vmem>>, vector<1x32x64xbf16>
      %239 = vector.shape_cast %238 : vector<1x32x64xbf16> to vector<32x64xbf16>
      %cst_79 = arith.constant dense<0.000000e+00> : vector<128x64xf32>
      %240 = tpu.matmul %237, %239, %cst_79 {dimension_numbers = #tpu.dot_dimension_numbers<[1], [0], [0], [1], [0, 0, 1, 1], [], []>} : vector<128x32xbf16>, vector<32x64xbf16>, vector<128x64xf32> -> vector<128x64xf32>
      %241 = arith.addf %235, %240 : vector<128x64xf32>
      %242 = vector.extract_strided_slice %120 {offsets = [0, 4, 0, 0], sizes = [2, 8, 8, 32], strides = [1, 1, 1, 1]} : vector<2x12x12x32xbf16> to vector<2x8x8x32xbf16>
      %243 = vector.shape_cast %242 : vector<2x8x8x32xbf16> to vector<128x32xbf16>
      %c20 = arith.constant 20 : index
      %c0_80 = arith.constant 0 : index
      %c0_81 = arith.constant 0 : index
      %244 = vector.load %arg6[%c20, %c0_80, %c0_81] : memref<25x32x64xbf16, #tpu.memory_space<vmem>>, vector<1x32x64xbf16>
      %245 = vector.shape_cast %244 : vector<1x32x64xbf16> to vector<32x64xbf16>
      %cst_82 = arith.constant dense<0.000000e+00> : vector<128x64xf32>
      %246 = tpu.matmul %243, %245, %cst_82 {dimension_numbers = #tpu.dot_dimension_numbers<[1], [0], [0], [1], [0, 0, 1, 1], [], []>} : vector<128x32xbf16>, vector<32x64xbf16>, vector<128x64xf32> -> vector<128x64xf32>
      %247 = arith.addf %241, %246 : vector<128x64xf32>
      %248 = vector.extract_strided_slice %120 {offsets = [0, 4, 1, 0], sizes = [2, 8, 8, 32], strides = [1, 1, 1, 1]} : vector<2x12x12x32xbf16> to vector<2x8x8x32xbf16>
      %249 = vector.shape_cast %248 : vector<2x8x8x32xbf16> to vector<128x32xbf16>
      %c21 = arith.constant 21 : index
      %c0_83 = arith.constant 0 : index
      %c0_84 = arith.constant 0 : index
      %250 = vector.load %arg6[%c21, %c0_83, %c0_84] : memref<25x32x64xbf16, #tpu.memory_space<vmem>>, vector<1x32x64xbf16>
      %251 = vector.shape_cast %250 : vector<1x32x64xbf16> to vector<32x64xbf16>
      %cst_85 = arith.constant dense<0.000000e+00> : vector<128x64xf32>
      %252 = tpu.matmul %249, %251, %cst_85 {dimension_numbers = #tpu.dot_dimension_numbers<[1], [0], [0], [1], [0, 0, 1, 1], [], []>} : vector<128x32xbf16>, vector<32x64xbf16>, vector<128x64xf32> -> vector<128x64xf32>
      %253 = arith.addf %247, %252 : vector<128x64xf32>
      %254 = vector.extract_strided_slice %120 {offsets = [0, 4, 2, 0], sizes = [2, 8, 8, 32], strides = [1, 1, 1, 1]} : vector<2x12x12x32xbf16> to vector<2x8x8x32xbf16>
      %255 = vector.shape_cast %254 : vector<2x8x8x32xbf16> to vector<128x32xbf16>
      %c22 = arith.constant 22 : index
      %c0_86 = arith.constant 0 : index
      %c0_87 = arith.constant 0 : index
      %256 = vector.load %arg6[%c22, %c0_86, %c0_87] : memref<25x32x64xbf16, #tpu.memory_space<vmem>>, vector<1x32x64xbf16>
      %257 = vector.shape_cast %256 : vector<1x32x64xbf16> to vector<32x64xbf16>
      %cst_88 = arith.constant dense<0.000000e+00> : vector<128x64xf32>
      %258 = tpu.matmul %255, %257, %cst_88 {dimension_numbers = #tpu.dot_dimension_numbers<[1], [0], [0], [1], [0, 0, 1, 1], [], []>} : vector<128x32xbf16>, vector<32x64xbf16>, vector<128x64xf32> -> vector<128x64xf32>
      %259 = arith.addf %253, %258 : vector<128x64xf32>
      %260 = vector.extract_strided_slice %120 {offsets = [0, 4, 3, 0], sizes = [2, 8, 8, 32], strides = [1, 1, 1, 1]} : vector<2x12x12x32xbf16> to vector<2x8x8x32xbf16>
      %261 = vector.shape_cast %260 : vector<2x8x8x32xbf16> to vector<128x32xbf16>
      %c23 = arith.constant 23 : index
      %c0_89 = arith.constant 0 : index
      %c0_90 = arith.constant 0 : index
      %262 = vector.load %arg6[%c23, %c0_89, %c0_90] : memref<25x32x64xbf16, #tpu.memory_space<vmem>>, vector<1x32x64xbf16>
      %263 = vector.shape_cast %262 : vector<1x32x64xbf16> to vector<32x64xbf16>
      %cst_91 = arith.constant dense<0.000000e+00> : vector<128x64xf32>
      %264 = tpu.matmul %261, %263, %cst_91 {dimension_numbers = #tpu.dot_dimension_numbers<[1], [0], [0], [1], [0, 0, 1, 1], [], []>} : vector<128x32xbf16>, vector<32x64xbf16>, vector<128x64xf32> -> vector<128x64xf32>
      %265 = arith.addf %259, %264 : vector<128x64xf32>
      %266 = vector.extract_strided_slice %120 {offsets = [0, 4, 4, 0], sizes = [2, 8, 8, 32], strides = [1, 1, 1, 1]} : vector<2x12x12x32xbf16> to vector<2x8x8x32xbf16>
      %267 = vector.shape_cast %266 : vector<2x8x8x32xbf16> to vector<128x32xbf16>
      %c24 = arith.constant 24 : index
      %c0_92 = arith.constant 0 : index
      %c0_93 = arith.constant 0 : index
      %268 = vector.load %arg6[%c24, %c0_92, %c0_93] : memref<25x32x64xbf16, #tpu.memory_space<vmem>>, vector<1x32x64xbf16>
      %269 = vector.shape_cast %268 : vector<1x32x64xbf16> to vector<32x64xbf16>
      %cst_94 = arith.constant dense<0.000000e+00> : vector<128x64xf32>
      %270 = tpu.matmul %267, %269, %cst_94 {dimension_numbers = #tpu.dot_dimension_numbers<[1], [0], [0], [1], [0, 0, 1, 1], [], []>} : vector<128x32xbf16>, vector<32x64xbf16>, vector<128x64xf32> -> vector<128x64xf32>
      %271 = arith.addf %265, %270 : vector<128x64xf32>
      %c0_95 = arith.constant 0 : index
      %c0_96 = arith.constant 0 : index
      %272 = vector.load %arg16[%c0_95, %c0_96] : memref<1x64xf32, #tpu.memory_space<vmem>>, vector<1x64xf32>
      %cst_97 = arith.constant dense<0.000000e+00> : vector<64xf32>
      %273 = vector.multi_reduction <add>, %271, %cst_97 [0] : vector<128x64xf32> to vector<64xf32>
      %274 = vector.shape_cast %273 : vector<64xf32> to vector<1x64xf32>
      %275 = arith.addf %272, %274 : vector<1x64xf32>
      %c0_98 = arith.constant 0 : index
      %c0_99 = arith.constant 0 : index
      %276 = vector.load %arg16[%c0_98, %c0_99] : memref<1x64xf32, #tpu.memory_space<vmem>>, vector<1x64xf32>
      tpu.vector_store %arg16[%c0_98, %c0_99], %275 {strides = array<i32>} : memref<1x64xf32, #tpu.memory_space<vmem>>, vector<1x64xf32>,
      %c0_100 = arith.constant 0 : index
      %c0_101 = arith.constant 0 : index
      %277 = vector.load %arg17[%c0_100, %c0_101] : memref<1x64xf32, #tpu.memory_space<vmem>>, vector<1x64xf32>
      %278 = arith.mulf %271, %271 : vector<128x64xf32>
      %cst_102 = arith.constant dense<0.000000e+00> : vector<64xf32>
      %279 = vector.multi_reduction <add>, %278, %cst_102 [0] : vector<128x64xf32> to vector<64xf32>
      %280 = vector.shape_cast %279 : vector<64xf32> to vector<1x64xf32>
      %281 = arith.addf %277, %280 : vector<1x64xf32>
      %c0_103 = arith.constant 0 : index
      %c0_104 = arith.constant 0 : index
      %282 = vector.load %arg17[%c0_103, %c0_104] : memref<1x64xf32, #tpu.memory_space<vmem>>, vector<1x64xf32>
      tpu.vector_store %arg17[%c0_103, %c0_104], %281 {strides = array<i32>} : memref<1x64xf32, #tpu.memory_space<vmem>>, vector<1x64xf32>,
      %283 = vector.shape_cast %271 : vector<128x64xf32> to vector<2x8x8x64xf32>
      %284 = arith.index_cast %0 : i32 to index
      %c0_105 = arith.constant 0 : index
      %c0_106 = arith.constant 0 : index
      %c0_107 = arith.constant 0 : index
      %285 = vector.load %arg13[%284, %c0_105, %c0_106, %c0_107] : memref<2x8x8x64xf32, #tpu.memory_space<vmem>>, vector<2x8x8x64xf32>
      tpu.vector_store %arg13[%284, %c0_105, %c0_106, %c0_107], %283 {strides = array<i32>} : memref<2x8x8x64xf32, #tpu.memory_space<vmem>>, vector<2x8x8x64xf32>,
    } else {
    }
    %c2_i32_2 = arith.constant 2 : i32
    %7 = arith.cmpi eq, %arg0, %c2_i32_2 : i32
    %8 = arith.extui %7 : i1 to i32
    %c0_i32_3 = arith.constant 0 : i32
    %9 = arith.cmpi ne, %8, %c0_i32_3 : i32
    scf.if %9 {
      %c0 = arith.constant 0 : index
      %c0_4 = arith.constant 0 : index
      %10 = vector.load %arg16[%c0, %c0_4] : memref<1x64xf32, #tpu.memory_space<vmem>>, vector<1x64xf32>
      %cst = arith.constant 7.812500e-03 : f32
      %11 = vector.broadcast %cst : f32 to vector<1x64xf32>
      %12 = arith.mulf %10, %11 : vector<1x64xf32>
      %c0_5 = arith.constant 0 : index
      %c0_6 = arith.constant 0 : index
      %13 = vector.load %arg17[%c0_5, %c0_6] : memref<1x64xf32, #tpu.memory_space<vmem>>, vector<1x64xf32>
      %cst_7 = arith.constant 7.812500e-03 : f32
      %14 = vector.broadcast %cst_7 : f32 to vector<1x64xf32>
      %15 = arith.mulf %13, %14 : vector<1x64xf32>
      %16 = arith.mulf %12, %12 : vector<1x64xf32>
      %17 = arith.subf %15, %16 : vector<1x64xf32>
      %cst_8 = arith.constant 0.000000e+00 : f32
      %18 = vector.broadcast %cst_8 : f32 to vector<1x64xf32>
      %19 = arith.maximumf %17, %18 : vector<1x64xf32>
      %c0_9 = arith.constant 0 : index
      %c0_10 = arith.constant 0 : index
      %20 = vector.load %arg7[%c0_9, %c0_10] : memref<1x64xf32, #tpu.memory_space<vmem>>, vector<1x64xf32>
      %cst_11 = arith.constant 9.99999974E-6 : f32
      %21 = vector.broadcast %cst_11 : f32 to vector<1x64xf32>
      %22 = arith.addf %19, %21 : vector<1x64xf32>
      %23 = math.rsqrt %22 : vector<1x64xf32>
      %24 = arith.mulf %20, %23 : vector<1x64xf32>
      %c0_12 = arith.constant 0 : index
      %c0_13 = arith.constant 0 : index
      %25 = vector.load %arg8[%c0_12, %c0_13] : memref<1x64xf32, #tpu.memory_space<vmem>>, vector<1x64xf32>
      %26 = arith.mulf %12, %24 : vector<1x64xf32>
      %27 = arith.subf %25, %26 : vector<1x64xf32>
      %28 = arith.index_cast %0 : i32 to index
      %c0_14 = arith.constant 0 : index
      %c0_15 = arith.constant 0 : index
      %c0_16 = arith.constant 0 : index
      %29 = vector.load %arg13[%28, %c0_14, %c0_15, %c0_16] : memref<2x8x8x64xf32, #tpu.memory_space<vmem>>, vector<2x8x8x64xf32>
      %30 = vector.shape_cast %24 : vector<1x64xf32> to vector<1x1x1x64xf32>
      %31 = vector.broadcast %30 : vector<1x1x1x64xf32> to vector<2x8x8x64xf32>
      %32 = arith.mulf %29, %31 : vector<2x8x8x64xf32>
      %33 = vector.shape_cast %27 : vector<1x64xf32> to vector<1x1x1x64xf32>
      %34 = vector.broadcast %33 : vector<1x1x1x64xf32> to vector<2x8x8x64xf32>
      %35 = arith.addf %32, %34 : vector<2x8x8x64xf32>
      %cst_17 = arith.constant 0.000000e+00 : f32
      %36 = vector.broadcast %cst_17 : f32 to vector<2x8x8x64xf32>
      %37 = arith.maximumf %35, %36 : vector<2x8x8x64xf32>
      %38 = vector.shape_cast %37 : vector<2x8x8x64xf32> to vector<2x4x2x8x64xf32>
      %39 = vector.extract_strided_slice %38 {offsets = [0, 0, 0, 0, 0], sizes = [2, 4, 1, 8, 64], strides = [1, 1, 1, 1, 1]} : vector<2x4x2x8x64xf32> to vector<2x4x1x8x64xf32>
      %40 = vector.shape_cast %39 : vector<2x4x1x8x64xf32> to vector<2x4x8x64xf32>
      %41 = vector.extract_strided_slice %38 {offsets = [0, 0, 1, 0, 0], sizes = [2, 4, 1, 8, 64], strides = [1, 1, 1, 1, 1]} : vector<2x4x2x8x64xf32> to vector<2x4x1x8x64xf32>
      %42 = vector.shape_cast %41 : vector<2x4x1x8x64xf32> to vector<2x4x8x64xf32>
      %43 = arith.maximumf %40, %42 : vector<2x4x8x64xf32>
      %44 = vector.extract_strided_slice %43 {offsets = [0, 0, 0, 0], sizes = [2, 4, 1, 64], strides = [1, 1, 1, 1]} : vector<2x4x8x64xf32> to vector<2x4x1x64xf32>
      %45 = vector.shape_cast %44 : vector<2x4x1x64xf32> to vector<2x4x64xf32>
      %46 = vector.extract_strided_slice %43 {offsets = [0, 0, 2, 0], sizes = [2, 4, 1, 64], strides = [1, 1, 1, 1]} : vector<2x4x8x64xf32> to vector<2x4x1x64xf32>
      %47 = vector.shape_cast %46 : vector<2x4x1x64xf32> to vector<2x4x64xf32>
      %48 = vector.extract_strided_slice %43 {offsets = [0, 0, 4, 0], sizes = [2, 4, 1, 64], strides = [1, 1, 1, 1]} : vector<2x4x8x64xf32> to vector<2x4x1x64xf32>
      %49 = vector.shape_cast %48 : vector<2x4x1x64xf32> to vector<2x4x64xf32>
      %50 = vector.extract_strided_slice %43 {offsets = [0, 0, 6, 0], sizes = [2, 4, 1, 64], strides = [1, 1, 1, 1]} : vector<2x4x8x64xf32> to vector<2x4x1x64xf32>
      %51 = vector.shape_cast %50 : vector<2x4x1x64xf32> to vector<2x4x64xf32>
      %52 = vector.shape_cast %45 : vector<2x4x64xf32> to vector<2x4x1x64xf32>
      %53 = vector.shape_cast %47 : vector<2x4x64xf32> to vector<2x4x1x64xf32>
      %54 = vector.shape_cast %49 : vector<2x4x64xf32> to vector<2x4x1x64xf32>
      %55 = vector.shape_cast %51 : vector<2x4x64xf32> to vector<2x4x1x64xf32>
      %56 = tpu.concatenate %52, %53, %54, %55 in 2 : vector<2x4x1x64xf32>, vector<2x4x1x64xf32>, vector<2x4x1x64xf32>, vector<2x4x1x64xf32> -> vector<2x4x4x64xf32>
      %57 = vector.extract_strided_slice %43 {offsets = [0, 0, 1, 0], sizes = [2, 4, 1, 64], strides = [1, 1, 1, 1]} : vector<2x4x8x64xf32> to vector<2x4x1x64xf32>
      %58 = vector.shape_cast %57 : vector<2x4x1x64xf32> to vector<2x4x64xf32>
      %59 = vector.extract_strided_slice %43 {offsets = [0, 0, 3, 0], sizes = [2, 4, 1, 64], strides = [1, 1, 1, 1]} : vector<2x4x8x64xf32> to vector<2x4x1x64xf32>
      %60 = vector.shape_cast %59 : vector<2x4x1x64xf32> to vector<2x4x64xf32>
      %61 = vector.extract_strided_slice %43 {offsets = [0, 0, 5, 0], sizes = [2, 4, 1, 64], strides = [1, 1, 1, 1]} : vector<2x4x8x64xf32> to vector<2x4x1x64xf32>
      %62 = vector.shape_cast %61 : vector<2x4x1x64xf32> to vector<2x4x64xf32>
      %63 = vector.extract_strided_slice %43 {offsets = [0, 0, 7, 0], sizes = [2, 4, 1, 64], strides = [1, 1, 1, 1]} : vector<2x4x8x64xf32> to vector<2x4x1x64xf32>
      %64 = vector.shape_cast %63 : vector<2x4x1x64xf32> to vector<2x4x64xf32>
      %65 = vector.shape_cast %58 : vector<2x4x64xf32> to vector<2x4x1x64xf32>
      %66 = vector.shape_cast %60 : vector<2x4x64xf32> to vector<2x4x1x64xf32>
      %67 = vector.shape_cast %62 : vector<2x4x64xf32> to vector<2x4x1x64xf32>
      %68 = vector.shape_cast %64 : vector<2x4x64xf32> to vector<2x4x1x64xf32>
      %69 = tpu.concatenate %65, %66, %67, %68 in 2 : vector<2x4x1x64xf32>, vector<2x4x1x64xf32>, vector<2x4x1x64xf32>, vector<2x4x1x64xf32> -> vector<2x4x4x64xf32>
      %70 = arith.maximumf %56, %69 : vector<2x4x4x64xf32>
      %cst_18 = arith.constant 0.000000e+00 : f32
      %71 = vector.broadcast %cst_18 : f32 to vector<2x128xf32>
      %72 = vector.extract_strided_slice %70 {offsets = [0, 0, 0, 0], sizes = [2, 1, 1, 64], strides = [1, 1, 1, 1]} : vector<2x4x4x64xf32> to vector<2x1x1x64xf32>
      %73 = vector.shape_cast %72 : vector<2x1x1x64xf32> to vector<2x64xf32>
      %74 = arith.truncf %73 : vector<2x64xf32> to vector<2x64xbf16>
      %c0_19 = arith.constant 0 : index
      %c0_20 = arith.constant 0 : index
      %c0_21 = arith.constant 0 : index
      %75 = vector.load %arg9[%c0_19, %c0_20, %c0_21] : memref<16x64x128xbf16, #tpu.memory_space<vmem>>, vector<1x64x128xbf16>
      %76 = vector.shape_cast %75 : vector<1x64x128xbf16> to vector<64x128xbf16>
      %cst_22 = arith.constant dense<0.000000e+00> : vector<2x128xf32>
      %77 = tpu.matmul %74, %76, %cst_22 {dimension_numbers = #tpu.dot_dimension_numbers<[1], [0], [0], [1], [0, 0, 1, 1], [], []>} : vector<2x64xbf16>, vector<64x128xbf16>, vector<2x128xf32> -> vector<2x128xf32>
      %78 = arith.addf %71, %77 : vector<2x128xf32>
      %79 = vector.extract_strided_slice %70 {offsets = [0, 0, 1, 0], sizes = [2, 1, 1, 64], strides = [1, 1, 1, 1]} : vector<2x4x4x64xf32> to vector<2x1x1x64xf32>
      %80 = vector.shape_cast %79 : vector<2x1x1x64xf32> to vector<2x64xf32>
      %81 = arith.truncf %80 : vector<2x64xf32> to vector<2x64xbf16>
      %c1 = arith.constant 1 : index
      %c0_23 = arith.constant 0 : index
      %c0_24 = arith.constant 0 : index
      %82 = vector.load %arg9[%c1, %c0_23, %c0_24] : memref<16x64x128xbf16, #tpu.memory_space<vmem>>, vector<1x64x128xbf16>
      %83 = vector.shape_cast %82 : vector<1x64x128xbf16> to vector<64x128xbf16>
      %cst_25 = arith.constant dense<0.000000e+00> : vector<2x128xf32>
      %84 = tpu.matmul %81, %83, %cst_25 {dimension_numbers = #tpu.dot_dimension_numbers<[1], [0], [0], [1], [0, 0, 1, 1], [], []>} : vector<2x64xbf16>, vector<64x128xbf16>, vector<2x128xf32> -> vector<2x128xf32>
      %85 = arith.addf %78, %84 : vector<2x128xf32>
      %86 = vector.extract_strided_slice %70 {offsets = [0, 0, 2, 0], sizes = [2, 1, 1, 64], strides = [1, 1, 1, 1]} : vector<2x4x4x64xf32> to vector<2x1x1x64xf32>
      %87 = vector.shape_cast %86 : vector<2x1x1x64xf32> to vector<2x64xf32>
      %88 = arith.truncf %87 : vector<2x64xf32> to vector<2x64xbf16>
      %c2 = arith.constant 2 : index
      %c0_26 = arith.constant 0 : index
      %c0_27 = arith.constant 0 : index
      %89 = vector.load %arg9[%c2, %c0_26, %c0_27] : memref<16x64x128xbf16, #tpu.memory_space<vmem>>, vector<1x64x128xbf16>
      %90 = vector.shape_cast %89 : vector<1x64x128xbf16> to vector<64x128xbf16>
      %cst_28 = arith.constant dense<0.000000e+00> : vector<2x128xf32>
      %91 = tpu.matmul %88, %90, %cst_28 {dimension_numbers = #tpu.dot_dimension_numbers<[1], [0], [0], [1], [0, 0, 1, 1], [], []>} : vector<2x64xbf16>, vector<64x128xbf16>, vector<2x128xf32> -> vector<2x128xf32>
      %92 = arith.addf %85, %91 : vector<2x128xf32>
      %93 = vector.extract_strided_slice %70 {offsets = [0, 0, 3, 0], sizes = [2, 1, 1, 64], strides = [1, 1, 1, 1]} : vector<2x4x4x64xf32> to vector<2x1x1x64xf32>
      %94 = vector.shape_cast %93 : vector<2x1x1x64xf32> to vector<2x64xf32>
      %95 = arith.truncf %94 : vector<2x64xf32> to vector<2x64xbf16>
      %c3 = arith.constant 3 : index
      %c0_29 = arith.constant 0 : index
      %c0_30 = arith.constant 0 : index
      %96 = vector.load %arg9[%c3, %c0_29, %c0_30] : memref<16x64x128xbf16, #tpu.memory_space<vmem>>, vector<1x64x128xbf16>
      %97 = vector.shape_cast %96 : vector<1x64x128xbf16> to vector<64x128xbf16>
      %cst_31 = arith.constant dense<0.000000e+00> : vector<2x128xf32>
      %98 = tpu.matmul %95, %97, %cst_31 {dimension_numbers = #tpu.dot_dimension_numbers<[1], [0], [0], [1], [0, 0, 1, 1], [], []>} : vector<2x64xbf16>, vector<64x128xbf16>, vector<2x128xf32> -> vector<2x128xf32>
      %99 = arith.addf %92, %98 : vector<2x128xf32>
      %100 = vector.extract_strided_slice %70 {offsets = [0, 1, 0, 0], sizes = [2, 1, 1, 64], strides = [1, 1, 1, 1]} : vector<2x4x4x64xf32> to vector<2x1x1x64xf32>
      %101 = vector.shape_cast %100 : vector<2x1x1x64xf32> to vector<2x64xf32>
      %102 = arith.truncf %101 : vector<2x64xf32> to vector<2x64xbf16>
      %c4 = arith.constant 4 : index
      %c0_32 = arith.constant 0 : index
      %c0_33 = arith.constant 0 : index
      %103 = vector.load %arg9[%c4, %c0_32, %c0_33] : memref<16x64x128xbf16, #tpu.memory_space<vmem>>, vector<1x64x128xbf16>
      %104 = vector.shape_cast %103 : vector<1x64x128xbf16> to vector<64x128xbf16>
      %cst_34 = arith.constant dense<0.000000e+00> : vector<2x128xf32>
      %105 = tpu.matmul %102, %104, %cst_34 {dimension_numbers = #tpu.dot_dimension_numbers<[1], [0], [0], [1], [0, 0, 1, 1], [], []>} : vector<2x64xbf16>, vector<64x128xbf16>, vector<2x128xf32> -> vector<2x128xf32>
      %106 = arith.addf %99, %105 : vector<2x128xf32>
      %107 = vector.extract_strided_slice %70 {offsets = [0, 1, 1, 0], sizes = [2, 1, 1, 64], strides = [1, 1, 1, 1]} : vector<2x4x4x64xf32> to vector<2x1x1x64xf32>
      %108 = vector.shape_cast %107 : vector<2x1x1x64xf32> to vector<2x64xf32>
      %109 = arith.truncf %108 : vector<2x64xf32> to vector<2x64xbf16>
      %c5 = arith.constant 5 : index
      %c0_35 = arith.constant 0 : index
      %c0_36 = arith.constant 0 : index
      %110 = vector.load %arg9[%c5, %c0_35, %c0_36] : memref<16x64x128xbf16, #tpu.memory_space<vmem>>, vector<1x64x128xbf16>
      %111 = vector.shape_cast %110 : vector<1x64x128xbf16> to vector<64x128xbf16>
      %cst_37 = arith.constant dense<0.000000e+00> : vector<2x128xf32>
      %112 = tpu.matmul %109, %111, %cst_37 {dimension_numbers = #tpu.dot_dimension_numbers<[1], [0], [0], [1], [0, 0, 1, 1], [], []>} : vector<2x64xbf16>, vector<64x128xbf16>, vector<2x128xf32> -> vector<2x128xf32>
      %113 = arith.addf %106, %112 : vector<2x128xf32>
      %114 = vector.extract_strided_slice %70 {offsets = [0, 1, 2, 0], sizes = [2, 1, 1, 64], strides = [1, 1, 1, 1]} : vector<2x4x4x64xf32> to vector<2x1x1x64xf32>
      %115 = vector.shape_cast %114 : vector<2x1x1x64xf32> to vector<2x64xf32>
      %116 = arith.truncf %115 : vector<2x64xf32> to vector<2x64xbf16>
      %c6 = arith.constant 6 : index
      %c0_38 = arith.constant 0 : index
      %c0_39 = arith.constant 0 : index
      %117 = vector.load %arg9[%c6, %c0_38, %c0_39] : memref<16x64x128xbf16, #tpu.memory_space<vmem>>, vector<1x64x128xbf16>
      %118 = vector.shape_cast %117 : vector<1x64x128xbf16> to vector<64x128xbf16>
      %cst_40 = arith.constant dense<0.000000e+00> : vector<2x128xf32>
      %119 = tpu.matmul %116, %118, %cst_40 {dimension_numbers = #tpu.dot_dimension_numbers<[1], [0], [0], [1], [0, 0, 1, 1], [], []>} : vector<2x64xbf16>, vector<64x128xbf16>, vector<2x128xf32> -> vector<2x128xf32>
      %120 = arith.addf %113, %119 : vector<2x128xf32>
      %121 = vector.extract_strided_slice %70 {offsets = [0, 1, 3, 0], sizes = [2, 1, 1, 64], strides = [1, 1, 1, 1]} : vector<2x4x4x64xf32> to vector<2x1x1x64xf32>
      %122 = vector.shape_cast %121 : vector<2x1x1x64xf32> to vector<2x64xf32>
      %123 = arith.truncf %122 : vector<2x64xf32> to vector<2x64xbf16>
      %c7 = arith.constant 7 : index
      %c0_41 = arith.constant 0 : index
      %c0_42 = arith.constant 0 : index
      %124 = vector.load %arg9[%c7, %c0_41, %c0_42] : memref<16x64x128xbf16, #tpu.memory_space<vmem>>, vector<1x64x128xbf16>
      %125 = vector.shape_cast %124 : vector<1x64x128xbf16> to vector<64x128xbf16>
      %cst_43 = arith.constant dense<0.000000e+00> : vector<2x128xf32>
      %126 = tpu.matmul %123, %125, %cst_43 {dimension_numbers = #tpu.dot_dimension_numbers<[1], [0], [0], [1], [0, 0, 1, 1], [], []>} : vector<2x64xbf16>, vector<64x128xbf16>, vector<2x128xf32> -> vector<2x128xf32>
      %127 = arith.addf %120, %126 : vector<2x128xf32>
      %128 = vector.extract_strided_slice %70 {offsets = [0, 2, 0, 0], sizes = [2, 1, 1, 64], strides = [1, 1, 1, 1]} : vector<2x4x4x64xf32> to vector<2x1x1x64xf32>
      %129 = vector.shape_cast %128 : vector<2x1x1x64xf32> to vector<2x64xf32>
      %130 = arith.truncf %129 : vector<2x64xf32> to vector<2x64xbf16>
      %c8 = arith.constant 8 : index
      %c0_44 = arith.constant 0 : index
      %c0_45 = arith.constant 0 : index
      %131 = vector.load %arg9[%c8, %c0_44, %c0_45] : memref<16x64x128xbf16, #tpu.memory_space<vmem>>, vector<1x64x128xbf16>
      %132 = vector.shape_cast %131 : vector<1x64x128xbf16> to vector<64x128xbf16>
      %cst_46 = arith.constant dense<0.000000e+00> : vector<2x128xf32>
      %133 = tpu.matmul %130, %132, %cst_46 {dimension_numbers = #tpu.dot_dimension_numbers<[1], [0], [0], [1], [0, 0, 1, 1], [], []>} : vector<2x64xbf16>, vector<64x128xbf16>, vector<2x128xf32> -> vector<2x128xf32>
      %134 = arith.addf %127, %133 : vector<2x128xf32>
      %135 = vector.extract_strided_slice %70 {offsets = [0, 2, 1, 0], sizes = [2, 1, 1, 64], strides = [1, 1, 1, 1]} : vector<2x4x4x64xf32> to vector<2x1x1x64xf32>
      %136 = vector.shape_cast %135 : vector<2x1x1x64xf32> to vector<2x64xf32>
      %137 = arith.truncf %136 : vector<2x64xf32> to vector<2x64xbf16>
      %c9 = arith.constant 9 : index
      %c0_47 = arith.constant 0 : index
      %c0_48 = arith.constant 0 : index
      %138 = vector.load %arg9[%c9, %c0_47, %c0_48] : memref<16x64x128xbf16, #tpu.memory_space<vmem>>, vector<1x64x128xbf16>
      %139 = vector.shape_cast %138 : vector<1x64x128xbf16> to vector<64x128xbf16>
      %cst_49 = arith.constant dense<0.000000e+00> : vector<2x128xf32>
      %140 = tpu.matmul %137, %139, %cst_49 {dimension_numbers = #tpu.dot_dimension_numbers<[1], [0], [0], [1], [0, 0, 1, 1], [], []>} : vector<2x64xbf16>, vector<64x128xbf16>, vector<2x128xf32> -> vector<2x128xf32>
      %141 = arith.addf %134, %140 : vector<2x128xf32>
      %142 = vector.extract_strided_slice %70 {offsets = [0, 2, 2, 0], sizes = [2, 1, 1, 64], strides = [1, 1, 1, 1]} : vector<2x4x4x64xf32> to vector<2x1x1x64xf32>
      %143 = vector.shape_cast %142 : vector<2x1x1x64xf32> to vector<2x64xf32>
      %144 = arith.truncf %143 : vector<2x64xf32> to vector<2x64xbf16>
      %c10 = arith.constant 10 : index
      %c0_50 = arith.constant 0 : index
      %c0_51 = arith.constant 0 : index
      %145 = vector.load %arg9[%c10, %c0_50, %c0_51] : memref<16x64x128xbf16, #tpu.memory_space<vmem>>, vector<1x64x128xbf16>
      %146 = vector.shape_cast %145 : vector<1x64x128xbf16> to vector<64x128xbf16>
      %cst_52 = arith.constant dense<0.000000e+00> : vector<2x128xf32>
      %147 = tpu.matmul %144, %146, %cst_52 {dimension_numbers = #tpu.dot_dimension_numbers<[1], [0], [0], [1], [0, 0, 1, 1], [], []>} : vector<2x64xbf16>, vector<64x128xbf16>, vector<2x128xf32> -> vector<2x128xf32>
      %148 = arith.addf %141, %147 : vector<2x128xf32>
      %149 = vector.extract_strided_slice %70 {offsets = [0, 2, 3, 0], sizes = [2, 1, 1, 64], strides = [1, 1, 1, 1]} : vector<2x4x4x64xf32> to vector<2x1x1x64xf32>
      %150 = vector.shape_cast %149 : vector<2x1x1x64xf32> to vector<2x64xf32>
      %151 = arith.truncf %150 : vector<2x64xf32> to vector<2x64xbf16>
      %c11 = arith.constant 11 : index
      %c0_53 = arith.constant 0 : index
      %c0_54 = arith.constant 0 : index
      %152 = vector.load %arg9[%c11, %c0_53, %c0_54] : memref<16x64x128xbf16, #tpu.memory_space<vmem>>, vector<1x64x128xbf16>
      %153 = vector.shape_cast %152 : vector<1x64x128xbf16> to vector<64x128xbf16>
      %cst_55 = arith.constant dense<0.000000e+00> : vector<2x128xf32>
      %154 = tpu.matmul %151, %153, %cst_55 {dimension_numbers = #tpu.dot_dimension_numbers<[1], [0], [0], [1], [0, 0, 1, 1], [], []>} : vector<2x64xbf16>, vector<64x128xbf16>, vector<2x128xf32> -> vector<2x128xf32>
      %155 = arith.addf %148, %154 : vector<2x128xf32>
      %156 = vector.extract_strided_slice %70 {offsets = [0, 3, 0, 0], sizes = [2, 1, 1, 64], strides = [1, 1, 1, 1]} : vector<2x4x4x64xf32> to vector<2x1x1x64xf32>
      %157 = vector.shape_cast %156 : vector<2x1x1x64xf32> to vector<2x64xf32>
      %158 = arith.truncf %157 : vector<2x64xf32> to vector<2x64xbf16>
      %c12 = arith.constant 12 : index
      %c0_56 = arith.constant 0 : index
      %c0_57 = arith.constant 0 : index
      %159 = vector.load %arg9[%c12, %c0_56, %c0_57] : memref<16x64x128xbf16, #tpu.memory_space<vmem>>, vector<1x64x128xbf16>
      %160 = vector.shape_cast %159 : vector<1x64x128xbf16> to vector<64x128xbf16>
      %cst_58 = arith.constant dense<0.000000e+00> : vector<2x128xf32>
      %161 = tpu.matmul %158, %160, %cst_58 {dimension_numbers = #tpu.dot_dimension_numbers<[1], [0], [0], [1], [0, 0, 1, 1], [], []>} : vector<2x64xbf16>, vector<64x128xbf16>, vector<2x128xf32> -> vector<2x128xf32>
      %162 = arith.addf %155, %161 : vector<2x128xf32>
      %163 = vector.extract_strided_slice %70 {offsets = [0, 3, 1, 0], sizes = [2, 1, 1, 64], strides = [1, 1, 1, 1]} : vector<2x4x4x64xf32> to vector<2x1x1x64xf32>
      %164 = vector.shape_cast %163 : vector<2x1x1x64xf32> to vector<2x64xf32>
      %165 = arith.truncf %164 : vector<2x64xf32> to vector<2x64xbf16>
      %c13 = arith.constant 13 : index
      %c0_59 = arith.constant 0 : index
      %c0_60 = arith.constant 0 : index
      %166 = vector.load %arg9[%c13, %c0_59, %c0_60] : memref<16x64x128xbf16, #tpu.memory_space<vmem>>, vector<1x64x128xbf16>
      %167 = vector.shape_cast %166 : vector<1x64x128xbf16> to vector<64x128xbf16>
      %cst_61 = arith.constant dense<0.000000e+00> : vector<2x128xf32>
      %168 = tpu.matmul %165, %167, %cst_61 {dimension_numbers = #tpu.dot_dimension_numbers<[1], [0], [0], [1], [0, 0, 1, 1], [], []>} : vector<2x64xbf16>, vector<64x128xbf16>, vector<2x128xf32> -> vector<2x128xf32>
      %169 = arith.addf %162, %168 : vector<2x128xf32>
      %170 = vector.extract_strided_slice %70 {offsets = [0, 3, 2, 0], sizes = [2, 1, 1, 64], strides = [1, 1, 1, 1]} : vector<2x4x4x64xf32> to vector<2x1x1x64xf32>
      %171 = vector.shape_cast %170 : vector<2x1x1x64xf32> to vector<2x64xf32>
      %172 = arith.truncf %171 : vector<2x64xf32> to vector<2x64xbf16>
      %c14 = arith.constant 14 : index
      %c0_62 = arith.constant 0 : index
      %c0_63 = arith.constant 0 : index
      %173 = vector.load %arg9[%c14, %c0_62, %c0_63] : memref<16x64x128xbf16, #tpu.memory_space<vmem>>, vector<1x64x128xbf16>
      %174 = vector.shape_cast %173 : vector<1x64x128xbf16> to vector<64x128xbf16>
      %cst_64 = arith.constant dense<0.000000e+00> : vector<2x128xf32>
      %175 = tpu.matmul %172, %174, %cst_64 {dimension_numbers = #tpu.dot_dimension_numbers<[1], [0], [0], [1], [0, 0, 1, 1], [], []>} : vector<2x64xbf16>, vector<64x128xbf16>, vector<2x128xf32> -> vector<2x128xf32>
      %176 = arith.addf %169, %175 : vector<2x128xf32>
      %177 = vector.extract_strided_slice %70 {offsets = [0, 3, 3, 0], sizes = [2, 1, 1, 64], strides = [1, 1, 1, 1]} : vector<2x4x4x64xf32> to vector<2x1x1x64xf32>
      %178 = vector.shape_cast %177 : vector<2x1x1x64xf32> to vector<2x64xf32>
      %179 = arith.truncf %178 : vector<2x64xf32> to vector<2x64xbf16>
      %c15 = arith.constant 15 : index
      %c0_65 = arith.constant 0 : index
      %c0_66 = arith.constant 0 : index
      %180 = vector.load %arg9[%c15, %c0_65, %c0_66] : memref<16x64x128xbf16, #tpu.memory_space<vmem>>, vector<1x64x128xbf16>
      %181 = vector.shape_cast %180 : vector<1x64x128xbf16> to vector<64x128xbf16>
      %cst_67 = arith.constant dense<0.000000e+00> : vector<2x128xf32>
      %182 = tpu.matmul %179, %181, %cst_67 {dimension_numbers = #tpu.dot_dimension_numbers<[1], [0], [0], [1], [0, 0, 1, 1], [], []>} : vector<2x64xbf16>, vector<64x128xbf16>, vector<2x128xf32> -> vector<2x128xf32>
      %183 = arith.addf %176, %182 : vector<2x128xf32>
      %c0_68 = arith.constant 0 : index
      %c0_69 = arith.constant 0 : index
      %184 = vector.load %arg10[%c0_68, %c0_69] : memref<1x128xf32, #tpu.memory_space<vmem>>, vector<1x128xf32>
      %185 = vector.broadcast %184 : vector<1x128xf32> to vector<2x128xf32>
      %186 = arith.addf %183, %185 : vector<2x128xf32>
      %187 = tpu.iota {dimensions = array<i32: 1>} : vector<2x128xi32>
      %cst_70 = arith.constant 2.000000e+01 : f32
      %188 = vector.broadcast %cst_70 : f32 to vector<2x128xf32>
      %189 = arith.cmpf ogt, %186, %188 : vector<2x128xf32>
      %cst_71 = arith.constant 2.000000e+01 : f32
      %190 = vector.broadcast %cst_71 : f32 to vector<2x128xf32>
      %191 = arith.minimumf %186, %190 : vector<2x128xf32>
      %192 = math.exp %191 : vector<2x128xf32>
      %193 = math.log1p %192 : vector<2x128xf32>
      %194 = arith.select %189, %186, %193 : vector<2x128xi1>, vector<2x128xf32>
      %c32_i32 = arith.constant 32 : i32
      %195 = vector.broadcast %c32_i32 : i32 to vector<2x128xi32>
      %196 = arith.cmpi sge, %187, %195 : vector<2x128xi32>
      %cst_72 = arith.constant 1.000000e-07 : f32
      %197 = vector.broadcast %cst_72 : f32 to vector<2x128xf32>
      %198 = arith.addf %194, %197 : vector<2x128xf32>
      %199 = arith.select %196, %198, %186 : vector<2x128xi1>, vector<2x128xf32>
      %c0_73 = arith.constant 0 : index
      %c0_74 = arith.constant 0 : index
      %200 = vector.load %arg11[%c0_73, %c0_74] : memref<2x128xf32, #tpu.memory_space<vmem>>, vector<2x128xf32>
      tpu.vector_store %arg11[%c0_73, %c0_74], %199 {strides = array<i32>} : memref<2x128xf32, #tpu.memory_space<vmem>>, vector<2x128xf32>,
    } else {
    }
    return
  }
  func.func @transform_0(%arg0: i32, %arg1: i32) -> (i32, i32, i32) {
    %c0_i32 = arith.constant 0 : i32
    %0 = arith.cmpi eq, %arg0, %c0_i32 : i32
    %c0_i32_0 = arith.constant 0 : i32
    %1 = arith.select %0, %arg1, %c0_i32_0 : i32
    %c0_i32_1 = arith.constant 0 : i32
    %c0_i32_2 = arith.constant 0 : i32
    %c0_i32_3 = arith.constant 0 : i32
    return %1, %c0_i32_1, %c0_i32_2 : i32, i32, i32
  }
  func.func @transform_1(%arg0: i32, %arg1: i32) -> (i32, i32) {
    %c0_i32 = arith.constant 0 : i32
    %c0_i32_0 = arith.constant 0 : i32
    %c0_i32_1 = arith.constant 0 : i32
    return %c0_i32, %c0_i32_0 : i32, i32
  }
  func.func @transform_2(%arg0: i32, %arg1: i32) -> (i32, i32) {
    %c0_i32 = arith.constant 0 : i32
    %c0_i32_0 = arith.constant 0 : i32
    %c0_i32_1 = arith.constant 0 : i32
    return %c0_i32, %c0_i32_0 : i32, i32
  }
  func.func @transform_3(%arg0: i32, %arg1: i32) -> (i32, i32) {
    %c0_i32 = arith.constant 0 : i32
    %c0_i32_0 = arith.constant 0 : i32
    %c0_i32_1 = arith.constant 0 : i32
    return %c0_i32, %c0_i32_0 : i32, i32
  }
  func.func @transform_4(%arg0: i32, %arg1: i32) -> (i32, i32, i32) {
    %c0_i32 = arith.constant 0 : i32
    %c0_i32_0 = arith.constant 0 : i32
    %c0_i32_1 = arith.constant 0 : i32
    %c0_i32_2 = arith.constant 0 : i32
    return %c0_i32, %c0_i32_0, %c0_i32_1 : i32, i32, i32
  }
  func.func @transform_5(%arg0: i32, %arg1: i32) -> (i32, i32) {
    %c0_i32 = arith.constant 0 : i32
    %c0_i32_0 = arith.constant 0 : i32
    %c0_i32_1 = arith.constant 0 : i32
    return %c0_i32, %c0_i32_0 : i32, i32
  }
  func.func @transform_6(%arg0: i32, %arg1: i32) -> (i32, i32) {
    %c0_i32 = arith.constant 0 : i32
    %c0_i32_0 = arith.constant 0 : i32
    %c0_i32_1 = arith.constant 0 : i32
    return %c0_i32, %c0_i32_0 : i32, i32
  }
  func.func @transform_7(%arg0: i32, %arg1: i32) -> (i32, i32, i32) {
    %c0_i32 = arith.constant 0 : i32
    %c0_i32_0 = arith.constant 0 : i32
    %c0_i32_1 = arith.constant 0 : i32
    %c0_i32_2 = arith.constant 0 : i32
    return %c0_i32, %c0_i32_0, %c0_i32_1 : i32, i32, i32
  }
  func.func @transform_8(%arg0: i32, %arg1: i32) -> (i32, i32) {
    %c0_i32 = arith.constant 0 : i32
    %c0_i32_0 = arith.constant 0 : i32
    %c0_i32_1 = arith.constant 0 : i32
    return %c0_i32, %c0_i32_0 : i32, i32
  }
  func.func @transform_9(%arg0: i32, %arg1: i32) -> (i32, i32) {
    %c2_i32 = arith.constant 2 : i32
    %0 = arith.cmpi eq, %arg0, %c2_i32 : i32
    %c0_i32 = arith.constant 0 : i32
    %1 = arith.select %0, %arg1, %c0_i32 : i32
    %c0_i32_0 = arith.constant 0 : i32
    %c0_i32_1 = arith.constant 0 : i32
    return %1, %c0_i32_0 : i32, i32
  }
}

</mosaic_0001>

<llo_original>
// kernel: qzd_forward.1
$region0: #{qzd_forward.1}
  #allocation0 [shape = 'u32[]', space=smem, size = 0x4, offset = 0x4, fixed_abs, tag = 'smem constant byte address 0x4 - core index']
  #allocation1 [shape = 'u32[72,128]{1,0:T(1,128)}', space=vmem, size = 0x9000, scoped, tag = 'internal scratch']
  #allocation2 [shape = 'bf16[2,24,24,32]{3,2,1,0:T(8,128)(2,1)}', space=vmem, size = 0x48000, scoped, tag = 'scratch operand']
  #allocation3 [shape = 'f32[2,8,8,64]{3,2,1,0:T(8,128)}', space=vmem, size = 0x10000, scoped, tag = 'scratch operand']
  #allocation4 [shape = 'f32[1,32]{1,0:T(1,128)}', space=vmem, size = 0x200, scoped, tag = 'scratch operand']
  #allocation5 [shape = 'f32[1,32]{1,0:T(1,128)}', space=vmem, size = 0x200, scoped, tag = 'scratch operand']
  #allocation6 [shape = 'f32[1,64]{1,0:T(1,128)}', space=vmem, size = 0x200, scoped, tag = 'scratch operand']
  #allocation7 [shape = 'f32[1,64]{1,0:T(1,128)}', space=vmem, size = 0x200, scoped, tag = 'scratch operand']
  %s0 = inlined_call_operand.vmem [shape: bf16[2,576,128], index: 0, kind: input, shape index: {}]
  %s1 = inlined_call_operand.vmem [shape: bf16[128,32], index: 1, kind: input, shape index: {}]
  %s2 = inlined_call_operand.vmem [shape: f32[1,32], index: 2, kind: input, shape index: {}]
  %s3 = inlined_call_operand.vmem [shape: f32[1,32], index: 3, kind: input, shape index: {}]
  %s4 = inlined_call_operand.vmem [shape: bf16[25,32,64], index: 4, kind: input, shape index: {}]
  %s5 = inlined_call_operand.vmem [shape: f32[1,64], index: 5, kind: input, shape index: {}]
  %s6 = inlined_call_operand.vmem [shape: f32[1,64], index: 6, kind: input, shape index: {}]
  %s7 = inlined_call_operand.vmem [shape: bf16[16,64,128], index: 7, kind: input, shape index: {}]
  %s8 = inlined_call_operand.vmem [shape: f32[1,128], index: 8, kind: input, shape index: {}]
  %s9 = inlined_call_operand.vmem [shape: f32[2,128], index: 9, kind: output, shape index: {}]
  %s10 = sld [smem:[#allocation0]]
  $region85: #{qzd_forward.1} parent=0
    _
  %s12 = ssub.s32 1, %s10
  %s13 = scalar_select 0, %s12, %s10
  loop: start=0, step=1, limit=5
  $region2: #{qzd_forward.1} parent=0 // loop_pre_header
    _
  $region3: #{qzd_forward.1} parent=0 // loop_header
    %s15 = sphi 0, %s19
    %p16 = scmp.ge.s32.totalorder %s15, 5
    %s22 = sphi 0, %s34
    %s23 = sphi 0, %s30
    %s24 = sphi 0, %s22
    %s25 = sphi 0, %s23
    %s26 = sphi 0, %s24
    %s27 = sphi 0, %s25
    %s41 = sphi 0, %s43
    %s44 = sphi 0, %s41
    %s45 = sphi 0, %s44
    %s61 = sphi 0, %s45
    %s65 = sphi 0, %s65
    %s67 = sphi 0, %s65
    %s68 = sphi 0, %s67
    %s82 = sphi 0, %s68
    %s86 = sphi 0, %s86
    %s88 = sphi 0, %s86
    %s89 = sphi 0, %s88
    %s103 = sphi 0, %s89
    %s107 = sphi 0, %s107
    %s109 = sphi 0, %s107
    %s110 = sphi 0, %s109
    %s124 = sphi 0, %s110
    %s128 = sphi 0, %s128
    %s130 = sphi 0, %s128
    %s131 = sphi 0, %s130
    %s145 = sphi 0, %s131
    %s149 = sphi 0, %s149
    %s151 = sphi 0, %s149
    %s152 = sphi 0, %s151
    %s166 = sphi 0, %s152
    %s170 = sphi 0, %s170
    %s172 = sphi 0, %s170
    %s173 = sphi 0, %s172
    %s187 = sphi 0, %s173
    %s191 = sphi 0, %s191
    %s193 = sphi 0, %s191
    %s194 = sphi 0, %s193
    %s208 = sphi 0, %s194
    %s212 = sphi 0, %s212
    %s214 = sphi 0, %s212
    %s215 = sphi 0, %s214
    %s229 = sphi 0, %s215
    %s239 = sphi 0, %s241
    %s242 = sphi 0, %s239
    %s243 = sphi 0, %s242
    %s259 = sphi 0, %s243
  $region4: #{qzd_forward.1} parent=0 // loop_header_branch
    %18 = sbr.rel (%p16) target = $region8
  $region5: #{qzd_forward.1} parent=0 // loop_body
    %s20 = ssub.s32 %s15, 1
    %s21 = ssub.s32 %s15, 2
    %s28 = sadd.s32 1, %s23
    %p29 = scmp.ge.s32.totalorder %s28, 1
    %s30 = scalar_select %p29, 0, %s28
    %s31 = sadd.s32 1, %s22
    %s32 = scalar_select %p29, %s31, %s22
    %p33 = scmp.ge.s32.totalorder %s32, 3
    %s34 = scalar_select %p33, 0, %s32
    %p35 = scmp.eq.s32.totalorder %s22, 0
    %s36 = scalar_select %p35, %s23, 0
    %p37 = scmp.eq.s32.totalorder %s34, 0
    %s38 = scalar_select %p37, %s30, 0
    %s39 = ssub.s32 %s36, %s38
    %p40 = scmp.eq.s32.totalorder %s39, 0
    %s42 = sadd.s32 %s41, 1
    %s43 = scalar_select %p40, %s41, %s42
    %p46 = pneg %p40
    %p47 = scmp.eq.s32.totalorder %s15, 2
    %p48 = por %p46, %p47
    %p49 = scmp.ne.s32.totalorder %s41, %s44
    %p50 = scmp.eq.s32.totalorder %s15, 0
    %p51 = por %p49, %p50
    %p52 = scmp.ne.s32.totalorder %s41, %s44
    %p53 = scmp.eq.s32.totalorder %s20, 2
    %p54 = por %p52, %p53
    %p55 = scmp.ne.s32.totalorder %s44, %s45
    %p56 = scmp.eq.s32.totalorder %s20, 0
    %p57 = por %p55, %p56
    %p58 = scmp.ne.s32.totalorder %s44, %s45
    %p59 = scmp.eq.s32.totalorder %s21, 2
    %p60 = por %p58, %p59
    %p62 = scmp.ne.s32.totalorder %s45, %s61
    %p63 = scmp.eq.s32.totalorder %s21, 0
    %p64 = por %p62, %p63
    %s66 = sadd.s32 %s65, 1
    %p69 = scmp.eq.s32.totalorder %s15, 2
    %p70 = scmp.ne.s32.totalorder %s65, %s67
    %p71 = scmp.eq.s32.totalorder %s15, 0
    %p72 = por %p70, %p71
    %p73 = scmp.ne.s32.totalorder %s65, %s67
    %p74 = scmp.eq.s32.totalorder %s20, 2
    %p75 = por %p73, %p74
    %p76 = scmp.ne.s32.totalorder %s67, %s68
    %p77 = scmp.eq.s32.totalorder %s20, 0
    %p78 = por %p76, %p77
    %p79 = scmp.ne.s32.totalorder %s67, %s68
    %p80 = scmp.eq.s32.totalorder %s21, 2
    %p81 = por %p79, %p80
    %p83 = scmp.ne.s32.totalorder %s68, %s82
    %p84 = scmp.eq.s32.totalorder %s21, 0
    %p85 = por %p83, %p84
    %s87 = sadd.s32 %s86, 1
    %p90 = scmp.eq.s32.totalorder %s15, 2
    %p91 = scmp.ne.s32.totalorder %s86, %s88
    %p92 = scmp.eq.s32.totalorder %s15, 0
    %p93 = por %p91, %p92
    %p94 = scmp.ne.s32.totalorder %s86, %s88
    %p95 = scmp.eq.s32.totalorder %s20, 2
    %p96 = por %p94, %p95
    %p97 = scmp.ne.s32.totalorder %s88, %s89
    %p98 = scmp.eq.s32.totalorder %s20, 0
    %p99 = por %p97, %p98
    %p100 = scmp.ne.s32.totalorder %s88, %s89
    %p101 = scmp.eq.s32.totalorder %s21, 2
    %p102 = por %p100, %p101
    %p104 = scmp.ne.s32.totalorder %s89, %s103
    %p105 = scmp.eq.s32.totalorder %s21, 0
    %p106 = por %p104, %p105
    %s108 = sadd.s32 %s107, 1
    %p111 = scmp.eq.s32.totalorder %s15, 2
    %p112 = scmp.ne.s32.totalorder %s107, %s109
    %p113 = scmp.eq.s32.totalorder %s15, 0
    %p114 = por %p112, %p113
    %p115 = scmp.ne.s32.totalorder %s107, %s109
    %p116 = scmp.eq.s32.totalorder %s20, 2
    %p117 = por %p115, %p116
    %p118 = scmp.ne.s32.totalorder %s109, %s110
    %p119 = scmp.eq.s32.totalorder %s20, 0
    %p120 = por %p118, %p119
    %p121 = scmp.ne.s32.totalorder %s109, %s110
    %p122 = scmp.eq.s32.totalorder %s21, 2
    %p123 = por %p121, %p122
    %p125 = scmp.ne.s32.totalorder %s110, %s124
    %p126 = scmp.eq.s32.totalorder %s21, 0
    %p127 = por %p125, %p126
    %s129 = sadd.s32 %s128, 1
    %p132 = scmp.eq.s32.totalorder %s15, 2
    %p133 = scmp.ne.s32.totalorder %s128, %s130
    %p134 = scmp.eq.s32.totalorder %s15, 0
    %p135 = por %p133, %p134
    %p136 = scmp.ne.s32.totalorder %s128, %s130
    %p137 = scmp.eq.s32.totalorder %s20, 2
    %p138 = por %p136, %p137
    %p139 = scmp.ne.s32.totalorder %s130, %s131
    %p140 = scmp.eq.s32.totalorder %s20, 0
    %p141 = por %p139, %p140
    %p142 = scmp.ne.s32.totalorder %s130, %s131
    %p143 = scmp.eq.s32.totalorder %s21, 2
    %p144 = por %p142, %p143
    %p146 = scmp.ne.s32.totalorder %s131, %s145
    %p147 = scmp.eq.s32.totalorder %s21, 0
    %p148 = por %p146, %p147
    %s150 = sadd.s32 %s149, 1
    %p153 = scmp.eq.s32.totalorder %s15, 2
    %p154 = scmp.ne.s32.totalorder %s149, %s151
    %p155 = scmp.eq.s32.totalorder %s15, 0
    %p156 = por %p154, %p155
    %p157 = scmp.ne.s32.totalorder %s149, %s151
    %p158 = scmp.eq.s32.totalorder %s20, 2
    %p159 = por %p157, %p158
    %p160 = scmp.ne.s32.totalorder %s151, %s152
    %p161 = scmp.eq.s32.totalorder %s20, 0
    %p162 = por %p160, %p161
    %p163 = scmp.ne.s32.totalorder %s151, %s152
    %p164 = scmp.eq.s32.totalorder %s21, 2
    %p165 = por %p163, %p164
    %p167 = scmp.ne.s32.totalorder %s152, %s166
    %p168 = scmp.eq.s32.totalorder %s21, 0
    %p169 = por %p167, %p168
    %s171 = sadd.s32 %s170, 1
    %p174 = scmp.eq.s32.totalorder %s15, 2
    %p175 = scmp.ne.s32.totalorder %s170, %s172
    %p176 = scmp.eq.s32.totalorder %s15, 0
    %p177 = por %p175, %p176
    %p178 = scmp.ne.s32.totalorder %s170, %s172
    %p179 = scmp.eq.s32.totalorder %s20, 2
    %p180 = por %p178, %p179
    %p181 = scmp.ne.s32.totalorder %s172, %s173
    %p182 = scmp.eq.s32.totalorder %s20, 0
    %p183 = por %p181, %p182
    %p184 = scmp.ne.s32.totalorder %s172, %s173
    %p185 = scmp.eq.s32.totalorder %s21, 2
    %p186 = por %p184, %p185
    %p188 = scmp.ne.s32.totalorder %s173, %s187
    %p189 = scmp.eq.s32.totalorder %s21, 0
    %p190 = por %p188, %p189
    %s192 = sadd.s32 %s191, 1
    %p195 = scmp.eq.s32.totalorder %s15, 2
    %p196 = scmp.ne.s32.totalorder %s191, %s193
    %p197 = scmp.eq.s32.totalorder %s15, 0
    %p198 = por %p196, %p197
    %p199 = scmp.ne.s32.totalorder %s191, %s193
    %p200 = scmp.eq.s32.totalorder %s20, 2
    %p201 = por %p199, %p200
    %p202 = scmp.ne.s32.totalorder %s193, %s194
    %p203 = scmp.eq.s32.totalorder %s20, 0
    %p204 = por %p202, %p203
    %p205 = scmp.ne.s32.totalorder %s193, %s194
    %p206 = scmp.eq.s32.totalorder %s21, 2
    %p207 = por %p205, %p206
    %p209 = scmp.ne.s32.totalorder %s194, %s208
    %p210 = scmp.eq.s32.totalorder %s21, 0
    %p211 = por %p209, %p210
    %s213 = sadd.s32 %s212, 1
    %p216 = scmp.eq.s32.totalorder %s15, 2
    %p217 = scmp.ne.s32.totalorder %s212, %s214
    %p218 = scmp.eq.s32.totalorder %s15, 0
    %p219 = por %p217, %p218
    %p220 = scmp.ne.s32.totalorder %s212, %s214
    %p221 = scmp.eq.s32.totalorder %s20, 2
    %p222 = por %p220, %p221
    %p223 = scmp.ne.s32.totalorder %s214, %s215
    %p224 = scmp.eq.s32.totalorder %s20, 0
    %p225 = por %p223, %p224
    %p226 = scmp.ne.s32.totalorder %s214, %s215
    %p227 = scmp.eq.s32.totalorder %s21, 2
    %p228 = por %p226, %p227
    %p230 = scmp.ne.s32.totalorder %s215, %s229
    %p231 = scmp.eq.s32.totalorder %s21, 0
    %p232 = por %p230, %p231
    %p233 = scmp.eq.s32.totalorder %s22, 2
    %s234 = scalar_select %p233, %s23, 0
    %p235 = scmp.eq.s32.totalorder %s34, 2
    %s236 = scalar_select %p235, %s30, 0
    %s237 = ssub.s32 %s234, %s236
    %p238 = scmp.eq.s32.totalorder %s237, 0
    %s240 = sadd.s32 %s239, 1
    %s241 = scalar_select %p238, %s239, %s240
    %p244 = pneg %p238
    %p245 = scmp.eq.s32.totalorder %s15, 2
    %p246 = por %p244, %p245
    %p247 = scmp.ne.s32.totalorder %s239, %s242
    %p248 = scmp.eq.s32.totalorder %s15, 0
    %p249 = por %p247, %p248
    %p250 = scmp.ne.s32.totalorder %s239, %s242
    %p251 = scmp.eq.s32.totalorder %s20, 2
    %p252 = por %p250, %p251
    %p253 = scmp.ne.s32.totalorder %s242, %s243
    %p254 = scmp.eq.s32.totalorder %s20, 0
    %p255 = por %p253, %p254
    %p256 = scmp.ne.s32.totalorder %s242, %s243
    %p257 = scmp.eq.s32.totalorder %s21, 2
    %p258 = por %p256, %p257
    %p260 = scmp.ne.s32.totalorder %s243, %s259
    %p261 = scmp.eq.s32.totalorder %s21, 0
    %p262 = por %p260, %p261
    %p263 = scmp.le.s32.totalorder 1, %s15
    %p264 = scmp.lt.s32.totalorder %s15, 4
    %p265 = pnand %p263, %p264
    %p266 = pneg %p265
    // Predicated region
    $region9: #{qzd_forward.1} parent=5 // pred_check
      _
    $region10: #{qzd_forward.1} parent=5 // pred_check_branch
      %268 = sbr.rel (%p265) target = $region12
    $region11: #{qzd_forward.1} parent=5 // pred_region
      %s269 = ssub.s32 %s15, 1
      // Predicated region
      $region13: #{qzd_forward.1} parent=11 // pred_check
        %p270 = pneg %p78
      $region14: #{qzd_forward.1} parent=11 // pred_check_branch
        %272 = sbr.rel (%p270) target = $region16
      $region15: #{qzd_forward.1} parent=11 // pred_region
        _
      $region16: #{qzd_forward.1} parent=11 // pred_fallthru
        _
      // Predicated region
      $region17: #{qzd_forward.1} parent=11 // pred_check
        %p273 = pneg %p99
      $region18: #{qzd_forward.1} parent=11 // pred_check_branch
        %275 = sbr.rel (%p273) target = $region20
      $region19: #{qzd_forward.1} parent=11 // pred_region
        _
      $region20: #{qzd_forward.1} parent=11 // pred_fallthru
        _
      // Predicated region
      $region21: #{qzd_forward.1} parent=11 // pred_check
        %p276 = pneg %p120
      $region22: #{qzd_forward.1} parent=11 // pred_check_branch
        %278 = sbr.rel (%p276) target = $region24
      $region23: #{qzd_forward.1} parent=11 // pred_region
        _
      $region24: #{qzd_forward.1} parent=11 // pred_fallthru
        _
      // Predicated region
      $region25: #{qzd_forward.1} parent=11 // pred_check
        %p279 = pneg %p141
      $region26: #{qzd_forward.1} parent=11 // pred_check_branch
        %281 = sbr.rel (%p279) target = $region28
      $region27: #{qzd_forward.1} parent=11 // pred_region
        _
      $region28: #{qzd_forward.1} parent=11 // pred_fallthru
        _
      // Predicated region
      $region29: #{qzd_forward.1} parent=11 // pred_check
        %p282 = pneg %p162
      $region30: #{qzd_forward.1} parent=11 // pred_check_branch
        %284 = sbr.rel (%p282) target = $region32
      $region31: #{qzd_forward.1} parent=11 // pred_region
        _
      $region32: #{qzd_forward.1} parent=11 // pred_fallthru
        _
      // Predicated region
      $region33: #{qzd_forward.1} parent=11 // pred_check
        %p285 = pneg %p183
      $region34: #{qzd_forward.1} parent=11 // pred_check_branch
        %287 = sbr.rel (%p285) target = $region36
      $region35: #{qzd_forward.1} parent=11 // pred_region
        _
      $region36: #{qzd_forward.1} parent=11 // pred_fallthru
        _
      // Predicated region
      $region37: #{qzd_forward.1} parent=11 // pred_check
        %p288 = pneg %p204
      $region38: #{qzd_forward.1} parent=11 // pred_check_branch
        %290 = sbr.rel (%p288) target = $region40
      $region39: #{qzd_forward.1} parent=11 // pred_region
        _
      $region40: #{qzd_forward.1} parent=11 // pred_fallthru
        _
      // Predicated region
      $region41: #{qzd_forward.1} parent=11 // pred_check
        %p291 = pneg %p225
      $region42: #{qzd_forward.1} parent=11 // pred_check_branch
        %293 = sbr.rel (%p291) target = $region44
      $region43: #{qzd_forward.1} parent=11 // pred_region
        _
      $region44: #{qzd_forward.1} parent=11 // pred_fallthru
        _
    $region12: #{qzd_forward.1} parent=5 // pred_fallthru
      _
    %p294 = scmp.lt.s32.totalorder %s15, 3
    // Predicated region
    $region45: #{qzd_forward.1} parent=5 // pred_check
      %p295 = pneg %p294
    $region46: #{qzd_forward.1} parent=5 // pred_check_branch
      %297 = sbr.rel (%p295) target = $region48
    $region47: #{qzd_forward.1} parent=5 // pred_region
      // Predicated region
      $region49: #{qzd_forward.1} parent=47 // pred_check
        %p298 = pneg %p51
      $region50: #{qzd_forward.1} parent=47 // pred_check_branch
        %300 = sbr.rel (%p298) target = $region52
      $region51: #{qzd_forward.1} parent=47 // pred_region
        %p301 = scmp.eq.s32.totalorder %s22, 0
        %s302 = scalar_select %p301, %s23, 0
        %s303 = smul.u32 2, %s302
        %p304 = scmp.lt.s32.totalorder %s303, 1
        %s305 = scalar_select %p304, %s303, 1
        %s306 = smul.addr %s305, 72
        %s307 = smul.addr %s306, 4
        %s308 = scalar_lea.vmem %s0, %s307
        %p309 = scmp.eq.s32.totalorder %s22, 0
        %s310 = scalar_select %p309, %s23, 0
        %s311 = smul.u32 2, %s310
      $region52: #{qzd_forward.1} parent=47 // pred_fallthru
        _
    $region48: #{qzd_forward.1} parent=5 // pred_fallthru
      _
    %p312 = scmp.le.s32.totalorder 1, %s15
    %p313 = scmp.lt.s32.totalorder %s15, 4
    %p314 = pnand %p312, %p313
    %p315 = pneg %p314
    // Predicated region
    $region53: #{qzd_forward.1} parent=5 // pred_check
      _
    $region54: #{qzd_forward.1} parent=5 // pred_check_branch
      %317 = sbr.rel (%p314) target = $region56
    $region55: #{qzd_forward.1} parent=5 // pred_region
      %s318 = ssub.s32 %s15, 1
      %p319 = scmp.eq.s32.totalorder %s24, 0
      %s320 = scalar_select %p319, %s25, 0
      %s321 = smul.u32 2, %s320
      %p322 = scmp.lt.s32.totalorder %s321, 1
      %s323 = scalar_select %p322, %s321, 1
      %s324 = smul.addr %s323, 72
      %s325 = smul.addr %s324, 4
      %s326 = scalar_lea.vmem %s0, %s325
      %p327 = pneg %p57
      %p328 = pneg %p54
      %p329 = pneg %p78
      %p330 = pneg %p75
      %p331 = pneg %p99
      %p332 = pneg %p96
      %p333 = pneg %p120
      %p334 = pneg %p117
      %p335 = pneg %p141
      %p336 = pneg %p138
      %p337 = pneg %p162
      %p338 = pneg %p159
      %p339 = pneg %p183
      %p340 = pneg %p180
      %p341 = pneg %p204
      %p342 = pneg %p201
      %p343 = pneg %p225
      %p344 = pneg %p222
      %p345 = pneg %p255
      %p346 = pneg %p252
      %p347 = scmp.eq.s32.totalorder %s24, 2
      %s348 = scalar_select %p347, %s25, 0
      %p349 = scmp.lt.s32.totalorder %s348, 0
      %s350 = scalar_select %p349, %s348, 0
      %s351 = smul.addr %s350, 2
      %s352 = scalar_lea.vmem %s9, %s351
      %p353 = scmp.eq.s32.totalorder %s24, 0
      %s354 = scalar_select %p353, %s25, 0
      %s355 = smul.u32 2, %s354
      %p356 = scmp.lt.s32.totalorder %s355, 1
      %s357 = scalar_select %p356, %s355, 1
      %s358 = smul.addr %s357, 72
      %s359 = smul.addr %s358, 4
      %s360 = scalar_lea.vmem %s0, %s359
      %p361 = scmp.eq.s32.totalorder %s24, 0
      %s362 = scalar_select %p361, %s25, 0
      %s363 = smul.u32 2, %s362
      %p364 = scmp.eq.s32.totalorder %s24, 2
      %s365 = scalar_select %p364, %s25, 0
      %p366 = scmp.lt.s32.totalorder %s365, 0
      %s367 = scalar_select %p366, %s365, 0
      %s368 = smul.addr %s367, 2
      %s369 = scalar_lea.vmem %s9, %s368
      %p370 = scmp.eq.s32.totalorder %s24, 2
      %s371 = scalar_select %p370, %s25, 0
      %s373 = smul.u32 %s25, 2
      %p374 = scmp.eq.s32.totalorder %s24, 0
      // Predicated region
      $region57: #{qzd_forward.1} parent=55 // pred_check
        %p375 = pneg %p374
      $region58: #{qzd_forward.1} parent=55 // pred_check_branch
        %377 = sbr.rel (%p375) target = $region60
      $region59: #{qzd_forward.1} parent=55 // pred_region
        %p378 = scmp.eq.s32.totalorder %s25, 0
        // Predicated region
        $region61: #{qzd_forward.1} parent=59 // pred_check
          %p379 = pneg %p378
        $region62: #{qzd_forward.1} parent=59 // pred_check_branch
          %381 = sbr.rel (%p379) target = $region64
        $region63: #{qzd_forward.1} parent=59 // pred_region
          %vm382 = vcmask 253952
          %383 = vst.msk [vmem:[#allocation4] sm:$0x1] %vm382, 0.0
          %384 = vst.msk [vmem:[#allocation5] sm:$0x1] %vm382, 0.0
          %vm385 = vcmask 516096
          %386 = vst.msk [vmem:[#allocation6] sm:$0x1] %vm385, 0.0
          %387 = vst.msk [vmem:[#allocation7] sm:$0x1] %vm385, 0.0
        $region64: #{qzd_forward.1} parent=59 // pred_fallthru
          _
        %v388 = vld [vmem:[%s360] sm:$0xf]
        %v389 = vld [vmem:[%s360 + $0x4] sm:$0xf]
        %v390 = vld [vmem:[%s360 + $0x8] sm:$0xf]
        %v391 = vld [vmem:[%s360 + $0xc] sm:$0xf]
        %v392 = vld [vmem:[%s360 + $0x10] sm:$0xf]
        %v393 = vld [vmem:[%s360 + $0x14] sm:$0xf]
        %v394 = vld [vmem:[%s360 + $0x18] sm:$0xf]
        %v395 = vld [vmem:[%s360 + $0x1c] sm:$0xf]
        %v396 = vld [vmem:[%s360 + $0x20] sm:$0xf]
        %v397 = vld [vmem:[%s360 + $0x24] sm:$0xf]
        %v398 = vld [vmem:[%s360 + $0x28] sm:$0xf]
        %v399 = vld [vmem:[%s360 + $0x2c] sm:$0xf]
        %v400 = vld [vmem:[%s360 + $0x30] sm:$0xf]
        %v401 = vld [vmem:[%s360 + $0x34] sm:$0xf]
        %v402 = vld [vmem:[%s360 + $0x38] sm:$0xf]
        %v403 = vld [vmem:[%s360 + $0x3c] sm:$0xf]
        %v404 = vld [vmem:[%s360 + $0x40] sm:$0xf]
        %v405 = vld [vmem:[%s360 + $0x44] sm:$0xf]
        %v406 = vld [vmem:[%s360 + $0x48] sm:$0xf]
        %v407 = vld [vmem:[%s360 + $0x4c] sm:$0xf]
        %v408 = vld [vmem:[%s360 + $0x50] sm:$0xf]
        %v409 = vld [vmem:[%s360 + $0x54] sm:$0xf]
        %v410 = vld [vmem:[%s360 + $0x58] sm:$0xf]
        %v411 = vld [vmem:[%s360 + $0x5c] sm:$0xf]
        %v412 = vld [vmem:[%s360 + $0x60] sm:$0xf]
        %v413 = vld [vmem:[%s360 + $0x64] sm:$0xf]
        %v414 = vld [vmem:[%s360 + $0x68] sm:$0xf]
        %v415 = vld [vmem:[%s360 + $0x6c] sm:$0xf]
        %v416 = vld [vmem:[%s360 + $0x70] sm:$0xf]
        %v417 = vld [vmem:[%s360 + $0x74] sm:$0xf]
        %v418 = vld [vmem:[%s360 + $0x78] sm:$0xf]
        %v419 = vld [vmem:[%s360 + $0x7c] sm:$0xf]
        %v420 = vld [vmem:[%s360 + $0x80] sm:$0xf]
        %v421 = vld [vmem:[%s360 + $0x84] sm:$0xf]
        %v422 = vld [vmem:[%s360 + $0x88] sm:$0xf]
        %v423 = vld [vmem:[%s360 + $0x8c] sm:$0xf]
        %v424 = vld [vmem:[%s360 + $0x90] sm:$0xf]
        %v425 = vld [vmem:[%s360 + $0x94] sm:$0xf]
        %v426 = vld [vmem:[%s360 + $0x98] sm:$0xf]
        %v427 = vld [vmem:[%s360 + $0x9c] sm:$0xf]
        %v428 = vld [vmem:[%s360 + $0xa0] sm:$0xf]
        %v429 = vld [vmem:[%s360 + $0xa4] sm:$0xf]
        %v430 = vld [vmem:[%s360 + $0xa8] sm:$0xf]
        %v431 = vld [vmem:[%s360 + $0xac] sm:$0xf]
        %v432 = vld [vmem:[%s360 + $0xb0] sm:$0xf]
        %v433 = vld [vmem:[%s360 + $0xb4] sm:$0xf]
        %v434 = vld [vmem:[%s360 + $0xb8] sm:$0xf]
        %v435 = vld [vmem:[%s360 + $0xbc] sm:$0xf]
        %v436 = vld [vmem:[%s360 + $0xc0] sm:$0xf]
        %v437 = vld [vmem:[%s360 + $0xc4] sm:$0xf]
        %v438 = vld [vmem:[%s360 + $0xc8] sm:$0xf]
        %v439 = vld [vmem:[%s360 + $0xcc] sm:$0xf]
        %v440 = vld [vmem:[%s360 + $0xd0] sm:$0xf]
        %v441 = vld [vmem:[%s360 + $0xd4] sm:$0xf]
        %v442 = vld [vmem:[%s360 + $0xd8] sm:$0xf]
        %v443 = vld [vmem:[%s360 + $0xdc] sm:$0xf]
        %v444 = vld [vmem:[%s360 + $0xe0] sm:$0xf]
        %v445 = vld [vmem:[%s360 + $0xe4] sm:$0xf]
        %v446 = vld [vmem:[%s360 + $0xe8] sm:$0xf]
        %v447 = vld [vmem:[%s360 + $0xec] sm:$0xf]
        %v448 = vld [vmem:[%s360 + $0xf0] sm:$0xf]
        %v449 = vld [vmem:[%s360 + $0xf4] sm:$0xf]
        %v450 = vld [vmem:[%s360 + $0xf8] sm:$0xf]
        %v451 = vld [vmem:[%s360 + $0xfc] sm:$0xf]
        %v452 = vld [vmem:[%s360 + $0x100] sm:$0xf]
        %v453 = vld [vmem:[%s360 + $0x104] sm:$0xf]
        %v454 = vld [vmem:[%s360 + $0x108] sm:$0xf]
        %v455 = vld [vmem:[%s360 + $0x10c] sm:$0xf]
        %v456 = vld [vmem:[%s360 + $0x110] sm:$0xf]
        %v457 = vld [vmem:[%s360 + $0x114] sm:$0xf]
        %v458 = vld [vmem:[%s360 + $0x118] sm:$0xf]
        %v459 = vld [vmem:[%s360 + $0x11c] sm:$0xf]
        %v460 = vld [vmem:[%s360 + $0x120] sm:$0xf]
        %v461 = vld [vmem:[%s360 + $0x124] sm:$0xf]
        %v462 = vld [vmem:[%s360 + $0x128] sm:$0xf]
        %v463 = vld [vmem:[%s360 + $0x12c] sm:$0xf]
        %v464 = vld [vmem:[%s360 + $0x130] sm:$0xf]
        %v465 = vld [vmem:[%s360 + $0x134] sm:$0xf]
        %v466 = vld [vmem:[%s360 + $0x138] sm:$0xf]
        %v467 = vld [vmem:[%s360 + $0x13c] sm:$0xf]
        %v468 = vld [vmem:[%s360 + $0x140] sm:$0xf]
        %v469 = vld [vmem:[%s360 + $0x144] sm:$0xf]
        %v470 = vld [vmem:[%s360 + $0x148] sm:$0xf]
        %v471 = vld [vmem:[%s360 + $0x14c] sm:$0xf]
        %v472 = vld [vmem:[%s360 + $0x150] sm:$0xf]
        %v473 = vld [vmem:[%s360 + $0x154] sm:$0xf]
        %v474 = vld [vmem:[%s360 + $0x158] sm:$0xf]
        %v475 = vld [vmem:[%s360 + $0x15c] sm:$0xf]
        %v476 = vld [vmem:[%s360 + $0x160] sm:$0xf]
        %v477 = vld [vmem:[%s360 + $0x164] sm:$0xf]
        %v478 = vld [vmem:[%s360 + $0x168] sm:$0xf]
        %v479 = vld [vmem:[%s360 + $0x16c] sm:$0xf]
        %v480 = vld [vmem:[%s360 + $0x170] sm:$0xf]
        %v481 = vld [vmem:[%s360 + $0x174] sm:$0xf]
        %v482 = vld [vmem:[%s360 + $0x178] sm:$0xf]
        %v483 = vld [vmem:[%s360 + $0x17c] sm:$0xf]
        %v484 = vld [vmem:[%s360 + $0x180] sm:$0xf]
        %v485 = vld [vmem:[%s360 + $0x184] sm:$0xf]
        %v486 = vld [vmem:[%s360 + $0x188] sm:$0xf]
        %v487 = vld [vmem:[%s360 + $0x18c] sm:$0xf]
        %v488 = vld [vmem:[%s360 + $0x190] sm:$0xf]
        %v489 = vld [vmem:[%s360 + $0x194] sm:$0xf]
        %v490 = vld [vmem:[%s360 + $0x198] sm:$0xf]
        %v491 = vld [vmem:[%s360 + $0x19c] sm:$0xf]
        %v492 = vld [vmem:[%s360 + $0x1a0] sm:$0xf]
        %v493 = vld [vmem:[%s360 + $0x1a4] sm:$0xf]
        %v494 = vld [vmem:[%s360 + $0x1a8] sm:$0xf]
        %v495 = vld [vmem:[%s360 + $0x1ac] sm:$0xf]
        %v496 = vld [vmem:[%s360 + $0x1b0] sm:$0xf]
        %v497 = vld [vmem:[%s360 + $0x1b4] sm:$0xf]
        %v498 = vld [vmem:[%s360 + $0x1b8] sm:$0xf]
        %v499 = vld [vmem:[%s360 + $0x1bc] sm:$0xf]
        %v500 = vld [vmem:[%s360 + $0x1c0] sm:$0xf]
        %v501 = vld [vmem:[%s360 + $0x1c4] sm:$0xf]
        %v502 = vld [vmem:[%s360 + $0x1c8] sm:$0xf]
        %v503 = vld [vmem:[%s360 + $0x1cc] sm:$0xf]
        %v504 = vld [vmem:[%s360 + $0x1d0] sm:$0xf]
        %v505 = vld [vmem:[%s360 + $0x1d4] sm:$0xf]
        %v506 = vld [vmem:[%s360 + $0x1d8] sm:$0xf]
        %v507 = vld [vmem:[%s360 + $0x1dc] sm:$0xf]
        %v508 = vld [vmem:[%s360 + $0x1e0] sm:$0xf]
        %v509 = vld [vmem:[%s360 + $0x1e4] sm:$0xf]
        %v510 = vld [vmem:[%s360 + $0x1e8] sm:$0xf]
        %v511 = vld [vmem:[%s360 + $0x1ec] sm:$0xf]
        %v512 = vld [vmem:[%s360 + $0x1f0] sm:$0xf]
        %v513 = vld [vmem:[%s360 + $0x1f4] sm:$0xf]
        %v514 = vld [vmem:[%s360 + $0x1f8] sm:$0xf]
        %v515 = vld [vmem:[%s360 + $0x1fc] sm:$0xf]
        %v516 = vld [vmem:[%s360 + $0x200] sm:$0xf]
        %v517 = vld [vmem:[%s360 + $0x204] sm:$0xf]
        %v518 = vld [vmem:[%s360 + $0x208] sm:$0xf]
        %v519 = vld [vmem:[%s360 + $0x20c] sm:$0xf]
        %v520 = vld [vmem:[%s360 + $0x210] sm:$0xf]
        %v521 = vld [vmem:[%s360 + $0x214] sm:$0xf]
        %v522 = vld [vmem:[%s360 + $0x218] sm:$0xf]
        %v523 = vld [vmem:[%s360 + $0x21c] sm:$0xf]
        %v524 = vld [vmem:[%s360 + $0x220] sm:$0xf]
        %v525 = vld [vmem:[%s360 + $0x224] sm:$0xf]
        %v526 = vld [vmem:[%s360 + $0x228] sm:$0xf]
        %v527 = vld [vmem:[%s360 + $0x22c] sm:$0xf]
        %v528 = vld [vmem:[%s360 + $0x230] sm:$0xf]
        %v529 = vld [vmem:[%s360 + $0x234] sm:$0xf]
        %v530 = vld [vmem:[%s360 + $0x238] sm:$0xf]
        %v531 = vld [vmem:[%s360 + $0x23c] sm:$0xf]
        %v532 = vld [vmem:[%s1] sm:$0xf]
        %v533 = vld [vmem:[%s1 + $0x4] sm:$0xf]
        %v534 = vld [vmem:[%s1 + $0x8] sm:$0xf]
        %v535 = vld [vmem:[%s1 + $0xc] sm:$0xf]
        %v536 = vld [vmem:[%s1 + $0x10] sm:$0xf]
        %v537 = vld [vmem:[%s1 + $0x14] sm:$0xf]
        %v538 = vld [vmem:[%s1 + $0x18] sm:$0xf]
        %v539 = vld [vmem:[%s1 + $0x1c] sm:$0xf]
        %v540 = vld [vmem:[%s1 + $0x20] sm:$0xf]
        %v541 = vld [vmem:[%s1 + $0x24] sm:$0xf]
        %v542 = vld [vmem:[%s1 + $0x28] sm:$0xf]
        %v543 = vld [vmem:[%s1 + $0x2c] sm:$0xf]
        %v544 = vld [vmem:[%s1 + $0x30] sm:$0xf]
        %v545 = vld [vmem:[%s1 + $0x34] sm:$0xf]
        %v546 = vld [vmem:[%s1 + $0x38] sm:$0xf]
        %v547 = vld [vmem:[%s1 + $0x3c] sm:$0xf]
        %v692 = vunpack.c.l.b16 %v388
        %v693 = vunpack.c.l.b16 %v389
        %v694 = vunpack.c.l.b16 %v390
        %v695 = vunpack.c.l.b16 %v391
        %v696 = vunpack.c.l.b16 %v392
        %v697 = vunpack.c.l.b16 %v393
        %v698 = vunpack.c.l.b16 %v394
        %v699 = vunpack.c.l.b16 %v395
        %v700 = vunpack.c.l.b16 %v396
        %v701 = vunpack.c.l.b16 %v397
        %v702 = vunpack.c.l.b16 %v398
        %v703 = vunpack.c.l.b16 %v399
        %v704 = vunpack.c.l.b16 %v400
        %v705 = vunpack.c.l.b16 %v401
        %v706 = vunpack.c.l.b16 %v402
        %v707 = vunpack.c.l.b16 %v403
        %v708 = vunpack.c.l.b16 %v404
        %v709 = vunpack.c.l.b16 %v405
        %v710 = vunpack.c.l.b16 %v406
        %v711 = vunpack.c.l.b16 %v407
        %v712 = vunpack.c.l.b16 %v408
        %v713 = vunpack.c.l.b16 %v409
        %v714 = vunpack.c.l.b16 %v410
        %v715 = vunpack.c.l.b16 %v411
        %v716 = vunpack.c.l.b16 %v412
        %v717 = vunpack.c.l.b16 %v413
        %v718 = vunpack.c.l.b16 %v414
        %v719 = vunpack.c.l.b16 %v415
        %v720 = vunpack.c.l.b16 %v416
        %v721 = vunpack.c.l.b16 %v417
        %v722 = vunpack.c.l.b16 %v418
        %v723 = vunpack.c.l.b16 %v419
        %v724 = vunpack.c.l.b16 %v420
        %v725 = vunpack.c.l.b16 %v421
        %v726 = vunpack.c.l.b16 %v422
        %v727 = vunpack.c.l.b16 %v423
        %v728 = vunpack.c.l.b16 %v424
        %v729 = vunpack.c.l.b16 %v425
        %v730 = vunpack.c.l.b16 %v426
        %v731 = vunpack.c.l.b16 %v427
        %v732 = vunpack.c.l.b16 %v428
        %v733 = vunpack.c.l.b16 %v429
        %v734 = vunpack.c.l.b16 %v430
        %v735 = vunpack.c.l.b16 %v431
        %v736 = vunpack.c.l.b16 %v432
        %v737 = vunpack.c.l.b16 %v433
        %v738 = vunpack.c.l.b16 %v434
        %v739 = vunpack.c.l.b16 %v435
        %v740 = vunpack.c.l.b16 %v436
        %v741 = vunpack.c.l.b16 %v437
        %v742 = vunpack.c.l.b16 %v438
        %v743 = vunpack.c.l.b16 %v439
        %v744 = vunpack.c.l.b16 %v440
        %v745 = vunpack.c.l.b16 %v441
        %v746 = vunpack.c.l.b16 %v442
        %v747 = vunpack.c.l.b16 %v443
        %v748 = vunpack.c.l.b16 %v444
        %v749 = vunpack.c.l.b16 %v445
        %v750 = vunpack.c.l.b16 %v446
        %v751 = vunpack.c.l.b16 %v447
        %v752 = vunpack.c.l.b16 %v448
        %v753 = vunpack.c.l.b16 %v449
        %v754 = vunpack.c.l.b16 %v450
        %v755 = vunpack.c.l.b16 %v451
        %v756 = vunpack.c.l.b16 %v452
        %v757 = vunpack.c.l.b16 %v453
        %v758 = vunpack.c.l.b16 %v454
        %v759 = vunpack.c.l.b16 %v455
        %v760 = vunpack.c.l.b16 %v456
        %v761 = vunpack.c.l.b16 %v457
        %v762 = vunpack.c.l.b16 %v458
        %v763 = vunpack.c.l.b16 %v459
        %v764 = vunpack.c.l.b16 %v460
        %v765 = vunpack.c.l.b16 %v461
        %v766 = vunpack.c.l.b16 %v462
        %v767 = vunpack.c.l.b16 %v463
        %v768 = vunpack.c.l.b16 %v464
        %v769 = vunpack.c.l.b16 %v465
        %v770 = vunpack.c.l.b16 %v466
        %v771 = vunpack.c.l.b16 %v467
        %v772 = vunpack.c.l.b16 %v468
        %v773 = vunpack.c.l.b16 %v469
        %v774 = vunpack.c.l.b16 %v470
        %v775 = vunpack.c.l.b16 %v471
        %v776 = vunpack.c.l.b16 %v472
        %v777 = vunpack.c.l.b16 %v473
        %v778 = vunpack.c.l.b16 %v474
        %v779 = vunpack.c.l.b16 %v475
        %v780 = vunpack.c.l.b16 %v476
        %v781 = vunpack.c.l.b16 %v477
        %v782 = vunpack.c.l.b16 %v478
        %v783 = vunpack.c.l.b16 %v479
        %v784 = vunpack.c.l.b16 %v480
        %v785 = vunpack.c.l.b16 %v481
        %v786 = vunpack.c.l.b16 %v482
        %v787 = vunpack.c.l.b16 %v483
        %v788 = vunpack.c.l.b16 %v484
        %v789 = vunpack.c.l.b16 %v485
        %v790 = vunpack.c.l.b16 %v486
        %v791 = vunpack.c.l.b16 %v487
        %v792 = vunpack.c.l.b16 %v488
        %v793 = vunpack.c.l.b16 %v489
        %v794 = vunpack.c.l.b16 %v490
        %v795 = vunpack.c.l.b16 %v491
        %v796 = vunpack.c.l.b16 %v492
        %v797 = vunpack.c.l.b16 %v493
        %v798 = vunpack.c.l.b16 %v494
        %v799 = vunpack.c.l.b16 %v495
        %v800 = vunpack.c.l.b16 %v496
        %v801 = vunpack.c.l.b16 %v497
        %v802 = vunpack.c.l.b16 %v498
        %v803 = vunpack.c.l.b16 %v499
        %v804 = vunpack.c.l.b16 %v500
        %v805 = vunpack.c.l.b16 %v501
        %v806 = vunpack.c.l.b16 %v502
        %v807 = vunpack.c.l.b16 %v503
        %v808 = vunpack.c.l.b16 %v504
        %v809 = vunpack.c.l.b16 %v505
        %v810 = vunpack.c.l.b16 %v506
        %v811 = vunpack.c.l.b16 %v507
        %v812 = vunpack.c.l.b16 %v508
        %v813 = vunpack.c.l.b16 %v509
        %v814 = vunpack.c.l.b16 %v510
        %v815 = vunpack.c.l.b16 %v511
        %v816 = vunpack.c.l.b16 %v512
        %v817 = vunpack.c.l.b16 %v513
        %v818 = vunpack.c.l.b16 %v514
        %v819 = vunpack.c.l.b16 %v515
        %v820 = vunpack.c.l.b16 %v516
        %v821 = vunpack.c.l.b16 %v517
        %v822 = vunpack.c.l.b16 %v518
        %v823 = vunpack.c.l.b16 %v519
        %v824 = vunpack.c.l.b16 %v520
        %v825 = vunpack.c.l.b16 %v521
        %v826 = vunpack.c.l.b16 %v522
        %v827 = vunpack.c.l.b16 %v523
        %v828 = vunpack.c.l.b16 %v524
        %v829 = vunpack.c.l.b16 %v525
        %v830 = vunpack.c.l.b16 %v526
        %v831 = vunpack.c.l.b16 %v527
        %v832 = vunpack.c.l.b16 %v528
        %v833 = vunpack.c.l.b16 %v529
        %v834 = vunpack.c.l.b16 %v530
        %v835 = vunpack.c.l.b16 %v531
        %v836 = vpack.c.b16 %v693, %v692
        %v837 = vpack.c.b16 %v695, %v694
        %v838 = vpack.c.b16 %v697, %v696
        %v839 = vpack.c.b16 %v699, %v698
        %v840 = vpack.c.b16 %v701, %v700
        %v841 = vpack.c.b16 %v703, %v702
        %v842 = vpack.c.b16 %v705, %v704
        %v843 = vpack.c.b16 %v707, %v706
        %v844 = vpack.c.b16 %v709, %v708
        %v845 = vpack.c.b16 %v711, %v710
        %v846 = vpack.c.b16 %v713, %v712
        %v847 = vpack.c.b16 %v715, %v714
        %v848 = vpack.c.b16 %v717, %v716
        %v849 = vpack.c.b16 %v719, %v718
        %v850 = vpack.c.b16 %v721, %v720
        %v851 = vpack.c.b16 %v723, %v722
        %v852 = vpack.c.b16 %v725, %v724
        %v853 = vpack.c.b16 %v727, %v726
        %v854 = vpack.c.b16 %v729, %v728
        %v855 = vpack.c.b16 %v731, %v730
        %v856 = vpack.c.b16 %v733, %v732
        %v857 = vpack.c.b16 %v735, %v734
        %v858 = vpack.c.b16 %v737, %v736
        %v859 = vpack.c.b16 %v739, %v738
        %v860 = vpack.c.b16 %v741, %v740
        %v861 = vpack.c.b16 %v743, %v742
        %v862 = vpack.c.b16 %v745, %v744
        %v863 = vpack.c.b16 %v747, %v746
        %v864 = vpack.c.b16 %v749, %v748
        %v865 = vpack.c.b16 %v751, %v750
        %v866 = vpack.c.b16 %v753, %v752
        %v867 = vpack.c.b16 %v755, %v754
        %v868 = vpack.c.b16 %v757, %v756
        %v869 = vpack.c.b16 %v759, %v758
        %v870 = vpack.c.b16 %v761, %v760
        %v871 = vpack.c.b16 %v763, %v762
        %v872 = vpack.c.b16 %v765, %v764
        %v873 = vpack.c.b16 %v767, %v766
        %v874 = vpack.c.b16 %v769, %v768
        %v875 = vpack.c.b16 %v771, %v770
        %v876 = vpack.c.b16 %v773, %v772
        %v877 = vpack.c.b16 %v775, %v774
        %v878 = vpack.c.b16 %v777, %v776
        %v879 = vpack.c.b16 %v779, %v778
        %v880 = vpack.c.b16 %v781, %v780
        %v881 = vpack.c.b16 %v783, %v782
        %v882 = vpack.c.b16 %v785, %v784
        %v883 = vpack.c.b16 %v787, %v786
        %v884 = vpack.c.b16 %v789, %v788
        %v885 = vpack.c.b16 %v791, %v790
        %v886 = vpack.c.b16 %v793, %v792
        %v887 = vpack.c.b16 %v795, %v794
        %v888 = vpack.c.b16 %v797, %v796
        %v889 = vpack.c.b16 %v799, %v798
        %v890 = vpack.c.b16 %v801, %v800
        %v891 = vpack.c.b16 %v803, %v802
        %v892 = vpack.c.b16 %v805, %v804
        %v893 = vpack.c.b16 %v807, %v806
        %v894 = vpack.c.b16 %v809, %v808
        %v895 = vpack.c.b16 %v811, %v810
        %v896 = vpack.c.b16 %v813, %v812
        %v897 = vpack.c.b16 %v815, %v814
        %v898 = vpack.c.b16 %v817, %v816
        %v899 = vpack.c.b16 %v819, %v818
        %v900 = vpack.c.b16 %v821, %v820
        %v901 = vpack.c.b16 %v823, %v822
        %v902 = vpack.c.b16 %v825, %v824
        %v903 = vpack.c.b16 %v827, %v826
        %v904 = vpack.c.b16 %v829, %v828
        %v905 = vpack.c.b16 %v831, %v830
        %v906 = vpack.c.b16 %v833, %v832
        %v907 = vpack.c.b16 %v835, %v834
        %v996 = vunpack.c.l.b16 %v532
        %v997 = vunpack.c.l.b16 %v533
        %v998 = vunpack.c.l.b16 %v534
        %v999 = vunpack.c.l.b16 %v535
        %v1000 = vunpack.c.l.b16 %v536
        %v1001 = vunpack.c.l.b16 %v537
        %v1002 = vunpack.c.l.b16 %v538
        %v1003 = vunpack.c.l.b16 %v539
        %v1004 = vunpack.c.l.b16 %v540
        %v1005 = vunpack.c.l.b16 %v541
        %v1006 = vunpack.c.l.b16 %v542
        %v1007 = vunpack.c.l.b16 %v543
        %v1008 = vunpack.c.l.b16 %v544
        %v1009 = vunpack.c.l.b16 %v545
        %v1010 = vunpack.c.l.b16 %v546
        %v1011 = vunpack.c.l.b16 %v547
        %v1012 = vpack.c.b16 %v997, %v996
        %v1013 = vpack.c.b16 %v999, %v998
        %v1014 = vpack.c.b16 %v1001, %v1000
        %v1015 = vpack.c.b16 %v1003, %v1002
        %v1016 = vpack.c.b16 %v1005, %v1004
        %v1017 = vpack.c.b16 %v1007, %v1006
        %v1018 = vpack.c.b16 %v1009, %v1008
        %v1019 = vpack.c.b16 %v1011, %v1010
        %1028 = vmatpush.bf16.msra.mxu0 %v1019
        %1029 = vmatpush.bf16.msra.mxu0 %v1018
        %1030 = vmatpush.bf16.msra.mxu0 %v1017
        %1031 = vmatpush.bf16.msra.mxu0 %v1016
        %1032 = vmatpush.bf16.msra.mxu0 %v1015
        %1033 = vmatpush.bf16.msra.mxu0 %v1014
        %1034 = vmatpush.bf16.msra.mxu0 %v1013
        %1035 = vmatpush.bf16.msra.mxu0 %v1012
        %1036 = vmatmul.bf16.gmra.mxu0 %v836
        %v1037 = vpop.f32.mrf.mxu0
        %v1038 = vadd.f32 0.0, %v1037
        %v1039 = vpop.f32.mrf.mxu0
        %v1040 = vadd.f32 0.0, %v1039
        %1041 = vmatmul.bf16.gmra.mxu0 %v837
        %v1042 = vpop.f32.mrf.mxu0
        %v1043 = vadd.f32 0.0, %v1042
        %v1044 = vpop.f32.mrf.mxu0
        %v1045 = vadd.f32 0.0, %v1044
        %1046 = vmatmul.bf16.gmra.mxu0 %v838
        %v1047 = vpop.f32.mrf.mxu0
        %v1048 = vadd.f32 0.0, %v1047
        %v1049 = vpop.f32.mrf.mxu0
        %v1050 = vadd.f32 0.0, %v1049
        %1051 = vmatmul.bf16.gmra.mxu0 %v839
        %v1052 = vpop.f32.mrf.mxu0
        %v1053 = vadd.f32 0.0, %v1052
        %v1054 = vpop.f32.mrf.mxu0
        %v1055 = vadd.f32 0.0, %v1054
        %1056 = vmatmul.bf16.gmra.mxu0 %v840
        %v1057 = vpop.f32.mrf.mxu0
        %v1058 = vadd.f32 0.0, %v1057
        %v1059 = vpop.f32.mrf.mxu0
        %v1060 = vadd.f32 0.0, %v1059
        %1061 = vmatmul.bf16.gmra.mxu0 %v841
        %v1062 = vpop.f32.mrf.mxu0
        %v1063 = vadd.f32 0.0, %v1062
        %v1064 = vpop.f32.mrf.mxu0
        %v1065 = vadd.f32 0.0, %v1064
        %1066 = vmatmul.bf16.gmra.mxu0 %v842
        %v1067 = vpop.f32.mrf.mxu0
        %v1068 = vadd.f32 0.0, %v1067
        %v1069 = vpop.f32.mrf.mxu0
        %v1070 = vadd.f32 0.0, %v1069
        %1071 = vmatmul.bf16.gmra.mxu0 %v843
        %v1072 = vpop.f32.mrf.mxu0
        %v1073 = vadd.f32 0.0, %v1072
        %v1074 = vpop.f32.mrf.mxu0
        %v1075 = vadd.f32 0.0, %v1074
        %1076 = vmatmul.bf16.gmra.mxu0 %v844
        %v1077 = vpop.f32.mrf.mxu0
        %v1078 = vadd.f32 0.0, %v1077
        %v1079 = vpop.f32.mrf.mxu0
        %v1080 = vadd.f32 0.0, %v1079
        %1081 = vmatmul.bf16.gmra.mxu0 %v845
        %v1082 = vpop.f32.mrf.mxu0
        %v1083 = vadd.f32 0.0, %v1082
        %v1084 = vpop.f32.mrf.mxu0
        %v1085 = vadd.f32 0.0, %v1084
        %1086 = vmatmul.bf16.gmra.mxu0 %v846
        %v1087 = vpop.f32.mrf.mxu0
        %v1088 = vadd.f32 0.0, %v1087
        %v1089 = vpop.f32.mrf.mxu0
        %v1090 = vadd.f32 0.0, %v1089
        %1091 = vmatmul.bf16.gmra.mxu0 %v847
        %v1092 = vpop.f32.mrf.mxu0
        %v1093 = vadd.f32 0.0, %v1092
        %v1094 = vpop.f32.mrf.mxu0
        %v1095 = vadd.f32 0.0, %v1094
        %1096 = vmatmul.bf16.gmra.mxu0 %v848
        %v1097 = vpop.f32.mrf.mxu0
        %v1098 = vadd.f32 0.0, %v1097
        %v1099 = vpop.f32.mrf.mxu0
        %v1100 = vadd.f32 0.0, %v1099
        %1101 = vmatmul.bf16.gmra.mxu0 %v849
        %v1102 = vpop.f32.mrf.mxu0
        %v1103 = vadd.f32 0.0, %v1102
        %v1104 = vpop.f32.mrf.mxu0
        %v1105 = vadd.f32 0.0, %v1104
        %1106 = vmatmul.bf16.gmra.mxu0 %v850
        %v1107 = vpop.f32.mrf.mxu0
        %v1108 = vadd.f32 0.0, %v1107
        %v1109 = vpop.f32.mrf.mxu0
        %v1110 = vadd.f32 0.0, %v1109
        %1111 = vmatmul.bf16.gmra.mxu0 %v851
        %v1112 = vpop.f32.mrf.mxu0
        %v1113 = vadd.f32 0.0, %v1112
        %v1114 = vpop.f32.mrf.mxu0
        %v1115 = vadd.f32 0.0, %v1114
        %1116 = vmatmul.bf16.gmra.mxu0 %v852
        %v1117 = vpop.f32.mrf.mxu0
        %v1118 = vadd.f32 0.0, %v1117
        %v1119 = vpop.f32.mrf.mxu0
        %v1120 = vadd.f32 0.0, %v1119
        %1121 = vmatmul.bf16.gmra.mxu0 %v853
        %v1122 = vpop.f32.mrf.mxu0
        %v1123 = vadd.f32 0.0, %v1122
        %v1124 = vpop.f32.mrf.mxu0
        %v1125 = vadd.f32 0.0, %v1124
        %1126 = vmatmul.bf16.gmra.mxu0 %v854
        %v1127 = vpop.f32.mrf.mxu0
        %v1128 = vadd.f32 0.0, %v1127
        %v1129 = vpop.f32.mrf.mxu0
        %v1130 = vadd.f32 0.0, %v1129
        %1131 = vmatmul.bf16.gmra.mxu0 %v855
        %v1132 = vpop.f32.mrf.mxu0
        %v1133 = vadd.f32 0.0, %v1132
        %v1134 = vpop.f32.mrf.mxu0
        %v1135 = vadd.f32 0.0, %v1134
        %1136 = vmatmul.bf16.gmra.mxu0 %v856
        %v1137 = vpop.f32.mrf.mxu0
        %v1138 = vadd.f32 0.0, %v1137
        %v1139 = vpop.f32.mrf.mxu0
        %v1140 = vadd.f32 0.0, %v1139
        %1141 = vmatmul.bf16.gmra.mxu0 %v857
        %v1142 = vpop.f32.mrf.mxu0
        %v1143 = vadd.f32 0.0, %v1142
        %v1144 = vpop.f32.mrf.mxu0
        %v1145 = vadd.f32 0.0, %v1144
        %1146 = vmatmul.bf16.gmra.mxu0 %v858
        %v1147 = vpop.f32.mrf.mxu0
        %v1148 = vadd.f32 0.0, %v1147
        %v1149 = vpop.f32.mrf.mxu0
        %v1150 = vadd.f32 0.0, %v1149
        %1151 = vmatmul.bf16.gmra.mxu0 %v859
        %v1152 = vpop.f32.mrf.mxu0
        %v1153 = vadd.f32 0.0, %v1152
        %v1154 = vpop.f32.mrf.mxu0
        %v1155 = vadd.f32 0.0, %v1154
        %1156 = vmatmul.bf16.gmra.mxu0 %v860
        %v1157 = vpop.f32.mrf.mxu0
        %v1158 = vadd.f32 0.0, %v1157
        %v1159 = vpop.f32.mrf.mxu0
        %v1160 = vadd.f32 0.0, %v1159
        %1161 = vmatmul.bf16.gmra.mxu0 %v861
        %v1162 = vpop.f32.mrf.mxu0
        %v1163 = vadd.f32 0.0, %v1162
        %v1164 = vpop.f32.mrf.mxu0
        %v1165 = vadd.f32 0.0, %v1164
        %1166 = vmatmul.bf16.gmra.mxu0 %v862
        %v1167 = vpop.f32.mrf.mxu0
        %v1168 = vadd.f32 0.0, %v1167
        %v1169 = vpop.f32.mrf.mxu0
        %v1170 = vadd.f32 0.0, %v1169
        %1171 = vmatmul.bf16.gmra.mxu0 %v863
        %v1172 = vpop.f32.mrf.mxu0
        %v1173 = vadd.f32 0.0, %v1172
        %v1174 = vpop.f32.mrf.mxu0
        %v1175 = vadd.f32 0.0, %v1174
        %1176 = vmatmul.bf16.gmra.mxu0 %v864
        %v1177 = vpop.f32.mrf.mxu0
        %v1178 = vadd.f32 0.0, %v1177
        %v1179 = vpop.f32.mrf.mxu0
        %v1180 = vadd.f32 0.0, %v1179
        %1181 = vmatmul.bf16.gmra.mxu0 %v865
        %v1182 = vpop.f32.mrf.mxu0
        %v1183 = vadd.f32 0.0, %v1182
        %v1184 = vpop.f32.mrf.mxu0
        %v1185 = vadd.f32 0.0, %v1184
        %1186 = vmatmul.bf16.gmra.mxu0 %v866
        %v1187 = vpop.f32.mrf.mxu0
        %v1188 = vadd.f32 0.0, %v1187
        %v1189 = vpop.f32.mrf.mxu0
        %v1190 = vadd.f32 0.0, %v1189
        %1191 = vmatmul.bf16.gmra.mxu0 %v867
        %v1192 = vpop.f32.mrf.mxu0
        %v1193 = vadd.f32 0.0, %v1192
        %v1194 = vpop.f32.mrf.mxu0
        %v1195 = vadd.f32 0.0, %v1194
        %1196 = vmatmul.bf16.gmra.mxu0 %v868
        %v1197 = vpop.f32.mrf.mxu0
        %v1198 = vadd.f32 0.0, %v1197
        %v1199 = vpop.f32.mrf.mxu0
        %v1200 = vadd.f32 0.0, %v1199
        %1201 = vmatmul.bf16.gmra.mxu0 %v869
        %v1202 = vpop.f32.mrf.mxu0
        %v1203 = vadd.f32 0.0, %v1202
        %v1204 = vpop.f32.mrf.mxu0
        %v1205 = vadd.f32 0.0, %v1204
        %1206 = vmatmul.bf16.gmra.mxu0 %v870
        %v1207 = vpop.f32.mrf.mxu0
        %v1208 = vadd.f32 0.0, %v1207
        %v1209 = vpop.f32.mrf.mxu0
        %v1210 = vadd.f32 0.0, %v1209
        %1211 = vmatmul.bf16.gmra.mxu0 %v871
        %v1212 = vpop.f32.mrf.mxu0
        %v1213 = vadd.f32 0.0, %v1212
        %v1214 = vpop.f32.mrf.mxu0
        %v1215 = vadd.f32 0.0, %v1214
        %1216 = vmatmul.bf16.gmra.mxu0 %v872
        %v1217 = vpop.f32.mrf.mxu0
        %v1218 = vadd.f32 0.0, %v1217
        %v1219 = vpop.f32.mrf.mxu0
        %v1220 = vadd.f32 0.0, %v1219
        %1221 = vmatmul.bf16.gmra.mxu0 %v873
        %v1222 = vpop.f32.mrf.mxu0
        %v1223 = vadd.f32 0.0, %v1222
        %v1224 = vpop.f32.mrf.mxu0
        %v1225 = vadd.f32 0.0, %v1224
        %1226 = vmatmul.bf16.gmra.mxu0 %v874
        %v1227 = vpop.f32.mrf.mxu0
        %v1228 = vadd.f32 0.0, %v1227
        %v1229 = vpop.f32.mrf.mxu0
        %v1230 = vadd.f32 0.0, %v1229
        %1231 = vmatmul.bf16.gmra.mxu0 %v875
        %v1232 = vpop.f32.mrf.mxu0
        %v1233 = vadd.f32 0.0, %v1232
        %v1234 = vpop.f32.mrf.mxu0
        %v1235 = vadd.f32 0.0, %v1234
        %1236 = vmatmul.bf16.gmra.mxu0 %v876
        %v1237 = vpop.f32.mrf.mxu0
        %v1238 = vadd.f32 0.0, %v1237
        %v1239 = vpop.f32.mrf.mxu0
        %v1240 = vadd.f32 0.0, %v1239
        %1241 = vmatmul.bf16.gmra.mxu0 %v877
        %v1242 = vpop.f32.mrf.mxu0
        %v1243 = vadd.f32 0.0, %v1242
        %v1244 = vpop.f32.mrf.mxu0
        %v1245 = vadd.f32 0.0, %v1244
        %1246 = vmatmul.bf16.gmra.mxu0 %v878
        %v1247 = vpop.f32.mrf.mxu0
        %v1248 = vadd.f32 0.0, %v1247
        %v1249 = vpop.f32.mrf.mxu0
        %v1250 = vadd.f32 0.0, %v1249
        %1251 = vmatmul.bf16.gmra.mxu0 %v879
        %v1252 = vpop.f32.mrf.mxu0
        %v1253 = vadd.f32 0.0, %v1252
        %v1254 = vpop.f32.mrf.mxu0
        %v1255 = vadd.f32 0.0, %v1254
        %1256 = vmatmul.bf16.gmra.mxu0 %v880
        %v1257 = vpop.f32.mrf.mxu0
        %v1258 = vadd.f32 0.0, %v1257
        %v1259 = vpop.f32.mrf.mxu0
        %v1260 = vadd.f32 0.0, %v1259
        %1261 = vmatmul.bf16.gmra.mxu0 %v881
        %v1262 = vpop.f32.mrf.mxu0
        %v1263 = vadd.f32 0.0, %v1262
        %v1264 = vpop.f32.mrf.mxu0
        %v1265 = vadd.f32 0.0, %v1264
        %1266 = vmatmul.bf16.gmra.mxu0 %v882
        %v1267 = vpop.f32.mrf.mxu0
        %v1268 = vadd.f32 0.0, %v1267
        %v1269 = vpop.f32.mrf.mxu0
        %v1270 = vadd.f32 0.0, %v1269
        %1271 = vmatmul.bf16.gmra.mxu0 %v883
        %v1272 = vpop.f32.mrf.mxu0
        %v1273 = vadd.f32 0.0, %v1272
        %v1274 = vpop.f32.mrf.mxu0
        %v1275 = vadd.f32 0.0, %v1274
        %1276 = vmatmul.bf16.gmra.mxu0 %v884
        %v1277 = vpop.f32.mrf.mxu0
        %v1278 = vadd.f32 0.0, %v1277
        %v1279 = vpop.f32.mrf.mxu0
        %v1280 = vadd.f32 0.0, %v1279
        %1281 = vmatmul.bf16.gmra.mxu0 %v885
        %v1282 = vpop.f32.mrf.mxu0
        %v1283 = vadd.f32 0.0, %v1282
        %v1284 = vpop.f32.mrf.mxu0
        %v1285 = vadd.f32 0.0, %v1284
        %1286 = vmatmul.bf16.gmra.mxu0 %v886
        %v1287 = vpop.f32.mrf.mxu0
        %v1288 = vadd.f32 0.0, %v1287
        %v1289 = vpop.f32.mrf.mxu0
        %v1290 = vadd.f32 0.0, %v1289
        %1291 = vmatmul.bf16.gmra.mxu0 %v887
        %v1292 = vpop.f32.mrf.mxu0
        %v1293 = vadd.f32 0.0, %v1292
        %v1294 = vpop.f32.mrf.mxu0
        %v1295 = vadd.f32 0.0, %v1294
        %1296 = vmatmul.bf16.gmra.mxu0 %v888
        %v1297 = vpop.f32.mrf.mxu0
        %v1298 = vadd.f32 0.0, %v1297
        %v1299 = vpop.f32.mrf.mxu0
        %v1300 = vadd.f32 0.0, %v1299
        %1301 = vmatmul.bf16.gmra.mxu0 %v889
        %v1302 = vpop.f32.mrf.mxu0
        %v1303 = vadd.f32 0.0, %v1302
        %v1304 = vpop.f32.mrf.mxu0
        %v1305 = vadd.f32 0.0, %v1304
        %1306 = vmatmul.bf16.gmra.mxu0 %v890
        %v1307 = vpop.f32.mrf.mxu0
        %v1308 = vadd.f32 0.0, %v1307
        %v1309 = vpop.f32.mrf.mxu0
        %v1310 = vadd.f32 0.0, %v1309
        %1311 = vmatmul.bf16.gmra.mxu0 %v891
        %v1312 = vpop.f32.mrf.mxu0
        %v1313 = vadd.f32 0.0, %v1312
        %v1314 = vpop.f32.mrf.mxu0
        %v1315 = vadd.f32 0.0, %v1314
        %1316 = vmatmul.bf16.gmra.mxu0 %v892
        %v1317 = vpop.f32.mrf.mxu0
        %v1318 = vadd.f32 0.0, %v1317
        %v1319 = vpop.f32.mrf.mxu0
        %v1320 = vadd.f32 0.0, %v1319
        %1321 = vmatmul.bf16.gmra.mxu0 %v893
        %v1322 = vpop.f32.mrf.mxu0
        %v1323 = vadd.f32 0.0, %v1322
        %v1324 = vpop.f32.mrf.mxu0
        %v1325 = vadd.f32 0.0, %v1324
        %1326 = vmatmul.bf16.gmra.mxu0 %v894
        %v1327 = vpop.f32.mrf.mxu0
        %v1328 = vadd.f32 0.0, %v1327
        %v1329 = vpop.f32.mrf.mxu0
        %v1330 = vadd.f32 0.0, %v1329
        %1331 = vmatmul.bf16.gmra.mxu0 %v895
        %v1332 = vpop.f32.mrf.mxu0
        %v1333 = vadd.f32 0.0, %v1332
        %v1334 = vpop.f32.mrf.mxu0
        %v1335 = vadd.f32 0.0, %v1334
        %1336 = vmatmul.bf16.gmra.mxu0 %v896
        %v1337 = vpop.f32.mrf.mxu0
        %v1338 = vadd.f32 0.0, %v1337
        %v1339 = vpop.f32.mrf.mxu0
        %v1340 = vadd.f32 0.0, %v1339
        %1341 = vmatmul.bf16.gmra.mxu0 %v897
        %v1342 = vpop.f32.mrf.mxu0
        %v1343 = vadd.f32 0.0, %v1342
        %v1344 = vpop.f32.mrf.mxu0
        %v1345 = vadd.f32 0.0, %v1344
        %1346 = vmatmul.bf16.gmra.mxu0 %v898
        %v1347 = vpop.f32.mrf.mxu0
        %v1348 = vadd.f32 0.0, %v1347
        %v1349 = vpop.f32.mrf.mxu0
        %v1350 = vadd.f32 0.0, %v1349
        %1351 = vmatmul.bf16.gmra.mxu0 %v899
        %v1352 = vpop.f32.mrf.mxu0
        %v1353 = vadd.f32 0.0, %v1352
        %v1354 = vpop.f32.mrf.mxu0
        %v1355 = vadd.f32 0.0, %v1354
        %1356 = vmatmul.bf16.gmra.mxu0 %v900
        %v1357 = vpop.f32.mrf.mxu0
        %v1358 = vadd.f32 0.0, %v1357
        %v1359 = vpop.f32.mrf.mxu0
        %v1360 = vadd.f32 0.0, %v1359
        %1361 = vmatmul.bf16.gmra.mxu0 %v901
        %v1362 = vpop.f32.mrf.mxu0
        %v1363 = vadd.f32 0.0, %v1362
        %v1364 = vpop.f32.mrf.mxu0
        %v1365 = vadd.f32 0.0, %v1364
        %1366 = vmatmul.bf16.gmra.mxu0 %v902
        %v1367 = vpop.f32.mrf.mxu0
        %v1368 = vadd.f32 0.0, %v1367
        %v1369 = vpop.f32.mrf.mxu0
        %v1370 = vadd.f32 0.0, %v1369
        %1371 = vmatmul.bf16.gmra.mxu0 %v903
        %v1372 = vpop.f32.mrf.mxu0
        %v1373 = vadd.f32 0.0, %v1372
        %v1374 = vpop.f32.mrf.mxu0
        %v1375 = vadd.f32 0.0, %v1374
        %1376 = vmatmul.bf16.gmra.mxu0 %v904
        %v1377 = vpop.f32.mrf.mxu0
        %v1378 = vadd.f32 0.0, %v1377
        %v1379 = vpop.f32.mrf.mxu0
        %v1380 = vadd.f32 0.0, %v1379
        %1381 = vmatmul.bf16.gmra.mxu0 %v905
        %v1382 = vpop.f32.mrf.mxu0
        %v1383 = vadd.f32 0.0, %v1382
        %v1384 = vpop.f32.mrf.mxu0
        %v1385 = vadd.f32 0.0, %v1384
        %1386 = vmatmul.bf16.gmra.mxu0 %v906
        %v1387 = vpop.f32.mrf.mxu0
        %v1388 = vadd.f32 0.0, %v1387
        %v1389 = vpop.f32.mrf.mxu0
        %v1390 = vadd.f32 0.0, %v1389
        %1391 = vmatmul.bf16.gmra.mxu0 %v907
        %v1392 = vpop.f32.mrf.mxu0
        %v1393 = vadd.f32 0.0, %v1392
        %v1394 = vpop.f32.mrf.mxu0
        %v1395 = vadd.f32 0.0, %v1394
        %1396 = vdwg.mxu0
        %v1397 = vld [vmem:[#allocation4] sm:$0x1]
        %vm1398 = vcmask 261120
        %v1399 = vsel %vm1398, %v1038, 0.0
        %v1400 = vsel %vm1398, %v1040, 0.0
        %v1401 = vadd.f32 %v1399, %v1400
        %v1402 = vsel %vm1398, %v1043, 0.0
        %v1403 = vadd.f32 %v1401, %v1402
        %v1404 = vsel %vm1398, %v1045, 0.0
        %v1405 = vadd.f32 %v1403, %v1404
        %v1406 = vsel %vm1398, %v1048, 0.0
        %v1407 = vadd.f32 %v1405, %v1406
        %v1408 = vsel %vm1398, %v1050, 0.0
        %v1409 = vadd.f32 %v1407, %v1408
        %v1410 = vsel %vm1398, %v1053, 0.0
        %v1411 = vadd.f32 %v1409, %v1410
        %v1412 = vsel %vm1398, %v1055, 0.0
        %v1413 = vadd.f32 %v1411, %v1412
        %v1414 = vsel %vm1398, %v1058, 0.0
        %v1415 = vadd.f32 %v1413, %v1414
        %v1416 = vsel %vm1398, %v1060, 0.0
        %v1417 = vadd.f32 %v1415, %v1416
        %v1418 = vsel %vm1398, %v1063, 0.0
        %v1419 = vadd.f32 %v1417, %v1418
        %v1420 = vsel %vm1398, %v1065, 0.0
        %v1421 = vadd.f32 %v1419, %v1420
        %v1422 = vsel %vm1398, %v1068, 0.0
        %v1423 = vadd.f32 %v1421, %v1422
        %v1424 = vsel %vm1398, %v1070, 0.0
        %v1425 = vadd.f32 %v1423, %v1424
        %v1426 = vsel %vm1398, %v1073, 0.0
        %v1427 = vadd.f32 %v1425, %v1426
        %v1428 = vsel %vm1398, %v1075, 0.0
        %v1429 = vadd.f32 %v1427, %v1428
        %v1430 = vsel %vm1398, %v1078, 0.0
        %v1431 = vadd.f32 %v1429, %v1430
        %v1432 = vsel %vm1398, %v1080, 0.0
        %v1433 = vadd.f32 %v1431, %v1432
        %v1434 = vsel %vm1398, %v1083, 0.0
        %v1435 = vadd.f32 %v1433, %v1434
        %v1436 = vsel %vm1398, %v1085, 0.0
        %v1437 = vadd.f32 %v1435, %v1436
        %v1438 = vsel %vm1398, %v1088, 0.0
        %v1439 = vadd.f32 %v1437, %v1438
        %v1440 = vsel %vm1398, %v1090, 0.0
        %v1441 = vadd.f32 %v1439, %v1440
        %v1442 = vsel %vm1398, %v1093, 0.0
        %v1443 = vadd.f32 %v1441, %v1442
        %v1444 = vsel %vm1398, %v1095, 0.0
        %v1445 = vadd.f32 %v1443, %v1444
        %v1446 = vsel %vm1398, %v1098, 0.0
        %v1447 = vadd.f32 %v1445, %v1446
        %v1448 = vsel %vm1398, %v1100, 0.0
        %v1449 = vadd.f32 %v1447, %v1448
        %v1450 = vsel %vm1398, %v1103, 0.0
        %v1451 = vadd.f32 %v1449, %v1450
        %v1452 = vsel %vm1398, %v1105, 0.0
        %v1453 = vadd.f32 %v1451, %v1452
        %v1454 = vsel %vm1398, %v1108, 0.0
        %v1455 = vadd.f32 %v1453, %v1454
        %v1456 = vsel %vm1398, %v1110, 0.0
        %v1457 = vadd.f32 %v1455, %v1456
        %v1458 = vsel %vm1398, %v1113, 0.0
        %v1459 = vadd.f32 %v1457, %v1458
        %v1460 = vsel %vm1398, %v1115, 0.0
        %v1461 = vadd.f32 %v1459, %v1460
        %v1462 = vsel %vm1398, %v1118, 0.0
        %v1463 = vadd.f32 %v1461, %v1462
        %v1464 = vsel %vm1398, %v1120, 0.0
        %v1465 = vadd.f32 %v1463, %v1464
        %v1466 = vsel %vm1398, %v1123, 0.0
        %v1467 = vadd.f32 %v1465, %v1466
        %v1468 = vsel %vm1398, %v1125, 0.0
        %v1469 = vadd.f32 %v1467, %v1468
        %v1470 = vsel %vm1398, %v1128, 0.0
        %v1471 = vadd.f32 %v1469, %v1470
        %v1472 = vsel %vm1398, %v1130, 0.0
        %v1473 = vadd.f32 %v1471, %v1472
        %v1474 = vsel %vm1398, %v1133, 0.0
        %v1475 = vadd.f32 %v1473, %v1474
        %v1476 = vsel %vm1398, %v1135, 0.0
        %v1477 = vadd.f32 %v1475, %v1476
        %v1478 = vsel %vm1398, %v1138, 0.0
        %v1479 = vadd.f32 %v1477, %v1478
        %v1480 = vsel %vm1398, %v1140, 0.0
        %v1481 = vadd.f32 %v1479, %v1480
        %v1482 = vsel %vm1398, %v1143, 0.0
        %v1483 = vadd.f32 %v1481, %v1482
        %v1484 = vsel %vm1398, %v1145, 0.0
        %v1485 = vadd.f32 %v1483, %v1484
        %v1486 = vsel %vm1398, %v1148, 0.0
        %v1487 = vadd.f32 %v1485, %v1486
        %v1488 = vsel %vm1398, %v1150, 0.0
        %v1489 = vadd.f32 %v1487, %v1488
        %v1490 = vsel %vm1398, %v1153, 0.0
        %v1491 = vadd.f32 %v1489, %v1490
        %v1492 = vsel %vm1398, %v1155, 0.0
        %v1493 = vadd.f32 %v1491, %v1492
        %v1494 = vsel %vm1398, %v1158, 0.0
        %v1495 = vadd.f32 %v1493, %v1494
        %v1496 = vsel %vm1398, %v1160, 0.0
        %v1497 = vadd.f32 %v1495, %v1496
        %v1498 = vsel %vm1398, %v1163, 0.0
        %v1499 = vadd.f32 %v1497, %v1498
        %v1500 = vsel %vm1398, %v1165, 0.0
        %v1501 = vadd.f32 %v1499, %v1500
        %v1502 = vsel %vm1398, %v1168, 0.0
        %v1503 = vadd.f32 %v1501, %v1502
        %v1504 = vsel %vm1398, %v1170, 0.0
        %v1505 = vadd.f32 %v1503, %v1504
        %v1506 = vsel %vm1398, %v1173, 0.0
        %v1507 = vadd.f32 %v1505, %v1506
        %v1508 = vsel %vm1398, %v1175, 0.0
        %v1509 = vadd.f32 %v1507, %v1508
        %v1510 = vsel %vm1398, %v1178, 0.0
        %v1511 = vadd.f32 %v1509, %v1510
        %v1512 = vsel %vm1398, %v1180, 0.0
        %v1513 = vadd.f32 %v1511, %v1512
        %v1514 = vsel %vm1398, %v1183, 0.0
        %v1515 = vadd.f32 %v1513, %v1514
        %v1516 = vsel %vm1398, %v1185, 0.0
        %v1517 = vadd.f32 %v1515, %v1516
        %v1518 = vsel %vm1398, %v1188, 0.0
        %v1519 = vadd.f32 %v1517, %v1518
        %v1520 = vsel %vm1398, %v1190, 0.0
        %v1521 = vadd.f32 %v1519, %v1520
        %v1522 = vsel %vm1398, %v1193, 0.0
        %v1523 = vadd.f32 %v1521, %v1522
        %v1524 = vsel %vm1398, %v1195, 0.0
        %v1525 = vadd.f32 %v1523, %v1524
        %v1526 = vsel %vm1398, %v1198, 0.0
        %v1527 = vadd.f32 %v1525, %v1526
        %v1528 = vsel %vm1398, %v1200, 0.0
        %v1529 = vadd.f32 %v1527, %v1528
        %v1530 = vsel %vm1398, %v1203, 0.0
        %v1531 = vadd.f32 %v1529, %v1530
        %v1532 = vsel %vm1398, %v1205, 0.0
        %v1533 = vadd.f32 %v1531, %v1532
        %v1534 = vsel %vm1398, %v1208, 0.0
        %v1535 = vadd.f32 %v1533, %v1534
        %v1536 = vsel %vm1398, %v1210, 0.0
        %v1537 = vadd.f32 %v1535, %v1536
        %v1538 = vsel %vm1398, %v1213, 0.0
        %v1539 = vadd.f32 %v1537, %v1538
        %v1540 = vsel %vm1398, %v1215, 0.0
        %v1541 = vadd.f32 %v1539, %v1540
        %v1542 = vsel %vm1398, %v1218, 0.0
        %v1543 = vadd.f32 %v1541, %v1542
        %v1544 = vsel %vm1398, %v1220, 0.0
        %v1545 = vadd.f32 %v1543, %v1544
        %v1546 = vsel %vm1398, %v1223, 0.0
        %v1547 = vadd.f32 %v1545, %v1546
        %v1548 = vsel %vm1398, %v1225, 0.0
        %v1549 = vadd.f32 %v1547, %v1548
        %v1550 = vsel %vm1398, %v1228, 0.0
        %v1551 = vadd.f32 %v1549, %v1550
        %v1552 = vsel %vm1398, %v1230, 0.0
        %v1553 = vadd.f32 %v1551, %v1552
        %v1554 = vsel %vm1398, %v1233, 0.0
        %v1555 = vadd.f32 %v1553, %v1554
        %v1556 = vsel %vm1398, %v1235, 0.0
        %v1557 = vadd.f32 %v1555, %v1556
        %v1558 = vsel %vm1398, %v1238, 0.0
        %v1559 = vadd.f32 %v1557, %v1558
        %v1560 = vsel %vm1398, %v1240, 0.0
        %v1561 = vadd.f32 %v1559, %v1560
        %v1562 = vsel %vm1398, %v1243, 0.0
        %v1563 = vadd.f32 %v1561, %v1562
        %v1564 = vsel %vm1398, %v1245, 0.0
        %v1565 = vadd.f32 %v1563, %v1564
        %v1566 = vsel %vm1398, %v1248, 0.0
        %v1567 = vadd.f32 %v1565, %v1566
        %v1568 = vsel %vm1398, %v1250, 0.0
        %v1569 = vadd.f32 %v1567, %v1568
        %v1570 = vsel %vm1398, %v1253, 0.0
        %v1571 = vadd.f32 %v1569, %v1570
        %v1572 = vsel %vm1398, %v1255, 0.0
        %v1573 = vadd.f32 %v1571, %v1572
        %v1574 = vsel %vm1398, %v1258, 0.0
        %v1575 = vadd.f32 %v1573, %v1574
        %v1576 = vsel %vm1398, %v1260, 0.0
        %v1577 = vadd.f32 %v1575, %v1576
        %v1578 = vsel %vm1398, %v1263, 0.0
        %v1579 = vadd.f32 %v1577, %v1578
        %v1580 = vsel %vm1398, %v1265, 0.0
        %v1581 = vadd.f32 %v1579, %v1580
        %v1582 = vsel %vm1398, %v1268, 0.0
        %v1583 = vadd.f32 %v1581, %v1582
        %v1584 = vsel %vm1398, %v1270, 0.0
        %v1585 = vadd.f32 %v1583, %v1584
        %v1586 = vsel %vm1398, %v1273, 0.0
        %v1587 = vadd.f32 %v1585, %v1586
        %v1588 = vsel %vm1398, %v1275, 0.0
        %v1589 = vadd.f32 %v1587, %v1588
        %v1590 = vsel %vm1398, %v1278, 0.0
        %v1591 = vadd.f32 %v1589, %v1590
        %v1592 = vsel %vm1398, %v1280, 0.0
        %v1593 = vadd.f32 %v1591, %v1592
        %v1594 = vsel %vm1398, %v1283, 0.0
        %v1595 = vadd.f32 %v1593, %v1594
        %v1596 = vsel %vm1398, %v1285, 0.0
        %v1597 = vadd.f32 %v1595, %v1596
        %v1598 = vsel %vm1398, %v1288, 0.0
        %v1599 = vadd.f32 %v1597, %v1598
        %v1600 = vsel %vm1398, %v1290, 0.0
        %v1601 = vadd.f32 %v1599, %v1600
        %v1602 = vsel %vm1398, %v1293, 0.0
        %v1603 = vadd.f32 %v1601, %v1602
        %v1604 = vsel %vm1398, %v1295, 0.0
        %v1605 = vadd.f32 %v1603, %v1604
        %v1606 = vsel %vm1398, %v1298, 0.0
        %v1607 = vadd.f32 %v1605, %v1606
        %v1608 = vsel %vm1398, %v1300, 0.0
        %v1609 = vadd.f32 %v1607, %v1608
        %v1610 = vsel %vm1398, %v1303, 0.0
        %v1611 = vadd.f32 %v1609, %v1610
        %v1612 = vsel %vm1398, %v1305, 0.0
        %v1613 = vadd.f32 %v1611, %v1612
        %v1614 = vsel %vm1398, %v1308, 0.0
        %v1615 = vadd.f32 %v1613, %v1614
        %v1616 = vsel %vm1398, %v1310, 0.0
        %v1617 = vadd.f32 %v1615, %v1616
        %v1618 = vsel %vm1398, %v1313, 0.0
        %v1619 = vadd.f32 %v1617, %v1618
        %v1620 = vsel %vm1398, %v1315, 0.0
        %v1621 = vadd.f32 %v1619, %v1620
        %v1622 = vsel %vm1398, %v1318, 0.0
        %v1623 = vadd.f32 %v1621, %v1622
        %v1624 = vsel %vm1398, %v1320, 0.0
        %v1625 = vadd.f32 %v1623, %v1624
        %v1626 = vsel %vm1398, %v1323, 0.0
        %v1627 = vadd.f32 %v1625, %v1626
        %v1628 = vsel %vm1398, %v1325, 0.0
        %v1629 = vadd.f32 %v1627, %v1628
        %v1630 = vsel %vm1398, %v1328, 0.0
        %v1631 = vadd.f32 %v1629, %v1630
        %v1632 = vsel %vm1398, %v1330, 0.0
        %v1633 = vadd.f32 %v1631, %v1632
        %v1634 = vsel %vm1398, %v1333, 0.0
        %v1635 = vadd.f32 %v1633, %v1634
        %v1636 = vsel %vm1398, %v1335, 0.0
        %v1637 = vadd.f32 %v1635, %v1636
        %v1638 = vsel %vm1398, %v1338, 0.0
        %v1639 = vadd.f32 %v1637, %v1638
        %v1640 = vsel %vm1398, %v1340, 0.0
        %v1641 = vadd.f32 %v1639, %v1640
        %v1642 = vsel %vm1398, %v1343, 0.0
        %v1643 = vadd.f32 %v1641, %v1642
        %v1644 = vsel %vm1398, %v1345, 0.0
        %v1645 = vadd.f32 %v1643, %v1644
        %v1646 = vsel %vm1398, %v1348, 0.0
        %v1647 = vadd.f32 %v1645, %v1646
        %v1648 = vsel %vm1398, %v1350, 0.0
        %v1649 = vadd.f32 %v1647, %v1648
        %v1650 = vsel %vm1398, %v1353, 0.0
        %v1651 = vadd.f32 %v1649, %v1650
        %v1652 = vsel %vm1398, %v1355, 0.0
        %v1653 = vadd.f32 %v1651, %v1652
        %v1654 = vsel %vm1398, %v1358, 0.0
        %v1655 = vadd.f32 %v1653, %v1654
        %v1656 = vsel %vm1398, %v1360, 0.0
        %v1657 = vadd.f32 %v1655, %v1656
        %v1658 = vsel %vm1398, %v1363, 0.0
        %v1659 = vadd.f32 %v1657, %v1658
        %v1660 = vsel %vm1398, %v1365, 0.0
        %v1661 = vadd.f32 %v1659, %v1660
        %v1662 = vsel %vm1398, %v1368, 0.0
        %v1663 = vadd.f32 %v1661, %v1662
        %v1664 = vsel %vm1398, %v1370, 0.0
        %v1665 = vadd.f32 %v1663, %v1664
        %v1666 = vsel %vm1398, %v1373, 0.0
        %v1667 = vadd.f32 %v1665, %v1666
        %v1668 = vsel %vm1398, %v1375, 0.0
        %v1669 = vadd.f32 %v1667, %v1668
        %v1670 = vsel %vm1398, %v1378, 0.0
        %v1671 = vadd.f32 %v1669, %v1670
        %v1672 = vsel %vm1398, %v1380, 0.0
        %v1673 = vadd.f32 %v1671, %v1672
        %v1674 = vsel %vm1398, %v1383, 0.0
        %v1675 = vadd.f32 %v1673, %v1674
        %v1676 = vsel %vm1398, %v1385, 0.0
        %v1677 = vadd.f32 %v1675, %v1676
        %v1678 = vsel %vm1398, %v1388, 0.0
        %v1679 = vadd.f32 %v1677, %v1678
        %v1680 = vsel %vm1398, %v1390, 0.0
        %v1681 = vadd.f32 %v1679, %v1680
        %v1682 = vsel %vm1398, %v1393, 0.0
        %v1683 = vadd.f32 %v1681, %v1682
        %v1684 = vsel %vm1398, %v1395, 0.0
        %v1685 = vadd.f32 %v1683, %v1684
        %v1686 = vrot.slane %v1685, 4
        %v1687 = vadd.f32 %v1685, %v1686
        %v1688 = vrot.slane %v1687, 2
        %v1689 = vadd.f32 %v1687, %v1688
        %v1690 = vrot.slane %v1689, 1
        %v1691 = vadd.f32 %v1689, %v1690
        %v1692 = vadd.f32 %v1397, %v1691
        %vm1693 = vcmask 253952
        %1694 = vst.msk [vmem:[#allocation4] sm:$0x1] %vm1693, %v1692
        %v1695 = vld [vmem:[#allocation5] sm:$0x1]
        %v1696 = vmul.f32 %v1038, %v1038
        %v1697 = vmul.f32 %v1040, %v1040
        %v1698 = vmul.f32 %v1043, %v1043
        %v1699 = vmul.f32 %v1045, %v1045
        %v1700 = vmul.f32 %v1048, %v1048
        %v1701 = vmul.f32 %v1050, %v1050
        %v1702 = vmul.f32 %v1053, %v1053
        %v1703 = vmul.f32 %v1055, %v1055
        %v1704 = vmul.f32 %v1058, %v1058
        %v1705 = vmul.f32 %v1060, %v1060
        %v1706 = vmul.f32 %v1063, %v1063
        %v1707 = vmul.f32 %v1065, %v1065
        %v1708 = vmul.f32 %v1068, %v1068
        %v1709 = vmul.f32 %v1070, %v1070
        %v1710 = vmul.f32 %v1073, %v1073
        %v1711 = vmul.f32 %v1075, %v1075
        %v1712 = vmul.f32 %v1078, %v1078
        %v1713 = vmul.f32 %v1080, %v1080
        %v1714 = vmul.f32 %v1083, %v1083
        %v1715 = vmul.f32 %v1085, %v1085
        %v1716 = vmul.f32 %v1088, %v1088
        %v1717 = vmul.f32 %v1090, %v1090
        %v1718 = vmul.f32 %v1093, %v1093
        %v1719 = vmul.f32 %v1095, %v1095
        %v1720 = vmul.f32 %v1098, %v1098
        %v1721 = vmul.f32 %v1100, %v1100
        %v1722 = vmul.f32 %v1103, %v1103
        %v1723 = vmul.f32 %v1105, %v1105
        %v1724 = vmul.f32 %v1108, %v1108
        %v1725 = vmul.f32 %v1110, %v1110
        %v1726 = vmul.f32 %v1113, %v1113
        %v1727 = vmul.f32 %v1115, %v1115
        %v1728 = vmul.f32 %v1118, %v1118
        %v1729 = vmul.f32 %v1120, %v1120
        %v1730 = vmul.f32 %v1123, %v1123
        %v1731 = vmul.f32 %v1125, %v1125
        %v1732 = vmul.f32 %v1128, %v1128
        %v1733 = vmul.f32 %v1130, %v1130
        %v1734 = vmul.f32 %v1133, %v1133
        %v1735 = vmul.f32 %v1135, %v1135
        %v1736 = vmul.f32 %v1138, %v1138
        %v1737 = vmul.f32 %v1140, %v1140
        %v1738 = vmul.f32 %v1143, %v1143
        %v1739 = vmul.f32 %v1145, %v1145
        %v1740 = vmul.f32 %v1148, %v1148
        %v1741 = vmul.f32 %v1150, %v1150
        %v1742 = vmul.f32 %v1153, %v1153
        %v1743 = vmul.f32 %v1155, %v1155
        %v1744 = vmul.f32 %v1158, %v1158
        %v1745 = vmul.f32 %v1160, %v1160
        %v1746 = vmul.f32 %v1163, %v1163
        %v1747 = vmul.f32 %v1165, %v1165
        %v1748 = vmul.f32 %v1168, %v1168
        %v1749 = vmul.f32 %v1170, %v1170
        %v1750 = vmul.f32 %v1173, %v1173
        %v1751 = vmul.f32 %v1175, %v1175
        %v1752 = vmul.f32 %v1178, %v1178
        %v1753 = vmul.f32 %v1180, %v1180
        %v1754 = vmul.f32 %v1183, %v1183
        %v1755 = vmul.f32 %v1185, %v1185
        %v1756 = vmul.f32 %v1188, %v1188
        %v1757 = vmul.f32 %v1190, %v1190
        %v1758 = vmul.f32 %v1193, %v1193
        %v1759 = vmul.f32 %v1195, %v1195
        %v1760 = vmul.f32 %v1198, %v1198
        %v1761 = vmul.f32 %v1200, %v1200
        %v1762 = vmul.f32 %v1203, %v1203
        %v1763 = vmul.f32 %v1205, %v1205
        %v1764 = vmul.f32 %v1208, %v1208
        %v1765 = vmul.f32 %v1210, %v1210
        %v1766 = vmul.f32 %v1213, %v1213
        %v1767 = vmul.f32 %v1215, %v1215
        %v1768 = vmul.f32 %v1218, %v1218
        %v1769 = vmul.f32 %v1220, %v1220
        %v1770 = vmul.f32 %v1223, %v1223
        %v1771 = vmul.f32 %v1225, %v1225
        %v1772 = vmul.f32 %v1228, %v1228
        %v1773 = vmul.f32 %v1230, %v1230
        %v1774 = vmul.f32 %v1233, %v1233
        %v1775 = vmul.f32 %v1235, %v1235
        %v1776 = vmul.f32 %v1238, %v1238
        %v1777 = vmul.f32 %v1240, %v1240
        %v1778 = vmul.f32 %v1243, %v1243
        %v1779 = vmul.f32 %v1245, %v1245
        %v1780 = vmul.f32 %v1248, %v1248
        %v1781 = vmul.f32 %v1250, %v1250
        %v1782 = vmul.f32 %v1253, %v1253
        %v1783 = vmul.f32 %v1255, %v1255
        %v1784 = vmul.f32 %v1258, %v1258
        %v1785 = vmul.f32 %v1260, %v1260
        %v1786 = vmul.f32 %v1263, %v1263
        %v1787 = vmul.f32 %v1265, %v1265
        %v1788 = vmul.f32 %v1268, %v1268
        %v1789 = vmul.f32 %v1270, %v1270
        %v1790 = vmul.f32 %v1273, %v1273
        %v1791 = vmul.f32 %v1275, %v1275
        %v1792 = vmul.f32 %v1278, %v1278
        %v1793 = vmul.f32 %v1280, %v1280
        %v1794 = vmul.f32 %v1283, %v1283
        %v1795 = vmul.f32 %v1285, %v1285
        %v1796 = vmul.f32 %v1288, %v1288
        %v1797 = vmul.f32 %v1290, %v1290
        %v1798 = vmul.f32 %v1293, %v1293
        %v1799 = vmul.f32 %v1295, %v1295
        %v1800 = vmul.f32 %v1298, %v1298
        %v1801 = vmul.f32 %v1300, %v1300
        %v1802 = vmul.f32 %v1303, %v1303
        %v1803 = vmul.f32 %v1305, %v1305
        %v1804 = vmul.f32 %v1308, %v1308
        %v1805 = vmul.f32 %v1310, %v1310
        %v1806 = vmul.f32 %v1313, %v1313
        %v1807 = vmul.f32 %v1315, %v1315
        %v1808 = vmul.f32 %v1318, %v1318
        %v1809 = vmul.f32 %v1320, %v1320
        %v1810 = vmul.f32 %v1323, %v1323
        %v1811 = vmul.f32 %v1325, %v1325
        %v1812 = vmul.f32 %v1328, %v1328
        %v1813 = vmul.f32 %v1330, %v1330
        %v1814 = vmul.f32 %v1333, %v1333
        %v1815 = vmul.f32 %v1335, %v1335
        %v1816 = vmul.f32 %v1338, %v1338
        %v1817 = vmul.f32 %v1340, %v1340
        %v1818 = vmul.f32 %v1343, %v1343
        %v1819 = vmul.f32 %v1345, %v1345
        %v1820 = vmul.f32 %v1348, %v1348
        %v1821 = vmul.f32 %v1350, %v1350
        %v1822 = vmul.f32 %v1353, %v1353
        %v1823 = vmul.f32 %v1355, %v1355
        %v1824 = vmul.f32 %v1358, %v1358
        %v1825 = vmul.f32 %v1360, %v1360
        %v1826 = vmul.f32 %v1363, %v1363
        %v1827 = vmul.f32 %v1365, %v1365
        %v1828 = vmul.f32 %v1368, %v1368
        %v1829 = vmul.f32 %v1370, %v1370
        %v1830 = vmul.f32 %v1373, %v1373
        %v1831 = vmul.f32 %v1375, %v1375
        %v1832 = vmul.f32 %v1378, %v1378
        %v1833 = vmul.f32 %v1380, %v1380
        %v1834 = vmul.f32 %v1383, %v1383
        %v1835 = vmul.f32 %v1385, %v1385
        %v1836 = vmul.f32 %v1388, %v1388
        %v1837 = vmul.f32 %v1390, %v1390
        %v1838 = vmul.f32 %v1393, %v1393
        %v1839 = vmul.f32 %v1395, %v1395
        %v1840 = vsel %vm1398, %v1696, 0.0
        %v1841 = vsel %vm1398, %v1697, 0.0
        %v1842 = vadd.f32 %v1840, %v1841
        %v1843 = vsel %vm1398, %v1698, 0.0
        %v1844 = vadd.f32 %v1842, %v1843
        %v1845 = vsel %vm1398, %v1699, 0.0
        %v1846 = vadd.f32 %v1844, %v1845
        %v1847 = vsel %vm1398, %v1700, 0.0
        %v1848 = vadd.f32 %v1846, %v1847
        %v1849 = vsel %vm1398, %v1701, 0.0
        %v1850 = vadd.f32 %v1848, %v1849
        %v1851 = vsel %vm1398, %v1702, 0.0
        %v1852 = vadd.f32 %v1850, %v1851
        %v1853 = vsel %vm1398, %v1703, 0.0
        %v1854 = vadd.f32 %v1852, %v1853
        %v1855 = vsel %vm1398, %v1704, 0.0
        %v1856 = vadd.f32 %v1854, %v1855
        %v1857 = vsel %vm1398, %v1705, 0.0
        %v1858 = vadd.f32 %v1856, %v1857
        %v1859 = vsel %vm1398, %v1706, 0.0
        %v1860 = vadd.f32 %v1858, %v1859
        %v1861 = vsel %vm1398, %v1707, 0.0
        %v1862 = vadd.f32 %v1860, %v1861
        %v1863 = vsel %vm1398, %v1708, 0.0
        %v1864 = vadd.f32 %v1862, %v1863
        %v1865 = vsel %vm1398, %v1709, 0.0
        %v1866 = vadd.f32 %v1864, %v1865
        %v1867 = vsel %vm1398, %v1710, 0.0
        %v1868 = vadd.f32 %v1866, %v1867
        %v1869 = vsel %vm1398, %v1711, 0.0
        %v1870 = vadd.f32 %v1868, %v1869
        %v1871 = vsel %vm1398, %v1712, 0.0
        %v1872 = vadd.f32 %v1870, %v1871
        %v1873 = vsel %vm1398, %v1713, 0.0
        %v1874 = vadd.f32 %v1872, %v1873
        %v1875 = vsel %vm1398, %v1714, 0.0
        %v1876 = vadd.f32 %v1874, %v1875
        %v1877 = vsel %vm1398, %v1715, 0.0
        %v1878 = vadd.f32 %v1876, %v1877
        %v1879 = vsel %vm1398, %v1716, 0.0
        %v1880 = vadd.f32 %v1878, %v1879
        %v1881 = vsel %vm1398, %v1717, 0.0
        %v1882 = vadd.f32 %v1880, %v1881
        %v1883 = vsel %vm1398, %v1718, 0.0
        %v1884 = vadd.f32 %v1882, %v1883
        %v1885 = vsel %vm1398, %v1719, 0.0
        %v1886 = vadd.f32 %v1884, %v1885
        %v1887 = vsel %vm1398, %v1720, 0.0
        %v1888 = vadd.f32 %v1886, %v1887
        %v1889 = vsel %vm1398, %v1721, 0.0
        %v1890 = vadd.f32 %v1888, %v1889
        %v1891 = vsel %vm1398, %v1722, 0.0
        %v1892 = vadd.f32 %v1890, %v1891
        %v1893 = vsel %vm1398, %v1723, 0.0
        %v1894 = vadd.f32 %v1892, %v1893
        %v1895 = vsel %vm1398, %v1724, 0.0
        %v1896 = vadd.f32 %v1894, %v1895
        %v1897 = vsel %vm1398, %v1725, 0.0
        %v1898 = vadd.f32 %v1896, %v1897
        %v1899 = vsel %vm1398, %v1726, 0.0
        %v1900 = vadd.f32 %v1898, %v1899
        %v1901 = vsel %vm1398, %v1727, 0.0
        %v1902 = vadd.f32 %v1900, %v1901
        %v1903 = vsel %vm1398, %v1728, 0.0
        %v1904 = vadd.f32 %v1902, %v1903
        %v1905 = vsel %vm1398, %v1729, 0.0
        %v1906 = vadd.f32 %v1904, %v1905
        %v1907 = vsel %vm1398, %v1730, 0.0
        %v1908 = vadd.f32 %v1906, %v1907
        %v1909 = vsel %vm1398, %v1731, 0.0
        %v1910 = vadd.f32 %v1908, %v1909
        %v1911 = vsel %vm1398, %v1732, 0.0
        %v1912 = vadd.f32 %v1910, %v1911
        %v1913 = vsel %vm1398, %v1733, 0.0
        %v1914 = vadd.f32 %v1912, %v1913
        %v1915 = vsel %vm1398, %v1734, 0.0
        %v1916 = vadd.f32 %v1914, %v1915
        %v1917 = vsel %vm1398, %v1735, 0.0
        %v1918 = vadd.f32 %v1916, %v1917
        %v1919 = vsel %vm1398, %v1736, 0.0
        %v1920 = vadd.f32 %v1918, %v1919
        %v1921 = vsel %vm1398, %v1737, 0.0
        %v1922 = vadd.f32 %v1920, %v1921
        %v1923 = vsel %vm1398, %v1738, 0.0
        %v1924 = vadd.f32 %v1922, %v1923
        %v1925 = vsel %vm1398, %v1739, 0.0
        %v1926 = vadd.f32 %v1924, %v1925
        %v1927 = vsel %vm1398, %v1740, 0.0
        %v1928 = vadd.f32 %v1926, %v1927
        %v1929 = vsel %vm1398, %v1741, 0.0
        %v1930 = vadd.f32 %v1928, %v1929
        %v1931 = vsel %vm1398, %v1742, 0.0
        %v1932 = vadd.f32 %v1930, %v1931
        %v1933 = vsel %vm1398, %v1743, 0.0
        %v1934 = vadd.f32 %v1932, %v1933
        %v1935 = vsel %vm1398, %v1744, 0.0
        %v1936 = vadd.f32 %v1934, %v1935
        %v1937 = vsel %vm1398, %v1745, 0.0
        %v1938 = vadd.f32 %v1936, %v1937
        %v1939 = vsel %vm1398, %v1746, 0.0
        %v1940 = vadd.f32 %v1938, %v1939
        %v1941 = vsel %vm1398, %v1747, 0.0
        %v1942 = vadd.f32 %v1940, %v1941
        %v1943 = vsel %vm1398, %v1748, 0.0
        %v1944 = vadd.f32 %v1942, %v1943
        %v1945 = vsel %vm1398, %v1749, 0.0
        %v1946 = vadd.f32 %v1944, %v1945
        %v1947 = vsel %vm1398, %v1750, 0.0
        %v1948 = vadd.f32 %v1946, %v1947
        %v1949 = vsel %vm1398, %v1751, 0.0
        %v1950 = vadd.f32 %v1948, %v1949
        %v1951 = vsel %vm1398, %v1752, 0.0
        %v1952 = vadd.f32 %v1950, %v1951
        %v1953 = vsel %vm1398, %v1753, 0.0
        %v1954 = vadd.f32 %v1952, %v1953
        %v1955 = vsel %vm1398, %v1754, 0.0
        %v1956 = vadd.f32 %v1954, %v1955
        %v1957 = vsel %vm1398, %v1755, 0.0
        %v1958 = vadd.f32 %v1956, %v1957
        %v1959 = vsel %vm1398, %v1756, 0.0
        %v1960 = vadd.f32 %v1958, %v1959
        %v1961 = vsel %vm1398, %v1757, 0.0
        %v1962 = vadd.f32 %v1960, %v1961
        %v1963 = vsel %vm1398, %v1758, 0.0
        %v1964 = vadd.f32 %v1962, %v1963
        %v1965 = vsel %vm1398, %v1759, 0.0
        %v1966 = vadd.f32 %v1964, %v1965
        %v1967 = vsel %vm1398, %v1760, 0.0
        %v1968 = vadd.f32 %v1966, %v1967
        %v1969 = vsel %vm1398, %v1761, 0.0
        %v1970 = vadd.f32 %v1968, %v1969
        %v1971 = vsel %vm1398, %v1762, 0.0
        %v1972 = vadd.f32 %v1970, %v1971
        %v1973 = vsel %vm1398, %v1763, 0.0
        %v1974 = vadd.f32 %v1972, %v1973
        %v1975 = vsel %vm1398, %v1764, 0.0
        %v1976 = vadd.f32 %v1974, %v1975
        %v1977 = vsel %vm1398, %v1765, 0.0
        %v1978 = vadd.f32 %v1976, %v1977
        %v1979 = vsel %vm1398, %v1766, 0.0
        %v1980 = vadd.f32 %v1978, %v1979
        %v1981 = vsel %vm1398, %v1767, 0.0
        %v1982 = vadd.f32 %v1980, %v1981
        %v1983 = vsel %vm1398, %v1768, 0.0
        %v1984 = vadd.f32 %v1982, %v1983
        %v1985 = vsel %vm1398, %v1769, 0.0
        %v1986 = vadd.f32 %v1984, %v1985
        %v1987 = vsel %vm1398, %v1770, 0.0
        %v1988 = vadd.f32 %v1986, %v1987
        %v1989 = vsel %vm1398, %v1771, 0.0
        %v1990 = vadd.f32 %v1988, %v1989
        %v1991 = vsel %vm1398, %v1772, 0.0
        %v1992 = vadd.f32 %v1990, %v1991
        %v1993 = vsel %vm1398, %v1773, 0.0
        %v1994 = vadd.f32 %v1992, %v1993
        %v1995 = vsel %vm1398, %v1774, 0.0
        %v1996 = vadd.f32 %v1994, %v1995
        %v1997 = vsel %vm1398, %v1775, 0.0
        %v1998 = vadd.f32 %v1996, %v1997
        %v1999 = vsel %vm1398, %v1776, 0.0
        %v2000 = vadd.f32 %v1998, %v1999
        %v2001 = vsel %vm1398, %v1777, 0.0
        %v2002 = vadd.f32 %v2000, %v2001
        %v2003 = vsel %vm1398, %v1778, 0.0
        %v2004 = vadd.f32 %v2002, %v2003
        %v2005 = vsel %vm1398, %v1779, 0.0
        %v2006 = vadd.f32 %v2004, %v2005
        %v2007 = vsel %vm1398, %v1780, 0.0
        %v2008 = vadd.f32 %v2006, %v2007
        %v2009 = vsel %vm1398, %v1781, 0.0
        %v2010 = vadd.f32 %v2008, %v2009
        %v2011 = vsel %vm1398, %v1782, 0.0
        %v2012 = vadd.f32 %v2010, %v2011
        %v2013 = vsel %vm1398, %v1783, 0.0
        %v2014 = vadd.f32 %v2012, %v2013
        %v2015 = vsel %vm1398, %v1784, 0.0
        %v2016 = vadd.f32 %v2014, %v2015
        %v2017 = vsel %vm1398, %v1785, 0.0
        %v2018 = vadd.f32 %v2016, %v2017
        %v2019 = vsel %vm1398, %v1786, 0.0
        %v2020 = vadd.f32 %v2018, %v2019
        %v2021 = vsel %vm1398, %v1787, 0.0
        %v2022 = vadd.f32 %v2020, %v2021
        %v2023 = vsel %vm1398, %v1788, 0.0
        %v2024 = vadd.f32 %v2022, %v2023
        %v2025 = vsel %vm1398, %v1789, 0.0
        %v2026 = vadd.f32 %v2024, %v2025
        %v2027 = vsel %vm1398, %v1790, 0.0
        %v2028 = vadd.f32 %v2026, %v2027
        %v2029 = vsel %vm1398, %v1791, 0.0
        %v2030 = vadd.f32 %v2028, %v2029
        %v2031 = vsel %vm1398, %v1792, 0.0
        %v2032 = vadd.f32 %v2030, %v2031
        %v2033 = vsel %vm1398, %v1793, 0.0
        %v2034 = vadd.f32 %v2032, %v2033
        %v2035 = vsel %vm1398, %v1794, 0.0
        %v2036 = vadd.f32 %v2034, %v2035
        %v2037 = vsel %vm1398, %v1795, 0.0
        %v2038 = vadd.f32 %v2036, %v2037
        %v2039 = vsel %vm1398, %v1796, 0.0
        %v2040 = vadd.f32 %v2038, %v2039
        %v2041 = vsel %vm1398, %v1797, 0.0
        %v2042 = vadd.f32 %v2040, %v2041
        %v2043 = vsel %vm1398, %v1798, 0.0
        %v2044 = vadd.f32 %v2042, %v2043
        %v2045 = vsel %vm1398, %v1799, 0.0
        %v2046 = vadd.f32 %v2044, %v2045
        %v2047 = vsel %vm1398, %v1800, 0.0
        %v2048 = vadd.f32 %v2046, %v2047
        %v2049 = vsel %vm1398, %v1801, 0.0
        %v2050 = vadd.f32 %v2048, %v2049
        %v2051 = vsel %vm1398, %v1802, 0.0
        %v2052 = vadd.f32 %v2050, %v2051
        %v2053 = vsel %vm1398, %v1803, 0.0
        %v2054 = vadd.f32 %v2052, %v2053
        %v2055 = vsel %vm1398, %v1804, 0.0
        %v2056 = vadd.f32 %v2054, %v2055
        %v2057 = vsel %vm1398, %v1805, 0.0
        %v2058 = vadd.f32 %v2056, %v2057
        %v2059 = vsel %vm1398, %v1806, 0.0
        %v2060 = vadd.f32 %v2058, %v2059
        %v2061 = vsel %vm1398, %v1807, 0.0
        %v2062 = vadd.f32 %v2060, %v2061
        %v2063 = vsel %vm1398, %v1808, 0.0
        %v2064 = vadd.f32 %v2062, %v2063
        %v2065 = vsel %vm1398, %v1809, 0.0
        %v2066 = vadd.f32 %v2064, %v2065
        %v2067 = vsel %vm1398, %v1810, 0.0
        %v2068 = vadd.f32 %v2066, %v2067
        %v2069 = vsel %vm1398, %v1811, 0.0
        %v2070 = vadd.f32 %v2068, %v2069
        %v2071 = vsel %vm1398, %v1812, 0.0
        %v2072 = vadd.f32 %v2070, %v2071
        %v2073 = vsel %vm1398, %v1813, 0.0
        %v2074 = vadd.f32 %v2072, %v2073
        %v2075 = vsel %vm1398, %v1814, 0.0
        %v2076 = vadd.f32 %v2074, %v2075
        %v2077 = vsel %vm1398, %v1815, 0.0
        %v2078 = vadd.f32 %v2076, %v2077
        %v2079 = vsel %vm1398, %v1816, 0.0
        %v2080 = vadd.f32 %v2078, %v2079
        %v2081 = vsel %vm1398, %v1817, 0.0
        %v2082 = vadd.f32 %v2080, %v2081
        %v2083 = vsel %vm1398, %v1818, 0.0
        %v2084 = vadd.f32 %v2082, %v2083
        %v2085 = vsel %vm1398, %v1819, 0.0
        %v2086 = vadd.f32 %v2084, %v2085
        %v2087 = vsel %vm1398, %v1820, 0.0
        %v2088 = vadd.f32 %v2086, %v2087
        %v2089 = vsel %vm1398, %v1821, 0.0
        %v2090 = vadd.f32 %v2088, %v2089
        %v2091 = vsel %vm1398, %v1822, 0.0
        %v2092 = vadd.f32 %v2090, %v2091
        %v2093 = vsel %vm1398, %v1823, 0.0
        %v2094 = vadd.f32 %v2092, %v2093
        %v2095 = vsel %vm1398, %v1824, 0.0
        %v2096 = vadd.f32 %v2094, %v2095
        %v2097 = vsel %vm1398, %v1825, 0.0
        %v2098 = vadd.f32 %v2096, %v2097
        %v2099 = vsel %vm1398, %v1826, 0.0
        %v2100 = vadd.f32 %v2098, %v2099
        %v2101 = vsel %vm1398, %v1827, 0.0
        %v2102 = vadd.f32 %v2100, %v2101
        %v2103 = vsel %vm1398, %v1828, 0.0
        %v2104 = vadd.f32 %v2102, %v2103
        %v2105 = vsel %vm1398, %v1829, 0.0
        %v2106 = vadd.f32 %v2104, %v2105
        %v2107 = vsel %vm1398, %v1830, 0.0
        %v2108 = vadd.f32 %v2106, %v2107
        %v2109 = vsel %vm1398, %v1831, 0.0
        %v2110 = vadd.f32 %v2108, %v2109
        %v2111 = vsel %vm1398, %v1832, 0.0
        %v2112 = vadd.f32 %v2110, %v2111
        %v2113 = vsel %vm1398, %v1833, 0.0
        %v2114 = vadd.f32 %v2112, %v2113
        %v2115 = vsel %vm1398, %v1834, 0.0
        %v2116 = vadd.f32 %v2114, %v2115
        %v2117 = vsel %vm1398, %v1835, 0.0
        %v2118 = vadd.f32 %v2116, %v2117
        %v2119 = vsel %vm1398, %v1836, 0.0
        %v2120 = vadd.f32 %v2118, %v2119
        %v2121 = vsel %vm1398, %v1837, 0.0
        %v2122 = vadd.f32 %v2120, %v2121
        %v2123 = vsel %vm1398, %v1838, 0.0
        %v2124 = vadd.f32 %v2122, %v2123
        %v2125 = vsel %vm1398, %v1839, 0.0
        %v2126 = vadd.f32 %v2124, %v2125
        %v2127 = vrot.slane %v2126, 4
        %v2128 = vadd.f32 %v2126, %v2127
        %v2129 = vrot.slane %v2128, 2
        %v2130 = vadd.f32 %v2128, %v2129
        %v2131 = vrot.slane %v2130, 1
        %v2132 = vadd.f32 %v2130, %v2131
        %v2133 = vadd.f32 %v1695, %v2132
        %2134 = vst.msk [vmem:[#allocation5] sm:$0x1] %vm1693, %v2133
        %v2135 = vpack.c.bf16 %v1038, %v1038
        %v2136 = vpack.c.bf16 %v1040, %v1040
        %v2137 = vpack.c.bf16 %v1043, %v1043
        %v2138 = vpack.c.bf16 %v1045, %v1045
        %v2139 = vpack.c.bf16 %v1048, %v1048
        %v2140 = vpack.c.bf16 %v1050, %v1050
        %v2141 = vpack.c.bf16 %v1053, %v1053
        %v2142 = vpack.c.bf16 %v1055, %v1055
        %v2143 = vpack.c.bf16 %v1058, %v1058
        %v2144 = vpack.c.bf16 %v1060, %v1060
        %v2145 = vpack.c.bf16 %v1063, %v1063
        %v2146 = vpack.c.bf16 %v1065, %v1065
        %v2147 = vpack.c.bf16 %v1068, %v1068
        %v2148 = vpack.c.bf16 %v1070, %v1070
        %v2149 = vpack.c.bf16 %v1073, %v1073
        %v2150 = vpack.c.bf16 %v1075, %v1075
        %v2151 = vpack.c.bf16 %v1078, %v1078
        %v2152 = vpack.c.bf16 %v1080, %v1080
        %v2153 = vpack.c.bf16 %v1083, %v1083
        %v2154 = vpack.c.bf16 %v1085, %v1085
        %v2155 = vpack.c.bf16 %v1088, %v1088
        %v2156 = vpack.c.bf16 %v1090, %v1090
        %v2157 = vpack.c.bf16 %v1093, %v1093
        %v2158 = vpack.c.bf16 %v1095, %v1095
        %v2159 = vpack.c.bf16 %v1098, %v1098
        %v2160 = vpack.c.bf16 %v1100, %v1100
        %v2161 = vpack.c.bf16 %v1103, %v1103
        %v2162 = vpack.c.bf16 %v1105, %v1105
        %v2163 = vpack.c.bf16 %v1108, %v1108
        %v2164 = vpack.c.bf16 %v1110, %v1110
        %v2165 = vpack.c.bf16 %v1113, %v1113
        %v2166 = vpack.c.bf16 %v1115, %v1115
        %v2167 = vpack.c.bf16 %v1118, %v1118
        %v2168 = vpack.c.bf16 %v1120, %v1120
        %v2169 = vpack.c.bf16 %v1123, %v1123
        %v2170 = vpack.c.bf16 %v1125, %v1125
        %v2171 = vpack.c.bf16 %v1128, %v1128
        %v2172 = vpack.c.bf16 %v1130, %v1130
        %v2173 = vpack.c.bf16 %v1133, %v1133
        %v2174 = vpack.c.bf16 %v1135, %v1135
        %v2175 = vpack.c.bf16 %v1138, %v1138
        %v2176 = vpack.c.bf16 %v1140, %v1140
        %v2177 = vpack.c.bf16 %v1143, %v1143
        %v2178 = vpack.c.bf16 %v1145, %v1145
        %v2179 = vpack.c.bf16 %v1148, %v1148
        %v2180 = vpack.c.bf16 %v1150, %v1150
        %v2181 = vpack.c.bf16 %v1153, %v1153
        %v2182 = vpack.c.bf16 %v1155, %v1155
        %v2183 = vpack.c.bf16 %v1158, %v1158
        %v2184 = vpack.c.bf16 %v1160, %v1160
        %v2185 = vpack.c.bf16 %v1163, %v1163
        %v2186 = vpack.c.bf16 %v1165, %v1165
        %v2187 = vpack.c.bf16 %v1168, %v1168
        %v2188 = vpack.c.bf16 %v1170, %v1170
        %v2189 = vpack.c.bf16 %v1173, %v1173
        %v2190 = vpack.c.bf16 %v1175, %v1175
        %v2191 = vpack.c.bf16 %v1178, %v1178
        %v2192 = vpack.c.bf16 %v1180, %v1180
        %v2193 = vpack.c.bf16 %v1183, %v1183
        %v2194 = vpack.c.bf16 %v1185, %v1185
        %v2195 = vpack.c.bf16 %v1188, %v1188
        %v2196 = vpack.c.bf16 %v1190, %v1190
        %v2197 = vpack.c.bf16 %v1193, %v1193
        %v2198 = vpack.c.bf16 %v1195, %v1195
        %v2199 = vpack.c.bf16 %v1198, %v1198
        %v2200 = vpack.c.bf16 %v1200, %v1200
        %v2201 = vpack.c.bf16 %v1203, %v1203
        %v2202 = vpack.c.bf16 %v1205, %v1205
        %v2203 = vpack.c.bf16 %v1208, %v1208
        %v2204 = vpack.c.bf16 %v1210, %v1210
        %v2205 = vpack.c.bf16 %v1213, %v1213
        %v2206 = vpack.c.bf16 %v1215, %v1215
        %v2207 = vpack.c.bf16 %v1218, %v1218
        %v2208 = vpack.c.bf16 %v1220, %v1220
        %v2209 = vpack.c.bf16 %v1223, %v1223
        %v2210 = vpack.c.bf16 %v1225, %v1225
        %v2211 = vpack.c.bf16 %v1228, %v1228
        %v2212 = vpack.c.bf16 %v1230, %v1230
        %v2213 = vpack.c.bf16 %v1233, %v1233
        %v2214 = vpack.c.bf16 %v1235, %v1235
        %v2215 = vpack.c.bf16 %v1238, %v1238
        %v2216 = vpack.c.bf16 %v1240, %v1240
        %v2217 = vpack.c.bf16 %v1243, %v1243
        %v2218 = vpack.c.bf16 %v1245, %v1245
        %v2219 = vpack.c.bf16 %v1248, %v1248
        %v2220 = vpack.c.bf16 %v1250, %v1250
        %v2221 = vpack.c.bf16 %v1253, %v1253
        %v2222 = vpack.c.bf16 %v1255, %v1255
        %v2223 = vpack.c.bf16 %v1258, %v1258
        %v2224 = vpack.c.bf16 %v1260, %v1260
        %v2225 = vpack.c.bf16 %v1263, %v1263
        %v2226 = vpack.c.bf16 %v1265, %v1265
        %v2227 = vpack.c.bf16 %v1268, %v1268
        %v2228 = vpack.c.bf16 %v1270, %v1270
        %v2229 = vpack.c.bf16 %v1273, %v1273
        %v2230 = vpack.c.bf16 %v1275, %v1275
        %v2231 = vpack.c.bf16 %v1278, %v1278
        %v2232 = vpack.c.bf16 %v1280, %v1280
        %v2233 = vpack.c.bf16 %v1283, %v1283
        %v2234 = vpack.c.bf16 %v1285, %v1285
        %v2235 = vpack.c.bf16 %v1288, %v1288
        %v2236 = vpack.c.bf16 %v1290, %v1290
        %v2237 = vpack.c.bf16 %v1293, %v1293
        %v2238 = vpack.c.bf16 %v1295, %v1295
        %v2239 = vpack.c.bf16 %v1298, %v1298
        %v2240 = vpack.c.bf16 %v1300, %v1300
        %v2241 = vpack.c.bf16 %v1303, %v1303
        %v2242 = vpack.c.bf16 %v1305, %v1305
        %v2243 = vpack.c.bf16 %v1308, %v1308
        %v2244 = vpack.c.bf16 %v1310, %v1310
        %v2245 = vpack.c.bf16 %v1313, %v1313
        %v2246 = vpack.c.bf16 %v1315, %v1315
        %v2247 = vpack.c.bf16 %v1318, %v1318
        %v2248 = vpack.c.bf16 %v1320, %v1320
        %v2249 = vpack.c.bf16 %v1323, %v1323
        %v2250 = vpack.c.bf16 %v1325, %v1325
        %v2251 = vpack.c.bf16 %v1328, %v1328
        %v2252 = vpack.c.bf16 %v1330, %v1330
        %v2253 = vpack.c.bf16 %v1333, %v1333
        %v2254 = vpack.c.bf16 %v1335, %v1335
        %v2255 = vpack.c.bf16 %v1338, %v1338
        %v2256 = vpack.c.bf16 %v1340, %v1340
        %v2257 = vpack.c.bf16 %v1343, %v1343
        %v2258 = vpack.c.bf16 %v1345, %v1345
        %v2259 = vpack.c.bf16 %v1348, %v1348
        %v2260 = vpack.c.bf16 %v1350, %v1350
        %v2261 = vpack.c.bf16 %v1353, %v1353
        %v2262 = vpack.c.bf16 %v1355, %v1355
        %v2263 = vpack.c.bf16 %v1358, %v1358
        %v2264 = vpack.c.bf16 %v1360, %v1360
        %v2265 = vpack.c.bf16 %v1363, %v1363
        %v2266 = vpack.c.bf16 %v1365, %v1365
        %v2267 = vpack.c.bf16 %v1368, %v1368
        %v2268 = vpack.c.bf16 %v1370, %v1370
        %v2269 = vpack.c.bf16 %v1373, %v1373
        %v2270 = vpack.c.bf16 %v1375, %v1375
        %v2271 = vpack.c.bf16 %v1378, %v1378
        %v2272 = vpack.c.bf16 %v1380, %v1380
        %v2273 = vpack.c.bf16 %v1383, %v1383
        %v2274 = vpack.c.bf16 %v1385, %v1385
        %v2275 = vpack.c.bf16 %v1388, %v1388
        %v2276 = vpack.c.bf16 %v1390, %v1390
        %v2277 = vpack.c.bf16 %v1393, %v1393
        %v2278 = vpack.c.bf16 %v1395, %v1395
        %s2279 = smul.u32 %s373, 72
        %s2280 = smul.addr %s2279, 4
        %s2281 = scalar_lea.vmem [#allocation2], %s2280
        %vm2282 = vcmask 257024
        %2283 = vst.msk [vmem:[%s2281] sm:$0xf] %vm2282, %v2135
        %2284 = vst.msk [vmem:[%s2281 + $0x4] sm:$0xf] %vm2282, %v2136
        %2285 = vst.msk [vmem:[%s2281 + $0x8] sm:$0xf] %vm2282, %v2137
        %2286 = vst.msk [vmem:[%s2281 + $0xc] sm:$0xf] %vm2282, %v2138
        %2287 = vst.msk [vmem:[%s2281 + $0x10] sm:$0xf] %vm2282, %v2139
        %2288 = vst.msk [vmem:[%s2281 + $0x14] sm:$0xf] %vm2282, %v2140
        %2289 = vst.msk [vmem:[%s2281 + $0x18] sm:$0xf] %vm2282, %v2141
        %2290 = vst.msk [vmem:[%s2281 + $0x1c] sm:$0xf] %vm2282, %v2142
        %2291 = vst.msk [vmem:[%s2281 + $0x20] sm:$0xf] %vm2282, %v2143
        %2292 = vst.msk [vmem:[%s2281 + $0x24] sm:$0xf] %vm2282, %v2144
        %2293 = vst.msk [vmem:[%s2281 + $0x28] sm:$0xf] %vm2282, %v2145
        %2294 = vst.msk [vmem:[%s2281 + $0x2c] sm:$0xf] %vm2282, %v2146
        %2295 = vst.msk [vmem:[%s2281 + $0x30] sm:$0xf] %vm2282, %v2147
        %2296 = vst.msk [vmem:[%s2281 + $0x34] sm:$0xf] %vm2282, %v2148
        %2297 = vst.msk [vmem:[%s2281 + $0x38] sm:$0xf] %vm2282, %v2149
        %2298 = vst.msk [vmem:[%s2281 + $0x3c] sm:$0xf] %vm2282, %v2150
        %2299 = vst.msk [vmem:[%s2281 + $0x40] sm:$0xf] %vm2282, %v2151
        %2300 = vst.msk [vmem:[%s2281 + $0x44] sm:$0xf] %vm2282, %v2152
        %2301 = vst.msk [vmem:[%s2281 + $0x48] sm:$0xf] %vm2282, %v2153
        %2302 = vst.msk [vmem:[%s2281 + $0x4c] sm:$0xf] %vm2282, %v2154
        %2303 = vst.msk [vmem:[%s2281 + $0x50] sm:$0xf] %vm2282, %v2155
        %2304 = vst.msk [vmem:[%s2281 + $0x54] sm:$0xf] %vm2282, %v2156
        %2305 = vst.msk [vmem:[%s2281 + $0x58] sm:$0xf] %vm2282, %v2157
        %2306 = vst.msk [vmem:[%s2281 + $0x5c] sm:$0xf] %vm2282, %v2158
        %2307 = vst.msk [vmem:[%s2281 + $0x60] sm:$0xf] %vm2282, %v2159
        %2308 = vst.msk [vmem:[%s2281 + $0x64] sm:$0xf] %vm2282, %v2160
        %2309 = vst.msk [vmem:[%s2281 + $0x68] sm:$0xf] %vm2282, %v2161
        %2310 = vst.msk [vmem:[%s2281 + $0x6c] sm:$0xf] %vm2282, %v2162
        %2311 = vst.msk [vmem:[%s2281 + $0x70] sm:$0xf] %vm2282, %v2163
        %2312 = vst.msk [vmem:[%s2281 + $0x74] sm:$0xf] %vm2282, %v2164
        %2313 = vst.msk [vmem:[%s2281 + $0x78] sm:$0xf] %vm2282, %v2165
        %2314 = vst.msk [vmem:[%s2281 + $0x7c] sm:$0xf] %vm2282, %v2166
        %2315 = vst.msk [vmem:[%s2281 + $0x80] sm:$0xf] %vm2282, %v2167
        %2316 = vst.msk [vmem:[%s2281 + $0x84] sm:$0xf] %vm2282, %v2168
        %2317 = vst.msk [vmem:[%s2281 + $0x88] sm:$0xf] %vm2282, %v2169
        %2318 = vst.msk [vmem:[%s2281 + $0x8c] sm:$0xf] %vm2282, %v2170
        %2319 = vst.msk [vmem:[%s2281 + $0x90] sm:$0xf] %vm2282, %v2171
        %2320 = vst.msk [vmem:[%s2281 + $0x94] sm:$0xf] %vm2282, %v2172
        %2321 = vst.msk [vmem:[%s2281 + $0x98] sm:$0xf] %vm2282, %v2173
        %2322 = vst.msk [vmem:[%s2281 + $0x9c] sm:$0xf] %vm2282, %v2174
        %2323 = vst.msk [vmem:[%s2281 + $0xa0] sm:$0xf] %vm2282, %v2175
        %2324 = vst.msk [vmem:[%s2281 + $0xa4] sm:$0xf] %vm2282, %v2176
        %2325 = vst.msk [vmem:[%s2281 + $0xa8] sm:$0xf] %vm2282, %v2177
        %2326 = vst.msk [vmem:[%s2281 + $0xac] sm:$0xf] %vm2282, %v2178
        %2327 = vst.msk [vmem:[%s2281 + $0xb0] sm:$0xf] %vm2282, %v2179
        %2328 = vst.msk [vmem:[%s2281 + $0xb4] sm:$0xf] %vm2282, %v2180
        %2329 = vst.msk [vmem:[%s2281 + $0xb8] sm:$0xf] %vm2282, %v2181
        %2330 = vst.msk [vmem:[%s2281 + $0xbc] sm:$0xf] %vm2282, %v2182
        %2331 = vst.msk [vmem:[%s2281 + $0xc0] sm:$0xf] %vm2282, %v2183
        %2332 = vst.msk [vmem:[%s2281 + $0xc4] sm:$0xf] %vm2282, %v2184
        %2333 = vst.msk [vmem:[%s2281 + $0xc8] sm:$0xf] %vm2282, %v2185
        %2334 = vst.msk [vmem:[%s2281 + $0xcc] sm:$0xf] %vm2282, %v2186
        %2335 = vst.msk [vmem:[%s2281 + $0xd0] sm:$0xf] %vm2282, %v2187
        %2336 = vst.msk [vmem:[%s2281 + $0xd4] sm:$0xf] %vm2282, %v2188
        %2337 = vst.msk [vmem:[%s2281 + $0xd8] sm:$0xf] %vm2282, %v2189
        %2338 = vst.msk [vmem:[%s2281 + $0xdc] sm:$0xf] %vm2282, %v2190
        %2339 = vst.msk [vmem:[%s2281 + $0xe0] sm:$0xf] %vm2282, %v2191
        %2340 = vst.msk [vmem:[%s2281 + $0xe4] sm:$0xf] %vm2282, %v2192
        %2341 = vst.msk [vmem:[%s2281 + $0xe8] sm:$0xf] %vm2282, %v2193
        %2342 = vst.msk [vmem:[%s2281 + $0xec] sm:$0xf] %vm2282, %v2194
        %2343 = vst.msk [vmem:[%s2281 + $0xf0] sm:$0xf] %vm2282, %v2195
        %2344 = vst.msk [vmem:[%s2281 + $0xf4] sm:$0xf] %vm2282, %v2196
        %2345 = vst.msk [vmem:[%s2281 + $0xf8] sm:$0xf] %vm2282, %v2197
        %2346 = vst.msk [vmem:[%s2281 + $0xfc] sm:$0xf] %vm2282, %v2198
        %2347 = vst.msk [vmem:[%s2281 + $0x100] sm:$0xf] %vm2282, %v2199
        %2348 = vst.msk [vmem:[%s2281 + $0x104] sm:$0xf] %vm2282, %v2200
        %2349 = vst.msk [vmem:[%s2281 + $0x108] sm:$0xf] %vm2282, %v2201
        %2350 = vst.msk [vmem:[%s2281 + $0x10c] sm:$0xf] %vm2282, %v2202
        %2351 = vst.msk [vmem:[%s2281 + $0x110] sm:$0xf] %vm2282, %v2203
        %2352 = vst.msk [vmem:[%s2281 + $0x114] sm:$0xf] %vm2282, %v2204
        %2353 = vst.msk [vmem:[%s2281 + $0x118] sm:$0xf] %vm2282, %v2205
        %2354 = vst.msk [vmem:[%s2281 + $0x11c] sm:$0xf] %vm2282, %v2206
        %2355 = vst.msk [vmem:[%s2281 + $0x120] sm:$0xf] %vm2282, %v2207
        %2356 = vst.msk [vmem:[%s2281 + $0x124] sm:$0xf] %vm2282, %v2208
        %2357 = vst.msk [vmem:[%s2281 + $0x128] sm:$0xf] %vm2282, %v2209
        %2358 = vst.msk [vmem:[%s2281 + $0x12c] sm:$0xf] %vm2282, %v2210
        %2359 = vst.msk [vmem:[%s2281 + $0x130] sm:$0xf] %vm2282, %v2211
        %2360 = vst.msk [vmem:[%s2281 + $0x134] sm:$0xf] %vm2282, %v2212
        %2361 = vst.msk [vmem:[%s2281 + $0x138] sm:$0xf] %vm2282, %v2213
        %2362 = vst.msk [vmem:[%s2281 + $0x13c] sm:$0xf] %vm2282, %v2214
        %2363 = vst.msk [vmem:[%s2281 + $0x140] sm:$0xf] %vm2282, %v2215
        %2364 = vst.msk [vmem:[%s2281 + $0x144] sm:$0xf] %vm2282, %v2216
        %2365 = vst.msk [vmem:[%s2281 + $0x148] sm:$0xf] %vm2282, %v2217
        %2366 = vst.msk [vmem:[%s2281 + $0x14c] sm:$0xf] %vm2282, %v2218
        %2367 = vst.msk [vmem:[%s2281 + $0x150] sm:$0xf] %vm2282, %v2219
        %2368 = vst.msk [vmem:[%s2281 + $0x154] sm:$0xf] %vm2282, %v2220
        %2369 = vst.msk [vmem:[%s2281 + $0x158] sm:$0xf] %vm2282, %v2221
        %2370 = vst.msk [vmem:[%s2281 + $0x15c] sm:$0xf] %vm2282, %v2222
        %2371 = vst.msk [vmem:[%s2281 + $0x160] sm:$0xf] %vm2282, %v2223
        %2372 = vst.msk [vmem:[%s2281 + $0x164] sm:$0xf] %vm2282, %v2224
        %2373 = vst.msk [vmem:[%s2281 + $0x168] sm:$0xf] %vm2282, %v2225
        %2374 = vst.msk [vmem:[%s2281 + $0x16c] sm:$0xf] %vm2282, %v2226
        %2375 = vst.msk [vmem:[%s2281 + $0x170] sm:$0xf] %vm2282, %v2227
        %2376 = vst.msk [vmem:[%s2281 + $0x174] sm:$0xf] %vm2282, %v2228
        %2377 = vst.msk [vmem:[%s2281 + $0x178] sm:$0xf] %vm2282, %v2229
        %2378 = vst.msk [vmem:[%s2281 + $0x17c] sm:$0xf] %vm2282, %v2230
        %2379 = vst.msk [vmem:[%s2281 + $0x180] sm:$0xf] %vm2282, %v2231
        %2380 = vst.msk [vmem:[%s2281 + $0x184] sm:$0xf] %vm2282, %v2232
        %2381 = vst.msk [vmem:[%s2281 + $0x188] sm:$0xf] %vm2282, %v2233
        %2382 = vst.msk [vmem:[%s2281 + $0x18c] sm:$0xf] %vm2282, %v2234
        %2383 = vst.msk [vmem:[%s2281 + $0x190] sm:$0xf] %vm2282, %v2235
        %2384 = vst.msk [vmem:[%s2281 + $0x194] sm:$0xf] %vm2282, %v2236
        %2385 = vst.msk [vmem:[%s2281 + $0x198] sm:$0xf] %vm2282, %v2237
        %2386 = vst.msk [vmem:[%s2281 + $0x19c] sm:$0xf] %vm2282, %v2238
        %2387 = vst.msk [vmem:[%s2281 + $0x1a0] sm:$0xf] %vm2282, %v2239
        %2388 = vst.msk [vmem:[%s2281 + $0x1a4] sm:$0xf] %vm2282, %v2240
        %2389 = vst.msk [vmem:[%s2281 + $0x1a8] sm:$0xf] %vm2282, %v2241
        %2390 = vst.msk [vmem:[%s2281 + $0x1ac] sm:$0xf] %vm2282, %v2242
        %2391 = vst.msk [vmem:[%s2281 + $0x1b0] sm:$0xf] %vm2282, %v2243
        %2392 = vst.msk [vmem:[%s2281 + $0x1b4] sm:$0xf] %vm2282, %v2244
        %2393 = vst.msk [vmem:[%s2281 + $0x1b8] sm:$0xf] %vm2282, %v2245
        %2394 = vst.msk [vmem:[%s2281 + $0x1bc] sm:$0xf] %vm2282, %v2246
        %2395 = vst.msk [vmem:[%s2281 + $0x1c0] sm:$0xf] %vm2282, %v2247
        %2396 = vst.msk [vmem:[%s2281 + $0x1c4] sm:$0xf] %vm2282, %v2248
        %2397 = vst.msk [vmem:[%s2281 + $0x1c8] sm:$0xf] %vm2282, %v2249
        %2398 = vst.msk [vmem:[%s2281 + $0x1cc] sm:$0xf] %vm2282, %v2250
        %2399 = vst.msk [vmem:[%s2281 + $0x1d0] sm:$0xf] %vm2282, %v2251
        %2400 = vst.msk [vmem:[%s2281 + $0x1d4] sm:$0xf] %vm2282, %v2252
        %2401 = vst.msk [vmem:[%s2281 + $0x1d8] sm:$0xf] %vm2282, %v2253
        %2402 = vst.msk [vmem:[%s2281 + $0x1dc] sm:$0xf] %vm2282, %v2254
        %2403 = vst.msk [vmem:[%s2281 + $0x1e0] sm:$0xf] %vm2282, %v2255
        %2404 = vst.msk [vmem:[%s2281 + $0x1e4] sm:$0xf] %vm2282, %v2256
        %2405 = vst.msk [vmem:[%s2281 + $0x1e8] sm:$0xf] %vm2282, %v2257
        %2406 = vst.msk [vmem:[%s2281 + $0x1ec] sm:$0xf] %vm2282, %v2258
        %2407 = vst.msk [vmem:[%s2281 + $0x1f0] sm:$0xf] %vm2282, %v2259
        %2408 = vst.msk [vmem:[%s2281 + $0x1f4] sm:$0xf] %vm2282, %v2260
        %2409 = vst.msk [vmem:[%s2281 + $0x1f8] sm:$0xf] %vm2282, %v2261
        %2410 = vst.msk [vmem:[%s2281 + $0x1fc] sm:$0xf] %vm2282, %v2262
        %2411 = vst.msk [vmem:[%s2281 + $0x200] sm:$0xf] %vm2282, %v2263
        %2412 = vst.msk [vmem:[%s2281 + $0x204] sm:$0xf] %vm2282, %v2264
        %2413 = vst.msk [vmem:[%s2281 + $0x208] sm:$0xf] %vm2282, %v2265
        %2414 = vst.msk [vmem:[%s2281 + $0x20c] sm:$0xf] %vm2282, %v2266
        %2415 = vst.msk [vmem:[%s2281 + $0x210] sm:$0xf] %vm2282, %v2267
        %2416 = vst.msk [vmem:[%s2281 + $0x214] sm:$0xf] %vm2282, %v2268
        %2417 = vst.msk [vmem:[%s2281 + $0x218] sm:$0xf] %vm2282, %v2269
        %2418 = vst.msk [vmem:[%s2281 + $0x21c] sm:$0xf] %vm2282, %v2270
        %2419 = vst.msk [vmem:[%s2281 + $0x220] sm:$0xf] %vm2282, %v2271
        %2420 = vst.msk [vmem:[%s2281 + $0x224] sm:$0xf] %vm2282, %v2272
        %2421 = vst.msk [vmem:[%s2281 + $0x228] sm:$0xf] %vm2282, %v2273
        %2422 = vst.msk [vmem:[%s2281 + $0x22c] sm:$0xf] %vm2282, %v2274
        %2423 = vst.msk [vmem:[%s2281 + $0x230] sm:$0xf] %vm2282, %v2275
        %2424 = vst.msk [vmem:[%s2281 + $0x234] sm:$0xf] %vm2282, %v2276
        %2425 = vst.msk [vmem:[%s2281 + $0x238] sm:$0xf] %vm2282, %v2277
        %2426 = vst.msk [vmem:[%s2281 + $0x23c] sm:$0xf] %vm2282, %v2278
      $region60: #{qzd_forward.1} parent=55 // pred_fallthru
        _
      %p2427 = scmp.eq.s32.totalorder %s24, 1
      // Predicated region
      $region65: #{qzd_forward.1} parent=55 // pred_check
        %p2428 = pneg %p2427
      $region66: #{qzd_forward.1} parent=55 // pred_check_branch
        %2430 = sbr.rel (%p2428) target = $region68
      $region67: #{qzd_forward.1} parent=55 // pred_region
        %v2431 = vld [vmem:[#allocation4] sm:$0x1]
        %v2432 = vmul.f32 %v2431, 0.00086805556
        %v2433 = vld [vmem:[#allocation5] sm:$0x1]
        %v2434 = vmul.f32 %v2433, 0.00086805556
        %v2435 = vmul.f32 %v2432, %v2432
        %v2436 = vsub.f32 %v2434, %v2435
        %v2437 = vmax.f32 %v2436, 0.0
        %v2438 = vld [vmem:[%s2] sm:$0x1]
        %v2439 = vadd.f32 %v2437, 1e-05
        %v2440 = vrsqrt.pop %v2439
        %v2441 = vmul.f32 %v2440, %v2439
        %v2442 = vmul.f32 %v2441, %v2440
        %v2443 = vmul.f32 0.5, %v2442
        %v2444 = vsub.f32 1.5, %v2443
        %v2445 = vmul.f32 %v2440, %v2444
        %vm2446 = vweird.f32 %v2439
        %vm2447 = vweird.f32 %v2440
        %vm2448 = vmor %vm2446, %vm2447
        %v2449 = vsel %vm2448, %v2440, %v2445
        %v2450 = vmul.f32 %v2438, %v2449
        %v2451 = vld [vmem:[%s3] sm:$0x1]
        %v2452 = vmul.f32 %v2432, %v2450
        %v2453 = vsub.f32 %v2451, %v2452
        %s2454 = smul.u32 %s373, 72
        %s2455 = smul.addr %s2454, 4
        %s2456 = scalar_lea.vmem [#allocation2], %s2455
        %v2457 = vld [vmem:[%s2456] sm:$0xf]
        %v2458 = vld [vmem:[%s2456 + $0x4] sm:$0xf]
        %v2459 = vld [vmem:[%s2456 + $0x8] sm:$0xf]
        %v2460 = vld [vmem:[%s2456 + $0xc] sm:$0xf]
        %v2461 = vld [vmem:[%s2456 + $0x10] sm:$0xf]
        %v2462 = vld [vmem:[%s2456 + $0x14] sm:$0xf]
        %v2463 = vld [vmem:[%s2456 + $0x18] sm:$0xf]
        %v2464 = vld [vmem:[%s2456 + $0x1c] sm:$0xf]
        %v2465 = vld [vmem:[%s2456 + $0x20] sm:$0xf]
        %v2466 = vld [vmem:[%s2456 + $0x24] sm:$0xf]
        %v2467 = vld [vmem:[%s2456 + $0x28] sm:$0xf]
        %v2468 = vld [vmem:[%s2456 + $0x2c] sm:$0xf]
        %v2469 = vld [vmem:[%s2456 + $0x30] sm:$0xf]
        %v2470 = vld [vmem:[%s2456 + $0x34] sm:$0xf]
        %v2471 = vld [vmem:[%s2456 + $0x38] sm:$0xf]
        %v2472 = vld [vmem:[%s2456 + $0x3c] sm:$0xf]
        %v2473 = vld [vmem:[%s2456 + $0x40] sm:$0xf]
        %v2474 = vld [vmem:[%s2456 + $0x44] sm:$0xf]
        %v2475 = vld [vmem:[%s2456 + $0x48] sm:$0xf]
        %v2476 = vld [vmem:[%s2456 + $0x4c] sm:$0xf]
        %v2477 = vld [vmem:[%s2456 + $0x50] sm:$0xf]
        %v2478 = vld [vmem:[%s2456 + $0x54] sm:$0xf]
        %v2479 = vld [vmem:[%s2456 + $0x58] sm:$0xf]
        %v2480 = vld [vmem:[%s2456 + $0x5c] sm:$0xf]
        %v2481 = vld [vmem:[%s2456 + $0x60] sm:$0xf]
        %v2482 = vld [vmem:[%s2456 + $0x64] sm:$0xf]
        %v2483 = vld [vmem:[%s2456 + $0x68] sm:$0xf]
        %v2484 = vld [vmem:[%s2456 + $0x6c] sm:$0xf]
        %v2485 = vld [vmem:[%s2456 + $0x70] sm:$0xf]
        %v2486 = vld [vmem:[%s2456 + $0x74] sm:$0xf]
        %v2487 = vld [vmem:[%s2456 + $0x78] sm:$0xf]
        %v2488 = vld [vmem:[%s2456 + $0x7c] sm:$0xf]
        %v2489 = vld [vmem:[%s2456 + $0x80] sm:$0xf]
        %v2490 = vld [vmem:[%s2456 + $0x84] sm:$0xf]
        %v2491 = vld [vmem:[%s2456 + $0x88] sm:$0xf]
        %v2492 = vld [vmem:[%s2456 + $0x8c] sm:$0xf]
        %v2493 = vld [vmem:[%s2456 + $0x90] sm:$0xf]
        %v2494 = vld [vmem:[%s2456 + $0x94] sm:$0xf]
        %v2495 = vld [vmem:[%s2456 + $0x98] sm:$0xf]
        %v2496 = vld [vmem:[%s2456 + $0x9c] sm:$0xf]
        %v2497 = vld [vmem:[%s2456 + $0xa0] sm:$0xf]
        %v2498 = vld [vmem:[%s2456 + $0xa4] sm:$0xf]
        %v2499 = vld [vmem:[%s2456 + $0xa8] sm:$0xf]
        %v2500 = vld [vmem:[%s2456 + $0xac] sm:$0xf]
        %v2501 = vld [vmem:[%s2456 + $0xb0] sm:$0xf]
        %v2502 = vld [vmem:[%s2456 + $0xb4] sm:$0xf]
        %v2503 = vld [vmem:[%s2456 + $0xb8] sm:$0xf]
        %v2504 = vld [vmem:[%s2456 + $0xbc] sm:$0xf]
        %v2505 = vld [vmem:[%s2456 + $0xc0] sm:$0xf]
        %v2506 = vld [vmem:[%s2456 + $0xc4] sm:$0xf]
        %v2507 = vld [vmem:[%s2456 + $0xc8] sm:$0xf]
        %v2508 = vld [vmem:[%s2456 + $0xcc] sm:$0xf]
        %v2509 = vld [vmem:[%s2456 + $0xd0] sm:$0xf]
        %v2510 = vld [vmem:[%s2456 + $0xd4] sm:$0xf]
        %v2511 = vld [vmem:[%s2456 + $0xd8] sm:$0xf]
        %v2512 = vld [vmem:[%s2456 + $0xdc] sm:$0xf]
        %v2513 = vld [vmem:[%s2456 + $0xe0] sm:$0xf]
        %v2514 = vld [vmem:[%s2456 + $0xe4] sm:$0xf]
        %v2515 = vld [vmem:[%s2456 + $0xe8] sm:$0xf]
        %v2516 = vld [vmem:[%s2456 + $0xec] sm:$0xf]
        %v2517 = vld [vmem:[%s2456 + $0xf0] sm:$0xf]
        %v2518 = vld [vmem:[%s2456 + $0xf4] sm:$0xf]
        %v2519 = vld [vmem:[%s2456 + $0xf8] sm:$0xf]
        %v2520 = vld [vmem:[%s2456 + $0xfc] sm:$0xf]
        %v2521 = vld [vmem:[%s2456 + $0x100] sm:$0xf]
        %v2522 = vld [vmem:[%s2456 + $0x104] sm:$0xf]
        %v2523 = vld [vmem:[%s2456 + $0x108] sm:$0xf]
        %v2524 = vld [vmem:[%s2456 + $0x10c] sm:$0xf]
        %v2525 = vld [vmem:[%s2456 + $0x110] sm:$0xf]
        %v2526 = vld [vmem:[%s2456 + $0x114] sm:$0xf]
        %v2527 = vld [vmem:[%s2456 + $0x118] sm:$0xf]
        %v2528 = vld [vmem:[%s2456 + $0x11c] sm:$0xf]
        %v2529 = vld [vmem:[%s2456 + $0x120] sm:$0xf]
        %v2530 = vld [vmem:[%s2456 + $0x124] sm:$0xf]
        %v2531 = vld [vmem:[%s2456 + $0x128] sm:$0xf]
        %v2532 = vld [vmem:[%s2456 + $0x12c] sm:$0xf]
        %v2533 = vld [vmem:[%s2456 + $0x130] sm:$0xf]
        %v2534 = vld [vmem:[%s2456 + $0x134] sm:$0xf]
        %v2535 = vld [vmem:[%s2456 + $0x138] sm:$0xf]
        %v2536 = vld [vmem:[%s2456 + $0x13c] sm:$0xf]
        %v2537 = vld [vmem:[%s2456 + $0x140] sm:$0xf]
        %v2538 = vld [vmem:[%s2456 + $0x144] sm:$0xf]
        %v2539 = vld [vmem:[%s2456 + $0x148] sm:$0xf]
        %v2540 = vld [vmem:[%s2456 + $0x14c] sm:$0xf]
        %v2541 = vld [vmem:[%s2456 + $0x150] sm:$0xf]
        %v2542 = vld [vmem:[%s2456 + $0x154] sm:$0xf]
        %v2543 = vld [vmem:[%s2456 + $0x158] sm:$0xf]
        %v2544 = vld [vmem:[%s2456 + $0x15c] sm:$0xf]
        %v2545 = vld [vmem:[%s2456 + $0x160] sm:$0xf]
        %v2546 = vld [vmem:[%s2456 + $0x164] sm:$0xf]
        %v2547 = vld [vmem:[%s2456 + $0x168] sm:$0xf]
        %v2548 = vld [vmem:[%s2456 + $0x16c] sm:$0xf]
        %v2549 = vld [vmem:[%s2456 + $0x170] sm:$0xf]
        %v2550 = vld [vmem:[%s2456 + $0x174] sm:$0xf]
        %v2551 = vld [vmem:[%s2456 + $0x178] sm:$0xf]
        %v2552 = vld [vmem:[%s2456 + $0x17c] sm:$0xf]
        %v2553 = vld [vmem:[%s2456 + $0x180] sm:$0xf]
        %v2554 = vld [vmem:[%s2456 + $0x184] sm:$0xf]
        %v2555 = vld [vmem:[%s2456 + $0x188] sm:$0xf]
        %v2556 = vld [vmem:[%s2456 + $0x18c] sm:$0xf]
        %v2557 = vld [vmem:[%s2456 + $0x190] sm:$0xf]
        %v2558 = vld [vmem:[%s2456 + $0x194] sm:$0xf]
        %v2559 = vld [vmem:[%s2456 + $0x198] sm:$0xf]
        %v2560 = vld [vmem:[%s2456 + $0x19c] sm:$0xf]
        %v2561 = vld [vmem:[%s2456 + $0x1a0] sm:$0xf]
        %v2562 = vld [vmem:[%s2456 + $0x1a4] sm:$0xf]
        %v2563 = vld [vmem:[%s2456 + $0x1a8] sm:$0xf]
        %v2564 = vld [vmem:[%s2456 + $0x1ac] sm:$0xf]
        %v2565 = vld [vmem:[%s2456 + $0x1b0] sm:$0xf]
        %v2566 = vld [vmem:[%s2456 + $0x1b4] sm:$0xf]
        %v2567 = vld [vmem:[%s2456 + $0x1b8] sm:$0xf]
        %v2568 = vld [vmem:[%s2456 + $0x1bc] sm:$0xf]
        %v2569 = vld [vmem:[%s2456 + $0x1c0] sm:$0xf]
        %v2570 = vld [vmem:[%s2456 + $0x1c4] sm:$0xf]
        %v2571 = vld [vmem:[%s2456 + $0x1c8] sm:$0xf]
        %v2572 = vld [vmem:[%s2456 + $0x1cc] sm:$0xf]
        %v2573 = vld [vmem:[%s2456 + $0x1d0] sm:$0xf]
        %v2574 = vld [vmem:[%s2456 + $0x1d4] sm:$0xf]
        %v2575 = vld [vmem:[%s2456 + $0x1d8] sm:$0xf]
        %v2576 = vld [vmem:[%s2456 + $0x1dc] sm:$0xf]
        %v2577 = vld [vmem:[%s2456 + $0x1e0] sm:$0xf]
        %v2578 = vld [vmem:[%s2456 + $0x1e4] sm:$0xf]
        %v2579 = vld [vmem:[%s2456 + $0x1e8] sm:$0xf]
        %v2580 = vld [vmem:[%s2456 + $0x1ec] sm:$0xf]
        %v2581 = vld [vmem:[%s2456 + $0x1f0] sm:$0xf]
        %v2582 = vld [vmem:[%s2456 + $0x1f4] sm:$0xf]
        %v2583 = vld [vmem:[%s2456 + $0x1f8] sm:$0xf]
        %v2584 = vld [vmem:[%s2456 + $0x1fc] sm:$0xf]
        %v2585 = vld [vmem:[%s2456 + $0x200] sm:$0xf]
        %v2586 = vld [vmem:[%s2456 + $0x204] sm:$0xf]
        %v2587 = vld [vmem:[%s2456 + $0x208] sm:$0xf]
        %v2588 = vld [vmem:[%s2456 + $0x20c] sm:$0xf]
        %v2589 = vld [vmem:[%s2456 + $0x210] sm:$0xf]
        %v2590 = vld [vmem:[%s2456 + $0x214] sm:$0xf]
        %v2591 = vld [vmem:[%s2456 + $0x218] sm:$0xf]
        %v2592 = vld [vmem:[%s2456 + $0x21c] sm:$0xf]
        %v2593 = vld [vmem:[%s2456 + $0x220] sm:$0xf]
        %v2594 = vld [vmem:[%s2456 + $0x224] sm:$0xf]
        %v2595 = vld [vmem:[%s2456 + $0x228] sm:$0xf]
        %v2596 = vld [vmem:[%s2456 + $0x22c] sm:$0xf]
        %v2597 = vld [vmem:[%s2456 + $0x230] sm:$0xf]
        %v2598 = vld [vmem:[%s2456 + $0x234] sm:$0xf]
        %v2599 = vld [vmem:[%s2456 + $0x238] sm:$0xf]
        %v2600 = vld [vmem:[%s2456 + $0x23c] sm:$0xf]
        %v2601 = vunpack.c.l.bf16 %v2457
        %v2602 = vunpack.c.l.bf16 %v2458
        %v2603 = vunpack.c.l.bf16 %v2459
        %v2604 = vunpack.c.l.bf16 %v2460
        %v2605 = vunpack.c.l.bf16 %v2461
        %v2606 = vunpack.c.l.bf16 %v2462
        %v2607 = vunpack.c.l.bf16 %v2463
        %v2608 = vunpack.c.l.bf16 %v2464
        %v2609 = vunpack.c.l.bf16 %v2465
        %v2610 = vunpack.c.l.bf16 %v2466
        %v2611 = vunpack.c.l.bf16 %v2467
        %v2612 = vunpack.c.l.bf16 %v2468
        %v2613 = vunpack.c.l.bf16 %v2469
        %v2614 = vunpack.c.l.bf16 %v2470
        %v2615 = vunpack.c.l.bf16 %v2471
        %v2616 = vunpack.c.l.bf16 %v2472
        %v2617 = vunpack.c.l.bf16 %v2473
        %v2618 = vunpack.c.l.bf16 %v2474
        %v2619 = vunpack.c.l.bf16 %v2475
        %v2620 = vunpack.c.l.bf16 %v2476
        %v2621 = vunpack.c.l.bf16 %v2477
        %v2622 = vunpack.c.l.bf16 %v2478
        %v2623 = vunpack.c.l.bf16 %v2479
        %v2624 = vunpack.c.l.bf16 %v2480
        %v2625 = vunpack.c.l.bf16 %v2481
        %v2626 = vunpack.c.l.bf16 %v2482
        %v2627 = vunpack.c.l.bf16 %v2483
        %v2628 = vunpack.c.l.bf16 %v2484
        %v2629 = vunpack.c.l.bf16 %v2485
        %v2630 = vunpack.c.l.bf16 %v2486
        %v2631 = vunpack.c.l.bf16 %v2487
        %v2632 = vunpack.c.l.bf16 %v2488
        %v2633 = vunpack.c.l.bf16 %v2489
        %v2634 = vunpack.c.l.bf16 %v2490
        %v2635 = vunpack.c.l.bf16 %v2491
        %v2636 = vunpack.c.l.bf16 %v2492
        %v2637 = vunpack.c.l.bf16 %v2493
        %v2638 = vunpack.c.l.bf16 %v2494
        %v2639 = vunpack.c.l.bf16 %v2495
        %v2640 = vunpack.c.l.bf16 %v2496
        %v2641 = vunpack.c.l.bf16 %v2497
        %v2642 = vunpack.c.l.bf16 %v2498
        %v2643 = vunpack.c.l.bf16 %v2499
        %v2644 = vunpack.c.l.bf16 %v2500
        %v2645 = vunpack.c.l.bf16 %v2501
        %v2646 = vunpack.c.l.bf16 %v2502
        %v2647 = vunpack.c.l.bf16 %v2503
        %v2648 = vunpack.c.l.bf16 %v2504
        %v2649 = vunpack.c.l.bf16 %v2505
        %v2650 = vunpack.c.l.bf16 %v2506
        %v2651 = vunpack.c.l.bf16 %v2507
        %v2652 = vunpack.c.l.bf16 %v2508
        %v2653 = vunpack.c.l.bf16 %v2509
        %v2654 = vunpack.c.l.bf16 %v2510
        %v2655 = vunpack.c.l.bf16 %v2511
        %v2656 = vunpack.c.l.bf16 %v2512
        %v2657 = vunpack.c.l.bf16 %v2513
        %v2658 = vunpack.c.l.bf16 %v2514
        %v2659 = vunpack.c.l.bf16 %v2515
        %v2660 = vunpack.c.l.bf16 %v2516
        %v2661 = vunpack.c.l.bf16 %v2517
        %v2662 = vunpack.c.l.bf16 %v2518
        %v2663 = vunpack.c.l.bf16 %v2519
        %v2664 = vunpack.c.l.bf16 %v2520
        %v2665 = vunpack.c.l.bf16 %v2521
        %v2666 = vunpack.c.l.bf16 %v2522
        %v2667 = vunpack.c.l.bf16 %v2523
        %v2668 = vunpack.c.l.bf16 %v2524
        %v2669 = vunpack.c.l.bf16 %v2525
        %v2670 = vunpack.c.l.bf16 %v2526
        %v2671 = vunpack.c.l.bf16 %v2527
        %v2672 = vunpack.c.l.bf16 %v2528
        %v2673 = vunpack.c.l.bf16 %v2529
        %v2674 = vunpack.c.l.bf16 %v2530
        %v2675 = vunpack.c.l.bf16 %v2531
        %v2676 = vunpack.c.l.bf16 %v2532
        %v2677 = vunpack.c.l.bf16 %v2533
        %v2678 = vunpack.c.l.bf16 %v2534
        %v2679 = vunpack.c.l.bf16 %v2535
        %v2680 = vunpack.c.l.bf16 %v2536
        %v2681 = vunpack.c.l.bf16 %v2537
        %v2682 = vunpack.c.l.bf16 %v2538
        %v2683 = vunpack.c.l.bf16 %v2539
        %v2684 = vunpack.c.l.bf16 %v2540
        %v2685 = vunpack.c.l.bf16 %v2541
        %v2686 = vunpack.c.l.bf16 %v2542
        %v2687 = vunpack.c.l.bf16 %v2543
        %v2688 = vunpack.c.l.bf16 %v2544
        %v2689 = vunpack.c.l.bf16 %v2545
        %v2690 = vunpack.c.l.bf16 %v2546
        %v2691 = vunpack.c.l.bf16 %v2547
        %v2692 = vunpack.c.l.bf16 %v2548
        %v2693 = vunpack.c.l.bf16 %v2549
        %v2694 = vunpack.c.l.bf16 %v2550
        %v2695 = vunpack.c.l.bf16 %v2551
        %v2696 = vunpack.c.l.bf16 %v2552
        %v2697 = vunpack.c.l.bf16 %v2553
        %v2698 = vunpack.c.l.bf16 %v2554
        %v2699 = vunpack.c.l.bf16 %v2555
        %v2700 = vunpack.c.l.bf16 %v2556
        %v2701 = vunpack.c.l.bf16 %v2557
        %v2702 = vunpack.c.l.bf16 %v2558
        %v2703 = vunpack.c.l.bf16 %v2559
        %v2704 = vunpack.c.l.bf16 %v2560
        %v2705 = vunpack.c.l.bf16 %v2561
        %v2706 = vunpack.c.l.bf16 %v2562
        %v2707 = vunpack.c.l.bf16 %v2563
        %v2708 = vunpack.c.l.bf16 %v2564
        %v2709 = vunpack.c.l.bf16 %v2565
        %v2710 = vunpack.c.l.bf16 %v2566
        %v2711 = vunpack.c.l.bf16 %v2567
        %v2712 = vunpack.c.l.bf16 %v2568
        %v2713 = vunpack.c.l.bf16 %v2569
        %v2714 = vunpack.c.l.bf16 %v2570
        %v2715 = vunpack.c.l.bf16 %v2571
        %v2716 = vunpack.c.l.bf16 %v2572
        %v2717 = vunpack.c.l.bf16 %v2573
        %v2718 = vunpack.c.l.bf16 %v2574
        %v2719 = vunpack.c.l.bf16 %v2575
        %v2720 = vunpack.c.l.bf16 %v2576
        %v2721 = vunpack.c.l.bf16 %v2577
        %v2722 = vunpack.c.l.bf16 %v2578
        %v2723 = vunpack.c.l.bf16 %v2579
        %v2724 = vunpack.c.l.bf16 %v2580
        %v2725 = vunpack.c.l.bf16 %v2581
        %v2726 = vunpack.c.l.bf16 %v2582
        %v2727 = vunpack.c.l.bf16 %v2583
        %v2728 = vunpack.c.l.bf16 %v2584
        %v2729 = vunpack.c.l.bf16 %v2585
        %v2730 = vunpack.c.l.bf16 %v2586
        %v2731 = vunpack.c.l.bf16 %v2587
        %v2732 = vunpack.c.l.bf16 %v2588
        %v2733 = vunpack.c.l.bf16 %v2589
        %v2734 = vunpack.c.l.bf16 %v2590
        %v2735 = vunpack.c.l.bf16 %v2591
        %v2736 = vunpack.c.l.bf16 %v2592
        %v2737 = vunpack.c.l.bf16 %v2593
        %v2738 = vunpack.c.l.bf16 %v2594
        %v2739 = vunpack.c.l.bf16 %v2595
        %v2740 = vunpack.c.l.bf16 %v2596
        %v2741 = vunpack.c.l.bf16 %v2597
        %v2742 = vunpack.c.l.bf16 %v2598
        %v2743 = vunpack.c.l.bf16 %v2599
        %v2744 = vunpack.c.l.bf16 %v2600
        %v2746 = vperm.slane %v2450, 0
        %v2748 = vmul.f32 %v2601, %v2746
        %v2749 = vmul.f32 %v2602, %v2746
        %v2750 = vmul.f32 %v2603, %v2746
        %v2751 = vmul.f32 %v2604, %v2746
        %v2752 = vmul.f32 %v2605, %v2746
        %v2753 = vmul.f32 %v2606, %v2746
        %v2754 = vmul.f32 %v2607, %v2746
        %v2755 = vmul.f32 %v2608, %v2746
        %v2756 = vmul.f32 %v2609, %v2746
        %v2757 = vmul.f32 %v2610, %v2746
        %v2758 = vmul.f32 %v2611, %v2746
        %v2759 = vmul.f32 %v2612, %v2746
        %v2760 = vmul.f32 %v2613, %v2746
        %v2761 = vmul.f32 %v2614, %v2746
        %v2762 = vmul.f32 %v2615, %v2746
        %v2763 = vmul.f32 %v2616, %v2746
        %v2764 = vmul.f32 %v2617, %v2746
        %v2765 = vmul.f32 %v2618, %v2746
        %v2766 = vmul.f32 %v2619, %v2746
        %v2767 = vmul.f32 %v2620, %v2746
        %v2768 = vmul.f32 %v2621, %v2746
        %v2769 = vmul.f32 %v2622, %v2746
        %v2770 = vmul.f32 %v2623, %v2746
        %v2771 = vmul.f32 %v2624, %v2746
        %v2772 = vmul.f32 %v2625, %v2746
        %v2773 = vmul.f32 %v2626, %v2746
        %v2774 = vmul.f32 %v2627, %v2746
        %v2775 = vmul.f32 %v2628, %v2746
        %v2776 = vmul.f32 %v2629, %v2746
        %v2777 = vmul.f32 %v2630, %v2746
        %v2778 = vmul.f32 %v2631, %v2746
        %v2779 = vmul.f32 %v2632, %v2746
        %v2780 = vmul.f32 %v2633, %v2746
        %v2781 = vmul.f32 %v2634, %v2746
        %v2782 = vmul.f32 %v2635, %v2746
        %v2783 = vmul.f32 %v2636, %v2746
        %v2784 = vmul.f32 %v2637, %v2746
        %v2785 = vmul.f32 %v2638, %v2746
        %v2786 = vmul.f32 %v2639, %v2746
        %v2787 = vmul.f32 %v2640, %v2746
        %v2788 = vmul.f32 %v2641, %v2746
        %v2789 = vmul.f32 %v2642, %v2746
        %v2790 = vmul.f32 %v2643, %v2746
        %v2791 = vmul.f32 %v2644, %v2746
        %v2792 = vmul.f32 %v2645, %v2746
        %v2793 = vmul.f32 %v2646, %v2746
        %v2794 = vmul.f32 %v2647, %v2746
        %v2795 = vmul.f32 %v2648, %v2746
        %v2796 = vmul.f32 %v2649, %v2746
        %v2797 = vmul.f32 %v2650, %v2746
        %v2798 = vmul.f32 %v2651, %v2746
        %v2799 = vmul.f32 %v2652, %v2746
        %v2800 = vmul.f32 %v2653, %v2746
        %v2801 = vmul.f32 %v2654, %v2746
        %v2802 = vmul.f32 %v2655, %v2746
        %v2803 = vmul.f32 %v2656, %v2746
        %v2804 = vmul.f32 %v2657, %v2746
        %v2805 = vmul.f32 %v2658, %v2746
        %v2806 = vmul.f32 %v2659, %v2746
        %v2807 = vmul.f32 %v2660, %v2746
        %v2808 = vmul.f32 %v2661, %v2746
        %v2809 = vmul.f32 %v2662, %v2746
        %v2810 = vmul.f32 %v2663, %v2746
        %v2811 = vmul.f32 %v2664, %v2746
        %v2812 = vmul.f32 %v2665, %v2746
        %v2813 = vmul.f32 %v2666, %v2746
        %v2814 = vmul.f32 %v2667, %v2746
        %v2815 = vmul.f32 %v2668, %v2746
        %v2816 = vmul.f32 %v2669, %v2746
        %v2817 = vmul.f32 %v2670, %v2746
        %v2818 = vmul.f32 %v2671, %v2746
        %v2819 = vmul.f32 %v2672, %v2746
        %v2820 = vmul.f32 %v2673, %v2746
        %v2821 = vmul.f32 %v2674, %v2746
        %v2822 = vmul.f32 %v2675, %v2746
        %v2823 = vmul.f32 %v2676, %v2746
        %v2824 = vmul.f32 %v2677, %v2746
        %v2825 = vmul.f32 %v2678, %v2746
        %v2826 = vmul.f32 %v2679, %v2746
        %v2827 = vmul.f32 %v2680, %v2746
        %v2828 = vmul.f32 %v2681, %v2746
        %v2829 = vmul.f32 %v2682, %v2746
        %v2830 = vmul.f32 %v2683, %v2746
        %v2831 = vmul.f32 %v2684, %v2746
        %v2832 = vmul.f32 %v2685, %v2746
        %v2833 = vmul.f32 %v2686, %v2746
        %v2834 = vmul.f32 %v2687, %v2746
        %v2835 = vmul.f32 %v2688, %v2746
        %v2836 = vmul.f32 %v2689, %v2746
        %v2837 = vmul.f32 %v2690, %v2746
        %v2838 = vmul.f32 %v2691, %v2746
        %v2839 = vmul.f32 %v2692, %v2746
        %v2840 = vmul.f32 %v2693, %v2746
        %v2841 = vmul.f32 %v2694, %v2746
        %v2842 = vmul.f32 %v2695, %v2746
        %v2843 = vmul.f32 %v2696, %v2746
        %v2844 = vmul.f32 %v2697, %v2746
        %v2845 = vmul.f32 %v2698, %v2746
        %v2846 = vmul.f32 %v2699, %v2746
        %v2847 = vmul.f32 %v2700, %v2746
        %v2848 = vmul.f32 %v2701, %v2746
        %v2849 = vmul.f32 %v2702, %v2746
        %v2850 = vmul.f32 %v2703, %v2746
        %v2851 = vmul.f32 %v2704, %v2746
        %v2852 = vmul.f32 %v2705, %v2746
        %v2853 = vmul.f32 %v2706, %v2746
        %v2854 = vmul.f32 %v2707, %v2746
        %v2855 = vmul.f32 %v2708, %v2746
        %v2856 = vmul.f32 %v2709, %v2746
        %v2857 = vmul.f32 %v2710, %v2746
        %v2858 = vmul.f32 %v2711, %v2746
        %v2859 = vmul.f32 %v2712, %v2746
        %v2860 = vmul.f32 %v2713, %v2746
        %v2861 = vmul.f32 %v2714, %v2746
        %v2862 = vmul.f32 %v2715, %v2746
        %v2863 = vmul.f32 %v2716, %v2746
        %v2864 = vmul.f32 %v2717, %v2746
        %v2865 = vmul.f32 %v2718, %v2746
        %v2866 = vmul.f32 %v2719, %v2746
        %v2867 = vmul.f32 %v2720, %v2746
        %v2868 = vmul.f32 %v2721, %v2746
        %v2869 = vmul.f32 %v2722, %v2746
        %v2870 = vmul.f32 %v2723, %v2746
        %v2871 = vmul.f32 %v2724, %v2746
        %v2872 = vmul.f32 %v2725, %v2746
        %v2873 = vmul.f32 %v2726, %v2746
        %v2874 = vmul.f32 %v2727, %v2746
        %v2875 = vmul.f32 %v2728, %v2746
        %v2876 = vmul.f32 %v2729, %v2746
        %v2877 = vmul.f32 %v2730, %v2746
        %v2878 = vmul.f32 %v2731, %v2746
        %v2879 = vmul.f32 %v2732, %v2746
        %v2880 = vmul.f32 %v2733, %v2746
        %v2881 = vmul.f32 %v2734, %v2746
        %v2882 = vmul.f32 %v2735, %v2746
        %v2883 = vmul.f32 %v2736, %v2746
        %v2884 = vmul.f32 %v2737, %v2746
        %v2885 = vmul.f32 %v2738, %v2746
        %v2886 = vmul.f32 %v2739, %v2746
        %v2887 = vmul.f32 %v2740, %v2746
        %v2888 = vmul.f32 %v2741, %v2746
        %v2889 = vmul.f32 %v2742, %v2746
        %v2890 = vmul.f32 %v2743, %v2746
        %v2891 = vmul.f32 %v2744, %v2746
        %v2893 = vperm.slane %v2453, 0
        %v2895 = vadd.f32 %v2748, %v2893
        %v2896 = vadd.f32 %v2749, %v2893
        %v2897 = vadd.f32 %v2750, %v2893
        %v2898 = vadd.f32 %v2751, %v2893
        %v2899 = vadd.f32 %v2752, %v2893
        %v2900 = vadd.f32 %v2753, %v2893
        %v2901 = vadd.f32 %v2754, %v2893
        %v2902 = vadd.f32 %v2755, %v2893
        %v2903 = vadd.f32 %v2756, %v2893
        %v2904 = vadd.f32 %v2757, %v2893
        %v2905 = vadd.f32 %v2758, %v2893
        %v2906 = vadd.f32 %v2759, %v2893
        %v2907 = vadd.f32 %v2760, %v2893
        %v2908 = vadd.f32 %v2761, %v2893
        %v2909 = vadd.f32 %v2762, %v2893
        %v2910 = vadd.f32 %v2763, %v2893
        %v2911 = vadd.f32 %v2764, %v2893
        %v2912 = vadd.f32 %v2765, %v2893
        %v2913 = vadd.f32 %v2766, %v2893
        %v2914 = vadd.f32 %v2767, %v2893
        %v2915 = vadd.f32 %v2768, %v2893
        %v2916 = vadd.f32 %v2769, %v2893
        %v2917 = vadd.f32 %v2770, %v2893
        %v2918 = vadd.f32 %v2771, %v2893
        %v2919 = vadd.f32 %v2772, %v2893
        %v2920 = vadd.f32 %v2773, %v2893
        %v2921 = vadd.f32 %v2774, %v2893
        %v2922 = vadd.f32 %v2775, %v2893
        %v2923 = vadd.f32 %v2776, %v2893
        %v2924 = vadd.f32 %v2777, %v2893
        %v2925 = vadd.f32 %v2778, %v2893
        %v2926 = vadd.f32 %v2779, %v2893
        %v2927 = vadd.f32 %v2780, %v2893
        %v2928 = vadd.f32 %v2781, %v2893
        %v2929 = vadd.f32 %v2782, %v2893
        %v2930 = vadd.f32 %v2783, %v2893
        %v2931 = vadd.f32 %v2784, %v2893
        %v2932 = vadd.f32 %v2785, %v2893
        %v2933 = vadd.f32 %v2786, %v2893
        %v2934 = vadd.f32 %v2787, %v2893
        %v2935 = vadd.f32 %v2788, %v2893
        %v2936 = vadd.f32 %v2789, %v2893
        %v2937 = vadd.f32 %v2790, %v2893
        %v2938 = vadd.f32 %v2791, %v2893
        %v2939 = vadd.f32 %v2792, %v2893
        %v2940 = vadd.f32 %v2793, %v2893
        %v2941 = vadd.f32 %v2794, %v2893
        %v2942 = vadd.f32 %v2795, %v2893
        %v2943 = vadd.f32 %v2796, %v2893
        %v2944 = vadd.f32 %v2797, %v2893
        %v2945 = vadd.f32 %v2798, %v2893
        %v2946 = vadd.f32 %v2799, %v2893
        %v2947 = vadd.f32 %v2800, %v2893
        %v2948 = vadd.f32 %v2801, %v2893
        %v2949 = vadd.f32 %v2802, %v2893
        %v2950 = vadd.f32 %v2803, %v2893
        %v2951 = vadd.f32 %v2804, %v2893
        %v2952 = vadd.f32 %v2805, %v2893
        %v2953 = vadd.f32 %v2806, %v2893
        %v2954 = vadd.f32 %v2807, %v2893
        %v2955 = vadd.f32 %v2808, %v2893
        %v2956 = vadd.f32 %v2809, %v2893
        %v2957 = vadd.f32 %v2810, %v2893
        %v2958 = vadd.f32 %v2811, %v2893
        %v2959 = vadd.f32 %v2812, %v2893
        %v2960 = vadd.f32 %v2813, %v2893
        %v2961 = vadd.f32 %v2814, %v2893
        %v2962 = vadd.f32 %v2815, %v2893
        %v2963 = vadd.f32 %v2816, %v2893
        %v2964 = vadd.f32 %v2817, %v2893
        %v2965 = vadd.f32 %v2818, %v2893
        %v2966 = vadd.f32 %v2819, %v2893
        %v2967 = vadd.f32 %v2820, %v2893
        %v2968 = vadd.f32 %v2821, %v2893
        %v2969 = vadd.f32 %v2822, %v2893
        %v2970 = vadd.f32 %v2823, %v2893
        %v2971 = vadd.f32 %v2824, %v2893
        %v2972 = vadd.f32 %v2825, %v2893
        %v2973 = vadd.f32 %v2826, %v2893
        %v2974 = vadd.f32 %v2827, %v2893
        %v2975 = vadd.f32 %v2828, %v2893
        %v2976 = vadd.f32 %v2829, %v2893
        %v2977 = vadd.f32 %v2830, %v2893
        %v2978 = vadd.f32 %v2831, %v2893
        %v2979 = vadd.f32 %v2832, %v2893
        %v2980 = vadd.f32 %v2833, %v2893
        %v2981 = vadd.f32 %v2834, %v2893
        %v2982 = vadd.f32 %v2835, %v2893
        %v2983 = vadd.f32 %v2836, %v2893
        %v2984 = vadd.f32 %v2837, %v2893
        %v2985 = vadd.f32 %v2838, %v2893
        %v2986 = vadd.f32 %v2839, %v2893
        %v2987 = vadd.f32 %v2840, %v2893
        %v2988 = vadd.f32 %v2841, %v2893
        %v2989 = vadd.f32 %v2842, %v2893
        %v2990 = vadd.f32 %v2843, %v2893
        %v2991 = vadd.f32 %v2844, %v2893
        %v2992 = vadd.f32 %v2845, %v2893
        %v2993 = vadd.f32 %v2846, %v2893
        %v2994 = vadd.f32 %v2847, %v2893
        %v2995 = vadd.f32 %v2848, %v2893
        %v2996 = vadd.f32 %v2849, %v2893
        %v2997 = vadd.f32 %v2850, %v2893
        %v2998 = vadd.f32 %v2851, %v2893
        %v2999 = vadd.f32 %v2852, %v2893
        %v3000 = vadd.f32 %v2853, %v2893
        %v3001 = vadd.f32 %v2854, %v2893
        %v3002 = vadd.f32 %v2855, %v2893
        %v3003 = vadd.f32 %v2856, %v2893
        %v3004 = vadd.f32 %v2857, %v2893
        %v3005 = vadd.f32 %v2858, %v2893
        %v3006 = vadd.f32 %v2859, %v2893
        %v3007 = vadd.f32 %v2860, %v2893
        %v3008 = vadd.f32 %v2861, %v2893
        %v3009 = vadd.f32 %v2862, %v2893
        %v3010 = vadd.f32 %v2863, %v2893
        %v3011 = vadd.f32 %v2864, %v2893
        %v3012 = vadd.f32 %v2865, %v2893
        %v3013 = vadd.f32 %v2866, %v2893
        %v3014 = vadd.f32 %v2867, %v2893
        %v3015 = vadd.f32 %v2868, %v2893
        %v3016 = vadd.f32 %v2869, %v2893
        %v3017 = vadd.f32 %v2870, %v2893
        %v3018 = vadd.f32 %v2871, %v2893
        %v3019 = vadd.f32 %v2872, %v2893
        %v3020 = vadd.f32 %v2873, %v2893
        %v3021 = vadd.f32 %v2874, %v2893
        %v3022 = vadd.f32 %v2875, %v2893
        %v3023 = vadd.f32 %v2876, %v2893
        %v3024 = vadd.f32 %v2877, %v2893
        %v3025 = vadd.f32 %v2878, %v2893
        %v3026 = vadd.f32 %v2879, %v2893
        %v3027 = vadd.f32 %v2880, %v2893
        %v3028 = vadd.f32 %v2881, %v2893
        %v3029 = vadd.f32 %v2882, %v2893
        %v3030 = vadd.f32 %v2883, %v2893
        %v3031 = vadd.f32 %v2884, %v2893
        %v3032 = vadd.f32 %v2885, %v2893
        %v3033 = vadd.f32 %v2886, %v2893
        %v3034 = vadd.f32 %v2887, %v2893
        %v3035 = vadd.f32 %v2888, %v2893
        %v3036 = vadd.f32 %v2889, %v2893
        %v3037 = vadd.f32 %v2890, %v2893
        %v3038 = vadd.f32 %v2891, %v2893
        %v3039 = vmax.f32 %v2895, 0.0
        %v3040 = vmax.f32 %v2896, 0.0
        %v3041 = vmax.f32 %v2897, 0.0
        %v3042 = vmax.f32 %v2898, 0.0
        %v3043 = vmax.f32 %v2899, 0.0
        %v3044 = vmax.f32 %v2900, 0.0
        %v3045 = vmax.f32 %v2901, 0.0
        %v3046 = vmax.f32 %v2902, 0.0
        %v3047 = vmax.f32 %v2903, 0.0
        %v3048 = vmax.f32 %v2904, 0.0
        %v3049 = vmax.f32 %v2905, 0.0
        %v3050 = vmax.f32 %v2906, 0.0
        %v3051 = vmax.f32 %v2907, 0.0
        %v3052 = vmax.f32 %v2908, 0.0
        %v3053 = vmax.f32 %v2909, 0.0
        %v3054 = vmax.f32 %v2910, 0.0
        %v3055 = vmax.f32 %v2911, 0.0
        %v3056 = vmax.f32 %v2912, 0.0
        %v3057 = vmax.f32 %v2913, 0.0
        %v3058 = vmax.f32 %v2914, 0.0
        %v3059 = vmax.f32 %v2915, 0.0
        %v3060 = vmax.f32 %v2916, 0.0
        %v3061 = vmax.f32 %v2917, 0.0
        %v3062 = vmax.f32 %v2918, 0.0
        %v3063 = vmax.f32 %v2919, 0.0
        %v3064 = vmax.f32 %v2920, 0.0
        %v3065 = vmax.f32 %v2921, 0.0
        %v3066 = vmax.f32 %v2922, 0.0
        %v3067 = vmax.f32 %v2923, 0.0
        %v3068 = vmax.f32 %v2924, 0.0
        %v3069 = vmax.f32 %v2925, 0.0
        %v3070 = vmax.f32 %v2926, 0.0
        %v3071 = vmax.f32 %v2927, 0.0
        %v3072 = vmax.f32 %v2928, 0.0
        %v3073 = vmax.f32 %v2929, 0.0
        %v3074 = vmax.f32 %v2930, 0.0
        %v3075 = vmax.f32 %v2931, 0.0
        %v3076 = vmax.f32 %v2932, 0.0
        %v3077 = vmax.f32 %v2933, 0.0
        %v3078 = vmax.f32 %v2934, 0.0
        %v3079 = vmax.f32 %v2935, 0.0
        %v3080 = vmax.f32 %v2936, 0.0
        %v3081 = vmax.f32 %v2937, 0.0
        %v3082 = vmax.f32 %v2938, 0.0
        %v3083 = vmax.f32 %v2939, 0.0
        %v3084 = vmax.f32 %v2940, 0.0
        %v3085 = vmax.f32 %v2941, 0.0
        %v3086 = vmax.f32 %v2942, 0.0
        %v3087 = vmax.f32 %v2943, 0.0
        %v3088 = vmax.f32 %v2944, 0.0
        %v3089 = vmax.f32 %v2945, 0.0
        %v3090 = vmax.f32 %v2946, 0.0
        %v3091 = vmax.f32 %v2947, 0.0
        %v3092 = vmax.f32 %v2948, 0.0
        %v3093 = vmax.f32 %v2949, 0.0
        %v3094 = vmax.f32 %v2950, 0.0
        %v3095 = vmax.f32 %v2951, 0.0
        %v3096 = vmax.f32 %v2952, 0.0
        %v3097 = vmax.f32 %v2953, 0.0
        %v3098 = vmax.f32 %v2954, 0.0
        %v3099 = vmax.f32 %v2955, 0.0
        %v3100 = vmax.f32 %v2956, 0.0
        %v3101 = vmax.f32 %v2957, 0.0
        %v3102 = vmax.f32 %v2958, 0.0
        %v3103 = vmax.f32 %v2959, 0.0
        %v3104 = vmax.f32 %v2960, 0.0
        %v3105 = vmax.f32 %v2961, 0.0
        %v3106 = vmax.f32 %v2962, 0.0
        %v3107 = vmax.f32 %v2963, 0.0
        %v3108 = vmax.f32 %v2964, 0.0
        %v3109 = vmax.f32 %v2965, 0.0
        %v3110 = vmax.f32 %v2966, 0.0
        %v3111 = vmax.f32 %v2967, 0.0
        %v3112 = vmax.f32 %v2968, 0.0
        %v3113 = vmax.f32 %v2969, 0.0
        %v3114 = vmax.f32 %v2970, 0.0
        %v3115 = vmax.f32 %v2971, 0.0
        %v3116 = vmax.f32 %v2972, 0.0
        %v3117 = vmax.f32 %v2973, 0.0
        %v3118 = vmax.f32 %v2974, 0.0
        %v3119 = vmax.f32 %v2975, 0.0
        %v3120 = vmax.f32 %v2976, 0.0
        %v3121 = vmax.f32 %v2977, 0.0
        %v3122 = vmax.f32 %v2978, 0.0
        %v3123 = vmax.f32 %v2979, 0.0
        %v3124 = vmax.f32 %v2980, 0.0
        %v3125 = vmax.f32 %v2981, 0.0
        %v3126 = vmax.f32 %v2982, 0.0
        %v3127 = vmax.f32 %v2983, 0.0
        %v3128 = vmax.f32 %v2984, 0.0
        %v3129 = vmax.f32 %v2985, 0.0
        %v3130 = vmax.f32 %v2986, 0.0
        %v3131 = vmax.f32 %v2987, 0.0
        %v3132 = vmax.f32 %v2988, 0.0
        %v3133 = vmax.f32 %v2989, 0.0
        %v3134 = vmax.f32 %v2990, 0.0
        %v3135 = vmax.f32 %v2991, 0.0
        %v3136 = vmax.f32 %v2992, 0.0
        %v3137 = vmax.f32 %v2993, 0.0
        %v3138 = vmax.f32 %v2994, 0.0
        %v3139 = vmax.f32 %v2995, 0.0
        %v3140 = vmax.f32 %v2996, 0.0
        %v3141 = vmax.f32 %v2997, 0.0
        %v3142 = vmax.f32 %v2998, 0.0
        %v3143 = vmax.f32 %v2999, 0.0
        %v3144 = vmax.f32 %v3000, 0.0
        %v3145 = vmax.f32 %v3001, 0.0
        %v3146 = vmax.f32 %v3002, 0.0
        %v3147 = vmax.f32 %v3003, 0.0
        %v3148 = vmax.f32 %v3004, 0.0
        %v3149 = vmax.f32 %v3005, 0.0
        %v3150 = vmax.f32 %v3006, 0.0
        %v3151 = vmax.f32 %v3007, 0.0
        %v3152 = vmax.f32 %v3008, 0.0
        %v3153 = vmax.f32 %v3009, 0.0
        %v3154 = vmax.f32 %v3010, 0.0
        %v3155 = vmax.f32 %v3011, 0.0
        %v3156 = vmax.f32 %v3012, 0.0
        %v3157 = vmax.f32 %v3013, 0.0
        %v3158 = vmax.f32 %v3014, 0.0
        %v3159 = vmax.f32 %v3015, 0.0
        %v3160 = vmax.f32 %v3016, 0.0
        %v3161 = vmax.f32 %v3017, 0.0
        %v3162 = vmax.f32 %v3018, 0.0
        %v3163 = vmax.f32 %v3019, 0.0
        %v3164 = vmax.f32 %v3020, 0.0
        %v3165 = vmax.f32 %v3021, 0.0
        %v3166 = vmax.f32 %v3022, 0.0
        %v3167 = vmax.f32 %v3023, 0.0
        %v3168 = vmax.f32 %v3024, 0.0
        %v3169 = vmax.f32 %v3025, 0.0
        %v3170 = vmax.f32 %v3026, 0.0
        %v3171 = vmax.f32 %v3027, 0.0
        %v3172 = vmax.f32 %v3028, 0.0
        %v3173 = vmax.f32 %v3029, 0.0
        %v3174 = vmax.f32 %v3030, 0.0
        %v3175 = vmax.f32 %v3031, 0.0
        %v3176 = vmax.f32 %v3032, 0.0
        %v3177 = vmax.f32 %v3033, 0.0
        %v3178 = vmax.f32 %v3034, 0.0
        %v3179 = vmax.f32 %v3035, 0.0
        %v3180 = vmax.f32 %v3036, 0.0
        %v3181 = vmax.f32 %v3037, 0.0
        %v3182 = vmax.f32 %v3038, 0.0
        %v3183 = vmax.f32 %v3039, %v3042
        %v3184 = vmax.f32 %v3040, %v3043
        %v3185 = vmax.f32 %v3041, %v3044
        %v3186 = vmax.f32 %v3045, %v3048
        %v3187 = vmax.f32 %v3046, %v3049
        %v3188 = vmax.f32 %v3047, %v3050
        %v3189 = vmax.f32 %v3051, %v3054
        %v3190 = vmax.f32 %v3052, %v3055
        %v3191 = vmax.f32 %v3053, %v3056
        %v3192 = vmax.f32 %v3057, %v3060
        %v3193 = vmax.f32 %v3058, %v3061
        %v3194 = vmax.f32 %v3059, %v3062
        %v3195 = vmax.f32 %v3063, %v3066
        %v3196 = vmax.f32 %v3064, %v3067
        %v3197 = vmax.f32 %v3065, %v3068
        %v3198 = vmax.f32 %v3069, %v3072
        %v3199 = vmax.f32 %v3070, %v3073
        %v3200 = vmax.f32 %v3071, %v3074
        %v3201 = vmax.f32 %v3075, %v3078
        %v3202 = vmax.f32 %v3076, %v3079
        %v3203 = vmax.f32 %v3077, %v3080
        %v3204 = vmax.f32 %v3081, %v3084
        %v3205 = vmax.f32 %v3082, %v3085
        %v3206 = vmax.f32 %v3083, %v3086
        %v3207 = vmax.f32 %v3087, %v3090
        %v3208 = vmax.f32 %v3088, %v3091
        %v3209 = vmax.f32 %v3089, %v3092
        %v3210 = vmax.f32 %v3093, %v3096
        %v3211 = vmax.f32 %v3094, %v3097
        %v3212 = vmax.f32 %v3095, %v3098
        %v3213 = vmax.f32 %v3099, %v3102
        %v3214 = vmax.f32 %v3100, %v3103
        %v3215 = vmax.f32 %v3101, %v3104
        %v3216 = vmax.f32 %v3105, %v3108
        %v3217 = vmax.f32 %v3106, %v3109
        %v3218 = vmax.f32 %v3107, %v3110
        %v3219 = vmax.f32 %v3111, %v3114
        %v3220 = vmax.f32 %v3112, %v3115
        %v3221 = vmax.f32 %v3113, %v3116
        %v3222 = vmax.f32 %v3117, %v3120
        %v3223 = vmax.f32 %v3118, %v3121
        %v3224 = vmax.f32 %v3119, %v3122
        %v3225 = vmax.f32 %v3123, %v3126
        %v3226 = vmax.f32 %v3124, %v3127
        %v3227 = vmax.f32 %v3125, %v3128
        %v3228 = vmax.f32 %v3129, %v3132
        %v3229 = vmax.f32 %v3130, %v3133
        %v3230 = vmax.f32 %v3131, %v3134
        %v3231 = vmax.f32 %v3135, %v3138
        %v3232 = vmax.f32 %v3136, %v3139
        %v3233 = vmax.f32 %v3137, %v3140
        %v3234 = vmax.f32 %v3141, %v3144
        %v3235 = vmax.f32 %v3142, %v3145
        %v3236 = vmax.f32 %v3143, %v3146
        %v3237 = vmax.f32 %v3147, %v3150
        %v3238 = vmax.f32 %v3148, %v3151
        %v3239 = vmax.f32 %v3149, %v3152
        %v3240 = vmax.f32 %v3153, %v3156
        %v3241 = vmax.f32 %v3154, %v3157
        %v3242 = vmax.f32 %v3155, %v3158
        %v3243 = vmax.f32 %v3159, %v3162
        %v3244 = vmax.f32 %v3160, %v3163
        %v3245 = vmax.f32 %v3161, %v3164
        %v3246 = vmax.f32 %v3165, %v3168
        %v3247 = vmax.f32 %v3166, %v3169
        %v3248 = vmax.f32 %v3167, %v3170
        %v3249 = vmax.f32 %v3171, %v3174
        %v3250 = vmax.f32 %v3172, %v3175
        %v3251 = vmax.f32 %v3173, %v3176
        %v3252 = vmax.f32 %v3177, %v3180
        %v3253 = vmax.f32 %v3178, %v3181
        %v3254 = vmax.f32 %v3179, %v3182
        %v3279 = vrot.slane %v3183, 1
        %v3280 = vrot.slane %v3186, 1
        %v3281 = vrot.slane %v3189, 1
        %v3282 = vrot.slane %v3192, 1
        %v3283 = vrot.slane %v3195, 1
        %v3284 = vrot.slane %v3198, 1
        %v3285 = vrot.slane %v3201, 1
        %v3286 = vrot.slane %v3204, 1
        %v3287 = vrot.slane %v3207, 1
        %v3288 = vrot.slane %v3210, 1
        %v3289 = vrot.slane %v3213, 1
        %v3290 = vrot.slane %v3216, 1
        %v3291 = vrot.slane %v3219, 1
        %v3292 = vrot.slane %v3222, 1
        %v3293 = vrot.slane %v3225, 1
        %v3294 = vrot.slane %v3228, 1
        %v3295 = vrot.slane %v3231, 1
        %v3296 = vrot.slane %v3234, 1
        %v3297 = vrot.slane %v3237, 1
        %v3298 = vrot.slane %v3240, 1
        %v3299 = vrot.slane %v3243, 1
        %v3300 = vrot.slane %v3246, 1
        %v3301 = vrot.slane %v3249, 1
        %v3302 = vrot.slane %v3252, 1
        %v3327 = vrot.slane %v3183, 2
        %v3328 = vrot.slane %v3186, 2
        %v3329 = vrot.slane %v3189, 2
        %v3330 = vrot.slane %v3192, 2
        %v3331 = vrot.slane %v3195, 2
        %v3332 = vrot.slane %v3198, 2
        %v3333 = vrot.slane %v3201, 2
        %v3334 = vrot.slane %v3204, 2
        %v3335 = vrot.slane %v3207, 2
        %v3336 = vrot.slane %v3210, 2
        %v3337 = vrot.slane %v3213, 2
        %v3338 = vrot.slane %v3216, 2
        %v3339 = vrot.slane %v3219, 2
        %v3340 = vrot.slane %v3222, 2
        %v3341 = vrot.slane %v3225, 2
        %v3342 = vrot.slane %v3228, 2
        %v3343 = vrot.slane %v3231, 2
        %v3344 = vrot.slane %v3234, 2
        %v3345 = vrot.slane %v3237, 2
        %v3346 = vrot.slane %v3240, 2
        %v3347 = vrot.slane %v3243, 2
        %v3348 = vrot.slane %v3246, 2
        %v3349 = vrot.slane %v3249, 2
        %v3350 = vrot.slane %v3252, 2
        %v3375 = vrot.slane %v3183, 3
        %v3376 = vrot.slane %v3186, 3
        %v3377 = vrot.slane %v3189, 3
        %v3378 = vrot.slane %v3192, 3
        %v3379 = vrot.slane %v3195, 3
        %v3380 = vrot.slane %v3198, 3
        %v3381 = vrot.slane %v3201, 3
        %v3382 = vrot.slane %v3204, 3
        %v3383 = vrot.slane %v3207, 3
        %v3384 = vrot.slane %v3210, 3
        %v3385 = vrot.slane %v3213, 3
        %v3386 = vrot.slane %v3216, 3
        %v3387 = vrot.slane %v3219, 3
        %v3388 = vrot.slane %v3222, 3
        %v3389 = vrot.slane %v3225, 3
        %v3390 = vrot.slane %v3228, 3
        %v3391 = vrot.slane %v3231, 3
        %v3392 = vrot.slane %v3234, 3
        %v3393 = vrot.slane %v3237, 3
        %v3394 = vrot.slane %v3240, 3
        %v3395 = vrot.slane %v3243, 3
        %v3396 = vrot.slane %v3246, 3
        %v3397 = vrot.slane %v3249, 3
        %v3398 = vrot.slane %v3252, 3
        %v3447 = vrot.slane %v3184, 4
        %v3448 = vrot.slane %v3187, 4
        %v3449 = vrot.slane %v3190, 4
        %v3450 = vrot.slane %v3193, 4
        %v3451 = vrot.slane %v3196, 4
        %v3452 = vrot.slane %v3199, 4
        %v3453 = vrot.slane %v3202, 4
        %v3454 = vrot.slane %v3205, 4
        %v3455 = vrot.slane %v3208, 4
        %v3456 = vrot.slane %v3211, 4
        %v3457 = vrot.slane %v3214, 4
        %v3458 = vrot.slane %v3217, 4
        %v3459 = vrot.slane %v3220, 4
        %v3460 = vrot.slane %v3223, 4
        %v3461 = vrot.slane %v3226, 4
        %v3462 = vrot.slane %v3229, 4
        %v3463 = vrot.slane %v3232, 4
        %v3464 = vrot.slane %v3235, 4
        %v3465 = vrot.slane %v3238, 4
        %v3466 = vrot.slane %v3241, 4
        %v3467 = vrot.slane %v3244, 4
        %v3468 = vrot.slane %v3247, 4
        %v3469 = vrot.slane %v3250, 4
        %v3470 = vrot.slane %v3253, 4
        %v3495 = vrot.slane %v3184, 5
        %v3496 = vrot.slane %v3187, 5
        %v3497 = vrot.slane %v3190, 5
        %v3498 = vrot.slane %v3193, 5
        %v3499 = vrot.slane %v3196, 5
        %v3500 = vrot.slane %v3199, 5
        %v3501 = vrot.slane %v3202, 5
        %v3502 = vrot.slane %v3205, 5
        %v3503 = vrot.slane %v3208, 5
        %v3504 = vrot.slane %v3211, 5
        %v3505 = vrot.slane %v3214, 5
        %v3506 = vrot.slane %v3217, 5
        %v3507 = vrot.slane %v3220, 5
        %v3508 = vrot.slane %v3223, 5
        %v3509 = vrot.slane %v3226, 5
        %v3510 = vrot.slane %v3229, 5
        %v3511 = vrot.slane %v3232, 5
        %v3512 = vrot.slane %v3235, 5
        %v3513 = vrot.slane %v3238, 5
        %v3514 = vrot.slane %v3241, 5
        %v3515 = vrot.slane %v3244, 5
        %v3516 = vrot.slane %v3247, 5
        %v3517 = vrot.slane %v3250, 5
        %v3518 = vrot.slane %v3253, 5
        %v3543 = vrot.slane %v3184, 6
        %v3544 = vrot.slane %v3187, 6
        %v3545 = vrot.slane %v3190, 6
        %v3546 = vrot.slane %v3193, 6
        %v3547 = vrot.slane %v3196, 6
        %v3548 = vrot.slane %v3199, 6
        %v3549 = vrot.slane %v3202, 6
        %v3550 = vrot.slane %v3205, 6
        %v3551 = vrot.slane %v3208, 6
        %v3552 = vrot.slane %v3211, 6
        %v3553 = vrot.slane %v3214, 6
        %v3554 = vrot.slane %v3217, 6
        %v3555 = vrot.slane %v3220, 6
        %v3556 = vrot.slane %v3223, 6
        %v3557 = vrot.slane %v3226, 6
        %v3558 = vrot.slane %v3229, 6
        %v3559 = vrot.slane %v3232, 6
        %v3560 = vrot.slane %v3235, 6
        %v3561 = vrot.slane %v3238, 6
        %v3562 = vrot.slane %v3241, 6
        %v3563 = vrot.slane %v3244, 6
        %v3564 = vrot.slane %v3247, 6
        %v3565 = vrot.slane %v3250, 6
        %v3566 = vrot.slane %v3253, 6
        %v3591 = vrot.slane %v3184, 7
        %v3592 = vrot.slane %v3187, 7
        %v3593 = vrot.slane %v3190, 7
        %v3594 = vrot.slane %v3193, 7
        %v3595 = vrot.slane %v3196, 7
        %v3596 = vrot.slane %v3199, 7
        %v3597 = vrot.slane %v3202, 7
        %v3598 = vrot.slane %v3205, 7
        %v3599 = vrot.slane %v3208, 7
        %v3600 = vrot.slane %v3211, 7
        %v3601 = vrot.slane %v3214, 7
        %v3602 = vrot.slane %v3217, 7
        %v3603 = vrot.slane %v3220, 7
        %v3604 = vrot.slane %v3223, 7
        %v3605 = vrot.slane %v3226, 7
        %v3606 = vrot.slane %v3229, 7
        %v3607 = vrot.slane %v3232, 7
        %v3608 = vrot.slane %v3235, 7
        %v3609 = vrot.slane %v3238, 7
        %v3610 = vrot.slane %v3241, 7
        %v3611 = vrot.slane %v3244, 7
        %v3612 = vrot.slane %v3247, 7
        %v3613 = vrot.slane %v3250, 7
        %v3614 = vrot.slane %v3253, 7
        %v3663 = vrot.slane %v3185, 1
        %v3664 = vrot.slane %v3188, 1
        %v3665 = vrot.slane %v3191, 1
        %v3666 = vrot.slane %v3194, 1
        %v3667 = vrot.slane %v3197, 1
        %v3668 = vrot.slane %v3200, 1
        %v3669 = vrot.slane %v3203, 1
        %v3670 = vrot.slane %v3206, 1
        %v3671 = vrot.slane %v3209, 1
        %v3672 = vrot.slane %v3212, 1
        %v3673 = vrot.slane %v3215, 1
        %v3674 = vrot.slane %v3218, 1
        %v3675 = vrot.slane %v3221, 1
        %v3676 = vrot.slane %v3224, 1
        %v3677 = vrot.slane %v3227, 1
        %v3678 = vrot.slane %v3230, 1
        %v3679 = vrot.slane %v3233, 1
        %v3680 = vrot.slane %v3236, 1
        %v3681 = vrot.slane %v3239, 1
        %v3682 = vrot.slane %v3242, 1
        %v3683 = vrot.slane %v3245, 1
        %v3684 = vrot.slane %v3248, 1
        %v3685 = vrot.slane %v3251, 1
        %v3686 = vrot.slane %v3254, 1
        %v3711 = vrot.slane %v3185, 2
        %v3712 = vrot.slane %v3188, 2
        %v3713 = vrot.slane %v3191, 2
        %v3714 = vrot.slane %v3194, 2
        %v3715 = vrot.slane %v3197, 2
        %v3716 = vrot.slane %v3200, 2
        %v3717 = vrot.slane %v3203, 2
        %v3718 = vrot.slane %v3206, 2
        %v3719 = vrot.slane %v3209, 2
        %v3720 = vrot.slane %v3212, 2
        %v3721 = vrot.slane %v3215, 2
        %v3722 = vrot.slane %v3218, 2
        %v3723 = vrot.slane %v3221, 2
        %v3724 = vrot.slane %v3224, 2
        %v3725 = vrot.slane %v3227, 2
        %v3726 = vrot.slane %v3230, 2
        %v3727 = vrot.slane %v3233, 2
        %v3728 = vrot.slane %v3236, 2
        %v3729 = vrot.slane %v3239, 2
        %v3730 = vrot.slane %v3242, 2
        %v3731 = vrot.slane %v3245, 2
        %v3732 = vrot.slane %v3248, 2
        %v3733 = vrot.slane %v3251, 2
        %v3734 = vrot.slane %v3254, 2
        %v3759 = vrot.slane %v3185, 3
        %v3760 = vrot.slane %v3188, 3
        %v3761 = vrot.slane %v3191, 3
        %v3762 = vrot.slane %v3194, 3
        %v3763 = vrot.slane %v3197, 3
        %v3764 = vrot.slane %v3200, 3
        %v3765 = vrot.slane %v3203, 3
        %v3766 = vrot.slane %v3206, 3
        %v3767 = vrot.slane %v3209, 3
        %v3768 = vrot.slane %v3212, 3
        %v3769 = vrot.slane %v3215, 3
        %v3770 = vrot.slane %v3218, 3
        %v3771 = vrot.slane %v3221, 3
        %v3772 = vrot.slane %v3224, 3
        %v3773 = vrot.slane %v3227, 3
        %v3774 = vrot.slane %v3230, 3
        %v3775 = vrot.slane %v3233, 3
        %v3776 = vrot.slane %v3236, 3
        %v3777 = vrot.slane %v3239, 3
        %v3778 = vrot.slane %v3242, 3
        %v3779 = vrot.slane %v3245, 3
        %v3780 = vrot.slane %v3248, 3
        %v3781 = vrot.slane %v3251, 3
        %v3782 = vrot.slane %v3254, 3
        %vm3807 = vcmask 1040384
        %v3808 = vsel %vm3807, %v3183, %v3279
        %v3809 = vsel %vm3807, %v3186, %v3280
        %v3810 = vsel %vm3807, %v3189, %v3281
        %v3811 = vsel %vm3807, %v3192, %v3282
        %v3812 = vsel %vm3807, %v3195, %v3283
        %v3813 = vsel %vm3807, %v3198, %v3284
        %v3814 = vsel %vm3807, %v3201, %v3285
        %v3815 = vsel %vm3807, %v3204, %v3286
        %v3816 = vsel %vm3807, %v3207, %v3287
        %v3817 = vsel %vm3807, %v3210, %v3288
        %v3818 = vsel %vm3807, %v3213, %v3289
        %v3819 = vsel %vm3807, %v3216, %v3290
        %v3820 = vsel %vm3807, %v3219, %v3291
        %v3821 = vsel %vm3807, %v3222, %v3292
        %v3822 = vsel %vm3807, %v3225, %v3293
        %v3823 = vsel %vm3807, %v3228, %v3294
        %v3824 = vsel %vm3807, %v3231, %v3295
        %v3825 = vsel %vm3807, %v3234, %v3296
        %v3826 = vsel %vm3807, %v3237, %v3297
        %v3827 = vsel %vm3807, %v3240, %v3298
        %v3828 = vsel %vm3807, %v3243, %v3299
        %v3829 = vsel %vm3807, %v3246, %v3300
        %v3830 = vsel %vm3807, %v3249, %v3301
        %v3831 = vsel %vm3807, %v3252, %v3302
        %vm3832 = vcmask 1041408
        %v3833 = vsel %vm3832, %v3808, %v3327
        %v3834 = vsel %vm3832, %v3809, %v3328
        %v3835 = vsel %vm3832, %v3810, %v3329
        %v3836 = vsel %vm3832, %v3811, %v3330
        %v3837 = vsel %vm3832, %v3812, %v3331
        %v3838 = vsel %vm3832, %v3813, %v3332
        %v3839 = vsel %vm3832, %v3814, %v3333
        %v3840 = vsel %vm3832, %v3815, %v3334
        %v3841 = vsel %vm3832, %v3816, %v3335
        %v3842 = vsel %vm3832, %v3817, %v3336
        %v3843 = vsel %vm3832, %v3818, %v3337
        %v3844 = vsel %vm3832, %v3819, %v3338
        %v3845 = vsel %vm3832, %v3820, %v3339
        %v3846 = vsel %vm3832, %v3821, %v3340
        %v3847 = vsel %vm3832, %v3822, %v3341
        %v3848 = vsel %vm3832, %v3823, %v3342
        %v3849 = vsel %vm3832, %v3824, %v3343
        %v3850 = vsel %vm3832, %v3825, %v3344
        %v3851 = vsel %vm3832, %v3826, %v3345
        %v3852 = vsel %vm3832, %v3827, %v3346
        %v3853 = vsel %vm3832, %v3828, %v3347
        %v3854 = vsel %vm3832, %v3829, %v3348
        %v3855 = vsel %vm3832, %v3830, %v3349
        %v3856 = vsel %vm3832, %v3831, %v3350
        %vm3857 = vcmask 1042432
        %v3858 = vsel %vm3857, %v3833, %v3375
        %v3859 = vsel %vm3857, %v3834, %v3376
        %v3860 = vsel %vm3857, %v3835, %v3377
        %v3861 = vsel %vm3857, %v3836, %v3378
        %v3862 = vsel %vm3857, %v3837, %v3379
        %v3863 = vsel %vm3857, %v3838, %v3380
        %v3864 = vsel %vm3857, %v3839, %v3381
        %v3865 = vsel %vm3857, %v3840, %v3382
        %v3866 = vsel %vm3857, %v3841, %v3383
        %v3867 = vsel %vm3857, %v3842, %v3384
        %v3868 = vsel %vm3857, %v3843, %v3385
        %v3869 = vsel %vm3857, %v3844, %v3386
        %v3870 = vsel %vm3857, %v3845, %v3387
        %v3871 = vsel %vm3857, %v3846, %v3388
        %v3872 = vsel %vm3857, %v3847, %v3389
        %v3873 = vsel %vm3857, %v3848, %v3390
        %v3874 = vsel %vm3857, %v3849, %v3391
        %v3875 = vsel %vm3857, %v3850, %v3392
        %v3876 = vsel %vm3857, %v3851, %v3393
        %v3877 = vsel %vm3857, %v3852, %v3394
        %v3878 = vsel %vm3857, %v3853, %v3395
        %v3879 = vsel %vm3857, %v3854, %v3396
        %v3880 = vsel %vm3857, %v3855, %v3397
        %v3881 = vsel %vm3857, %v3856, %v3398
        %vm3882 = vcmask 1043456
        %v3883 = vsel %vm3882, %v3858, %v3447
        %v3884 = vsel %vm3882, %v3859, %v3448
        %v3885 = vsel %vm3882, %v3860, %v3449
        %v3886 = vsel %vm3882, %v3861, %v3450
        %v3887 = vsel %vm3882, %v3862, %v3451
        %v3888 = vsel %vm3882, %v3863, %v3452
        %v3889 = vsel %vm3882, %v3864, %v3453
        %v3890 = vsel %vm3882, %v3865, %v3454
        %v3891 = vsel %vm3882, %v3866, %v3455
        %v3892 = vsel %vm3882, %v3867, %v3456
        %v3893 = vsel %vm3882, %v3868, %v3457
        %v3894 = vsel %vm3882, %v3869, %v3458
        %v3895 = vsel %vm3882, %v3870, %v3459
        %v3896 = vsel %vm3882, %v3871, %v3460
        %v3897 = vsel %vm3882, %v3872, %v3461
        %v3898 = vsel %vm3882, %v3873, %v3462
        %v3899 = vsel %vm3882, %v3874, %v3463
        %v3900 = vsel %vm3882, %v3875, %v3464
        %v3901 = vsel %vm3882, %v3876, %v3465
        %v3902 = vsel %vm3882, %v3877, %v3466
        %v3903 = vsel %vm3882, %v3878, %v3467
        %v3904 = vsel %vm3882, %v3879, %v3468
        %v3905 = vsel %vm3882, %v3880, %v3469
        %v3906 = vsel %vm3882, %v3881, %v3470
        %vm3907 = vcmask 1044480
        %v3908 = vsel %vm3907, %v3883, %v3495
        %v3909 = vsel %vm3907, %v3884, %v3496
        %v3910 = vsel %vm3907, %v3885, %v3497
        %v3911 = vsel %vm3907, %v3886, %v3498
        %v3912 = vsel %vm3907, %v3887, %v3499
        %v3913 = vsel %vm3907, %v3888, %v3500
        %v3914 = vsel %vm3907, %v3889, %v3501
        %v3915 = vsel %vm3907, %v3890, %v3502
        %v3916 = vsel %vm3907, %v3891, %v3503
        %v3917 = vsel %vm3907, %v3892, %v3504
        %v3918 = vsel %vm3907, %v3893, %v3505
        %v3919 = vsel %vm3907, %v3894, %v3506
        %v3920 = vsel %vm3907, %v3895, %v3507
        %v3921 = vsel %vm3907, %v3896, %v3508
        %v3922 = vsel %vm3907, %v3897, %v3509
        %v3923 = vsel %vm3907, %v3898, %v3510
        %v3924 = vsel %vm3907, %v3899, %v3511
        %v3925 = vsel %vm3907, %v3900, %v3512
        %v3926 = vsel %vm3907, %v3901, %v3513
        %v3927 = vsel %vm3907, %v3902, %v3514
        %v3928 = vsel %vm3907, %v3903, %v3515
        %v3929 = vsel %vm3907, %v3904, %v3516
        %v3930 = vsel %vm3907, %v3905, %v3517
        %v3931 = vsel %vm3907, %v3906, %v3518
        %vm3932 = vcmask 1045504
        %v3933 = vsel %vm3932, %v3908, %v3543
        %v3934 = vsel %vm3932, %v3909, %v3544
        %v3935 = vsel %vm3932, %v3910, %v3545
        %v3936 = vsel %vm3932, %v3911, %v3546
        %v3937 = vsel %vm3932, %v3912, %v3547
        %v3938 = vsel %vm3932, %v3913, %v3548
        %v3939 = vsel %vm3932, %v3914, %v3549
        %v3940 = vsel %vm3932, %v3915, %v3550
        %v3941 = vsel %vm3932, %v3916, %v3551
        %v3942 = vsel %vm3932, %v3917, %v3552
        %v3943 = vsel %vm3932, %v3918, %v3553
        %v3944 = vsel %vm3932, %v3919, %v3554
        %v3945 = vsel %vm3932, %v3920, %v3555
        %v3946 = vsel %vm3932, %v3921, %v3556
        %v3947 = vsel %vm3932, %v3922, %v3557
        %v3948 = vsel %vm3932, %v3923, %v3558
        %v3949 = vsel %vm3932, %v3924, %v3559
        %v3950 = vsel %vm3932, %v3925, %v3560
        %v3951 = vsel %vm3932, %v3926, %v3561
        %v3952 = vsel %vm3932, %v3927, %v3562
        %v3953 = vsel %vm3932, %v3928, %v3563
        %v3954 = vsel %vm3932, %v3929, %v3564
        %v3955 = vsel %vm3932, %v3930, %v3565
        %v3956 = vsel %vm3932, %v3931, %v3566
        %vm3957 = vcmask 1046528
        %v3958 = vsel %vm3957, %v3933, %v3591
        %v3959 = vsel %vm3957, %v3934, %v3592
        %v3960 = vsel %vm3957, %v3935, %v3593
        %v3961 = vsel %vm3957, %v3936, %v3594
        %v3962 = vsel %vm3957, %v3937, %v3595
        %v3963 = vsel %vm3957, %v3938, %v3596
        %v3964 = vsel %vm3957, %v3939, %v3597
        %v3965 = vsel %vm3957, %v3940, %v3598
        %v3966 = vsel %vm3957, %v3941, %v3599
        %v3967 = vsel %vm3957, %v3942, %v3600
        %v3968 = vsel %vm3957, %v3943, %v3601
        %v3969 = vsel %vm3957, %v3944, %v3602
        %v3970 = vsel %vm3957, %v3945, %v3603
        %v3971 = vsel %vm3957, %v3946, %v3604
        %v3972 = vsel %vm3957, %v3947, %v3605
        %v3973 = vsel %vm3957, %v3948, %v3606
        %v3974 = vsel %vm3957, %v3949, %v3607
        %v3975 = vsel %vm3957, %v3950, %v3608
        %v3976 = vsel %vm3957, %v3951, %v3609
        %v3977 = vsel %vm3957, %v3952, %v3610
        %v3978 = vsel %vm3957, %v3953, %v3611
        %v3979 = vsel %vm3957, %v3954, %v3612
        %v3980 = vsel %vm3957, %v3955, %v3613
        %v3981 = vsel %vm3957, %v3956, %v3614
        %v3982 = vsel %vm3807, %v3185, %v3663
        %v3983 = vsel %vm3807, %v3188, %v3664
        %v3984 = vsel %vm3807, %v3191, %v3665
        %v3985 = vsel %vm3807, %v3194, %v3666
        %v3986 = vsel %vm3807, %v3197, %v3667
        %v3987 = vsel %vm3807, %v3200, %v3668
        %v3988 = vsel %vm3807, %v3203, %v3669
        %v3989 = vsel %vm3807, %v3206, %v3670
        %v3990 = vsel %vm3807, %v3209, %v3671
        %v3991 = vsel %vm3807, %v3212, %v3672
        %v3992 = vsel %vm3807, %v3215, %v3673
        %v3993 = vsel %vm3807, %v3218, %v3674
        %v3994 = vsel %vm3807, %v3221, %v3675
        %v3995 = vsel %vm3807, %v3224, %v3676
        %v3996 = vsel %vm3807, %v3227, %v3677
        %v3997 = vsel %vm3807, %v3230, %v3678
        %v3998 = vsel %vm3807, %v3233, %v3679
        %v3999 = vsel %vm3807, %v3236, %v3680
        %v4000 = vsel %vm3807, %v3239, %v3681
        %v4001 = vsel %vm3807, %v3242, %v3682
        %v4002 = vsel %vm3807, %v3245, %v3683
        %v4003 = vsel %vm3807, %v3248, %v3684
        %v4004 = vsel %vm3807, %v3251, %v3685
        %v4005 = vsel %vm3807, %v3254, %v3686
        %v4006 = vsel %vm3832, %v3982, %v3711
        %v4007 = vsel %vm3832, %v3983, %v3712
        %v4008 = vsel %vm3832, %v3984, %v3713
        %v4009 = vsel %vm3832, %v3985, %v3714
        %v4010 = vsel %vm3832, %v3986, %v3715
        %v4011 = vsel %vm3832, %v3987, %v3716
        %v4012 = vsel %vm3832, %v3988, %v3717
        %v4013 = vsel %vm3832, %v3989, %v3718
        %v4014 = vsel %vm3832, %v3990, %v3719
        %v4015 = vsel %vm3832, %v3991, %v3720
        %v4016 = vsel %vm3832, %v3992, %v3721
        %v4017 = vsel %vm3832, %v3993, %v3722
        %v4018 = vsel %vm3832, %v3994, %v3723
        %v4019 = vsel %vm3832, %v3995, %v3724
        %v4020 = vsel %vm3832, %v3996, %v3725
        %v4021 = vsel %vm3832, %v3997, %v3726
        %v4022 = vsel %vm3832, %v3998, %v3727
        %v4023 = vsel %vm3832, %v3999, %v3728
        %v4024 = vsel %vm3832, %v4000, %v3729
        %v4025 = vsel %vm3832, %v4001, %v3730
        %v4026 = vsel %vm3832, %v4002, %v3731
        %v4027 = vsel %vm3832, %v4003, %v3732
        %v4028 = vsel %vm3832, %v4004, %v3733
        %v4029 = vsel %vm3832, %v4005, %v3734
        %v4030 = vsel %vm3857, %v4006, %v3759
        %v4031 = vsel %vm3857, %v4007, %v3760
        %v4032 = vsel %vm3857, %v4008, %v3761
        %v4033 = vsel %vm3857, %v4009, %v3762
        %v4034 = vsel %vm3857, %v4010, %v3763
        %v4035 = vsel %vm3857, %v4011, %v3764
        %v4036 = vsel %vm3857, %v4012, %v3765
        %v4037 = vsel %vm3857, %v4013, %v3766
        %v4038 = vsel %vm3857, %v4014, %v3767
        %v4039 = vsel %vm3857, %v4015, %v3768
        %v4040 = vsel %vm3857, %v4016, %v3769
        %v4041 = vsel %vm3857, %v4017, %v3770
        %v4042 = vsel %vm3857, %v4018, %v3771
        %v4043 = vsel %vm3857, %v4019, %v3772
        %v4044 = vsel %vm3857, %v4020, %v3773
        %v4045 = vsel %vm3857, %v4021, %v3774
        %v4046 = vsel %vm3857, %v4022, %v3775
        %v4047 = vsel %vm3857, %v4023, %v3776
        %v4048 = vsel %vm3857, %v4024, %v3777
        %v4049 = vsel %vm3857, %v4025, %v3778
        %v4050 = vsel %vm3857, %v4026, %v3779
        %v4051 = vsel %vm3857, %v4027, %v3780
        %v4052 = vsel %vm3857, %v4028, %v3781
        %v4053 = vsel %vm3857, %v4029, %v3782
        %v4054 = vrot.slane %v3183, 4
        %v4055 = vrot.slane %v3186, 4
        %v4056 = vrot.slane %v3189, 4
        %v4057 = vrot.slane %v3192, 4
        %v4058 = vrot.slane %v3195, 4
        %v4059 = vrot.slane %v3198, 4
        %v4060 = vrot.slane %v3201, 4
        %v4061 = vrot.slane %v3204, 4
        %v4062 = vrot.slane %v3207, 4
        %v4063 = vrot.slane %v3210, 4
        %v4064 = vrot.slane %v3213, 4
        %v4065 = vrot.slane %v3216, 4
        %v4066 = vrot.slane %v3219, 4
        %v4067 = vrot.slane %v3222, 4
        %v4068 = vrot.slane %v3225, 4
        %v4069 = vrot.slane %v3228, 4
        %v4070 = vrot.slane %v3231, 4
        %v4071 = vrot.slane %v3234, 4
        %v4072 = vrot.slane %v3237, 4
        %v4073 = vrot.slane %v3240, 4
        %v4074 = vrot.slane %v3243, 4
        %v4075 = vrot.slane %v3246, 4
        %v4076 = vrot.slane %v3249, 4
        %v4077 = vrot.slane %v3252, 4
        %v4102 = vrot.slane %v3185, 4
        %v4103 = vrot.slane %v3188, 4
        %v4104 = vrot.slane %v3191, 4
        %v4105 = vrot.slane %v3194, 4
        %v4106 = vrot.slane %v3197, 4
        %v4107 = vrot.slane %v3200, 4
        %v4108 = vrot.slane %v3203, 4
        %v4109 = vrot.slane %v3206, 4
        %v4110 = vrot.slane %v3209, 4
        %v4111 = vrot.slane %v3212, 4
        %v4112 = vrot.slane %v3215, 4
        %v4113 = vrot.slane %v3218, 4
        %v4114 = vrot.slane %v3221, 4
        %v4115 = vrot.slane %v3224, 4
        %v4116 = vrot.slane %v3227, 4
        %v4117 = vrot.slane %v3230, 4
        %v4118 = vrot.slane %v3233, 4
        %v4119 = vrot.slane %v3236, 4
        %v4120 = vrot.slane %v3239, 4
        %v4121 = vrot.slane %v3242, 4
        %v4122 = vrot.slane %v3245, 4
        %v4123 = vrot.slane %v3248, 4
        %v4124 = vrot.slane %v3251, 4
        %v4125 = vrot.slane %v3254, 4
        %v4150 = vsel %vm3807, %v3279, %v3327
        %v4151 = vsel %vm3807, %v3280, %v3328
        %v4152 = vsel %vm3807, %v3281, %v3329
        %v4153 = vsel %vm3807, %v3282, %v3330
        %v4154 = vsel %vm3807, %v3283, %v3331
        %v4155 = vsel %vm3807, %v3284, %v3332
        %v4156 = vsel %vm3807, %v3285, %v3333
        %v4157 = vsel %vm3807, %v3286, %v3334
        %v4158 = vsel %vm3807, %v3287, %v3335
        %v4159 = vsel %vm3807, %v3288, %v3336
        %v4160 = vsel %vm3807, %v3289, %v3337
        %v4161 = vsel %vm3807, %v3290, %v3338
        %v4162 = vsel %vm3807, %v3291, %v3339
        %v4163 = vsel %vm3807, %v3292, %v3340
        %v4164 = vsel %vm3807, %v3293, %v3341
        %v4165 = vsel %vm3807, %v3294, %v3342
        %v4166 = vsel %vm3807, %v3295, %v3343
        %v4167 = vsel %vm3807, %v3296, %v3344
        %v4168 = vsel %vm3807, %v3297, %v3345
        %v4169 = vsel %vm3807, %v3298, %v3346
        %v4170 = vsel %vm3807, %v3299, %v3347
        %v4171 = vsel %vm3807, %v3300, %v3348
        %v4172 = vsel %vm3807, %v3301, %v3349
        %v4173 = vsel %vm3807, %v3302, %v3350
        %v4174 = vsel %vm3832, %v4150, %v3375
        %v4175 = vsel %vm3832, %v4151, %v3376
        %v4176 = vsel %vm3832, %v4152, %v3377
        %v4177 = vsel %vm3832, %v4153, %v3378
        %v4178 = vsel %vm3832, %v4154, %v3379
        %v4179 = vsel %vm3832, %v4155, %v3380
        %v4180 = vsel %vm3832, %v4156, %v3381
        %v4181 = vsel %vm3832, %v4157, %v3382
        %v4182 = vsel %vm3832, %v4158, %v3383
        %v4183 = vsel %vm3832, %v4159, %v3384
        %v4184 = vsel %vm3832, %v4160, %v3385
        %v4185 = vsel %vm3832, %v4161, %v3386
        %v4186 = vsel %vm3832, %v4162, %v3387
        %v4187 = vsel %vm3832, %v4163, %v3388
        %v4188 = vsel %vm3832, %v4164, %v3389
        %v4189 = vsel %vm3832, %v4165, %v3390
        %v4190 = vsel %vm3832, %v4166, %v3391
        %v4191 = vsel %vm3832, %v4167, %v3392
        %v4192 = vsel %vm3832, %v4168, %v3393
        %v4193 = vsel %vm3832, %v4169, %v3394
        %v4194 = vsel %vm3832, %v4170, %v3395
        %v4195 = vsel %vm3832, %v4171, %v3396
        %v4196 = vsel %vm3832, %v4172, %v3397
        %v4197 = vsel %vm3832, %v4173, %v3398
        %v4198 = vsel %vm3857, %v4174, %v4054
        %v4199 = vsel %vm3857, %v4175, %v4055
        %v4200 = vsel %vm3857, %v4176, %v4056
        %v4201 = vsel %vm3857, %v4177, %v4057
        %v4202 = vsel %vm3857, %v4178, %v4058
        %v4203 = vsel %vm3857, %v4179, %v4059
        %v4204 = vsel %vm3857, %v4180, %v4060
        %v4205 = vsel %vm3857, %v4181, %v4061
        %v4206 = vsel %vm3857, %v4182, %v4062
        %v4207 = vsel %vm3857, %v4183, %v4063
        %v4208 = vsel %vm3857, %v4184, %v4064
        %v4209 = vsel %vm3857, %v4185, %v4065
        %v4210 = vsel %vm3857, %v4186, %v4066
        %v4211 = vsel %vm3857, %v4187, %v4067
        %v4212 = vsel %vm3857, %v4188, %v4068
        %v4213 = vsel %vm3857, %v4189, %v4069
        %v4214 = vsel %vm3857, %v4190, %v4070
        %v4215 = vsel %vm3857, %v4191, %v4071
        %v4216 = vsel %vm3857, %v4192, %v4072
        %v4217 = vsel %vm3857, %v4193, %v4073
        %v4218 = vsel %vm3857, %v4194, %v4074
        %v4219 = vsel %vm3857, %v4195, %v4075
        %v4220 = vsel %vm3857, %v4196, %v4076
        %v4221 = vsel %vm3857, %v4197, %v4077
        %v4222 = vsel %vm3882, %v4198, %v3495
        %v4223 = vsel %vm3882, %v4199, %v3496
        %v4224 = vsel %vm3882, %v4200, %v3497
        %v4225 = vsel %vm3882, %v4201, %v3498
        %v4226 = vsel %vm3882, %v4202, %v3499
        %v4227 = vsel %vm3882, %v4203, %v3500
        %v4228 = vsel %vm3882, %v4204, %v3501
        %v4229 = vsel %vm3882, %v4205, %v3502
        %v4230 = vsel %vm3882, %v4206, %v3503
        %v4231 = vsel %vm3882, %v4207, %v3504
        %v4232 = vsel %vm3882, %v4208, %v3505
        %v4233 = vsel %vm3882, %v4209, %v3506
        %v4234 = vsel %vm3882, %v4210, %v3507
        %v4235 = vsel %vm3882, %v4211, %v3508
        %v4236 = vsel %vm3882, %v4212, %v3509
        %v4237 = vsel %vm3882, %v4213, %v3510
        %v4238 = vsel %vm3882, %v4214, %v3511
        %v4239 = vsel %vm3882, %v4215, %v3512
        %v4240 = vsel %vm3882, %v4216, %v3513
        %v4241 = vsel %vm3882, %v4217, %v3514
        %v4242 = vsel %vm3882, %v4218, %v3515
        %v4243 = vsel %vm3882, %v4219, %v3516
        %v4244 = vsel %vm3882, %v4220, %v3517
        %v4245 = vsel %vm3882, %v4221, %v3518
        %v4246 = vsel %vm3907, %v4222, %v3543
        %v4247 = vsel %vm3907, %v4223, %v3544
        %v4248 = vsel %vm3907, %v4224, %v3545
        %v4249 = vsel %vm3907, %v4225, %v3546
        %v4250 = vsel %vm3907, %v4226, %v3547
        %v4251 = vsel %vm3907, %v4227, %v3548
        %v4252 = vsel %vm3907, %v4228, %v3549
        %v4253 = vsel %vm3907, %v4229, %v3550
        %v4254 = vsel %vm3907, %v4230, %v3551
        %v4255 = vsel %vm3907, %v4231, %v3552
        %v4256 = vsel %vm3907, %v4232, %v3553
        %v4257 = vsel %vm3907, %v4233, %v3554
        %v4258 = vsel %vm3907, %v4234, %v3555
        %v4259 = vsel %vm3907, %v4235, %v3556
        %v4260 = vsel %vm3907, %v4236, %v3557
        %v4261 = vsel %vm3907, %v4237, %v3558
        %v4262 = vsel %vm3907, %v4238, %v3559
        %v4263 = vsel %vm3907, %v4239, %v3560
        %v4264 = vsel %vm3907, %v4240, %v3561
        %v4265 = vsel %vm3907, %v4241, %v3562
        %v4266 = vsel %vm3907, %v4242, %v3563
        %v4267 = vsel %vm3907, %v4243, %v3564
        %v4268 = vsel %vm3907, %v4244, %v3565
        %v4269 = vsel %vm3907, %v4245, %v3566
        %v4270 = vsel %vm3932, %v4246, %v3591
        %v4271 = vsel %vm3932, %v4247, %v3592
        %v4272 = vsel %vm3932, %v4248, %v3593
        %v4273 = vsel %vm3932, %v4249, %v3594
        %v4274 = vsel %vm3932, %v4250, %v3595
        %v4275 = vsel %vm3932, %v4251, %v3596
        %v4276 = vsel %vm3932, %v4252, %v3597
        %v4277 = vsel %vm3932, %v4253, %v3598
        %v4278 = vsel %vm3932, %v4254, %v3599
        %v4279 = vsel %vm3932, %v4255, %v3600
        %v4280 = vsel %vm3932, %v4256, %v3601
        %v4281 = vsel %vm3932, %v4257, %v3602
        %v4282 = vsel %vm3932, %v4258, %v3603
        %v4283 = vsel %vm3932, %v4259, %v3604
        %v4284 = vsel %vm3932, %v4260, %v3605
        %v4285 = vsel %vm3932, %v4261, %v3606
        %v4286 = vsel %vm3932, %v4262, %v3607
        %v4287 = vsel %vm3932, %v4263, %v3608
        %v4288 = vsel %vm3932, %v4264, %v3609
        %v4289 = vsel %vm3932, %v4265, %v3610
        %v4290 = vsel %vm3932, %v4266, %v3611
        %v4291 = vsel %vm3932, %v4267, %v3612
        %v4292 = vsel %vm3932, %v4268, %v3613
        %v4293 = vsel %vm3932, %v4269, %v3614
        %v4294 = vsel %vm3957, %v4270, %v3184
        %v4295 = vsel %vm3957, %v4271, %v3187
        %v4296 = vsel %vm3957, %v4272, %v3190
        %v4297 = vsel %vm3957, %v4273, %v3193
        %v4298 = vsel %vm3957, %v4274, %v3196
        %v4299 = vsel %vm3957, %v4275, %v3199
        %v4300 = vsel %vm3957, %v4276, %v3202
        %v4301 = vsel %vm3957, %v4277, %v3205
        %v4302 = vsel %vm3957, %v4278, %v3208
        %v4303 = vsel %vm3957, %v4279, %v3211
        %v4304 = vsel %vm3957, %v4280, %v3214
        %v4305 = vsel %vm3957, %v4281, %v3217
        %v4306 = vsel %vm3957, %v4282, %v3220
        %v4307 = vsel %vm3957, %v4283, %v3223
        %v4308 = vsel %vm3957, %v4284, %v3226
        %v4309 = vsel %vm3957, %v4285, %v3229
        %v4310 = vsel %vm3957, %v4286, %v3232
        %v4311 = vsel %vm3957, %v4287, %v3235
        %v4312 = vsel %vm3957, %v4288, %v3238
        %v4313 = vsel %vm3957, %v4289, %v3241
        %v4314 = vsel %vm3957, %v4290, %v3244
        %v4315 = vsel %vm3957, %v4291, %v3247
        %v4316 = vsel %vm3957, %v4292, %v3250
        %v4317 = vsel %vm3957, %v4293, %v3253
        %v4318 = vsel %vm3807, %v3663, %v3711
        %v4319 = vsel %vm3807, %v3664, %v3712
        %v4320 = vsel %vm3807, %v3665, %v3713
        %v4321 = vsel %vm3807, %v3666, %v3714
        %v4322 = vsel %vm3807, %v3667, %v3715
        %v4323 = vsel %vm3807, %v3668, %v3716
        %v4324 = vsel %vm3807, %v3669, %v3717
        %v4325 = vsel %vm3807, %v3670, %v3718
        %v4326 = vsel %vm3807, %v3671, %v3719
        %v4327 = vsel %vm3807, %v3672, %v3720
        %v4328 = vsel %vm3807, %v3673, %v3721
        %v4329 = vsel %vm3807, %v3674, %v3722
        %v4330 = vsel %vm3807, %v3675, %v3723
        %v4331 = vsel %vm3807, %v3676, %v3724
        %v4332 = vsel %vm3807, %v3677, %v3725
        %v4333 = vsel %vm3807, %v3678, %v3726
        %v4334 = vsel %vm3807, %v3679, %v3727
        %v4335 = vsel %vm3807, %v3680, %v3728
        %v4336 = vsel %vm3807, %v3681, %v3729
        %v4337 = vsel %vm3807, %v3682, %v3730
        %v4338 = vsel %vm3807, %v3683, %v3731
        %v4339 = vsel %vm3807, %v3684, %v3732
        %v4340 = vsel %vm3807, %v3685, %v3733
        %v4341 = vsel %vm3807, %v3686, %v3734
        %v4342 = vsel %vm3832, %v4318, %v3759
        %v4343 = vsel %vm3832, %v4319, %v3760
        %v4344 = vsel %vm3832, %v4320, %v3761
        %v4345 = vsel %vm3832, %v4321, %v3762
        %v4346 = vsel %vm3832, %v4322, %v3763
        %v4347 = vsel %vm3832, %v4323, %v3764
        %v4348 = vsel %vm3832, %v4324, %v3765
        %v4349 = vsel %vm3832, %v4325, %v3766
        %v4350 = vsel %vm3832, %v4326, %v3767
        %v4351 = vsel %vm3832, %v4327, %v3768
        %v4352 = vsel %vm3832, %v4328, %v3769
        %v4353 = vsel %vm3832, %v4329, %v3770
        %v4354 = vsel %vm3832, %v4330, %v3771
        %v4355 = vsel %vm3832, %v4331, %v3772
        %v4356 = vsel %vm3832, %v4332, %v3773
        %v4357 = vsel %vm3832, %v4333, %v3774
        %v4358 = vsel %vm3832, %v4334, %v3775
        %v4359 = vsel %vm3832, %v4335, %v3776
        %v4360 = vsel %vm3832, %v4336, %v3777
        %v4361 = vsel %vm3832, %v4337, %v3778
        %v4362 = vsel %vm3832, %v4338, %v3779
        %v4363 = vsel %vm3832, %v4339, %v3780
        %v4364 = vsel %vm3832, %v4340, %v3781
        %v4365 = vsel %vm3832, %v4341, %v3782
        %v4366 = vsel %vm3857, %v4342, %v4102
        %v4367 = vsel %vm3857, %v4343, %v4103
        %v4368 = vsel %vm3857, %v4344, %v4104
        %v4369 = vsel %vm3857, %v4345, %v4105
        %v4370 = vsel %vm3857, %v4346, %v4106
        %v4371 = vsel %vm3857, %v4347, %v4107
        %v4372 = vsel %vm3857, %v4348, %v4108
        %v4373 = vsel %vm3857, %v4349, %v4109
        %v4374 = vsel %vm3857, %v4350, %v4110
        %v4375 = vsel %vm3857, %v4351, %v4111
        %v4376 = vsel %vm3857, %v4352, %v4112
        %v4377 = vsel %vm3857, %v4353, %v4113
        %v4378 = vsel %vm3857, %v4354, %v4114
        %v4379 = vsel %vm3857, %v4355, %v4115
        %v4380 = vsel %vm3857, %v4356, %v4116
        %v4381 = vsel %vm3857, %v4357, %v4117
        %v4382 = vsel %vm3857, %v4358, %v4118
        %v4383 = vsel %vm3857, %v4359, %v4119
        %v4384 = vsel %vm3857, %v4360, %v4120
        %v4385 = vsel %vm3857, %v4361, %v4121
        %v4386 = vsel %vm3857, %v4362, %v4122
        %v4387 = vsel %vm3857, %v4363, %v4123
        %v4388 = vsel %vm3857, %v4364, %v4124
        %v4389 = vsel %vm3857, %v4365, %v4125
        %v4390 = vmax.f32 %v3958, %v4294
        %v4391 = vmax.f32 %v4030, %v4366
        %v4392 = vmax.f32 %v3959, %v4295
        %v4393 = vmax.f32 %v4031, %v4367
        %v4394 = vmax.f32 %v3960, %v4296
        %v4395 = vmax.f32 %v4032, %v4368
        %v4396 = vmax.f32 %v3961, %v4297
        %v4397 = vmax.f32 %v4033, %v4369
        %v4398 = vmax.f32 %v3962, %v4298
        %v4399 = vmax.f32 %v4034, %v4370
        %v4400 = vmax.f32 %v3963, %v4299
        %v4401 = vmax.f32 %v4035, %v4371
        %v4402 = vmax.f32 %v3964, %v4300
        %v4403 = vmax.f32 %v4036, %v4372
        %v4404 = vmax.f32 %v3965, %v4301
        %v4405 = vmax.f32 %v4037, %v4373
        %v4406 = vmax.f32 %v3966, %v4302
        %v4407 = vmax.f32 %v4038, %v4374
        %v4408 = vmax.f32 %v3967, %v4303
        %v4409 = vmax.f32 %v4039, %v4375
        %v4410 = vmax.f32 %v3968, %v4304
        %v4411 = vmax.f32 %v4040, %v4376
        %v4412 = vmax.f32 %v3969, %v4305
        %v4413 = vmax.f32 %v4041, %v4377
        %v4414 = vmax.f32 %v3970, %v4306
        %v4415 = vmax.f32 %v4042, %v4378
        %v4416 = vmax.f32 %v3971, %v4307
        %v4417 = vmax.f32 %v4043, %v4379
        %v4418 = vmax.f32 %v3972, %v4308
        %v4419 = vmax.f32 %v4044, %v4380
        %v4420 = vmax.f32 %v3973, %v4309
        %v4421 = vmax.f32 %v4045, %v4381
        %v4422 = vmax.f32 %v3974, %v4310
        %v4423 = vmax.f32 %v4046, %v4382
        %v4424 = vmax.f32 %v3975, %v4311
        %v4425 = vmax.f32 %v4047, %v4383
        %v4426 = vmax.f32 %v3976, %v4312
        %v4427 = vmax.f32 %v4048, %v4384
        %v4428 = vmax.f32 %v3977, %v4313
        %v4429 = vmax.f32 %v4049, %v4385
        %v4430 = vmax.f32 %v3978, %v4314
        %v4431 = vmax.f32 %v4050, %v4386
        %v4432 = vmax.f32 %v3979, %v4315
        %v4433 = vmax.f32 %v4051, %v4387
        %v4434 = vmax.f32 %v3980, %v4316
        %v4435 = vmax.f32 %v4052, %v4388
        %v4436 = vmax.f32 %v3981, %v4317
        %v4437 = vmax.f32 %v4053, %v4389
        %v4438 = vpack.c.bf16 %v4390, %v4390
        %v4439 = vpack.c.bf16 %v4391, %v4391
        %v4440 = vpack.c.bf16 %v4392, %v4392
        %v4441 = vpack.c.bf16 %v4393, %v4393
        %v4442 = vpack.c.bf16 %v4394, %v4394
        %v4443 = vpack.c.bf16 %v4395, %v4395
        %v4444 = vpack.c.bf16 %v4396, %v4396
        %v4445 = vpack.c.bf16 %v4397, %v4397
        %v4446 = vpack.c.bf16 %v4398, %v4398
        %v4447 = vpack.c.bf16 %v4399, %v4399
        %v4448 = vpack.c.bf16 %v4400, %v4400
        %v4449 = vpack.c.bf16 %v4401, %v4401
        %v4450 = vpack.c.bf16 %v4402, %v4402
        %v4451 = vpack.c.bf16 %v4403, %v4403
        %v4452 = vpack.c.bf16 %v4404, %v4404
        %v4453 = vpack.c.bf16 %v4405, %v4405
        %v4454 = vpack.c.bf16 %v4406, %v4406
        %v4455 = vpack.c.bf16 %v4407, %v4407
        %v4456 = vpack.c.bf16 %v4408, %v4408
        %v4457 = vpack.c.bf16 %v4409, %v4409
        %v4458 = vpack.c.bf16 %v4410, %v4410
        %v4459 = vpack.c.bf16 %v4411, %v4411
        %v4460 = vpack.c.bf16 %v4412, %v4412
        %v4461 = vpack.c.bf16 %v4413, %v4413
        %v4462 = vpack.c.bf16 %v4414, %v4414
        %v4463 = vpack.c.bf16 %v4415, %v4415
        %v4464 = vpack.c.bf16 %v4416, %v4416
        %v4465 = vpack.c.bf16 %v4417, %v4417
        %v4466 = vpack.c.bf16 %v4418, %v4418
        %v4467 = vpack.c.bf16 %v4419, %v4419
        %v4468 = vpack.c.bf16 %v4420, %v4420
        %v4469 = vpack.c.bf16 %v4421, %v4421
        %v4470 = vpack.c.bf16 %v4422, %v4422
        %v4471 = vpack.c.bf16 %v4423, %v4423
        %v4472 = vpack.c.bf16 %v4424, %v4424
        %v4473 = vpack.c.bf16 %v4425, %v4425
        %v4474 = vpack.c.bf16 %v4426, %v4426
        %v4475 = vpack.c.bf16 %v4427, %v4427
        %v4476 = vpack.c.bf16 %v4428, %v4428
        %v4477 = vpack.c.bf16 %v4429, %v4429
        %v4478 = vpack.c.bf16 %v4430, %v4430
        %v4479 = vpack.c.bf16 %v4431, %v4431
        %v4480 = vpack.c.bf16 %v4432, %v4432
        %v4481 = vpack.c.bf16 %v4433, %v4433
        %v4482 = vpack.c.bf16 %v4434, %v4434
        %v4483 = vpack.c.bf16 %v4435, %v4435
        %v4484 = vpack.c.bf16 %v4436, %v4436
        %v4485 = vpack.c.bf16 %v4437, %v4437
        %v4486 = vld [vmem:[%s4] sm:$0xf]
        %v4487 = vld [vmem:[%s4 + $0x4] sm:$0xf]
        %v4488 = vld [vmem:[%s4 + $0x8] sm:$0xf]
        %v4489 = vld [vmem:[%s4 + $0xc] sm:$0xf]
        %vm4490 = vsmask.f32 3328
        %vm4491 = vsmask.f32 7440
        %vm4492 = vmor %vm4490, %vm4491
        %v4494 = vshrl.u32 %v4438, 16
        %v4496 = vrot.slane %v4494, 4
        %v4497 = vshll.u32 %v4438, 16
        %v4499 = vrot.slane %v4497, 5
        %v4500 = vor.u32 %v4496, %v4499
        %v4501 = vrot.slane %v4500, 4
        %v4503 = vshll.u32 %v4439, 16
        %v4505 = vrot.slane %v4503, 5
        %v4506 = vsel %vm4492, %v4501, %v4505
        %v4508 = vshrl.u32 %v4440, 16
        %v4510 = vrot.slane %v4508, 4
        %v4511 = vshll.u32 %v4440, 16
        %v4513 = vrot.slane %v4511, 5
        %v4514 = vor.u32 %v4510, %v4513
        %v4515 = vrot.slane %v4514, 4
        %v4517 = vshll.u32 %v4441, 16
        %v4519 = vrot.slane %v4517, 5
        %v4520 = vsel %vm4492, %v4515, %v4519
        %v4522 = vshrl.u32 %v4442, 16
        %v4524 = vrot.slane %v4522, 4
        %v4525 = vshll.u32 %v4442, 16
        %v4527 = vrot.slane %v4525, 5
        %v4528 = vor.u32 %v4524, %v4527
        %v4529 = vrot.slane %v4528, 4
        %v4531 = vshll.u32 %v4443, 16
        %v4533 = vrot.slane %v4531, 5
        %v4534 = vsel %vm4492, %v4529, %v4533
        %v4536 = vshrl.u32 %v4444, 16
        %v4538 = vrot.slane %v4536, 4
        %v4539 = vshll.u32 %v4444, 16
        %v4541 = vrot.slane %v4539, 5
        %v4542 = vor.u32 %v4538, %v4541
        %v4543 = vrot.slane %v4542, 4
        %v4545 = vshll.u32 %v4445, 16
        %v4547 = vrot.slane %v4545, 5
        %v4548 = vsel %vm4492, %v4543, %v4547
        %v4550 = vshrl.u32 %v4446, 16
        %v4552 = vrot.slane %v4550, 4
        %v4553 = vshll.u32 %v4446, 16
        %v4555 = vrot.slane %v4553, 5
        %v4556 = vor.u32 %v4552, %v4555
        %v4557 = vrot.slane %v4556, 4
        %v4559 = vshll.u32 %v4447, 16
        %v4561 = vrot.slane %v4559, 5
        %v4562 = vsel %vm4492, %v4557, %v4561
        %v4564 = vshrl.u32 %v4448, 16
        %v4566 = vrot.slane %v4564, 4
        %v4567 = vshll.u32 %v4448, 16
        %v4569 = vrot.slane %v4567, 5
        %v4570 = vor.u32 %v4566, %v4569
        %v4571 = vrot.slane %v4570, 4
        %v4573 = vshll.u32 %v4449, 16
        %v4575 = vrot.slane %v4573, 5
        %v4576 = vsel %vm4492, %v4571, %v4575
        %v4578 = vshrl.u32 %v4450, 16
        %v4580 = vrot.slane %v4578, 4
        %v4581 = vshll.u32 %v4450, 16
        %v4583 = vrot.slane %v4581, 5
        %v4584 = vor.u32 %v4580, %v4583
        %v4585 = vrot.slane %v4584, 4
        %v4587 = vshll.u32 %v4451, 16
        %v4589 = vrot.slane %v4587, 5
        %v4590 = vsel %vm4492, %v4585, %v4589
        %v4592 = vshrl.u32 %v4452, 16
        %v4594 = vrot.slane %v4592, 4
        %v4595 = vshll.u32 %v4452, 16
        %v4597 = vrot.slane %v4595, 5
        %v4598 = vor.u32 %v4594, %v4597
        %v4599 = vrot.slane %v4598, 4
        %v4601 = vshll.u32 %v4453, 16
        %v4603 = vrot.slane %v4601, 5
        %v4604 = vsel %vm4492, %v4599, %v4603
        %v4606 = vshrl.u32 %v4462, 16
        %v4608 = vrot.slane %v4606, 4
        %v4609 = vshll.u32 %v4462, 16
        %v4611 = vrot.slane %v4609, 5
        %v4612 = vor.u32 %v4608, %v4611
        %v4613 = vrot.slane %v4612, 4
        %v4615 = vshll.u32 %v4463, 16
        %v4617 = vrot.slane %v4615, 5
        %v4618 = vsel %vm4492, %v4613, %v4617
        %v4620 = vshrl.u32 %v4464, 16
        %v4622 = vrot.slane %v4620, 4
        %v4623 = vshll.u32 %v4464, 16
        %v4625 = vrot.slane %v4623, 5
        %v4626 = vor.u32 %v4622, %v4625
        %v4627 = vrot.slane %v4626, 4
        %v4629 = vshll.u32 %v4465, 16
        %v4631 = vrot.slane %v4629, 5
        %v4632 = vsel %vm4492, %v4627, %v4631
        %v4634 = vshrl.u32 %v4466, 16
        %v4636 = vrot.slane %v4634, 4
        %v4637 = vshll.u32 %v4466, 16
        %v4639 = vrot.slane %v4637, 5
        %v4640 = vor.u32 %v4636, %v4639
        %v4641 = vrot.slane %v4640, 4
        %v4643 = vshll.u32 %v4467, 16
        %v4645 = vrot.slane %v4643, 5
        %v4646 = vsel %vm4492, %v4641, %v4645
        %v4648 = vshrl.u32 %v4468, 16
        %v4650 = vrot.slane %v4648, 4
        %v4651 = vshll.u32 %v4468, 16
        %v4653 = vrot.slane %v4651, 5
        %v4654 = vor.u32 %v4650, %v4653
        %v4655 = vrot.slane %v4654, 4
        %v4657 = vshll.u32 %v4469, 16
        %v4659 = vrot.slane %v4657, 5
        %v4660 = vsel %vm4492, %v4655, %v4659
        %v4662 = vshrl.u32 %v4470, 16
        %v4664 = vrot.slane %v4662, 4
        %v4665 = vshll.u32 %v4470, 16
        %v4667 = vrot.slane %v4665, 5
        %v4668 = vor.u32 %v4664, %v4667
        %v4669 = vrot.slane %v4668, 4
        %v4671 = vshll.u32 %v4471, 16
        %v4673 = vrot.slane %v4671, 5
        %v4674 = vsel %vm4492, %v4669, %v4673
        %v4676 = vshrl.u32 %v4472, 16
        %v4678 = vrot.slane %v4676, 4
        %v4679 = vshll.u32 %v4472, 16
        %v4681 = vrot.slane %v4679, 5
        %v4682 = vor.u32 %v4678, %v4681
        %v4683 = vrot.slane %v4682, 4
        %v4685 = vshll.u32 %v4473, 16
        %v4687 = vrot.slane %v4685, 5
        %v4688 = vsel %vm4492, %v4683, %v4687
        %v4690 = vshrl.u32 %v4474, 16
        %v4692 = vrot.slane %v4690, 4
        %v4693 = vshll.u32 %v4474, 16
        %v4695 = vrot.slane %v4693, 5
        %v4696 = vor.u32 %v4692, %v4695
        %v4697 = vrot.slane %v4696, 4
        %v4699 = vshll.u32 %v4475, 16
        %v4701 = vrot.slane %v4699, 5
        %v4702 = vsel %vm4492, %v4697, %v4701
        %v4704 = vshrl.u32 %v4476, 16
        %v4706 = vrot.slane %v4704, 4
        %v4707 = vshll.u32 %v4476, 16
        %v4709 = vrot.slane %v4707, 5
        %v4710 = vor.u32 %v4706, %v4709
        %v4711 = vrot.slane %v4710, 4
        %v4713 = vshll.u32 %v4477, 16
        %v4715 = vrot.slane %v4713, 5
        %v4716 = vsel %vm4492, %v4711, %v4715
        %s4717 = scalar_lea.vmem %s4, 16
        %v4718 = vld [vmem:[%s4717] sm:$0xf]
        %v4719 = vld [vmem:[%s4717 + $0x4] sm:$0xf]
        %v4720 = vld [vmem:[%s4717 + $0x8] sm:$0xf]
        %v4721 = vld [vmem:[%s4717 + $0xc] sm:$0xf]
        %v4722 = vunpack.c.l.b16 %v4506
        %v4723 = vunpack.c.l.b16 %v4520
        %v4724 = vunpack.c.l.b16 %v4534
        %v4725 = vunpack.c.l.b16 %v4548
        %v4726 = vunpack.c.l.b16 %v4562
        %v4727 = vunpack.c.l.b16 %v4576
        %v4728 = vunpack.c.l.b16 %v4590
        %v4729 = vunpack.c.l.b16 %v4604
        %v4730 = vunpack.c.l.b16 %v4618
        %v4731 = vunpack.c.l.b16 %v4632
        %v4732 = vunpack.c.l.b16 %v4646
        %v4733 = vunpack.c.l.b16 %v4660
        %v4734 = vunpack.c.l.b16 %v4674
        %v4735 = vunpack.c.l.b16 %v4688
        %v4736 = vunpack.c.l.b16 %v4702
        %v4737 = vunpack.c.l.b16 %v4716
        %v4738 = vpack.c.b16 %v4723, %v4722
        %v4739 = vpack.c.b16 %v4725, %v4724
        %v4740 = vpack.c.b16 %v4727, %v4726
        %v4741 = vpack.c.b16 %v4729, %v4728
        %v4742 = vpack.c.b16 %v4731, %v4730
        %v4743 = vpack.c.b16 %v4733, %v4732
        %v4744 = vpack.c.b16 %v4735, %v4734
        %v4745 = vpack.c.b16 %v4737, %v4736
        %v4750 = vunpack.c.l.b16 %v4718
        %v4751 = vunpack.c.l.b16 %v4719
        %v4752 = vunpack.c.l.b16 %v4720
        %v4753 = vunpack.c.l.b16 %v4721
        %v4754 = vpack.c.b16 %v4751, %v4750
        %v4755 = vpack.c.b16 %v4753, %v4752
        %vm4758 = vcmask 261120
        %v4760 = vsel %vm4758, %v4738, 0
        %v4763 = vsel %vm4758, %v4739, 0
        %v4766 = vsel %vm4758, %v4740, 0
        %v4769 = vsel %vm4758, %v4741, 0
        %v4772 = vsel %vm4758, %v4742, 0
        %v4775 = vsel %vm4758, %v4743, 0
        %v4778 = vsel %vm4758, %v4744, 0
        %v4781 = vsel %vm4758, %v4745, 0
        %4783 = vmatpush.bf16.msra.mxu0 0
        %4784 = vmatpush.bf16.msra.mxu0 0
        %4785 = vmatpush.bf16.msra.mxu0 0
        %4786 = vmatpush.bf16.msra.mxu0 0
        %4787 = vmatpush.bf16.msra.mxu0 0
        %4788 = vmatpush.bf16.msra.mxu0 0
        %4789 = vmatpush.bf16.msra.mxu0 %v4755
        %4790 = vmatpush.bf16.msra.mxu0 %v4754
        %4791 = vmatmul.bf16.gmra.mxu0 %v4760
        %v4792 = vpop.f32.mrf.mxu0
        %v4793 = vadd.f32 0.0, %v4792
        %v4794 = vpop.f32.mrf.mxu0
        %v4795 = vadd.f32 0.0, %v4794
        %4796 = vmatmul.bf16.gmra.mxu0 %v4763
        %v4797 = vpop.f32.mrf.mxu0
        %v4798 = vadd.f32 0.0, %v4797
        %v4799 = vpop.f32.mrf.mxu0
        %v4800 = vadd.f32 0.0, %v4799
        %4801 = vmatmul.bf16.gmra.mxu0 %v4766
        %v4802 = vpop.f32.mrf.mxu0
        %v4803 = vadd.f32 0.0, %v4802
        %v4804 = vpop.f32.mrf.mxu0
        %v4805 = vadd.f32 0.0, %v4804
        %4806 = vmatmul.bf16.gmra.mxu0 %v4769
        %v4807 = vpop.f32.mrf.mxu0
        %v4808 = vadd.f32 0.0, %v4807
        %v4809 = vpop.f32.mrf.mxu0
        %v4810 = vadd.f32 0.0, %v4809
        %4811 = vmatmul.bf16.gmra.mxu0 %v4772
        %v4812 = vpop.f32.mrf.mxu0
        %v4813 = vadd.f32 0.0, %v4812
        %v4814 = vpop.f32.mrf.mxu0
        %v4815 = vadd.f32 0.0, %v4814
        %4816 = vmatmul.bf16.gmra.mxu0 %v4775
        %v4817 = vpop.f32.mrf.mxu0
        %v4818 = vadd.f32 0.0, %v4817
        %v4819 = vpop.f32.mrf.mxu0
        %v4820 = vadd.f32 0.0, %v4819
        %4821 = vmatmul.bf16.gmra.mxu0 %v4778
        %v4822 = vpop.f32.mrf.mxu0
        %v4823 = vadd.f32 0.0, %v4822
        %v4824 = vpop.f32.mrf.mxu0
        %v4825 = vadd.f32 0.0, %v4824
        %4826 = vmatmul.bf16.gmra.mxu0 %v4781
        %v4827 = vpop.f32.mrf.mxu0
        %v4828 = vadd.f32 0.0, %v4827
        %v4829 = vpop.f32.mrf.mxu0
        %v4830 = vadd.f32 0.0, %v4829
        %4831 = vdwg.mxu0
        %v4848 = vunpack.c.l.b16 %v4438
        %v4849 = vunpack.c.l.b16 %v4440
        %v4850 = vunpack.c.l.b16 %v4442
        %v4851 = vunpack.c.l.b16 %v4444
        %v4852 = vunpack.c.l.b16 %v4446
        %v4853 = vunpack.c.l.b16 %v4448
        %v4854 = vunpack.c.l.b16 %v4450
        %v4855 = vunpack.c.l.b16 %v4452
        %v4856 = vunpack.c.l.b16 %v4462
        %v4857 = vunpack.c.l.b16 %v4464
        %v4858 = vunpack.c.l.b16 %v4466
        %v4859 = vunpack.c.l.b16 %v4468
        %v4860 = vunpack.c.l.b16 %v4470
        %v4861 = vunpack.c.l.b16 %v4472
        %v4862 = vunpack.c.l.b16 %v4474
        %v4863 = vunpack.c.l.b16 %v4476
        %v4864 = vpack.c.b16 %v4849, %v4848
        %v4865 = vpack.c.b16 %v4851, %v4850
        %v4866 = vpack.c.b16 %v4853, %v4852
        %v4867 = vpack.c.b16 %v4855, %v4854
        %v4868 = vpack.c.b16 %v4857, %v4856
        %v4869 = vpack.c.b16 %v4859, %v4858
        %v4870 = vpack.c.b16 %v4861, %v4860
        %v4871 = vpack.c.b16 %v4863, %v4862
        %v4876 = vunpack.c.l.b16 %v4486
        %v4877 = vunpack.c.l.b16 %v4487
        %v4878 = vunpack.c.l.b16 %v4488
        %v4879 = vunpack.c.l.b16 %v4489
        %v4880 = vpack.c.b16 %v4877, %v4876
        %v4881 = vpack.c.b16 %v4879, %v4878
        %v4885 = vsel %vm4758, %v4864, 0
        %v4888 = vsel %vm4758, %v4865, 0
        %v4891 = vsel %vm4758, %v4866, 0
        %v4894 = vsel %vm4758, %v4867, 0
        %v4897 = vsel %vm4758, %v4868, 0
        %v4900 = vsel %vm4758, %v4869, 0
        %v4903 = vsel %vm4758, %v4870, 0
        %v4906 = vsel %vm4758, %v4871, 0
        %4908 = vmatpush.bf16.msra.mxu0 0
        %4909 = vmatpush.bf16.msra.mxu0 0
        %4910 = vmatpush.bf16.msra.mxu0 0
        %4911 = vmatpush.bf16.msra.mxu0 0
        %4912 = vmatpush.bf16.msra.mxu0 0
        %4913 = vmatpush.bf16.msra.mxu0 0
        %4914 = vmatpush.bf16.msra.mxu0 %v4881
        %4915 = vmatpush.bf16.msra.mxu0 %v4880
        %4916 = vmatmul.bf16.gmra.mxu0 %v4885
        %v4917 = vpop.f32.mrf.mxu0
        %v4918 = vadd.f32 %v4793, %v4917
        %v4919 = vpop.f32.mrf.mxu0
        %v4920 = vadd.f32 %v4795, %v4919
        %4921 = vmatmul.bf16.gmra.mxu0 %v4888
        %v4922 = vpop.f32.mrf.mxu0
        %v4923 = vadd.f32 %v4798, %v4922
        %v4924 = vpop.f32.mrf.mxu0
        %v4925 = vadd.f32 %v4800, %v4924
        %4926 = vmatmul.bf16.gmra.mxu0 %v4891
        %v4927 = vpop.f32.mrf.mxu0
        %v4928 = vadd.f32 %v4803, %v4927
        %v4929 = vpop.f32.mrf.mxu0
        %v4930 = vadd.f32 %v4805, %v4929
        %4931 = vmatmul.bf16.gmra.mxu0 %v4894
        %v4932 = vpop.f32.mrf.mxu0
        %v4933 = vadd.f32 %v4808, %v4932
        %v4934 = vpop.f32.mrf.mxu0
        %v4935 = vadd.f32 %v4810, %v4934
        %4936 = vmatmul.bf16.gmra.mxu0 %v4897
        %v4937 = vpop.f32.mrf.mxu0
        %v4938 = vadd.f32 %v4813, %v4937
        %v4939 = vpop.f32.mrf.mxu0
        %v4940 = vadd.f32 %v4815, %v4939
        %4941 = vmatmul.bf16.gmra.mxu0 %v4900
        %v4942 = vpop.f32.mrf.mxu0
        %v4943 = vadd.f32 %v4818, %v4942
        %v4944 = vpop.f32.mrf.mxu0
        %v4945 = vadd.f32 %v4820, %v4944
        %4946 = vmatmul.bf16.gmra.mxu0 %v4903
        %v4947 = vpop.f32.mrf.mxu0
        %v4948 = vadd.f32 %v4823, %v4947
        %v4949 = vpop.f32.mrf.mxu0
        %v4950 = vadd.f32 %v4825, %v4949
        %4951 = vmatmul.bf16.gmra.mxu0 %v4906
        %v4952 = vpop.f32.mrf.mxu0
        %v4953 = vadd.f32 %v4828, %v4952
        %v4954 = vpop.f32.mrf.mxu0
        %v4955 = vadd.f32 %v4830, %v4954
        %4956 = vdwg.mxu0
        %vm4973 = vcmask 1042432
        %vm4974 = vcmask 1046532
        %vm4975 = vmor %vm4973, %vm4974
        %v4976 = vrot.slane %v4438, 5
        %v4977 = vrot.slane %v4976, 4
        %v4978 = vrot.slane %v4439, 5
        %v4979 = vsel %vm4975, %v4977, %v4978
        %v4980 = vrot.slane %v4440, 5
        %v4981 = vrot.slane %v4980, 4
        %v4982 = vrot.slane %v4441, 5
        %v4983 = vsel %vm4975, %v4981, %v4982
        %v4984 = vrot.slane %v4442, 5
        %v4985 = vrot.slane %v4984, 4
        %v4986 = vrot.slane %v4443, 5
        %v4987 = vsel %vm4975, %v4985, %v4986
        %v4988 = vrot.slane %v4444, 5
        %v4989 = vrot.slane %v4988, 4
        %v4990 = vrot.slane %v4445, 5
        %v4991 = vsel %vm4975, %v4989, %v4990
        %v4992 = vrot.slane %v4446, 5
        %v4993 = vrot.slane %v4992, 4
        %v4994 = vrot.slane %v4447, 5
        %v4995 = vsel %vm4975, %v4993, %v4994
        %v4996 = vrot.slane %v4448, 5
        %v4997 = vrot.slane %v4996, 4
        %v4998 = vrot.slane %v4449, 5
        %v4999 = vsel %vm4975, %v4997, %v4998
        %v5000 = vrot.slane %v4450, 5
        %v5001 = vrot.slane %v5000, 4
        %v5002 = vrot.slane %v4451, 5
        %v5003 = vsel %vm4975, %v5001, %v5002
        %v5004 = vrot.slane %v4452, 5
        %v5005 = vrot.slane %v5004, 4
        %v5006 = vrot.slane %v4453, 5
        %v5007 = vsel %vm4975, %v5005, %v5006
        %v5008 = vrot.slane %v4462, 5
        %v5009 = vrot.slane %v5008, 4
        %v5010 = vrot.slane %v4463, 5
        %v5011 = vsel %vm4975, %v5009, %v5010
        %v5012 = vrot.slane %v4464, 5
        %v5013 = vrot.slane %v5012, 4
        %v5014 = vrot.slane %v4465, 5
        %v5015 = vsel %vm4975, %v5013, %v5014
        %v5016 = vrot.slane %v4466, 5
        %v5017 = vrot.slane %v5016, 4
        %v5018 = vrot.slane %v4467, 5
        %v5019 = vsel %vm4975, %v5017, %v5018
        %v5020 = vrot.slane %v4468, 5
        %v5021 = vrot.slane %v5020, 4
        %v5022 = vrot.slane %v4469, 5
        %v5023 = vsel %vm4975, %v5021, %v5022
        %v5024 = vrot.slane %v4470, 5
        %v5025 = vrot.slane %v5024, 4
        %v5026 = vrot.slane %v4471, 5
        %v5027 = vsel %vm4975, %v5025, %v5026
        %v5028 = vrot.slane %v4472, 5
        %v5029 = vrot.slane %v5028, 4
        %v5030 = vrot.slane %v4473, 5
        %v5031 = vsel %vm4975, %v5029, %v5030
        %v5032 = vrot.slane %v4474, 5
        %v5033 = vrot.slane %v5032, 4
        %v5034 = vrot.slane %v4475, 5
        %v5035 = vsel %vm4975, %v5033, %v5034
        %v5036 = vrot.slane %v4476, 5
        %v5037 = vrot.slane %v5036, 4
        %v5038 = vrot.slane %v4477, 5
        %v5039 = vsel %vm4975, %v5037, %v5038
        %s5040 = scalar_lea.vmem %s4, 32
        %v5041 = vld [vmem:[%s5040] sm:$0xf]
        %v5042 = vld [vmem:[%s5040 + $0x4] sm:$0xf]
        %v5043 = vld [vmem:[%s5040 + $0x8] sm:$0xf]
        %v5044 = vld [vmem:[%s5040 + $0xc] sm:$0xf]
        %v5045 = vunpack.c.l.b16 %v4979
        %v5046 = vunpack.c.l.b16 %v4983
        %v5047 = vunpack.c.l.b16 %v4987
        %v5048 = vunpack.c.l.b16 %v4991
        %v5049 = vunpack.c.l.b16 %v4995
        %v5050 = vunpack.c.l.b16 %v4999
        %v5051 = vunpack.c.l.b16 %v5003
        %v5052 = vunpack.c.l.b16 %v5007
        %v5053 = vunpack.c.l.b16 %v5011
        %v5054 = vunpack.c.l.b16 %v5015
        %v5055 = vunpack.c.l.b16 %v5019
        %v5056 = vunpack.c.l.b16 %v5023
        %v5057 = vunpack.c.l.b16 %v5027
        %v5058 = vunpack.c.l.b16 %v5031
        %v5059 = vunpack.c.l.b16 %v5035
        %v5060 = vunpack.c.l.b16 %v5039
        %v5061 = vpack.c.b16 %v5046, %v5045
        %v5062 = vpack.c.b16 %v5048, %v5047
        %v5063 = vpack.c.b16 %v5050, %v5049
        %v5064 = vpack.c.b16 %v5052, %v5051
        %v5065 = vpack.c.b16 %v5054, %v5053
        %v5066 = vpack.c.b16 %v5056, %v5055
        %v5067 = vpack.c.b16 %v5058, %v5057
        %v5068 = vpack.c.b16 %v5060, %v5059
        %v5073 = vunpack.c.l.b16 %v5041
        %v5074 = vunpack.c.l.b16 %v5042
        %v5075 = vunpack.c.l.b16 %v5043
        %v5076 = vunpack.c.l.b16 %v5044
        %v5077 = vpack.c.b16 %v5074, %v5073
        %v5078 = vpack.c.b16 %v5076, %v5075
        %v5082 = vsel %vm4758, %v5061, 0
        %v5085 = vsel %vm4758, %v5062, 0
        %v5088 = vsel %vm4758, %v5063, 0
        %v5091 = vsel %vm4758, %v5064, 0
        %v5094 = vsel %vm4758, %v5065, 0
        %v5097 = vsel %vm4758, %v5066, 0
        %v5100 = vsel %vm4758, %v5067, 0
        %v5103 = vsel %vm4758, %v5068, 0
        %5105 = vmatpush.bf16.msra.mxu0 0
        %5106 = vmatpush.bf16.msra.mxu0 0
        %5107 = vmatpush.bf16.msra.mxu0 0
        %5108 = vmatpush.bf16.msra.mxu0 0
        %5109 = vmatpush.bf16.msra.mxu0 0
        %5110 = vmatpush.bf16.msra.mxu0 0
        %5111 = vmatpush.bf16.msra.mxu0 %v5078
        %5112 = vmatpush.bf16.msra.mxu0 %v5077
        %5113 = vmatmul.bf16.gmra.mxu0 %v5082
        %v5114 = vpop.f32.mrf.mxu0
        %v5115 = vadd.f32 0.0, %v5114
        %v5116 = vpop.f32.mrf.mxu0
        %v5117 = vadd.f32 0.0, %v5116
        %5118 = vmatmul.bf16.gmra.mxu0 %v5085
        %v5119 = vpop.f32.mrf.mxu0
        %v5120 = vadd.f32 0.0, %v5119
        %v5121 = vpop.f32.mrf.mxu0
        %v5122 = vadd.f32 0.0, %v5121
        %5123 = vmatmul.bf16.gmra.mxu0 %v5088
        %v5124 = vpop.f32.mrf.mxu0
        %v5125 = vadd.f32 0.0, %v5124
        %v5126 = vpop.f32.mrf.mxu0
        %v5127 = vadd.f32 0.0, %v5126
        %5128 = vmatmul.bf16.gmra.mxu0 %v5091
        %v5129 = vpop.f32.mrf.mxu0
        %v5130 = vadd.f32 0.0, %v5129
        %v5131 = vpop.f32.mrf.mxu0
        %v5132 = vadd.f32 0.0, %v5131
        %5133 = vmatmul.bf16.gmra.mxu0 %v5094
        %v5134 = vpop.f32.mrf.mxu0
        %v5135 = vadd.f32 0.0, %v5134
        %v5136 = vpop.f32.mrf.mxu0
        %v5137 = vadd.f32 0.0, %v5136
        %5138 = vmatmul.bf16.gmra.mxu0 %v5097
        %v5139 = vpop.f32.mrf.mxu0
        %v5140 = vadd.f32 0.0, %v5139
        %v5141 = vpop.f32.mrf.mxu0
        %v5142 = vadd.f32 0.0, %v5141
        %5143 = vmatmul.bf16.gmra.mxu0 %v5100
        %v5144 = vpop.f32.mrf.mxu0
        %v5145 = vadd.f32 0.0, %v5144
        %v5146 = vpop.f32.mrf.mxu0
        %v5147 = vadd.f32 0.0, %v5146
        %5148 = vmatmul.bf16.gmra.mxu0 %v5103
        %v5149 = vpop.f32.mrf.mxu0
        %v5150 = vadd.f32 0.0, %v5149
        %v5151 = vpop.f32.mrf.mxu0
        %v5152 = vadd.f32 0.0, %v5151
        %5153 = vdwg.mxu0
        %v5154 = vadd.f32 %v4918, %v5115
        %v5155 = vadd.f32 %v4920, %v5117
        %v5156 = vadd.f32 %v4923, %v5120
        %v5157 = vadd.f32 %v4925, %v5122
        %v5158 = vadd.f32 %v4928, %v5125
        %v5159 = vadd.f32 %v4930, %v5127
        %v5160 = vadd.f32 %v4933, %v5130
        %v5161 = vadd.f32 %v4935, %v5132
        %v5162 = vadd.f32 %v4938, %v5135
        %v5163 = vadd.f32 %v4940, %v5137
        %v5164 = vadd.f32 %v4943, %v5140
        %v5165 = vadd.f32 %v4945, %v5142
        %v5166 = vadd.f32 %v4948, %v5145
        %v5167 = vadd.f32 %v4950, %v5147
        %v5168 = vadd.f32 %v4953, %v5150
        %v5169 = vadd.f32 %v4955, %v5152
        %vm5170 = vsmask.f32 2304
        %vm5171 = vsmask.f32 6416
        %vm5172 = vmor %vm5170, %vm5171
        %v5173 = vrot.slane %v4494, 5
        %v5174 = vrot.slane %v4497, 6
        %v5175 = vor.u32 %v5173, %v5174
        %v5176 = vrot.slane %v5175, 4
        %v5177 = vshrl.u32 %v4439, 16
        %v5179 = vrot.slane %v5177, 5
        %v5180 = vrot.slane %v4503, 6
        %v5181 = vor.u32 %v5179, %v5180
        %v5182 = vsel %vm5172, %v5176, %v5181
        %v5183 = vrot.slane %v4508, 5
        %v5184 = vrot.slane %v4511, 6
        %v5185 = vor.u32 %v5183, %v5184
        %v5186 = vrot.slane %v5185, 4
        %v5187 = vshrl.u32 %v4441, 16
        %v5189 = vrot.slane %v5187, 5
        %v5190 = vrot.slane %v4517, 6
        %v5191 = vor.u32 %v5189, %v5190
        %v5192 = vsel %vm5172, %v5186, %v5191
        %v5193 = vrot.slane %v4522, 5
        %v5194 = vrot.slane %v4525, 6
        %v5195 = vor.u32 %v5193, %v5194
        %v5196 = vrot.slane %v5195, 4
        %v5197 = vshrl.u32 %v4443, 16
        %v5199 = vrot.slane %v5197, 5
        %v5200 = vrot.slane %v4531, 6
        %v5201 = vor.u32 %v5199, %v5200
        %v5202 = vsel %vm5172, %v5196, %v5201
        %v5203 = vrot.slane %v4536, 5
        %v5204 = vrot.slane %v4539, 6
        %v5205 = vor.u32 %v5203, %v5204
        %v5206 = vrot.slane %v5205, 4
        %v5207 = vshrl.u32 %v4445, 16
        %v5209 = vrot.slane %v5207, 5
        %v5210 = vrot.slane %v4545, 6
        %v5211 = vor.u32 %v5209, %v5210
        %v5212 = vsel %vm5172, %v5206, %v5211
        %v5213 = vrot.slane %v4550, 5
        %v5214 = vrot.slane %v4553, 6
        %v5215 = vor.u32 %v5213, %v5214
        %v5216 = vrot.slane %v5215, 4
        %v5217 = vshrl.u32 %v4447, 16
        %v5219 = vrot.slane %v5217, 5
        %v5220 = vrot.slane %v4559, 6
        %v5221 = vor.u32 %v5219, %v5220
        %v5222 = vsel %vm5172, %v5216, %v5221
        %v5223 = vrot.slane %v4564, 5
        %v5224 = vrot.slane %v4567, 6
        %v5225 = vor.u32 %v5223, %v5224
        %v5226 = vrot.slane %v5225, 4
        %v5227 = vshrl.u32 %v4449, 16
        %v5229 = vrot.slane %v5227, 5
        %v5230 = vrot.slane %v4573, 6
        %v5231 = vor.u32 %v5229, %v5230
        %v5232 = vsel %vm5172, %v5226, %v5231
        %v5233 = vrot.slane %v4578, 5
        %v5234 = vrot.slane %v4581, 6
        %v5235 = vor.u32 %v5233, %v5234
        %v5236 = vrot.slane %v5235, 4
        %v5237 = vshrl.u32 %v4451, 16
        %v5239 = vrot.slane %v5237, 5
        %v5240 = vrot.slane %v4587, 6
        %v5241 = vor.u32 %v5239, %v5240
        %v5242 = vsel %vm5172, %v5236, %v5241
        %v5243 = vrot.slane %v4592, 5
        %v5244 = vrot.slane %v4595, 6
        %v5245 = vor.u32 %v5243, %v5244
        %v5246 = vrot.slane %v5245, 4
        %v5247 = vshrl.u32 %v4453, 16
        %v5249 = vrot.slane %v5247, 5
        %v5250 = vrot.slane %v4601, 6
        %v5251 = vor.u32 %v5249, %v5250
        %v5252 = vsel %vm5172, %v5246, %v5251
        %v5253 = vrot.slane %v4606, 5
        %v5254 = vrot.slane %v4609, 6
        %v5255 = vor.u32 %v5253, %v5254
        %v5256 = vrot.slane %v5255, 4
        %v5257 = vshrl.u32 %v4463, 16
        %v5259 = vrot.slane %v5257, 5
        %v5260 = vrot.slane %v4615, 6
        %v5261 = vor.u32 %v5259, %v5260
        %v5262 = vsel %vm5172, %v5256, %v5261
        %v5263 = vrot.slane %v4620, 5
        %v5264 = vrot.slane %v4623, 6
        %v5265 = vor.u32 %v5263, %v5264
        %v5266 = vrot.slane %v5265, 4
        %v5267 = vshrl.u32 %v4465, 16
        %v5269 = vrot.slane %v5267, 5
        %v5270 = vrot.slane %v4629, 6
        %v5271 = vor.u32 %v5269, %v5270
        %v5272 = vsel %vm5172, %v5266, %v5271
        %v5273 = vrot.slane %v4634, 5
        %v5274 = vrot.slane %v4637, 6
        %v5275 = vor.u32 %v5273, %v5274
        %v5276 = vrot.slane %v5275, 4
        %v5277 = vshrl.u32 %v4467, 16
        %v5279 = vrot.slane %v5277, 5
        %v5280 = vrot.slane %v4643, 6
        %v5281 = vor.u32 %v5279, %v5280
        %v5282 = vsel %vm5172, %v5276, %v5281
        %v5283 = vrot.slane %v4648, 5
        %v5284 = vrot.slane %v4651, 6
        %v5285 = vor.u32 %v5283, %v5284
        %v5286 = vrot.slane %v5285, 4
        %v5287 = vshrl.u32 %v4469, 16
        %v5289 = vrot.slane %v5287, 5
        %v5290 = vrot.slane %v4657, 6
        %v5291 = vor.u32 %v5289, %v5290
        %v5292 = vsel %vm5172, %v5286, %v5291
        %v5293 = vrot.slane %v4662, 5
        %v5294 = vrot.slane %v4665, 6
        %v5295 = vor.u32 %v5293, %v5294
        %v5296 = vrot.slane %v5295, 4
        %v5297 = vshrl.u32 %v4471, 16
        %v5299 = vrot.slane %v5297, 5
        %v5300 = vrot.slane %v4671, 6
        %v5301 = vor.u32 %v5299, %v5300
        %v5302 = vsel %vm5172, %v5296, %v5301
        %v5303 = vrot.slane %v4676, 5
        %v5304 = vrot.slane %v4679, 6
        %v5305 = vor.u32 %v5303, %v5304
        %v5306 = vrot.slane %v5305, 4
        %v5307 = vshrl.u32 %v4473, 16
        %v5309 = vrot.slane %v5307, 5
        %v5310 = vrot.slane %v4685, 6
        %v5311 = vor.u32 %v5309, %v5310
        %v5312 = vsel %vm5172, %v5306, %v5311
        %v5313 = vrot.slane %v4690, 5
        %v5314 = vrot.slane %v4693, 6
        %v5315 = vor.u32 %v5313, %v5314
        %v5316 = vrot.slane %v5315, 4
        %v5317 = vshrl.u32 %v4475, 16
        %v5319 = vrot.slane %v5317, 5
        %v5320 = vrot.slane %v4699, 6
        %v5321 = vor.u32 %v5319, %v5320
        %v5322 = vsel %vm5172, %v5316, %v5321
        %v5323 = vrot.slane %v4704, 5
        %v5324 = vrot.slane %v4707, 6
        %v5325 = vor.u32 %v5323, %v5324
        %v5326 = vrot.slane %v5325, 4
        %v5327 = vshrl.u32 %v4477, 16
        %v5329 = vrot.slane %v5327, 5
        %v5330 = vrot.slane %v4713, 6
        %v5331 = vor.u32 %v5329, %v5330
        %v5332 = vsel %vm5172, %v5326, %v5331
        %s5333 = scalar_lea.vmem %s4, 48
        %v5334 = vld [vmem:[%s5333] sm:$0xf]
        %v5335 = vld [vmem:[%s5333 + $0x4] sm:$0xf]
        %v5336 = vld [vmem:[%s5333 + $0x8] sm:$0xf]
        %v5337 = vld [vmem:[%s5333 + $0xc] sm:$0xf]
        %v5338 = vunpack.c.l.b16 %v5182
        %v5339 = vunpack.c.l.b16 %v5192
        %v5340 = vunpack.c.l.b16 %v5202
        %v5341 = vunpack.c.l.b16 %v5212
        %v5342 = vunpack.c.l.b16 %v5222
        %v5343 = vunpack.c.l.b16 %v5232
        %v5344 = vunpack.c.l.b16 %v5242
        %v5345 = vunpack.c.l.b16 %v5252
        %v5346 = vunpack.c.l.b16 %v5262
        %v5347 = vunpack.c.l.b16 %v5272
        %v5348 = vunpack.c.l.b16 %v5282
        %v5349 = vunpack.c.l.b16 %v5292
        %v5350 = vunpack.c.l.b16 %v5302
        %v5351 = vunpack.c.l.b16 %v5312
        %v5352 = vunpack.c.l.b16 %v5322
        %v5353 = vunpack.c.l.b16 %v5332
        %v5354 = vpack.c.b16 %v5339, %v5338
        %v5355 = vpack.c.b16 %v5341, %v5340
        %v5356 = vpack.c.b16 %v5343, %v5342
        %v5357 = vpack.c.b16 %v5345, %v5344
        %v5358 = vpack.c.b16 %v5347, %v5346
        %v5359 = vpack.c.b16 %v5349, %v5348
        %v5360 = vpack.c.b16 %v5351, %v5350
        %v5361 = vpack.c.b16 %v5353, %v5352
        %v5366 = vunpack.c.l.b16 %v5334
        %v5367 = vunpack.c.l.b16 %v5335
        %v5368 = vunpack.c.l.b16 %v5336
        %v5369 = vunpack.c.l.b16 %v5337
        %v5370 = vpack.c.b16 %v5367, %v5366
        %v5371 = vpack.c.b16 %v5369, %v5368
        %v5375 = vsel %vm4758, %v5354, 0
        %v5378 = vsel %vm4758, %v5355, 0
        %v5381 = vsel %vm4758, %v5356, 0
        %v5384 = vsel %vm4758, %v5357, 0
        %v5387 = vsel %vm4758, %v5358, 0
        %v5390 = vsel %vm4758, %v5359, 0
        %v5393 = vsel %vm4758, %v5360, 0
        %v5396 = vsel %vm4758, %v5361, 0
        %5398 = vmatpush.bf16.msra.mxu0 0
        %5399 = vmatpush.bf16.msra.mxu0 0
        %5400 = vmatpush.bf16.msra.mxu0 0
        %5401 = vmatpush.bf16.msra.mxu0 0
        %5402 = vmatpush.bf16.msra.mxu0 0
        %5403 = vmatpush.bf16.msra.mxu0 0
        %5404 = vmatpush.bf16.msra.mxu0 %v5371
        %5405 = vmatpush.bf16.msra.mxu0 %v5370
        %5406 = vmatmul.bf16.gmra.mxu0 %v5375
        %v5407 = vpop.f32.mrf.mxu0
        %v5408 = vadd.f32 0.0, %v5407
        %v5409 = vpop.f32.mrf.mxu0
        %v5410 = vadd.f32 0.0, %v5409
        %5411 = vmatmul.bf16.gmra.mxu0 %v5378
        %v5412 = vpop.f32.mrf.mxu0
        %v5413 = vadd.f32 0.0, %v5412
        %v5414 = vpop.f32.mrf.mxu0
        %v5415 = vadd.f32 0.0, %v5414
        %5416 = vmatmul.bf16.gmra.mxu0 %v5381
        %v5417 = vpop.f32.mrf.mxu0
        %v5418 = vadd.f32 0.0, %v5417
        %v5419 = vpop.f32.mrf.mxu0
        %v5420 = vadd.f32 0.0, %v5419
        %5421 = vmatmul.bf16.gmra.mxu0 %v5384
        %v5422 = vpop.f32.mrf.mxu0
        %v5423 = vadd.f32 0.0, %v5422
        %v5424 = vpop.f32.mrf.mxu0
        %v5425 = vadd.f32 0.0, %v5424
        %5426 = vmatmul.bf16.gmra.mxu0 %v5387
        %v5427 = vpop.f32.mrf.mxu0
        %v5428 = vadd.f32 0.0, %v5427
        %v5429 = vpop.f32.mrf.mxu0
        %v5430 = vadd.f32 0.0, %v5429
        %5431 = vmatmul.bf16.gmra.mxu0 %v5390
        %v5432 = vpop.f32.mrf.mxu0
        %v5433 = vadd.f32 0.0, %v5432
        %v5434 = vpop.f32.mrf.mxu0
        %v5435 = vadd.f32 0.0, %v5434
        %5436 = vmatmul.bf16.gmra.mxu0 %v5393
        %v5437 = vpop.f32.mrf.mxu0
        %v5438 = vadd.f32 0.0, %v5437
        %v5439 = vpop.f32.mrf.mxu0
        %v5440 = vadd.f32 0.0, %v5439
        %5441 = vmatmul.bf16.gmra.mxu0 %v5396
        %v5442 = vpop.f32.mrf.mxu0
        %v5443 = vadd.f32 0.0, %v5442
        %v5444 = vpop.f32.mrf.mxu0
        %v5445 = vadd.f32 0.0, %v5444
        %5446 = vdwg.mxu0
        %v5447 = vadd.f32 %v5154, %v5408
        %v5448 = vadd.f32 %v5155, %v5410
        %v5449 = vadd.f32 %v5156, %v5413
        %v5450 = vadd.f32 %v5157, %v5415
        %v5451 = vadd.f32 %v5158, %v5418
        %v5452 = vadd.f32 %v5159, %v5420
        %v5453 = vadd.f32 %v5160, %v5423
        %v5454 = vadd.f32 %v5161, %v5425
        %v5455 = vadd.f32 %v5162, %v5428
        %v5456 = vadd.f32 %v5163, %v5430
        %v5457 = vadd.f32 %v5164, %v5433
        %v5458 = vadd.f32 %v5165, %v5435
        %v5459 = vadd.f32 %v5166, %v5438
        %v5460 = vadd.f32 %v5167, %v5440
        %v5461 = vadd.f32 %v5168, %v5443
        %v5462 = vadd.f32 %v5169, %v5445
        %vm5463 = vcmask 1041408
        %vm5464 = vcmask 1045508
        %vm5465 = vmor %vm5463, %vm5464
        %v5466 = vrot.slane %v4438, 6
        %v5467 = vrot.slane %v5466, 4
        %v5468 = vrot.slane %v4439, 6
        %v5469 = vsel %vm5465, %v5467, %v5468
        %v5470 = vrot.slane %v4440, 6
        %v5471 = vrot.slane %v5470, 4
        %v5472 = vrot.slane %v4441, 6
        %v5473 = vsel %vm5465, %v5471, %v5472
        %v5474 = vrot.slane %v4442, 6
        %v5475 = vrot.slane %v5474, 4
        %v5476 = vrot.slane %v4443, 6
        %v5477 = vsel %vm5465, %v5475, %v5476
        %v5478 = vrot.slane %v4444, 6
        %v5479 = vrot.slane %v5478, 4
        %v5480 = vrot.slane %v4445, 6
        %v5481 = vsel %vm5465, %v5479, %v5480
        %v5482 = vrot.slane %v4446, 6
        %v5483 = vrot.slane %v5482, 4
        %v5484 = vrot.slane %v4447, 6
        %v5485 = vsel %vm5465, %v5483, %v5484
        %v5486 = vrot.slane %v4448, 6
        %v5487 = vrot.slane %v5486, 4
        %v5488 = vrot.slane %v4449, 6
        %v5489 = vsel %vm5465, %v5487, %v5488
        %v5490 = vrot.slane %v4450, 6
        %v5491 = vrot.slane %v5490, 4
        %v5492 = vrot.slane %v4451, 6
        %v5493 = vsel %vm5465, %v5491, %v5492
        %v5494 = vrot.slane %v4452, 6
        %v5495 = vrot.slane %v5494, 4
        %v5496 = vrot.slane %v4453, 6
        %v5497 = vsel %vm5465, %v5495, %v5496
        %v5498 = vrot.slane %v4462, 6
        %v5499 = vrot.slane %v5498, 4
        %v5500 = vrot.slane %v4463, 6
        %v5501 = vsel %vm5465, %v5499, %v5500
        %v5502 = vrot.slane %v4464, 6
        %v5503 = vrot.slane %v5502, 4
        %v5504 = vrot.slane %v4465, 6
        %v5505 = vsel %vm5465, %v5503, %v5504
        %v5506 = vrot.slane %v4466, 6
        %v5507 = vrot.slane %v5506, 4
        %v5508 = vrot.slane %v4467, 6
        %v5509 = vsel %vm5465, %v5507, %v5508
        %v5510 = vrot.slane %v4468, 6
        %v5511 = vrot.slane %v5510, 4
        %v5512 = vrot.slane %v4469, 6
        %v5513 = vsel %vm5465, %v5511, %v5512
        %v5514 = vrot.slane %v4470, 6
        %v5515 = vrot.slane %v5514, 4
        %v5516 = vrot.slane %v4471, 6
        %v5517 = vsel %vm5465, %v5515, %v5516
        %v5518 = vrot.slane %v4472, 6
        %v5519 = vrot.slane %v5518, 4
        %v5520 = vrot.slane %v4473, 6
        %v5521 = vsel %vm5465, %v5519, %v5520
        %v5522 = vrot.slane %v4474, 6
        %v5523 = vrot.slane %v5522, 4
        %v5524 = vrot.slane %v4475, 6
        %v5525 = vsel %vm5465, %v5523, %v5524
        %v5526 = vrot.slane %v4476, 6
        %v5527 = vrot.slane %v5526, 4
        %v5528 = vrot.slane %v4477, 6
        %v5529 = vsel %vm5465, %v5527, %v5528
        %s5530 = scalar_lea.vmem %s4, 64
        %v5531 = vld [vmem:[%s5530] sm:$0xf]
        %v5532 = vld [vmem:[%s5530 + $0x4] sm:$0xf]
        %v5533 = vld [vmem:[%s5530 + $0x8] sm:$0xf]
        %v5534 = vld [vmem:[%s5530 + $0xc] sm:$0xf]
        %v5535 = vunpack.c.l.b16 %v5469
        %v5536 = vunpack.c.l.b16 %v5473
        %v5537 = vunpack.c.l.b16 %v5477
        %v5538 = vunpack.c.l.b16 %v5481
        %v5539 = vunpack.c.l.b16 %v5485
        %v5540 = vunpack.c.l.b16 %v5489
        %v5541 = vunpack.c.l.b16 %v5493
        %v5542 = vunpack.c.l.b16 %v5497
        %v5543 = vunpack.c.l.b16 %v5501
        %v5544 = vunpack.c.l.b16 %v5505
        %v5545 = vunpack.c.l.b16 %v5509
        %v5546 = vunpack.c.l.b16 %v5513
        %v5547 = vunpack.c.l.b16 %v5517
        %v5548 = vunpack.c.l.b16 %v5521
        %v5549 = vunpack.c.l.b16 %v5525
        %v5550 = vunpack.c.l.b16 %v5529
        %v5551 = vpack.c.b16 %v5536, %v5535
        %v5552 = vpack.c.b16 %v5538, %v5537
        %v5553 = vpack.c.b16 %v5540, %v5539
        %v5554 = vpack.c.b16 %v5542, %v5541
        %v5555 = vpack.c.b16 %v5544, %v5543
        %v5556 = vpack.c.b16 %v5546, %v5545
        %v5557 = vpack.c.b16 %v5548, %v5547
        %v5558 = vpack.c.b16 %v5550, %v5549
        %v5563 = vunpack.c.l.b16 %v5531
        %v5564 = vunpack.c.l.b16 %v5532
        %v5565 = vunpack.c.l.b16 %v5533
        %v5566 = vunpack.c.l.b16 %v5534
        %v5567 = vpack.c.b16 %v5564, %v5563
        %v5568 = vpack.c.b16 %v5566, %v5565
        %v5572 = vsel %vm4758, %v5551, 0
        %v5575 = vsel %vm4758, %v5552, 0
        %v5578 = vsel %vm4758, %v5553, 0
        %v5581 = vsel %vm4758, %v5554, 0
        %v5584 = vsel %vm4758, %v5555, 0
        %v5587 = vsel %vm4758, %v5556, 0
        %v5590 = vsel %vm4758, %v5557, 0
        %v5593 = vsel %vm4758, %v5558, 0
        %5595 = vmatpush.bf16.msra.mxu0 0
        %5596 = vmatpush.bf16.msra.mxu0 0
        %5597 = vmatpush.bf16.msra.mxu0 0
        %5598 = vmatpush.bf16.msra.mxu0 0
        %5599 = vmatpush.bf16.msra.mxu0 0
        %5600 = vmatpush.bf16.msra.mxu0 0
        %5601 = vmatpush.bf16.msra.mxu0 %v5568
        %5602 = vmatpush.bf16.msra.mxu0 %v5567
        %5603 = vmatmul.bf16.gmra.mxu0 %v5572
        %v5604 = vpop.f32.mrf.mxu0
        %v5605 = vadd.f32 0.0, %v5604
        %v5606 = vpop.f32.mrf.mxu0
        %v5607 = vadd.f32 0.0, %v5606
        %5608 = vmatmul.bf16.gmra.mxu0 %v5575
        %v5609 = vpop.f32.mrf.mxu0
        %v5610 = vadd.f32 0.0, %v5609
        %v5611 = vpop.f32.mrf.mxu0
        %v5612 = vadd.f32 0.0, %v5611
        %5613 = vmatmul.bf16.gmra.mxu0 %v5578
        %v5614 = vpop.f32.mrf.mxu0
        %v5615 = vadd.f32 0.0, %v5614
        %v5616 = vpop.f32.mrf.mxu0
        %v5617 = vadd.f32 0.0, %v5616
        %5618 = vmatmul.bf16.gmra.mxu0 %v5581
        %v5619 = vpop.f32.mrf.mxu0
        %v5620 = vadd.f32 0.0, %v5619
        %v5621 = vpop.f32.mrf.mxu0
        %v5622 = vadd.f32 0.0, %v5621
        %5623 = vmatmul.bf16.gmra.mxu0 %v5584
        %v5624 = vpop.f32.mrf.mxu0
        %v5625 = vadd.f32 0.0, %v5624
        %v5626 = vpop.f32.mrf.mxu0
        %v5627 = vadd.f32 0.0, %v5626
        %5628 = vmatmul.bf16.gmra.mxu0 %v5587
        %v5629 = vpop.f32.mrf.mxu0
        %v5630 = vadd.f32 0.0, %v5629
        %v5631 = vpop.f32.mrf.mxu0
        %v5632 = vadd.f32 0.0, %v5631
        %5633 = vmatmul.bf16.gmra.mxu0 %v5590
        %v5634 = vpop.f32.mrf.mxu0
        %v5635 = vadd.f32 0.0, %v5634
        %v5636 = vpop.f32.mrf.mxu0
        %v5637 = vadd.f32 0.0, %v5636
        %5638 = vmatmul.bf16.gmra.mxu0 %v5593
        %v5639 = vpop.f32.mrf.mxu0
        %v5640 = vadd.f32 0.0, %v5639
        %v5641 = vpop.f32.mrf.mxu0
        %v5642 = vadd.f32 0.0, %v5641
        %5643 = vdwg.mxu0
        %v5644 = vadd.f32 %v5447, %v5605
        %v5645 = vadd.f32 %v5448, %v5607
        %v5646 = vadd.f32 %v5449, %v5610
        %v5647 = vadd.f32 %v5450, %v5612
        %v5648 = vadd.f32 %v5451, %v5615
        %v5649 = vadd.f32 %v5452, %v5617
        %v5650 = vadd.f32 %v5453, %v5620
        %v5651 = vadd.f32 %v5454, %v5622
        %v5652 = vadd.f32 %v5455, %v5625
        %v5653 = vadd.f32 %v5456, %v5627
        %v5654 = vadd.f32 %v5457, %v5630
        %v5655 = vadd.f32 %v5458, %v5632
        %v5656 = vadd.f32 %v5459, %v5635
        %v5657 = vadd.f32 %v5460, %v5637
        %v5658 = vadd.f32 %v5461, %v5640
        %v5659 = vadd.f32 %v5462, %v5642
        %s5660 = scalar_lea.vmem %s4, 80
        %v5661 = vld [vmem:[%s5660] sm:$0xf]
        %v5662 = vld [vmem:[%s5660 + $0x4] sm:$0xf]
        %v5663 = vld [vmem:[%s5660 + $0x8] sm:$0xf]
        %v5664 = vld [vmem:[%s5660 + $0xc] sm:$0xf]
        %v5667 = vunpack.c.l.b16 %v4454
        %v5668 = vunpack.c.l.b16 %v4478
        %v5669 = vpack.c.b16 %v4850, %v4849
        %v5670 = vpack.c.b16 %v4852, %v4851
        %v5671 = vpack.c.b16 %v4854, %v4853
        %v5672 = vpack.c.b16 %v5667, %v4855
        %v5673 = vpack.c.b16 %v4858, %v4857
        %v5674 = vpack.c.b16 %v4860, %v4859
        %v5675 = vpack.c.b16 %v4862, %v4861
        %v5676 = vpack.c.b16 %v5668, %v4863
        %v5681 = vunpack.c.l.b16 %v5661
        %v5682 = vunpack.c.l.b16 %v5662
        %v5683 = vunpack.c.l.b16 %v5663
        %v5684 = vunpack.c.l.b16 %v5664
        %v5685 = vpack.c.b16 %v5682, %v5681
        %v5686 = vpack.c.b16 %v5684, %v5683
        %v5690 = vsel %vm4758, %v5669, 0
        %v5693 = vsel %vm4758, %v5670, 0
        %v5696 = vsel %vm4758, %v5671, 0
        %v5699 = vsel %vm4758, %v5672, 0
        %v5702 = vsel %vm4758, %v5673, 0
        %v5705 = vsel %vm4758, %v5674, 0
        %v5708 = vsel %vm4758, %v5675, 0
        %v5711 = vsel %vm4758, %v5676, 0
        %5713 = vmatpush.bf16.msra.mxu0 0
        %5714 = vmatpush.bf16.msra.mxu0 0
        %5715 = vmatpush.bf16.msra.mxu0 0
        %5716 = vmatpush.bf16.msra.mxu0 0
        %5717 = vmatpush.bf16.msra.mxu0 0
        %5718 = vmatpush.bf16.msra.mxu0 0
        %5719 = vmatpush.bf16.msra.mxu0 %v5686
        %5720 = vmatpush.bf16.msra.mxu0 %v5685
        %5721 = vmatmul.bf16.gmra.mxu0 %v5690
        %v5722 = vpop.f32.mrf.mxu0
        %v5723 = vadd.f32 0.0, %v5722
        %v5724 = vpop.f32.mrf.mxu0
        %v5725 = vadd.f32 0.0, %v5724
        %5726 = vmatmul.bf16.gmra.mxu0 %v5693
        %v5727 = vpop.f32.mrf.mxu0
        %v5728 = vadd.f32 0.0, %v5727
        %v5729 = vpop.f32.mrf.mxu0
        %v5730 = vadd.f32 0.0, %v5729
        %5731 = vmatmul.bf16.gmra.mxu0 %v5696
        %v5732 = vpop.f32.mrf.mxu0
        %v5733 = vadd.f32 0.0, %v5732
        %v5734 = vpop.f32.mrf.mxu0
        %v5735 = vadd.f32 0.0, %v5734
        %5736 = vmatmul.bf16.gmra.mxu0 %v5699
        %v5737 = vpop.f32.mrf.mxu0
        %v5738 = vadd.f32 0.0, %v5737
        %v5739 = vpop.f32.mrf.mxu0
        %v5740 = vadd.f32 0.0, %v5739
        %5741 = vmatmul.bf16.gmra.mxu0 %v5702
        %v5742 = vpop.f32.mrf.mxu0
        %v5743 = vadd.f32 0.0, %v5742
        %v5744 = vpop.f32.mrf.mxu0
        %v5745 = vadd.f32 0.0, %v5744
        %5746 = vmatmul.bf16.gmra.mxu0 %v5705
        %v5747 = vpop.f32.mrf.mxu0
        %v5748 = vadd.f32 0.0, %v5747
        %v5749 = vpop.f32.mrf.mxu0
        %v5750 = vadd.f32 0.0, %v5749
        %5751 = vmatmul.bf16.gmra.mxu0 %v5708
        %v5752 = vpop.f32.mrf.mxu0
        %v5753 = vadd.f32 0.0, %v5752
        %v5754 = vpop.f32.mrf.mxu0
        %v5755 = vadd.f32 0.0, %v5754
        %5756 = vmatmul.bf16.gmra.mxu0 %v5711
        %v5757 = vpop.f32.mrf.mxu0
        %v5758 = vadd.f32 0.0, %v5757
        %v5759 = vpop.f32.mrf.mxu0
        %v5760 = vadd.f32 0.0, %v5759
        %5761 = vdwg.mxu0
        %v5762 = vadd.f32 %v5644, %v5723
        %v5763 = vadd.f32 %v5645, %v5725
        %v5764 = vadd.f32 %v5646, %v5728
        %v5765 = vadd.f32 %v5647, %v5730
        %v5766 = vadd.f32 %v5648, %v5733
        %v5767 = vadd.f32 %v5649, %v5735
        %v5768 = vadd.f32 %v5650, %v5738
        %v5769 = vadd.f32 %v5651, %v5740
        %v5770 = vadd.f32 %v5652, %v5743
        %v5771 = vadd.f32 %v5653, %v5745
        %v5772 = vadd.f32 %v5654, %v5748
        %v5773 = vadd.f32 %v5655, %v5750
        %v5774 = vadd.f32 %v5656, %v5753
        %v5775 = vadd.f32 %v5657, %v5755
        %v5776 = vadd.f32 %v5658, %v5758
        %v5777 = vadd.f32 %v5659, %v5760
        %v5779 = vshrl.u32 %v4454, 16
        %v5781 = vrot.slane %v5779, 4
        %v5782 = vshll.u32 %v4454, 16
        %v5784 = vrot.slane %v5782, 5
        %v5785 = vor.u32 %v5781, %v5784
        %v5786 = vrot.slane %v5785, 4
        %v5788 = vshll.u32 %v4455, 16
        %v5790 = vrot.slane %v5788, 5
        %v5791 = vsel %vm4492, %v5786, %v5790
        %v5793 = vshrl.u32 %v4478, 16
        %v5795 = vrot.slane %v5793, 4
        %v5796 = vshll.u32 %v4478, 16
        %v5798 = vrot.slane %v5796, 5
        %v5799 = vor.u32 %v5795, %v5798
        %v5800 = vrot.slane %v5799, 4
        %v5802 = vshll.u32 %v4479, 16
        %v5804 = vrot.slane %v5802, 5
        %v5805 = vsel %vm4492, %v5800, %v5804
        %s5806 = scalar_lea.vmem %s4, 96
        %v5807 = vld [vmem:[%s5806] sm:$0xf]
        %v5808 = vld [vmem:[%s5806 + $0x4] sm:$0xf]
        %v5809 = vld [vmem:[%s5806 + $0x8] sm:$0xf]
        %v5810 = vld [vmem:[%s5806 + $0xc] sm:$0xf]
        %v5811 = vunpack.c.l.b16 %v5791
        %v5812 = vunpack.c.l.b16 %v5805
        %v5813 = vpack.c.b16 %v4724, %v4723
        %v5814 = vpack.c.b16 %v4726, %v4725
        %v5815 = vpack.c.b16 %v4728, %v4727
        %v5816 = vpack.c.b16 %v5811, %v4729
        %v5817 = vpack.c.b16 %v4732, %v4731
        %v5818 = vpack.c.b16 %v4734, %v4733
        %v5819 = vpack.c.b16 %v4736, %v4735
        %v5820 = vpack.c.b16 %v5812, %v4737
        %v5825 = vunpack.c.l.b16 %v5807
        %v5826 = vunpack.c.l.b16 %v5808
        %v5827 = vunpack.c.l.b16 %v5809
        %v5828 = vunpack.c.l.b16 %v5810
        %v5829 = vpack.c.b16 %v5826, %v5825
        %v5830 = vpack.c.b16 %v5828, %v5827
        %v5834 = vsel %vm4758, %v5813, 0
        %v5837 = vsel %vm4758, %v5814, 0
        %v5840 = vsel %vm4758, %v5815, 0
        %v5843 = vsel %vm4758, %v5816, 0
        %v5846 = vsel %vm4758, %v5817, 0
        %v5849 = vsel %vm4758, %v5818, 0
        %v5852 = vsel %vm4758, %v5819, 0
        %v5855 = vsel %vm4758, %v5820, 0
        %5857 = vmatpush.bf16.msra.mxu0 0
        %5858 = vmatpush.bf16.msra.mxu0 0
        %5859 = vmatpush.bf16.msra.mxu0 0
        %5860 = vmatpush.bf16.msra.mxu0 0
        %5861 = vmatpush.bf16.msra.mxu0 0
        %5862 = vmatpush.bf16.msra.mxu0 0
        %5863 = vmatpush.bf16.msra.mxu0 %v5830
        %5864 = vmatpush.bf16.msra.mxu0 %v5829
        %5865 = vmatmul.bf16.gmra.mxu0 %v5834
        %v5866 = vpop.f32.mrf.mxu0
        %v5867 = vadd.f32 0.0, %v5866
        %v5868 = vpop.f32.mrf.mxu0
        %v5869 = vadd.f32 0.0, %v5868
        %5870 = vmatmul.bf16.gmra.mxu0 %v5837
        %v5871 = vpop.f32.mrf.mxu0
        %v5872 = vadd.f32 0.0, %v5871
        %v5873 = vpop.f32.mrf.mxu0
        %v5874 = vadd.f32 0.0, %v5873
        %5875 = vmatmul.bf16.gmra.mxu0 %v5840
        %v5876 = vpop.f32.mrf.mxu0
        %v5877 = vadd.f32 0.0, %v5876
        %v5878 = vpop.f32.mrf.mxu0
        %v5879 = vadd.f32 0.0, %v5878
        %5880 = vmatmul.bf16.gmra.mxu0 %v5843
        %v5881 = vpop.f32.mrf.mxu0
        %v5882 = vadd.f32 0.0, %v5881
        %v5883 = vpop.f32.mrf.mxu0
        %v5884 = vadd.f32 0.0, %v5883
        %5885 = vmatmul.bf16.gmra.mxu0 %v5846
        %v5886 = vpop.f32.mrf.mxu0
        %v5887 = vadd.f32 0.0, %v5886
        %v5888 = vpop.f32.mrf.mxu0
        %v5889 = vadd.f32 0.0, %v5888
        %5890 = vmatmul.bf16.gmra.mxu0 %v5849
        %v5891 = vpop.f32.mrf.mxu0
        %v5892 = vadd.f32 0.0, %v5891
        %v5893 = vpop.f32.mrf.mxu0
        %v5894 = vadd.f32 0.0, %v5893
        %5895 = vmatmul.bf16.gmra.mxu0 %v5852
        %v5896 = vpop.f32.mrf.mxu0
        %v5897 = vadd.f32 0.0, %v5896
        %v5898 = vpop.f32.mrf.mxu0
        %v5899 = vadd.f32 0.0, %v5898
        %5900 = vmatmul.bf16.gmra.mxu0 %v5855
        %v5901 = vpop.f32.mrf.mxu0
        %v5902 = vadd.f32 0.0, %v5901
        %v5903 = vpop.f32.mrf.mxu0
        %v5904 = vadd.f32 0.0, %v5903
        %5905 = vdwg.mxu0
        %v5906 = vadd.f32 %v5762, %v5867
        %v5907 = vadd.f32 %v5763, %v5869
        %v5908 = vadd.f32 %v5764, %v5872
        %v5909 = vadd.f32 %v5765, %v5874
        %v5910 = vadd.f32 %v5766, %v5877
        %v5911 = vadd.f32 %v5767, %v5879
        %v5912 = vadd.f32 %v5768, %v5882
        %v5913 = vadd.f32 %v5769, %v5884
        %v5914 = vadd.f32 %v5770, %v5887
        %v5915 = vadd.f32 %v5771, %v5889
        %v5916 = vadd.f32 %v5772, %v5892
        %v5917 = vadd.f32 %v5773, %v5894
        %v5918 = vadd.f32 %v5774, %v5897
        %v5919 = vadd.f32 %v5775, %v5899
        %v5920 = vadd.f32 %v5776, %v5902
        %v5921 = vadd.f32 %v5777, %v5904
        %v5924 = vrot.slane %v4454, 5
        %v5925 = vrot.slane %v5924, 4
        %v5926 = vrot.slane %v4455, 5
        %v5927 = vsel %vm4975, %v5925, %v5926
        %v5928 = vrot.slane %v4478, 5
        %v5929 = vrot.slane %v5928, 4
        %v5930 = vrot.slane %v4479, 5
        %v5931 = vsel %vm4975, %v5929, %v5930
        %s5932 = scalar_lea.vmem %s4, 112
        %v5933 = vld [vmem:[%s5932] sm:$0xf]
        %v5934 = vld [vmem:[%s5932 + $0x4] sm:$0xf]
        %v5935 = vld [vmem:[%s5932 + $0x8] sm:$0xf]
        %v5936 = vld [vmem:[%s5932 + $0xc] sm:$0xf]
        %v5937 = vunpack.c.l.b16 %v5927
        %v5938 = vunpack.c.l.b16 %v5931
        %v5939 = vpack.c.b16 %v5047, %v5046
        %v5940 = vpack.c.b16 %v5049, %v5048
        %v5941 = vpack.c.b16 %v5051, %v5050
        %v5942 = vpack.c.b16 %v5937, %v5052
        %v5943 = vpack.c.b16 %v5055, %v5054
        %v5944 = vpack.c.b16 %v5057, %v5056
        %v5945 = vpack.c.b16 %v5059, %v5058
        %v5946 = vpack.c.b16 %v5938, %v5060
        %v5951 = vunpack.c.l.b16 %v5933
        %v5952 = vunpack.c.l.b16 %v5934
        %v5953 = vunpack.c.l.b16 %v5935
        %v5954 = vunpack.c.l.b16 %v5936
        %v5955 = vpack.c.b16 %v5952, %v5951
        %v5956 = vpack.c.b16 %v5954, %v5953
        %v5960 = vsel %vm4758, %v5939, 0
        %v5963 = vsel %vm4758, %v5940, 0
        %v5966 = vsel %vm4758, %v5941, 0
        %v5969 = vsel %vm4758, %v5942, 0
        %v5972 = vsel %vm4758, %v5943, 0
        %v5975 = vsel %vm4758, %v5944, 0
        %v5978 = vsel %vm4758, %v5945, 0
        %v5981 = vsel %vm4758, %v5946, 0
        %5983 = vmatpush.bf16.msra.mxu0 0
        %5984 = vmatpush.bf16.msra.mxu0 0
        %5985 = vmatpush.bf16.msra.mxu0 0
        %5986 = vmatpush.bf16.msra.mxu0 0
        %5987 = vmatpush.bf16.msra.mxu0 0
        %5988 = vmatpush.bf16.msra.mxu0 0
        %5989 = vmatpush.bf16.msra.mxu0 %v5956
        %5990 = vmatpush.bf16.msra.mxu0 %v5955
        %5991 = vmatmul.bf16.gmra.mxu0 %v5960
        %v5992 = vpop.f32.mrf.mxu0
        %v5993 = vadd.f32 0.0, %v5992
        %v5994 = vpop.f32.mrf.mxu0
        %v5995 = vadd.f32 0.0, %v5994
        %5996 = vmatmul.bf16.gmra.mxu0 %v5963
        %v5997 = vpop.f32.mrf.mxu0
        %v5998 = vadd.f32 0.0, %v5997
        %v5999 = vpop.f32.mrf.mxu0
        %v6000 = vadd.f32 0.0, %v5999
        %6001 = vmatmul.bf16.gmra.mxu0 %v5966
        %v6002 = vpop.f32.mrf.mxu0
        %v6003 = vadd.f32 0.0, %v6002
        %v6004 = vpop.f32.mrf.mxu0
        %v6005 = vadd.f32 0.0, %v6004
        %6006 = vmatmul.bf16.gmra.mxu0 %v5969
        %v6007 = vpop.f32.mrf.mxu0
        %v6008 = vadd.f32 0.0, %v6007
        %v6009 = vpop.f32.mrf.mxu0
        %v6010 = vadd.f32 0.0, %v6009
        %6011 = vmatmul.bf16.gmra.mxu0 %v5972
        %v6012 = vpop.f32.mrf.mxu0
        %v6013 = vadd.f32 0.0, %v6012
        %v6014 = vpop.f32.mrf.mxu0
        %v6015 = vadd.f32 0.0, %v6014
        %6016 = vmatmul.bf16.gmra.mxu0 %v5975
        %v6017 = vpop.f32.mrf.mxu0
        %v6018 = vadd.f32 0.0, %v6017
        %v6019 = vpop.f32.mrf.mxu0
        %v6020 = vadd.f32 0.0, %v6019
        %6021 = vmatmul.bf16.gmra.mxu0 %v5978
        %v6022 = vpop.f32.mrf.mxu0
        %v6023 = vadd.f32 0.0, %v6022
        %v6024 = vpop.f32.mrf.mxu0
        %v6025 = vadd.f32 0.0, %v6024
        %6026 = vmatmul.bf16.gmra.mxu0 %v5981
        %v6027 = vpop.f32.mrf.mxu0
        %v6028 = vadd.f32 0.0, %v6027
        %v6029 = vpop.f32.mrf.mxu0
        %v6030 = vadd.f32 0.0, %v6029
        %6031 = vdwg.mxu0
        %v6032 = vadd.f32 %v5906, %v5993
        %v6033 = vadd.f32 %v5907, %v5995
        %v6034 = vadd.f32 %v5908, %v5998
        %v6035 = vadd.f32 %v5909, %v6000
        %v6036 = vadd.f32 %v5910, %v6003
        %v6037 = vadd.f32 %v5911, %v6005
        %v6038 = vadd.f32 %v5912, %v6008
        %v6039 = vadd.f32 %v5913, %v6010
        %v6040 = vadd.f32 %v5914, %v6013
        %v6041 = vadd.f32 %v5915, %v6015
        %v6042 = vadd.f32 %v5916, %v6018
        %v6043 = vadd.f32 %v5917, %v6020
        %v6044 = vadd.f32 %v5918, %v6023
        %v6045 = vadd.f32 %v5919, %v6025
        %v6046 = vadd.f32 %v5920, %v6028
        %v6047 = vadd.f32 %v5921, %v6030
        %v6048 = vrot.slane %v5779, 5
        %v6049 = vrot.slane %v5782, 6
        %v6050 = vor.u32 %v6048, %v6049
        %v6051 = vrot.slane %v6050, 4
        %v6052 = vshrl.u32 %v4455, 16
        %v6054 = vrot.slane %v6052, 5
        %v6055 = vrot.slane %v5788, 6
        %v6056 = vor.u32 %v6054, %v6055
        %v6057 = vsel %vm5172, %v6051, %v6056
        %v6058 = vrot.slane %v5793, 5
        %v6059 = vrot.slane %v5796, 6
        %v6060 = vor.u32 %v6058, %v6059
        %v6061 = vrot.slane %v6060, 4
        %v6062 = vshrl.u32 %v4479, 16
        %v6064 = vrot.slane %v6062, 5
        %v6065 = vrot.slane %v5802, 6
        %v6066 = vor.u32 %v6064, %v6065
        %v6067 = vsel %vm5172, %v6061, %v6066
        %s6068 = scalar_lea.vmem %s4, 128
        %v6069 = vld [vmem:[%s6068] sm:$0xf]
        %v6070 = vld [vmem:[%s6068 + $0x4] sm:$0xf]
        %v6071 = vld [vmem:[%s6068 + $0x8] sm:$0xf]
        %v6072 = vld [vmem:[%s6068 + $0xc] sm:$0xf]
        %v6073 = vunpack.c.l.b16 %v6057
        %v6074 = vunpack.c.l.b16 %v6067
        %v6075 = vpack.c.b16 %v5340, %v5339
        %v6076 = vpack.c.b16 %v5342, %v5341
        %v6077 = vpack.c.b16 %v5344, %v5343
        %v6078 = vpack.c.b16 %v6073, %v5345
        %v6079 = vpack.c.b16 %v5348, %v5347
        %v6080 = vpack.c.b16 %v5350, %v5349
        %v6081 = vpack.c.b16 %v5352, %v5351
        %v6082 = vpack.c.b16 %v6074, %v5353
        %v6087 = vunpack.c.l.b16 %v6069
        %v6088 = vunpack.c.l.b16 %v6070
        %v6089 = vunpack.c.l.b16 %v6071
        %v6090 = vunpack.c.l.b16 %v6072
        %v6091 = vpack.c.b16 %v6088, %v6087
        %v6092 = vpack.c.b16 %v6090, %v6089
        %v6096 = vsel %vm4758, %v6075, 0
        %v6099 = vsel %vm4758, %v6076, 0
        %v6102 = vsel %vm4758, %v6077, 0
        %v6105 = vsel %vm4758, %v6078, 0
        %v6108 = vsel %vm4758, %v6079, 0
        %v6111 = vsel %vm4758, %v6080, 0
        %v6114 = vsel %vm4758, %v6081, 0
        %v6117 = vsel %vm4758, %v6082, 0
        %6119 = vmatpush.bf16.msra.mxu0 0
        %6120 = vmatpush.bf16.msra.mxu0 0
        %6121 = vmatpush.bf16.msra.mxu0 0
        %6122 = vmatpush.bf16.msra.mxu0 0
        %6123 = vmatpush.bf16.msra.mxu0 0
        %6124 = vmatpush.bf16.msra.mxu0 0
        %6125 = vmatpush.bf16.msra.mxu0 %v6092
        %6126 = vmatpush.bf16.msra.mxu0 %v6091
        %6127 = vmatmul.bf16.gmra.mxu0 %v6096
        %v6128 = vpop.f32.mrf.mxu0
        %v6129 = vadd.f32 0.0, %v6128
        %v6130 = vpop.f32.mrf.mxu0
        %v6131 = vadd.f32 0.0, %v6130
        %6132 = vmatmul.bf16.gmra.mxu0 %v6099
        %v6133 = vpop.f32.mrf.mxu0
        %v6134 = vadd.f32 0.0, %v6133
        %v6135 = vpop.f32.mrf.mxu0
        %v6136 = vadd.f32 0.0, %v6135
        %6137 = vmatmul.bf16.gmra.mxu0 %v6102
        %v6138 = vpop.f32.mrf.mxu0
        %v6139 = vadd.f32 0.0, %v6138
        %v6140 = vpop.f32.mrf.mxu0
        %v6141 = vadd.f32 0.0, %v6140
        %6142 = vmatmul.bf16.gmra.mxu0 %v6105
        %v6143 = vpop.f32.mrf.mxu0
        %v6144 = vadd.f32 0.0, %v6143
        %v6145 = vpop.f32.mrf.mxu0
        %v6146 = vadd.f32 0.0, %v6145
        %6147 = vmatmul.bf16.gmra.mxu0 %v6108
        %v6148 = vpop.f32.mrf.mxu0
        %v6149 = vadd.f32 0.0, %v6148
        %v6150 = vpop.f32.mrf.mxu0
        %v6151 = vadd.f32 0.0, %v6150
        %6152 = vmatmul.bf16.gmra.mxu0 %v6111
        %v6153 = vpop.f32.mrf.mxu0
        %v6154 = vadd.f32 0.0, %v6153
        %v6155 = vpop.f32.mrf.mxu0
        %v6156 = vadd.f32 0.0, %v6155
        %6157 = vmatmul.bf16.gmra.mxu0 %v6114
        %v6158 = vpop.f32.mrf.mxu0
        %v6159 = vadd.f32 0.0, %v6158
        %v6160 = vpop.f32.mrf.mxu0
        %v6161 = vadd.f32 0.0, %v6160
        %6162 = vmatmul.bf16.gmra.mxu0 %v6117
        %v6163 = vpop.f32.mrf.mxu0
        %v6164 = vadd.f32 0.0, %v6163
        %v6165 = vpop.f32.mrf.mxu0
        %v6166 = vadd.f32 0.0, %v6165
        %6167 = vdwg.mxu0
        %v6168 = vadd.f32 %v6032, %v6129
        %v6169 = vadd.f32 %v6033, %v6131
        %v6170 = vadd.f32 %v6034, %v6134
        %v6171 = vadd.f32 %v6035, %v6136
        %v6172 = vadd.f32 %v6036, %v6139
        %v6173 = vadd.f32 %v6037, %v6141
        %v6174 = vadd.f32 %v6038, %v6144
        %v6175 = vadd.f32 %v6039, %v6146
        %v6176 = vadd.f32 %v6040, %v6149
        %v6177 = vadd.f32 %v6041, %v6151
        %v6178 = vadd.f32 %v6042, %v6154
        %v6179 = vadd.f32 %v6043, %v6156
        %v6180 = vadd.f32 %v6044, %v6159
        %v6181 = vadd.f32 %v6045, %v6161
        %v6182 = vadd.f32 %v6046, %v6164
        %v6183 = vadd.f32 %v6047, %v6166
        %v6184 = vrot.slane %v4454, 6
        %v6185 = vrot.slane %v6184, 4
        %v6186 = vrot.slane %v4455, 6
        %v6187 = vsel %vm5465, %v6185, %v6186
        %v6188 = vrot.slane %v4478, 6
        %v6189 = vrot.slane %v6188, 4
        %v6190 = vrot.slane %v4479, 6
        %v6191 = vsel %vm5465, %v6189, %v6190
        %s6192 = scalar_lea.vmem %s4, 144
        %v6193 = vld [vmem:[%s6192] sm:$0xf]
        %v6194 = vld [vmem:[%s6192 + $0x4] sm:$0xf]
        %v6195 = vld [vmem:[%s6192 + $0x8] sm:$0xf]
        %v6196 = vld [vmem:[%s6192 + $0xc] sm:$0xf]
        %v6197 = vunpack.c.l.b16 %v6187
        %v6198 = vunpack.c.l.b16 %v6191
        %v6199 = vpack.c.b16 %v5537, %v5536
        %v6200 = vpack.c.b16 %v5539, %v5538
        %v6201 = vpack.c.b16 %v5541, %v5540
        %v6202 = vpack.c.b16 %v6197, %v5542
        %v6203 = vpack.c.b16 %v5545, %v5544
        %v6204 = vpack.c.b16 %v5547, %v5546
        %v6205 = vpack.c.b16 %v5549, %v5548
        %v6206 = vpack.c.b16 %v6198, %v5550
        %v6211 = vunpack.c.l.b16 %v6193
        %v6212 = vunpack.c.l.b16 %v6194
        %v6213 = vunpack.c.l.b16 %v6195
        %v6214 = vunpack.c.l.b16 %v6196
        %v6215 = vpack.c.b16 %v6212, %v6211
        %v6216 = vpack.c.b16 %v6214, %v6213
        %v6220 = vsel %vm4758, %v6199, 0
        %v6223 = vsel %vm4758, %v6200, 0
        %v6226 = vsel %vm4758, %v6201, 0
        %v6229 = vsel %vm4758, %v6202, 0
        %v6232 = vsel %vm4758, %v6203, 0
        %v6235 = vsel %vm4758, %v6204, 0
        %v6238 = vsel %vm4758, %v6205, 0
        %v6241 = vsel %vm4758, %v6206, 0
        %6243 = vmatpush.bf16.msra.mxu0 0
        %6244 = vmatpush.bf16.msra.mxu0 0
        %6245 = vmatpush.bf16.msra.mxu0 0
        %6246 = vmatpush.bf16.msra.mxu0 0
        %6247 = vmatpush.bf16.msra.mxu0 0
        %6248 = vmatpush.bf16.msra.mxu0 0
        %6249 = vmatpush.bf16.msra.mxu0 %v6216
        %6250 = vmatpush.bf16.msra.mxu0 %v6215
        %6251 = vmatmul.bf16.gmra.mxu0 %v6220
        %v6252 = vpop.f32.mrf.mxu0
        %v6253 = vadd.f32 0.0, %v6252
        %v6254 = vpop.f32.mrf.mxu0
        %v6255 = vadd.f32 0.0, %v6254
        %6256 = vmatmul.bf16.gmra.mxu0 %v6223
        %v6257 = vpop.f32.mrf.mxu0
        %v6258 = vadd.f32 0.0, %v6257
        %v6259 = vpop.f32.mrf.mxu0
        %v6260 = vadd.f32 0.0, %v6259
        %6261 = vmatmul.bf16.gmra.mxu0 %v6226
        %v6262 = vpop.f32.mrf.mxu0
        %v6263 = vadd.f32 0.0, %v6262
        %v6264 = vpop.f32.mrf.mxu0
        %v6265 = vadd.f32 0.0, %v6264
        %6266 = vmatmul.bf16.gmra.mxu0 %v6229
        %v6267 = vpop.f32.mrf.mxu0
        %v6268 = vadd.f32 0.0, %v6267
        %v6269 = vpop.f32.mrf.mxu0
        %v6270 = vadd.f32 0.0, %v6269
        %6271 = vmatmul.bf16.gmra.mxu0 %v6232
        %v6272 = vpop.f32.mrf.mxu0
        %v6273 = vadd.f32 0.0, %v6272
        %v6274 = vpop.f32.mrf.mxu0
        %v6275 = vadd.f32 0.0, %v6274
        %6276 = vmatmul.bf16.gmra.mxu0 %v6235
        %v6277 = vpop.f32.mrf.mxu0
        %v6278 = vadd.f32 0.0, %v6277
        %v6279 = vpop.f32.mrf.mxu0
        %v6280 = vadd.f32 0.0, %v6279
        %6281 = vmatmul.bf16.gmra.mxu0 %v6238
        %v6282 = vpop.f32.mrf.mxu0
        %v6283 = vadd.f32 0.0, %v6282
        %v6284 = vpop.f32.mrf.mxu0
        %v6285 = vadd.f32 0.0, %v6284
        %6286 = vmatmul.bf16.gmra.mxu0 %v6241
        %v6287 = vpop.f32.mrf.mxu0
        %v6288 = vadd.f32 0.0, %v6287
        %v6289 = vpop.f32.mrf.mxu0
        %v6290 = vadd.f32 0.0, %v6289
        %6291 = vdwg.mxu0
        %v6292 = vadd.f32 %v6168, %v6253
        %v6293 = vadd.f32 %v6169, %v6255
        %v6294 = vadd.f32 %v6170, %v6258
        %v6295 = vadd.f32 %v6171, %v6260
        %v6296 = vadd.f32 %v6172, %v6263
        %v6297 = vadd.f32 %v6173, %v6265
        %v6298 = vadd.f32 %v6174, %v6268
        %v6299 = vadd.f32 %v6175, %v6270
        %v6300 = vadd.f32 %v6176, %v6273
        %v6301 = vadd.f32 %v6177, %v6275
        %v6302 = vadd.f32 %v6178, %v6278
        %v6303 = vadd.f32 %v6179, %v6280
        %v6304 = vadd.f32 %v6180, %v6283
        %v6305 = vadd.f32 %v6181, %v6285
        %v6306 = vadd.f32 %v6182, %v6288
        %v6307 = vadd.f32 %v6183, %v6290
        %s6308 = scalar_lea.vmem %s4, 160
        %v6309 = vld [vmem:[%s6308] sm:$0xf]
        %v6310 = vld [vmem:[%s6308 + $0x4] sm:$0xf]
        %v6311 = vld [vmem:[%s6308 + $0x8] sm:$0xf]
        %v6312 = vld [vmem:[%s6308 + $0xc] sm:$0xf]
        %v6315 = vunpack.c.l.b16 %v4456
        %v6316 = vunpack.c.l.b16 %v4480
        %v6317 = vpack.c.b16 %v6315, %v5667
        %v6318 = vpack.c.b16 %v6316, %v5668
        %v6323 = vunpack.c.l.b16 %v6309
        %v6324 = vunpack.c.l.b16 %v6310
        %v6325 = vunpack.c.l.b16 %v6311
        %v6326 = vunpack.c.l.b16 %v6312
        %v6327 = vpack.c.b16 %v6324, %v6323
        %v6328 = vpack.c.b16 %v6326, %v6325
        %v6332 = vsel %vm4758, %v6317, 0
        %v6335 = vsel %vm4758, %v6318, 0
        %6337 = vmatpush.bf16.msra.mxu0 0
        %6338 = vmatpush.bf16.msra.mxu0 0
        %6339 = vmatpush.bf16.msra.mxu0 0
        %6340 = vmatpush.bf16.msra.mxu0 0
        %6341 = vmatpush.bf16.msra.mxu0 0
        %6342 = vmatpush.bf16.msra.mxu0 0
        %6343 = vmatpush.bf16.msra.mxu0 %v6328
        %6344 = vmatpush.bf16.msra.mxu0 %v6327
        %6345 = vmatmul.bf16.gmra.mxu0 %v4888
        %v6346 = vpop.f32.mrf.mxu0
        %v6347 = vadd.f32 0.0, %v6346
        %v6348 = vpop.f32.mrf.mxu0
        %v6349 = vadd.f32 0.0, %v6348
        %6350 = vmatmul.bf16.gmra.mxu0 %v4891
        %v6351 = vpop.f32.mrf.mxu0
        %v6352 = vadd.f32 0.0, %v6351
        %v6353 = vpop.f32.mrf.mxu0
        %v6354 = vadd.f32 0.0, %v6353
        %6355 = vmatmul.bf16.gmra.mxu0 %v4894
        %v6356 = vpop.f32.mrf.mxu0
        %v6357 = vadd.f32 0.0, %v6356
        %v6358 = vpop.f32.mrf.mxu0
        %v6359 = vadd.f32 0.0, %v6358
        %6360 = vmatmul.bf16.gmra.mxu0 %v6332
        %v6361 = vpop.f32.mrf.mxu0
        %v6362 = vadd.f32 0.0, %v6361
        %v6363 = vpop.f32.mrf.mxu0
        %v6364 = vadd.f32 0.0, %v6363
        %6365 = vmatmul.bf16.gmra.mxu0 %v4900
        %v6366 = vpop.f32.mrf.mxu0
        %v6367 = vadd.f32 0.0, %v6366
        %v6368 = vpop.f32.mrf.mxu0
        %v6369 = vadd.f32 0.0, %v6368
        %6370 = vmatmul.bf16.gmra.mxu0 %v4903
        %v6371 = vpop.f32.mrf.mxu0
        %v6372 = vadd.f32 0.0, %v6371
        %v6373 = vpop.f32.mrf.mxu0
        %v6374 = vadd.f32 0.0, %v6373
        %6375 = vmatmul.bf16.gmra.mxu0 %v4906
        %v6376 = vpop.f32.mrf.mxu0
        %v6377 = vadd.f32 0.0, %v6376
        %v6378 = vpop.f32.mrf.mxu0
        %v6379 = vadd.f32 0.0, %v6378
        %6380 = vmatmul.bf16.gmra.mxu0 %v6335
        %v6381 = vpop.f32.mrf.mxu0
        %v6382 = vadd.f32 0.0, %v6381
        %v6383 = vpop.f32.mrf.mxu0
        %v6384 = vadd.f32 0.0, %v6383
        %6385 = vdwg.mxu0
        %v6386 = vadd.f32 %v6292, %v6347
        %v6387 = vadd.f32 %v6293, %v6349
        %v6388 = vadd.f32 %v6294, %v6352
        %v6389 = vadd.f32 %v6295, %v6354
        %v6390 = vadd.f32 %v6296, %v6357
        %v6391 = vadd.f32 %v6297, %v6359
        %v6392 = vadd.f32 %v6298, %v6362
        %v6393 = vadd.f32 %v6299, %v6364
        %v6394 = vadd.f32 %v6300, %v6367
        %v6395 = vadd.f32 %v6301, %v6369
        %v6396 = vadd.f32 %v6302, %v6372
        %v6397 = vadd.f32 %v6303, %v6374
        %v6398 = vadd.f32 %v6304, %v6377
        %v6399 = vadd.f32 %v6305, %v6379
        %v6400 = vadd.f32 %v6306, %v6382
        %v6401 = vadd.f32 %v6307, %v6384
        %v6403 = vshrl.u32 %v4456, 16
        %v6405 = vrot.slane %v6403, 4
        %v6406 = vshll.u32 %v4456, 16
        %v6408 = vrot.slane %v6406, 5
        %v6409 = vor.u32 %v6405, %v6408
        %v6410 = vrot.slane %v6409, 4
        %v6412 = vshll.u32 %v4457, 16
        %v6414 = vrot.slane %v6412, 5
        %v6415 = vsel %vm4492, %v6410, %v6414
        %v6417 = vshrl.u32 %v4480, 16
        %v6419 = vrot.slane %v6417, 4
        %v6420 = vshll.u32 %v4480, 16
        %v6422 = vrot.slane %v6420, 5
        %v6423 = vor.u32 %v6419, %v6422
        %v6424 = vrot.slane %v6423, 4
        %v6426 = vshll.u32 %v4481, 16
        %v6428 = vrot.slane %v6426, 5
        %v6429 = vsel %vm4492, %v6424, %v6428
        %s6430 = scalar_lea.vmem %s4, 176
        %v6431 = vld [vmem:[%s6430] sm:$0xf]
        %v6432 = vld [vmem:[%s6430 + $0x4] sm:$0xf]
        %v6433 = vld [vmem:[%s6430 + $0x8] sm:$0xf]
        %v6434 = vld [vmem:[%s6430 + $0xc] sm:$0xf]
        %v6435 = vunpack.c.l.b16 %v6415
        %v6436 = vunpack.c.l.b16 %v6429
        %v6437 = vpack.c.b16 %v6435, %v5811
        %v6438 = vpack.c.b16 %v6436, %v5812
        %v6443 = vunpack.c.l.b16 %v6431
        %v6444 = vunpack.c.l.b16 %v6432
        %v6445 = vunpack.c.l.b16 %v6433
        %v6446 = vunpack.c.l.b16 %v6434
        %v6447 = vpack.c.b16 %v6444, %v6443
        %v6448 = vpack.c.b16 %v6446, %v6445
        %v6452 = vsel %vm4758, %v6437, 0
        %v6455 = vsel %vm4758, %v6438, 0
        %6457 = vmatpush.bf16.msra.mxu0 0
        %6458 = vmatpush.bf16.msra.mxu0 0
        %6459 = vmatpush.bf16.msra.mxu0 0
        %6460 = vmatpush.bf16.msra.mxu0 0
        %6461 = vmatpush.bf16.msra.mxu0 0
        %6462 = vmatpush.bf16.msra.mxu0 0
        %6463 = vmatpush.bf16.msra.mxu0 %v6448
        %6464 = vmatpush.bf16.msra.mxu0 %v6447
        %6465 = vmatmul.bf16.gmra.mxu0 %v4763
        %v6466 = vpop.f32.mrf.mxu0
        %v6467 = vadd.f32 0.0, %v6466
        %v6468 = vpop.f32.mrf.mxu0
        %v6469 = vadd.f32 0.0, %v6468
        %6470 = vmatmul.bf16.gmra.mxu0 %v4766
        %v6471 = vpop.f32.mrf.mxu0
        %v6472 = vadd.f32 0.0, %v6471
        %v6473 = vpop.f32.mrf.mxu0
        %v6474 = vadd.f32 0.0, %v6473
        %6475 = vmatmul.bf16.gmra.mxu0 %v4769
        %v6476 = vpop.f32.mrf.mxu0
        %v6477 = vadd.f32 0.0, %v6476
        %v6478 = vpop.f32.mrf.mxu0
        %v6479 = vadd.f32 0.0, %v6478
        %6480 = vmatmul.bf16.gmra.mxu0 %v6452
        %v6481 = vpop.f32.mrf.mxu0
        %v6482 = vadd.f32 0.0, %v6481
        %v6483 = vpop.f32.mrf.mxu0
        %v6484 = vadd.f32 0.0, %v6483
        %6485 = vmatmul.bf16.gmra.mxu0 %v4775
        %v6486 = vpop.f32.mrf.mxu0
        %v6487 = vadd.f32 0.0, %v6486
        %v6488 = vpop.f32.mrf.mxu0
        %v6489 = vadd.f32 0.0, %v6488
        %6490 = vmatmul.bf16.gmra.mxu0 %v4778
        %v6491 = vpop.f32.mrf.mxu0
        %v6492 = vadd.f32 0.0, %v6491
        %v6493 = vpop.f32.mrf.mxu0
        %v6494 = vadd.f32 0.0, %v6493
        %6495 = vmatmul.bf16.gmra.mxu0 %v4781
        %v6496 = vpop.f32.mrf.mxu0
        %v6497 = vadd.f32 0.0, %v6496
        %v6498 = vpop.f32.mrf.mxu0
        %v6499 = vadd.f32 0.0, %v6498
        %6500 = vmatmul.bf16.gmra.mxu0 %v6455
        %v6501 = vpop.f32.mrf.mxu0
        %v6502 = vadd.f32 0.0, %v6501
        %v6503 = vpop.f32.mrf.mxu0
        %v6504 = vadd.f32 0.0, %v6503
        %6505 = vdwg.mxu0
        %v6506 = vadd.f32 %v6386, %v6467
        %v6507 = vadd.f32 %v6387, %v6469
        %v6508 = vadd.f32 %v6388, %v6472
        %v6509 = vadd.f32 %v6389, %v6474
        %v6510 = vadd.f32 %v6390, %v6477
        %v6511 = vadd.f32 %v6391, %v6479
        %v6512 = vadd.f32 %v6392, %v6482
        %v6513 = vadd.f32 %v6393, %v6484
        %v6514 = vadd.f32 %v6394, %v6487
        %v6515 = vadd.f32 %v6395, %v6489
        %v6516 = vadd.f32 %v6396, %v6492
        %v6517 = vadd.f32 %v6397, %v6494
        %v6518 = vadd.f32 %v6398, %v6497
        %v6519 = vadd.f32 %v6399, %v6499
        %v6520 = vadd.f32 %v6400, %v6502
        %v6521 = vadd.f32 %v6401, %v6504
        %v6524 = vrot.slane %v4456, 5
        %v6525 = vrot.slane %v6524, 4
        %v6526 = vrot.slane %v4457, 5
        %v6527 = vsel %vm4975, %v6525, %v6526
        %v6528 = vrot.slane %v4480, 5
        %v6529 = vrot.slane %v6528, 4
        %v6530 = vrot.slane %v4481, 5
        %v6531 = vsel %vm4975, %v6529, %v6530
        %s6532 = scalar_lea.vmem %s4, 192
        %v6533 = vld [vmem:[%s6532] sm:$0xf]
        %v6534 = vld [vmem:[%s6532 + $0x4] sm:$0xf]
        %v6535 = vld [vmem:[%s6532 + $0x8] sm:$0xf]
        %v6536 = vld [vmem:[%s6532 + $0xc] sm:$0xf]
        %v6537 = vunpack.c.l.b16 %v6527
        %v6538 = vunpack.c.l.b16 %v6531
        %v6539 = vpack.c.b16 %v6537, %v5937
        %v6540 = vpack.c.b16 %v6538, %v5938
        %v6545 = vunpack.c.l.b16 %v6533
        %v6546 = vunpack.c.l.b16 %v6534
        %v6547 = vunpack.c.l.b16 %v6535
        %v6548 = vunpack.c.l.b16 %v6536
        %v6549 = vpack.c.b16 %v6546, %v6545
        %v6550 = vpack.c.b16 %v6548, %v6547
        %v6554 = vsel %vm4758, %v6539, 0
        %v6557 = vsel %vm4758, %v6540, 0
        %6559 = vmatpush.bf16.msra.mxu0 0
        %6560 = vmatpush.bf16.msra.mxu0 0
        %6561 = vmatpush.bf16.msra.mxu0 0
        %6562 = vmatpush.bf16.msra.mxu0 0
        %6563 = vmatpush.bf16.msra.mxu0 0
        %6564 = vmatpush.bf16.msra.mxu0 0
        %6565 = vmatpush.bf16.msra.mxu0 %v6550
        %6566 = vmatpush.bf16.msra.mxu0 %v6549
        %6567 = vmatmul.bf16.gmra.mxu0 %v5085
        %v6568 = vpop.f32.mrf.mxu0
        %v6569 = vadd.f32 0.0, %v6568
        %v6570 = vpop.f32.mrf.mxu0
        %v6571 = vadd.f32 0.0, %v6570
        %6572 = vmatmul.bf16.gmra.mxu0 %v5088
        %v6573 = vpop.f32.mrf.mxu0
        %v6574 = vadd.f32 0.0, %v6573
        %v6575 = vpop.f32.mrf.mxu0
        %v6576 = vadd.f32 0.0, %v6575
        %6577 = vmatmul.bf16.gmra.mxu0 %v5091
        %v6578 = vpop.f32.mrf.mxu0
        %v6579 = vadd.f32 0.0, %v6578
        %v6580 = vpop.f32.mrf.mxu0
        %v6581 = vadd.f32 0.0, %v6580
        %6582 = vmatmul.bf16.gmra.mxu0 %v6554
        %v6583 = vpop.f32.mrf.mxu0
        %v6584 = vadd.f32 0.0, %v6583
        %v6585 = vpop.f32.mrf.mxu0
        %v6586 = vadd.f32 0.0, %v6585
        %6587 = vmatmul.bf16.gmra.mxu0 %v5097
        %v6588 = vpop.f32.mrf.mxu0
        %v6589 = vadd.f32 0.0, %v6588
        %v6590 = vpop.f32.mrf.mxu0
        %v6591 = vadd.f32 0.0, %v6590
        %6592 = vmatmul.bf16.gmra.mxu0 %v5100
        %v6593 = vpop.f32.mrf.mxu0
        %v6594 = vadd.f32 0.0, %v6593
        %v6595 = vpop.f32.mrf.mxu0
        %v6596 = vadd.f32 0.0, %v6595
        %6597 = vmatmul.bf16.gmra.mxu0 %v5103
        %v6598 = vpop.f32.mrf.mxu0
        %v6599 = vadd.f32 0.0, %v6598
        %v6600 = vpop.f32.mrf.mxu0
        %v6601 = vadd.f32 0.0, %v6600
        %6602 = vmatmul.bf16.gmra.mxu0 %v6557
        %v6603 = vpop.f32.mrf.mxu0
        %v6604 = vadd.f32 0.0, %v6603
        %v6605 = vpop.f32.mrf.mxu0
        %v6606 = vadd.f32 0.0, %v6605
        %6607 = vdwg.mxu0
        %v6608 = vadd.f32 %v6506, %v6569
        %v6609 = vadd.f32 %v6507, %v6571
        %v6610 = vadd.f32 %v6508, %v6574
        %v6611 = vadd.f32 %v6509, %v6576
        %v6612 = vadd.f32 %v6510, %v6579
        %v6613 = vadd.f32 %v6511, %v6581
        %v6614 = vadd.f32 %v6512, %v6584
        %v6615 = vadd.f32 %v6513, %v6586
        %v6616 = vadd.f32 %v6514, %v6589
        %v6617 = vadd.f32 %v6515, %v6591
        %v6618 = vadd.f32 %v6516, %v6594
        %v6619 = vadd.f32 %v6517, %v6596
        %v6620 = vadd.f32 %v6518, %v6599
        %v6621 = vadd.f32 %v6519, %v6601
        %v6622 = vadd.f32 %v6520, %v6604
        %v6623 = vadd.f32 %v6521, %v6606
        %v6624 = vrot.slane %v6403, 5
        %v6625 = vrot.slane %v6406, 6
        %v6626 = vor.u32 %v6624, %v6625
        %v6627 = vrot.slane %v6626, 4
        %v6628 = vshrl.u32 %v4457, 16
        %v6630 = vrot.slane %v6628, 5
        %v6631 = vrot.slane %v6412, 6
        %v6632 = vor.u32 %v6630, %v6631
        %v6633 = vsel %vm5172, %v6627, %v6632
        %v6634 = vrot.slane %v6417, 5
        %v6635 = vrot.slane %v6420, 6
        %v6636 = vor.u32 %v6634, %v6635
        %v6637 = vrot.slane %v6636, 4
        %v6638 = vshrl.u32 %v4481, 16
        %v6640 = vrot.slane %v6638, 5
        %v6641 = vrot.slane %v6426, 6
        %v6642 = vor.u32 %v6640, %v6641
        %v6643 = vsel %vm5172, %v6637, %v6642
        %s6644 = scalar_lea.vmem %s4, 208
        %v6645 = vld [vmem:[%s6644] sm:$0xf]
        %v6646 = vld [vmem:[%s6644 + $0x4] sm:$0xf]
        %v6647 = vld [vmem:[%s6644 + $0x8] sm:$0xf]
        %v6648 = vld [vmem:[%s6644 + $0xc] sm:$0xf]
        %v6649 = vunpack.c.l.b16 %v6633
        %v6650 = vunpack.c.l.b16 %v6643
        %v6651 = vpack.c.b16 %v6649, %v6073
        %v6652 = vpack.c.b16 %v6650, %v6074
        %v6657 = vunpack.c.l.b16 %v6645
        %v6658 = vunpack.c.l.b16 %v6646
        %v6659 = vunpack.c.l.b16 %v6647
        %v6660 = vunpack.c.l.b16 %v6648
        %v6661 = vpack.c.b16 %v6658, %v6657
        %v6662 = vpack.c.b16 %v6660, %v6659
        %v6666 = vsel %vm4758, %v6651, 0
        %v6669 = vsel %vm4758, %v6652, 0
        %6671 = vmatpush.bf16.msra.mxu0 0
        %6672 = vmatpush.bf16.msra.mxu0 0
        %6673 = vmatpush.bf16.msra.mxu0 0
        %6674 = vmatpush.bf16.msra.mxu0 0
        %6675 = vmatpush.bf16.msra.mxu0 0
        %6676 = vmatpush.bf16.msra.mxu0 0
        %6677 = vmatpush.bf16.msra.mxu0 %v6662
        %6678 = vmatpush.bf16.msra.mxu0 %v6661
        %6679 = vmatmul.bf16.gmra.mxu0 %v5378
        %v6680 = vpop.f32.mrf.mxu0
        %v6681 = vadd.f32 0.0, %v6680
        %v6682 = vpop.f32.mrf.mxu0
        %v6683 = vadd.f32 0.0, %v6682
        %6684 = vmatmul.bf16.gmra.mxu0 %v5381
        %v6685 = vpop.f32.mrf.mxu0
        %v6686 = vadd.f32 0.0, %v6685
        %v6687 = vpop.f32.mrf.mxu0
        %v6688 = vadd.f32 0.0, %v6687
        %6689 = vmatmul.bf16.gmra.mxu0 %v5384
        %v6690 = vpop.f32.mrf.mxu0
        %v6691 = vadd.f32 0.0, %v6690
        %v6692 = vpop.f32.mrf.mxu0
        %v6693 = vadd.f32 0.0, %v6692
        %6694 = vmatmul.bf16.gmra.mxu0 %v6666
        %v6695 = vpop.f32.mrf.mxu0
        %v6696 = vadd.f32 0.0, %v6695
        %v6697 = vpop.f32.mrf.mxu0
        %v6698 = vadd.f32 0.0, %v6697
        %6699 = vmatmul.bf16.gmra.mxu0 %v5390
        %v6700 = vpop.f32.mrf.mxu0
        %v6701 = vadd.f32 0.0, %v6700
        %v6702 = vpop.f32.mrf.mxu0
        %v6703 = vadd.f32 0.0, %v6702
        %6704 = vmatmul.bf16.gmra.mxu0 %v5393
        %v6705 = vpop.f32.mrf.mxu0
        %v6706 = vadd.f32 0.0, %v6705
        %v6707 = vpop.f32.mrf.mxu0
        %v6708 = vadd.f32 0.0, %v6707
        %6709 = vmatmul.bf16.gmra.mxu0 %v5396
        %v6710 = vpop.f32.mrf.mxu0
        %v6711 = vadd.f32 0.0, %v6710
        %v6712 = vpop.f32.mrf.mxu0
        %v6713 = vadd.f32 0.0, %v6712
        %6714 = vmatmul.bf16.gmra.mxu0 %v6669
        %v6715 = vpop.f32.mrf.mxu0
        %v6716 = vadd.f32 0.0, %v6715
        %v6717 = vpop.f32.mrf.mxu0
        %v6718 = vadd.f32 0.0, %v6717
        %6719 = vdwg.mxu0
        %v6720 = vadd.f32 %v6608, %v6681
        %v6721 = vadd.f32 %v6609, %v6683
        %v6722 = vadd.f32 %v6610, %v6686
        %v6723 = vadd.f32 %v6611, %v6688
        %v6724 = vadd.f32 %v6612, %v6691
        %v6725 = vadd.f32 %v6613, %v6693
        %v6726 = vadd.f32 %v6614, %v6696
        %v6727 = vadd.f32 %v6615, %v6698
        %v6728 = vadd.f32 %v6616, %v6701
        %v6729 = vadd.f32 %v6617, %v6703
        %v6730 = vadd.f32 %v6618, %v6706
        %v6731 = vadd.f32 %v6619, %v6708
        %v6732 = vadd.f32 %v6620, %v6711
        %v6733 = vadd.f32 %v6621, %v6713
        %v6734 = vadd.f32 %v6622, %v6716
        %v6735 = vadd.f32 %v6623, %v6718
        %v6736 = vrot.slane %v4456, 6
        %v6737 = vrot.slane %v6736, 4
        %v6738 = vrot.slane %v4457, 6
        %v6739 = vsel %vm5465, %v6737, %v6738
        %v6740 = vrot.slane %v4480, 6
        %v6741 = vrot.slane %v6740, 4
        %v6742 = vrot.slane %v4481, 6
        %v6743 = vsel %vm5465, %v6741, %v6742
        %s6744 = scalar_lea.vmem %s4, 224
        %v6745 = vld [vmem:[%s6744] sm:$0xf]
        %v6746 = vld [vmem:[%s6744 + $0x4] sm:$0xf]
        %v6747 = vld [vmem:[%s6744 + $0x8] sm:$0xf]
        %v6748 = vld [vmem:[%s6744 + $0xc] sm:$0xf]
        %v6749 = vunpack.c.l.b16 %v6739
        %v6750 = vunpack.c.l.b16 %v6743
        %v6751 = vpack.c.b16 %v6749, %v6197
        %v6752 = vpack.c.b16 %v6750, %v6198
        %v6757 = vunpack.c.l.b16 %v6745
        %v6758 = vunpack.c.l.b16 %v6746
        %v6759 = vunpack.c.l.b16 %v6747
        %v6760 = vunpack.c.l.b16 %v6748
        %v6761 = vpack.c.b16 %v6758, %v6757
        %v6762 = vpack.c.b16 %v6760, %v6759
        %v6766 = vsel %vm4758, %v6751, 0
        %v6769 = vsel %vm4758, %v6752, 0
        %6771 = vmatpush.bf16.msra.mxu0 0
        %6772 = vmatpush.bf16.msra.mxu0 0
        %6773 = vmatpush.bf16.msra.mxu0 0
        %6774 = vmatpush.bf16.msra.mxu0 0
        %6775 = vmatpush.bf16.msra.mxu0 0
        %6776 = vmatpush.bf16.msra.mxu0 0
        %6777 = vmatpush.bf16.msra.mxu0 %v6762
        %6778 = vmatpush.bf16.msra.mxu0 %v6761
        %6779 = vmatmul.bf16.gmra.mxu0 %v5575
        %v6780 = vpop.f32.mrf.mxu0
        %v6781 = vadd.f32 0.0, %v6780
        %v6782 = vpop.f32.mrf.mxu0
        %v6783 = vadd.f32 0.0, %v6782
        %6784 = vmatmul.bf16.gmra.mxu0 %v5578
        %v6785 = vpop.f32.mrf.mxu0
        %v6786 = vadd.f32 0.0, %v6785
        %v6787 = vpop.f32.mrf.mxu0
        %v6788 = vadd.f32 0.0, %v6787
        %6789 = vmatmul.bf16.gmra.mxu0 %v5581
        %v6790 = vpop.f32.mrf.mxu0
        %v6791 = vadd.f32 0.0, %v6790
        %v6792 = vpop.f32.mrf.mxu0
        %v6793 = vadd.f32 0.0, %v6792
        %6794 = vmatmul.bf16.gmra.mxu0 %v6766
        %v6795 = vpop.f32.mrf.mxu0
        %v6796 = vadd.f32 0.0, %v6795
        %v6797 = vpop.f32.mrf.mxu0
        %v6798 = vadd.f32 0.0, %v6797
        %6799 = vmatmul.bf16.gmra.mxu0 %v5587
        %v6800 = vpop.f32.mrf.mxu0
        %v6801 = vadd.f32 0.0, %v6800
        %v6802 = vpop.f32.mrf.mxu0
        %v6803 = vadd.f32 0.0, %v6802
        %6804 = vmatmul.bf16.gmra.mxu0 %v5590
        %v6805 = vpop.f32.mrf.mxu0
        %v6806 = vadd.f32 0.0, %v6805
        %v6807 = vpop.f32.mrf.mxu0
        %v6808 = vadd.f32 0.0, %v6807
        %6809 = vmatmul.bf16.gmra.mxu0 %v5593
        %v6810 = vpop.f32.mrf.mxu0
        %v6811 = vadd.f32 0.0, %v6810
        %v6812 = vpop.f32.mrf.mxu0
        %v6813 = vadd.f32 0.0, %v6812
        %6814 = vmatmul.bf16.gmra.mxu0 %v6769
        %v6815 = vpop.f32.mrf.mxu0
        %v6816 = vadd.f32 0.0, %v6815
        %v6817 = vpop.f32.mrf.mxu0
        %v6818 = vadd.f32 0.0, %v6817
        %6819 = vdwg.mxu0
        %v6820 = vadd.f32 %v6720, %v6781
        %v6821 = vadd.f32 %v6721, %v6783
        %v6822 = vadd.f32 %v6722, %v6786
        %v6823 = vadd.f32 %v6723, %v6788
        %v6824 = vadd.f32 %v6724, %v6791
        %v6825 = vadd.f32 %v6725, %v6793
        %v6826 = vadd.f32 %v6726, %v6796
        %v6827 = vadd.f32 %v6727, %v6798
        %v6828 = vadd.f32 %v6728, %v6801
        %v6829 = vadd.f32 %v6729, %v6803
        %v6830 = vadd.f32 %v6730, %v6806
        %v6831 = vadd.f32 %v6731, %v6808
        %v6832 = vadd.f32 %v6732, %v6811
        %v6833 = vadd.f32 %v6733, %v6813
        %v6834 = vadd.f32 %v6734, %v6816
        %v6835 = vadd.f32 %v6735, %v6818
        %s6836 = scalar_lea.vmem %s4, 240
        %v6837 = vld [vmem:[%s6836] sm:$0xf]
        %v6838 = vld [vmem:[%s6836 + $0x4] sm:$0xf]
        %v6839 = vld [vmem:[%s6836 + $0x8] sm:$0xf]
        %v6840 = vld [vmem:[%s6836 + $0xc] sm:$0xf]
        %v6843 = vunpack.c.l.b16 %v4458
        %v6844 = vunpack.c.l.b16 %v4482
        %v6845 = vpack.c.b16 %v6843, %v6315
        %v6846 = vpack.c.b16 %v6844, %v6316
        %v6851 = vunpack.c.l.b16 %v6837
        %v6852 = vunpack.c.l.b16 %v6838
        %v6853 = vunpack.c.l.b16 %v6839
        %v6854 = vunpack.c.l.b16 %v6840
        %v6855 = vpack.c.b16 %v6852, %v6851
        %v6856 = vpack.c.b16 %v6854, %v6853
        %v6860 = vsel %vm4758, %v6845, 0
        %v6863 = vsel %vm4758, %v6846, 0
        %6865 = vmatpush.bf16.msra.mxu0 0
        %6866 = vmatpush.bf16.msra.mxu0 0
        %6867 = vmatpush.bf16.msra.mxu0 0
        %6868 = vmatpush.bf16.msra.mxu0 0
        %6869 = vmatpush.bf16.msra.mxu0 0
        %6870 = vmatpush.bf16.msra.mxu0 0
        %6871 = vmatpush.bf16.msra.mxu0 %v6856
        %6872 = vmatpush.bf16.msra.mxu0 %v6855
        %6873 = vmatmul.bf16.gmra.mxu0 %v5693
        %v6874 = vpop.f32.mrf.mxu0
        %v6875 = vadd.f32 0.0, %v6874
        %v6876 = vpop.f32.mrf.mxu0
        %v6877 = vadd.f32 0.0, %v6876
        %6878 = vmatmul.bf16.gmra.mxu0 %v5696
        %v6879 = vpop.f32.mrf.mxu0
        %v6880 = vadd.f32 0.0, %v6879
        %v6881 = vpop.f32.mrf.mxu0
        %v6882 = vadd.f32 0.0, %v6881
        %6883 = vmatmul.bf16.gmra.mxu0 %v5699
        %v6884 = vpop.f32.mrf.mxu0
        %v6885 = vadd.f32 0.0, %v6884
        %v6886 = vpop.f32.mrf.mxu0
        %v6887 = vadd.f32 0.0, %v6886
        %6888 = vmatmul.bf16.gmra.mxu0 %v6860
        %v6889 = vpop.f32.mrf.mxu0
        %v6890 = vadd.f32 0.0, %v6889
        %v6891 = vpop.f32.mrf.mxu0
        %v6892 = vadd.f32 0.0, %v6891
        %6893 = vmatmul.bf16.gmra.mxu0 %v5705
        %v6894 = vpop.f32.mrf.mxu0
        %v6895 = vadd.f32 0.0, %v6894
        %v6896 = vpop.f32.mrf.mxu0
        %v6897 = vadd.f32 0.0, %v6896
        %6898 = vmatmul.bf16.gmra.mxu0 %v5708
        %v6899 = vpop.f32.mrf.mxu0
        %v6900 = vadd.f32 0.0, %v6899
        %v6901 = vpop.f32.mrf.mxu0
        %v6902 = vadd.f32 0.0, %v6901
        %6903 = vmatmul.bf16.gmra.mxu0 %v5711
        %v6904 = vpop.f32.mrf.mxu0
        %v6905 = vadd.f32 0.0, %v6904
        %v6906 = vpop.f32.mrf.mxu0
        %v6907 = vadd.f32 0.0, %v6906
        %6908 = vmatmul.bf16.gmra.mxu0 %v6863
        %v6909 = vpop.f32.mrf.mxu0
        %v6910 = vadd.f32 0.0, %v6909
        %v6911 = vpop.f32.mrf.mxu0
        %v6912 = vadd.f32 0.0, %v6911
        %6913 = vdwg.mxu0
        %v6914 = vadd.f32 %v6820, %v6875
        %v6915 = vadd.f32 %v6821, %v6877
        %v6916 = vadd.f32 %v6822, %v6880
        %v6917 = vadd.f32 %v6823, %v6882
        %v6918 = vadd.f32 %v6824, %v6885
        %v6919 = vadd.f32 %v6825, %v6887
        %v6920 = vadd.f32 %v6826, %v6890
        %v6921 = vadd.f32 %v6827, %v6892
        %v6922 = vadd.f32 %v6828, %v6895
        %v6923 = vadd.f32 %v6829, %v6897
        %v6924 = vadd.f32 %v6830, %v6900
        %v6925 = vadd.f32 %v6831, %v6902
        %v6926 = vadd.f32 %v6832, %v6905
        %v6927 = vadd.f32 %v6833, %v6907
        %v6928 = vadd.f32 %v6834, %v6910
        %v6929 = vadd.f32 %v6835, %v6912
        %v6931 = vshrl.u32 %v4458, 16
        %v6933 = vrot.slane %v6931, 4
        %v6934 = vshll.u32 %v4458, 16
        %v6936 = vrot.slane %v6934, 5
        %v6937 = vor.u32 %v6933, %v6936
        %v6938 = vrot.slane %v6937, 4
        %v6940 = vshll.u32 %v4459, 16
        %v6942 = vrot.slane %v6940, 5
        %v6943 = vsel %vm4492, %v6938, %v6942
        %v6945 = vshrl.u32 %v4482, 16
        %v6947 = vrot.slane %v6945, 4
        %v6948 = vshll.u32 %v4482, 16
        %v6950 = vrot.slane %v6948, 5
        %v6951 = vor.u32 %v6947, %v6950
        %v6952 = vrot.slane %v6951, 4
        %v6954 = vshll.u32 %v4483, 16
        %v6956 = vrot.slane %v6954, 5
        %v6957 = vsel %vm4492, %v6952, %v6956
        %s6958 = scalar_lea.vmem %s4, 256
        %v6959 = vld [vmem:[%s6958] sm:$0xf]
        %v6960 = vld [vmem:[%s6958 + $0x4] sm:$0xf]
        %v6961 = vld [vmem:[%s6958 + $0x8] sm:$0xf]
        %v6962 = vld [vmem:[%s6958 + $0xc] sm:$0xf]
        %v6963 = vunpack.c.l.b16 %v6943
        %v6964 = vunpack.c.l.b16 %v6957
        %v6965 = vpack.c.b16 %v6963, %v6435
        %v6966 = vpack.c.b16 %v6964, %v6436
        %v6971 = vunpack.c.l.b16 %v6959
        %v6972 = vunpack.c.l.b16 %v6960
        %v6973 = vunpack.c.l.b16 %v6961
        %v6974 = vunpack.c.l.b16 %v6962
        %v6975 = vpack.c.b16 %v6972, %v6971
        %v6976 = vpack.c.b16 %v6974, %v6973
        %v6980 = vsel %vm4758, %v6965, 0
        %v6983 = vsel %vm4758, %v6966, 0
        %6985 = vmatpush.bf16.msra.mxu0 0
        %6986 = vmatpush.bf16.msra.mxu0 0
        %6987 = vmatpush.bf16.msra.mxu0 0
        %6988 = vmatpush.bf16.msra.mxu0 0
        %6989 = vmatpush.bf16.msra.mxu0 0
        %6990 = vmatpush.bf16.msra.mxu0 0
        %6991 = vmatpush.bf16.msra.mxu0 %v6976
        %6992 = vmatpush.bf16.msra.mxu0 %v6975
        %6993 = vmatmul.bf16.gmra.mxu0 %v5837
        %v6994 = vpop.f32.mrf.mxu0
        %v6995 = vadd.f32 0.0, %v6994
        %v6996 = vpop.f32.mrf.mxu0
        %v6997 = vadd.f32 0.0, %v6996
        %6998 = vmatmul.bf16.gmra.mxu0 %v5840
        %v6999 = vpop.f32.mrf.mxu0
        %v7000 = vadd.f32 0.0, %v6999
        %v7001 = vpop.f32.mrf.mxu0
        %v7002 = vadd.f32 0.0, %v7001
        %7003 = vmatmul.bf16.gmra.mxu0 %v5843
        %v7004 = vpop.f32.mrf.mxu0
        %v7005 = vadd.f32 0.0, %v7004
        %v7006 = vpop.f32.mrf.mxu0
        %v7007 = vadd.f32 0.0, %v7006
        %7008 = vmatmul.bf16.gmra.mxu0 %v6980
        %v7009 = vpop.f32.mrf.mxu0
        %v7010 = vadd.f32 0.0, %v7009
        %v7011 = vpop.f32.mrf.mxu0
        %v7012 = vadd.f32 0.0, %v7011
        %7013 = vmatmul.bf16.gmra.mxu0 %v5849
        %v7014 = vpop.f32.mrf.mxu0
        %v7015 = vadd.f32 0.0, %v7014
        %v7016 = vpop.f32.mrf.mxu0
        %v7017 = vadd.f32 0.0, %v7016
        %7018 = vmatmul.bf16.gmra.mxu0 %v5852
        %v7019 = vpop.f32.mrf.mxu0
        %v7020 = vadd.f32 0.0, %v7019
        %v7021 = vpop.f32.mrf.mxu0
        %v7022 = vadd.f32 0.0, %v7021
        %7023 = vmatmul.bf16.gmra.mxu0 %v5855
        %v7024 = vpop.f32.mrf.mxu0
        %v7025 = vadd.f32 0.0, %v7024
        %v7026 = vpop.f32.mrf.mxu0
        %v7027 = vadd.f32 0.0, %v7026
        %7028 = vmatmul.bf16.gmra.mxu0 %v6983
        %v7029 = vpop.f32.mrf.mxu0
        %v7030 = vadd.f32 0.0, %v7029
        %v7031 = vpop.f32.mrf.mxu0
        %v7032 = vadd.f32 0.0, %v7031
        %7033 = vdwg.mxu0
        %v7034 = vadd.f32 %v6914, %v6995
        %v7035 = vadd.f32 %v6915, %v6997
        %v7036 = vadd.f32 %v6916, %v7000
        %v7037 = vadd.f32 %v6917, %v7002
        %v7038 = vadd.f32 %v6918, %v7005
        %v7039 = vadd.f32 %v6919, %v7007
        %v7040 = vadd.f32 %v6920, %v7010
        %v7041 = vadd.f32 %v6921, %v7012
        %v7042 = vadd.f32 %v6922, %v7015
        %v7043 = vadd.f32 %v6923, %v7017
        %v7044 = vadd.f32 %v6924, %v7020
        %v7045 = vadd.f32 %v6925, %v7022
        %v7046 = vadd.f32 %v6926, %v7025
        %v7047 = vadd.f32 %v6927, %v7027
        %v7048 = vadd.f32 %v6928, %v7030
        %v7049 = vadd.f32 %v6929, %v7032
        %v7052 = vrot.slane %v4458, 5
        %v7053 = vrot.slane %v7052, 4
        %v7054 = vrot.slane %v4459, 5
        %v7055 = vsel %vm4975, %v7053, %v7054
        %v7056 = vrot.slane %v4482, 5
        %v7057 = vrot.slane %v7056, 4
        %v7058 = vrot.slane %v4483, 5
        %v7059 = vsel %vm4975, %v7057, %v7058
        %s7060 = scalar_lea.vmem %s4, 272
        %v7061 = vld [vmem:[%s7060] sm:$0xf]
        %v7062 = vld [vmem:[%s7060 + $0x4] sm:$0xf]
        %v7063 = vld [vmem:[%s7060 + $0x8] sm:$0xf]
        %v7064 = vld [vmem:[%s7060 + $0xc] sm:$0xf]
        %v7065 = vunpack.c.l.b16 %v7055
        %v7066 = vunpack.c.l.b16 %v7059
        %v7067 = vpack.c.b16 %v7065, %v6537
        %v7068 = vpack.c.b16 %v7066, %v6538
        %v7073 = vunpack.c.l.b16 %v7061
        %v7074 = vunpack.c.l.b16 %v7062
        %v7075 = vunpack.c.l.b16 %v7063
        %v7076 = vunpack.c.l.b16 %v7064
        %v7077 = vpack.c.b16 %v7074, %v7073
        %v7078 = vpack.c.b16 %v7076, %v7075
        %v7082 = vsel %vm4758, %v7067, 0
        %v7085 = vsel %vm4758, %v7068, 0
        %7087 = vmatpush.bf16.msra.mxu0 0
        %7088 = vmatpush.bf16.msra.mxu0 0
        %7089 = vmatpush.bf16.msra.mxu0 0
        %7090 = vmatpush.bf16.msra.mxu0 0
        %7091 = vmatpush.bf16.msra.mxu0 0
        %7092 = vmatpush.bf16.msra.mxu0 0
        %7093 = vmatpush.bf16.msra.mxu0 %v7078
        %7094 = vmatpush.bf16.msra.mxu0 %v7077
        %7095 = vmatmul.bf16.gmra.mxu0 %v5963
        %v7096 = vpop.f32.mrf.mxu0
        %v7097 = vadd.f32 0.0, %v7096
        %v7098 = vpop.f32.mrf.mxu0
        %v7099 = vadd.f32 0.0, %v7098
        %7100 = vmatmul.bf16.gmra.mxu0 %v5966
        %v7101 = vpop.f32.mrf.mxu0
        %v7102 = vadd.f32 0.0, %v7101
        %v7103 = vpop.f32.mrf.mxu0
        %v7104 = vadd.f32 0.0, %v7103
        %7105 = vmatmul.bf16.gmra.mxu0 %v5969
        %v7106 = vpop.f32.mrf.mxu0
        %v7107 = vadd.f32 0.0, %v7106
        %v7108 = vpop.f32.mrf.mxu0
        %v7109 = vadd.f32 0.0, %v7108
        %7110 = vmatmul.bf16.gmra.mxu0 %v7082
        %v7111 = vpop.f32.mrf.mxu0
        %v7112 = vadd.f32 0.0, %v7111
        %v7113 = vpop.f32.mrf.mxu0
        %v7114 = vadd.f32 0.0, %v7113
        %7115 = vmatmul.bf16.gmra.mxu0 %v5975
        %v7116 = vpop.f32.mrf.mxu0
        %v7117 = vadd.f32 0.0, %v7116
        %v7118 = vpop.f32.mrf.mxu0
        %v7119 = vadd.f32 0.0, %v7118
        %7120 = vmatmul.bf16.gmra.mxu0 %v5978
        %v7121 = vpop.f32.mrf.mxu0
        %v7122 = vadd.f32 0.0, %v7121
        %v7123 = vpop.f32.mrf.mxu0
        %v7124 = vadd.f32 0.0, %v7123
        %7125 = vmatmul.bf16.gmra.mxu0 %v5981
        %v7126 = vpop.f32.mrf.mxu0
        %v7127 = vadd.f32 0.0, %v7126
        %v7128 = vpop.f32.mrf.mxu0
        %v7129 = vadd.f32 0.0, %v7128
        %7130 = vmatmul.bf16.gmra.mxu0 %v7085
        %v7131 = vpop.f32.mrf.mxu0
        %v7132 = vadd.f32 0.0, %v7131
        %v7133 = vpop.f32.mrf.mxu0
        %v7134 = vadd.f32 0.0, %v7133
        %7135 = vdwg.mxu0
        %v7136 = vadd.f32 %v7034, %v7097
        %v7137 = vadd.f32 %v7035, %v7099
        %v7138 = vadd.f32 %v7036, %v7102
        %v7139 = vadd.f32 %v7037, %v7104
        %v7140 = vadd.f32 %v7038, %v7107
        %v7141 = vadd.f32 %v7039, %v7109
        %v7142 = vadd.f32 %v7040, %v7112
        %v7143 = vadd.f32 %v7041, %v7114
        %v7144 = vadd.f32 %v7042, %v7117
        %v7145 = vadd.f32 %v7043, %v7119
        %v7146 = vadd.f32 %v7044, %v7122
        %v7147 = vadd.f32 %v7045, %v7124
        %v7148 = vadd.f32 %v7046, %v7127
        %v7149 = vadd.f32 %v7047, %v7129
        %v7150 = vadd.f32 %v7048, %v7132
        %v7151 = vadd.f32 %v7049, %v7134
        %v7152 = vrot.slane %v6931, 5
        %v7153 = vrot.slane %v6934, 6
        %v7154 = vor.u32 %v7152, %v7153
        %v7155 = vrot.slane %v7154, 4
        %v7156 = vshrl.u32 %v4459, 16
        %v7158 = vrot.slane %v7156, 5
        %v7159 = vrot.slane %v6940, 6
        %v7160 = vor.u32 %v7158, %v7159
        %v7161 = vsel %vm5172, %v7155, %v7160
        %v7162 = vrot.slane %v6945, 5
        %v7163 = vrot.slane %v6948, 6
        %v7164 = vor.u32 %v7162, %v7163
        %v7165 = vrot.slane %v7164, 4
        %v7166 = vshrl.u32 %v4483, 16
        %v7168 = vrot.slane %v7166, 5
        %v7169 = vrot.slane %v6954, 6
        %v7170 = vor.u32 %v7168, %v7169
        %v7171 = vsel %vm5172, %v7165, %v7170
        %s7172 = scalar_lea.vmem %s4, 288
        %v7173 = vld [vmem:[%s7172] sm:$0xf]
        %v7174 = vld [vmem:[%s7172 + $0x4] sm:$0xf]
        %v7175 = vld [vmem:[%s7172 + $0x8] sm:$0xf]
        %v7176 = vld [vmem:[%s7172 + $0xc] sm:$0xf]
        %v7177 = vunpack.c.l.b16 %v7161
        %v7178 = vunpack.c.l.b16 %v7171
        %v7179 = vpack.c.b16 %v7177, %v6649
        %v7180 = vpack.c.b16 %v7178, %v6650
        %v7185 = vunpack.c.l.b16 %v7173
        %v7186 = vunpack.c.l.b16 %v7174
        %v7187 = vunpack.c.l.b16 %v7175
        %v7188 = vunpack.c.l.b16 %v7176
        %v7189 = vpack.c.b16 %v7186, %v7185
        %v7190 = vpack.c.b16 %v7188, %v7187
        %v7194 = vsel %vm4758, %v7179, 0
        %v7197 = vsel %vm4758, %v7180, 0
        %7199 = vmatpush.bf16.msra.mxu0 0
        %7200 = vmatpush.bf16.msra.mxu0 0
        %7201 = vmatpush.bf16.msra.mxu0 0
        %7202 = vmatpush.bf16.msra.mxu0 0
        %7203 = vmatpush.bf16.msra.mxu0 0
        %7204 = vmatpush.bf16.msra.mxu0 0
        %7205 = vmatpush.bf16.msra.mxu0 %v7190
        %7206 = vmatpush.bf16.msra.mxu0 %v7189
        %7207 = vmatmul.bf16.gmra.mxu0 %v6099
        %v7208 = vpop.f32.mrf.mxu0
        %v7209 = vadd.f32 0.0, %v7208
        %v7210 = vpop.f32.mrf.mxu0
        %v7211 = vadd.f32 0.0, %v7210
        %7212 = vmatmul.bf16.gmra.mxu0 %v6102
        %v7213 = vpop.f32.mrf.mxu0
        %v7214 = vadd.f32 0.0, %v7213
        %v7215 = vpop.f32.mrf.mxu0
        %v7216 = vadd.f32 0.0, %v7215
        %7217 = vmatmul.bf16.gmra.mxu0 %v6105
        %v7218 = vpop.f32.mrf.mxu0
        %v7219 = vadd.f32 0.0, %v7218
        %v7220 = vpop.f32.mrf.mxu0
        %v7221 = vadd.f32 0.0, %v7220
        %7222 = vmatmul.bf16.gmra.mxu0 %v7194
        %v7223 = vpop.f32.mrf.mxu0
        %v7224 = vadd.f32 0.0, %v7223
        %v7225 = vpop.f32.mrf.mxu0
        %v7226 = vadd.f32 0.0, %v7225
        %7227 = vmatmul.bf16.gmra.mxu0 %v6111
        %v7228 = vpop.f32.mrf.mxu0
        %v7229 = vadd.f32 0.0, %v7228
        %v7230 = vpop.f32.mrf.mxu0
        %v7231 = vadd.f32 0.0, %v7230
        %7232 = vmatmul.bf16.gmra.mxu0 %v6114
        %v7233 = vpop.f32.mrf.mxu0
        %v7234 = vadd.f32 0.0, %v7233
        %v7235 = vpop.f32.mrf.mxu0
        %v7236 = vadd.f32 0.0, %v7235
        %7237 = vmatmul.bf16.gmra.mxu0 %v6117
        %v7238 = vpop.f32.mrf.mxu0
        %v7239 = vadd.f32 0.0, %v7238
        %v7240 = vpop.f32.mrf.mxu0
        %v7241 = vadd.f32 0.0, %v7240
        %7242 = vmatmul.bf16.gmra.mxu0 %v7197
        %v7243 = vpop.f32.mrf.mxu0
        %v7244 = vadd.f32 0.0, %v7243
        %v7245 = vpop.f32.mrf.mxu0
        %v7246 = vadd.f32 0.0, %v7245
        %7247 = vdwg.mxu0
        %v7248 = vadd.f32 %v7136, %v7209
        %v7249 = vadd.f32 %v7137, %v7211
        %v7250 = vadd.f32 %v7138, %v7214
        %v7251 = vadd.f32 %v7139, %v7216
        %v7252 = vadd.f32 %v7140, %v7219
        %v7253 = vadd.f32 %v7141, %v7221
        %v7254 = vadd.f32 %v7142, %v7224
        %v7255 = vadd.f32 %v7143, %v7226
        %v7256 = vadd.f32 %v7144, %v7229
        %v7257 = vadd.f32 %v7145, %v7231
        %v7258 = vadd.f32 %v7146, %v7234
        %v7259 = vadd.f32 %v7147, %v7236
        %v7260 = vadd.f32 %v7148, %v7239
        %v7261 = vadd.f32 %v7149, %v7241
        %v7262 = vadd.f32 %v7150, %v7244
        %v7263 = vadd.f32 %v7151, %v7246
        %v7264 = vrot.slane %v4458, 6
        %v7265 = vrot.slane %v7264, 4
        %v7266 = vrot.slane %v4459, 6
        %v7267 = vsel %vm5465, %v7265, %v7266
        %v7268 = vrot.slane %v4482, 6
        %v7269 = vrot.slane %v7268, 4
        %v7270 = vrot.slane %v4483, 6
        %v7271 = vsel %vm5465, %v7269, %v7270
        %s7272 = scalar_lea.vmem %s4, 304
        %v7273 = vld [vmem:[%s7272] sm:$0xf]
        %v7274 = vld [vmem:[%s7272 + $0x4] sm:$0xf]
        %v7275 = vld [vmem:[%s7272 + $0x8] sm:$0xf]
        %v7276 = vld [vmem:[%s7272 + $0xc] sm:$0xf]
        %v7277 = vunpack.c.l.b16 %v7267
        %v7278 = vunpack.c.l.b16 %v7271
        %v7279 = vpack.c.b16 %v7277, %v6749
        %v7280 = vpack.c.b16 %v7278, %v6750
        %v7285 = vunpack.c.l.b16 %v7273
        %v7286 = vunpack.c.l.b16 %v7274
        %v7287 = vunpack.c.l.b16 %v7275
        %v7288 = vunpack.c.l.b16 %v7276
        %v7289 = vpack.c.b16 %v7286, %v7285
        %v7290 = vpack.c.b16 %v7288, %v7287
        %v7294 = vsel %vm4758, %v7279, 0
        %v7297 = vsel %vm4758, %v7280, 0
        %7299 = vmatpush.bf16.msra.mxu0 0
        %7300 = vmatpush.bf16.msra.mxu0 0
        %7301 = vmatpush.bf16.msra.mxu0 0
        %7302 = vmatpush.bf16.msra.mxu0 0
        %7303 = vmatpush.bf16.msra.mxu0 0
        %7304 = vmatpush.bf16.msra.mxu0 0
        %7305 = vmatpush.bf16.msra.mxu0 %v7290
        %7306 = vmatpush.bf16.msra.mxu0 %v7289
        %7307 = vmatmul.bf16.gmra.mxu0 %v6223
        %v7308 = vpop.f32.mrf.mxu0
        %v7309 = vadd.f32 0.0, %v7308
        %v7310 = vpop.f32.mrf.mxu0
        %v7311 = vadd.f32 0.0, %v7310
        %7312 = vmatmul.bf16.gmra.mxu0 %v6226
        %v7313 = vpop.f32.mrf.mxu0
        %v7314 = vadd.f32 0.0, %v7313
        %v7315 = vpop.f32.mrf.mxu0
        %v7316 = vadd.f32 0.0, %v7315
        %7317 = vmatmul.bf16.gmra.mxu0 %v6229
        %v7318 = vpop.f32.mrf.mxu0
        %v7319 = vadd.f32 0.0, %v7318
        %v7320 = vpop.f32.mrf.mxu0
        %v7321 = vadd.f32 0.0, %v7320
        %7322 = vmatmul.bf16.gmra.mxu0 %v7294
        %v7323 = vpop.f32.mrf.mxu0
        %v7324 = vadd.f32 0.0, %v7323
        %v7325 = vpop.f32.mrf.mxu0
        %v7326 = vadd.f32 0.0, %v7325
        %7327 = vmatmul.bf16.gmra.mxu0 %v6235
        %v7328 = vpop.f32.mrf.mxu0
        %v7329 = vadd.f32 0.0, %v7328
        %v7330 = vpop.f32.mrf.mxu0
        %v7331 = vadd.f32 0.0, %v7330
        %7332 = vmatmul.bf16.gmra.mxu0 %v6238
        %v7333 = vpop.f32.mrf.mxu0
        %v7334 = vadd.f32 0.0, %v7333
        %v7335 = vpop.f32.mrf.mxu0
        %v7336 = vadd.f32 0.0, %v7335
        %7337 = vmatmul.bf16.gmra.mxu0 %v6241
        %v7338 = vpop.f32.mrf.mxu0
        %v7339 = vadd.f32 0.0, %v7338
        %v7340 = vpop.f32.mrf.mxu0
        %v7341 = vadd.f32 0.0, %v7340
        %7342 = vmatmul.bf16.gmra.mxu0 %v7297
        %v7343 = vpop.f32.mrf.mxu0
        %v7344 = vadd.f32 0.0, %v7343
        %v7345 = vpop.f32.mrf.mxu0
        %v7346 = vadd.f32 0.0, %v7345
        %7347 = vdwg.mxu0
        %v7348 = vadd.f32 %v7248, %v7309
        %v7349 = vadd.f32 %v7249, %v7311
        %v7350 = vadd.f32 %v7250, %v7314
        %v7351 = vadd.f32 %v7251, %v7316
        %v7352 = vadd.f32 %v7252, %v7319
        %v7353 = vadd.f32 %v7253, %v7321
        %v7354 = vadd.f32 %v7254, %v7324
        %v7355 = vadd.f32 %v7255, %v7326
        %v7356 = vadd.f32 %v7256, %v7329
        %v7357 = vadd.f32 %v7257, %v7331
        %v7358 = vadd.f32 %v7258, %v7334
        %v7359 = vadd.f32 %v7259, %v7336
        %v7360 = vadd.f32 %v7260, %v7339
        %v7361 = vadd.f32 %v7261, %v7341
        %v7362 = vadd.f32 %v7262, %v7344
        %v7363 = vadd.f32 %v7263, %v7346
        %s7364 = scalar_lea.vmem %s4, 320
        %v7365 = vld [vmem:[%s7364] sm:$0xf]
        %v7366 = vld [vmem:[%s7364 + $0x4] sm:$0xf]
        %v7367 = vld [vmem:[%s7364 + $0x8] sm:$0xf]
        %v7368 = vld [vmem:[%s7364 + $0xc] sm:$0xf]
        %v7371 = vunpack.c.l.b16 %v4460
        %v7372 = vunpack.c.l.b16 %v4484
        %v7373 = vpack.c.b16 %v7371, %v6843
        %v7374 = vpack.c.b16 %v7372, %v6844
        %v7379 = vunpack.c.l.b16 %v7365
        %v7380 = vunpack.c.l.b16 %v7366
        %v7381 = vunpack.c.l.b16 %v7367
        %v7382 = vunpack.c.l.b16 %v7368
        %v7383 = vpack.c.b16 %v7380, %v7379
        %v7384 = vpack.c.b16 %v7382, %v7381
        %v7388 = vsel %vm4758, %v7373, 0
        %v7391 = vsel %vm4758, %v7374, 0
        %7393 = vmatpush.bf16.msra.mxu0 0
        %7394 = vmatpush.bf16.msra.mxu0 0
        %7395 = vmatpush.bf16.msra.mxu0 0
        %7396 = vmatpush.bf16.msra.mxu0 0
        %7397 = vmatpush.bf16.msra.mxu0 0
        %7398 = vmatpush.bf16.msra.mxu0 0
        %7399 = vmatpush.bf16.msra.mxu0 %v7384
        %7400 = vmatpush.bf16.msra.mxu0 %v7383
        %7401 = vmatmul.bf16.gmra.mxu0 %v4891
        %v7402 = vpop.f32.mrf.mxu0
        %v7403 = vadd.f32 0.0, %v7402
        %v7404 = vpop.f32.mrf.mxu0
        %v7405 = vadd.f32 0.0, %v7404
        %7406 = vmatmul.bf16.gmra.mxu0 %v4894
        %v7407 = vpop.f32.mrf.mxu0
        %v7408 = vadd.f32 0.0, %v7407
        %v7409 = vpop.f32.mrf.mxu0
        %v7410 = vadd.f32 0.0, %v7409
        %7411 = vmatmul.bf16.gmra.mxu0 %v6332
        %v7412 = vpop.f32.mrf.mxu0
        %v7413 = vadd.f32 0.0, %v7412
        %v7414 = vpop.f32.mrf.mxu0
        %v7415 = vadd.f32 0.0, %v7414
        %7416 = vmatmul.bf16.gmra.mxu0 %v7388
        %v7417 = vpop.f32.mrf.mxu0
        %v7418 = vadd.f32 0.0, %v7417
        %v7419 = vpop.f32.mrf.mxu0
        %v7420 = vadd.f32 0.0, %v7419
        %7421 = vmatmul.bf16.gmra.mxu0 %v4903
        %v7422 = vpop.f32.mrf.mxu0
        %v7423 = vadd.f32 0.0, %v7422
        %v7424 = vpop.f32.mrf.mxu0
        %v7425 = vadd.f32 0.0, %v7424
        %7426 = vmatmul.bf16.gmra.mxu0 %v4906
        %v7427 = vpop.f32.mrf.mxu0
        %v7428 = vadd.f32 0.0, %v7427
        %v7429 = vpop.f32.mrf.mxu0
        %v7430 = vadd.f32 0.0, %v7429
        %7431 = vmatmul.bf16.gmra.mxu0 %v6335
        %v7432 = vpop.f32.mrf.mxu0
        %v7433 = vadd.f32 0.0, %v7432
        %v7434 = vpop.f32.mrf.mxu0
        %v7435 = vadd.f32 0.0, %v7434
        %7436 = vmatmul.bf16.gmra.mxu0 %v7391
        %v7437 = vpop.f32.mrf.mxu0
        %v7438 = vadd.f32 0.0, %v7437
        %v7439 = vpop.f32.mrf.mxu0
        %v7440 = vadd.f32 0.0, %v7439
        %7441 = vdwg.mxu0
        %v7442 = vadd.f32 %v7348, %v7403
        %v7443 = vadd.f32 %v7349, %v7405
        %v7444 = vadd.f32 %v7350, %v7408
        %v7445 = vadd.f32 %v7351, %v7410
        %v7446 = vadd.f32 %v7352, %v7413
        %v7447 = vadd.f32 %v7353, %v7415
        %v7448 = vadd.f32 %v7354, %v7418
        %v7449 = vadd.f32 %v7355, %v7420
        %v7450 = vadd.f32 %v7356, %v7423
        %v7451 = vadd.f32 %v7357, %v7425
        %v7452 = vadd.f32 %v7358, %v7428
        %v7453 = vadd.f32 %v7359, %v7430
        %v7454 = vadd.f32 %v7360, %v7433
        %v7455 = vadd.f32 %v7361, %v7435
        %v7456 = vadd.f32 %v7362, %v7438
        %v7457 = vadd.f32 %v7363, %v7440
        %v7459 = vshrl.u32 %v4460, 16
        %v7461 = vrot.slane %v7459, 4
        %v7462 = vshll.u32 %v4460, 16
        %v7464 = vrot.slane %v7462, 5
        %v7465 = vor.u32 %v7461, %v7464
        %v7466 = vrot.slane %v7465, 4
        %v7468 = vshll.u32 %v4461, 16
        %v7470 = vrot.slane %v7468, 5
        %v7471 = vsel %vm4492, %v7466, %v7470
        %v7473 = vshrl.u32 %v4484, 16
        %v7475 = vrot.slane %v7473, 4
        %v7476 = vshll.u32 %v4484, 16
        %v7478 = vrot.slane %v7476, 5
        %v7479 = vor.u32 %v7475, %v7478
        %v7480 = vrot.slane %v7479, 4
        %v7482 = vshll.u32 %v4485, 16
        %v7484 = vrot.slane %v7482, 5
        %v7485 = vsel %vm4492, %v7480, %v7484
        %s7486 = scalar_lea.vmem %s4, 336
        %v7487 = vld [vmem:[%s7486] sm:$0xf]
        %v7488 = vld [vmem:[%s7486 + $0x4] sm:$0xf]
        %v7489 = vld [vmem:[%s7486 + $0x8] sm:$0xf]
        %v7490 = vld [vmem:[%s7486 + $0xc] sm:$0xf]
        %v7491 = vunpack.c.l.b16 %v7471
        %v7492 = vunpack.c.l.b16 %v7485
        %v7493 = vpack.c.b16 %v7491, %v6963
        %v7494 = vpack.c.b16 %v7492, %v6964
        %v7499 = vunpack.c.l.b16 %v7487
        %v7500 = vunpack.c.l.b16 %v7488
        %v7501 = vunpack.c.l.b16 %v7489
        %v7502 = vunpack.c.l.b16 %v7490
        %v7503 = vpack.c.b16 %v7500, %v7499
        %v7504 = vpack.c.b16 %v7502, %v7501
        %v7508 = vsel %vm4758, %v7493, 0
        %v7511 = vsel %vm4758, %v7494, 0
        %7513 = vmatpush.bf16.msra.mxu0 0
        %7514 = vmatpush.bf16.msra.mxu0 0
        %7515 = vmatpush.bf16.msra.mxu0 0
        %7516 = vmatpush.bf16.msra.mxu0 0
        %7517 = vmatpush.bf16.msra.mxu0 0
        %7518 = vmatpush.bf16.msra.mxu0 0
        %7519 = vmatpush.bf16.msra.mxu0 %v7504
        %7520 = vmatpush.bf16.msra.mxu0 %v7503
        %7521 = vmatmul.bf16.gmra.mxu0 %v4766
        %v7522 = vpop.f32.mrf.mxu0
        %v7523 = vadd.f32 0.0, %v7522
        %v7524 = vpop.f32.mrf.mxu0
        %v7525 = vadd.f32 0.0, %v7524
        %7526 = vmatmul.bf16.gmra.mxu0 %v4769
        %v7527 = vpop.f32.mrf.mxu0
        %v7528 = vadd.f32 0.0, %v7527
        %v7529 = vpop.f32.mrf.mxu0
        %v7530 = vadd.f32 0.0, %v7529
        %7531 = vmatmul.bf16.gmra.mxu0 %v6452
        %v7532 = vpop.f32.mrf.mxu0
        %v7533 = vadd.f32 0.0, %v7532
        %v7534 = vpop.f32.mrf.mxu0
        %v7535 = vadd.f32 0.0, %v7534
        %7536 = vmatmul.bf16.gmra.mxu0 %v7508
        %v7537 = vpop.f32.mrf.mxu0
        %v7538 = vadd.f32 0.0, %v7537
        %v7539 = vpop.f32.mrf.mxu0
        %v7540 = vadd.f32 0.0, %v7539
        %7541 = vmatmul.bf16.gmra.mxu0 %v4778
        %v7542 = vpop.f32.mrf.mxu0
        %v7543 = vadd.f32 0.0, %v7542
        %v7544 = vpop.f32.mrf.mxu0
        %v7545 = vadd.f32 0.0, %v7544
        %7546 = vmatmul.bf16.gmra.mxu0 %v4781
        %v7547 = vpop.f32.mrf.mxu0
        %v7548 = vadd.f32 0.0, %v7547
        %v7549 = vpop.f32.mrf.mxu0
        %v7550 = vadd.f32 0.0, %v7549
        %7551 = vmatmul.bf16.gmra.mxu0 %v6455
        %v7552 = vpop.f32.mrf.mxu0
        %v7553 = vadd.f32 0.0, %v7552
        %v7554 = vpop.f32.mrf.mxu0
        %v7555 = vadd.f32 0.0, %v7554
        %7556 = vmatmul.bf16.gmra.mxu0 %v7511
        %v7557 = vpop.f32.mrf.mxu0
        %v7558 = vadd.f32 0.0, %v7557
        %v7559 = vpop.f32.mrf.mxu0
        %v7560 = vadd.f32 0.0, %v7559
        %7561 = vdwg.mxu0
        %v7562 = vadd.f32 %v7442, %v7523
        %v7563 = vadd.f32 %v7443, %v7525
        %v7564 = vadd.f32 %v7444, %v7528
        %v7565 = vadd.f32 %v7445, %v7530
        %v7566 = vadd.f32 %v7446, %v7533
        %v7567 = vadd.f32 %v7447, %v7535
        %v7568 = vadd.f32 %v7448, %v7538
        %v7569 = vadd.f32 %v7449, %v7540
        %v7570 = vadd.f32 %v7450, %v7543
        %v7571 = vadd.f32 %v7451, %v7545
        %v7572 = vadd.f32 %v7452, %v7548
        %v7573 = vadd.f32 %v7453, %v7550
        %v7574 = vadd.f32 %v7454, %v7553
        %v7575 = vadd.f32 %v7455, %v7555
        %v7576 = vadd.f32 %v7456, %v7558
        %v7577 = vadd.f32 %v7457, %v7560
        %v7580 = vrot.slane %v4460, 5
        %v7581 = vrot.slane %v7580, 4
        %v7582 = vrot.slane %v4461, 5
        %v7583 = vsel %vm4975, %v7581, %v7582
        %v7584 = vrot.slane %v4484, 5
        %v7585 = vrot.slane %v7584, 4
        %v7586 = vrot.slane %v4485, 5
        %v7587 = vsel %vm4975, %v7585, %v7586
        %s7588 = scalar_lea.vmem %s4, 352
        %v7589 = vld [vmem:[%s7588] sm:$0xf]
        %v7590 = vld [vmem:[%s7588 + $0x4] sm:$0xf]
        %v7591 = vld [vmem:[%s7588 + $0x8] sm:$0xf]
        %v7592 = vld [vmem:[%s7588 + $0xc] sm:$0xf]
        %v7593 = vunpack.c.l.b16 %v7583
        %v7594 = vunpack.c.l.b16 %v7587
        %v7595 = vpack.c.b16 %v7593, %v7065
        %v7596 = vpack.c.b16 %v7594, %v7066
        %v7601 = vunpack.c.l.b16 %v7589
        %v7602 = vunpack.c.l.b16 %v7590
        %v7603 = vunpack.c.l.b16 %v7591
        %v7604 = vunpack.c.l.b16 %v7592
        %v7605 = vpack.c.b16 %v7602, %v7601
        %v7606 = vpack.c.b16 %v7604, %v7603
        %v7610 = vsel %vm4758, %v7595, 0
        %v7613 = vsel %vm4758, %v7596, 0
        %7615 = vmatpush.bf16.msra.mxu0 0
        %7616 = vmatpush.bf16.msra.mxu0 0
        %7617 = vmatpush.bf16.msra.mxu0 0
        %7618 = vmatpush.bf16.msra.mxu0 0
        %7619 = vmatpush.bf16.msra.mxu0 0
        %7620 = vmatpush.bf16.msra.mxu0 0
        %7621 = vmatpush.bf16.msra.mxu0 %v7606
        %7622 = vmatpush.bf16.msra.mxu0 %v7605
        %7623 = vmatmul.bf16.gmra.mxu0 %v5088
        %v7624 = vpop.f32.mrf.mxu0
        %v7625 = vadd.f32 0.0, %v7624
        %v7626 = vpop.f32.mrf.mxu0
        %v7627 = vadd.f32 0.0, %v7626
        %7628 = vmatmul.bf16.gmra.mxu0 %v5091
        %v7629 = vpop.f32.mrf.mxu0
        %v7630 = vadd.f32 0.0, %v7629
        %v7631 = vpop.f32.mrf.mxu0
        %v7632 = vadd.f32 0.0, %v7631
        %7633 = vmatmul.bf16.gmra.mxu0 %v6554
        %v7634 = vpop.f32.mrf.mxu0
        %v7635 = vadd.f32 0.0, %v7634
        %v7636 = vpop.f32.mrf.mxu0
        %v7637 = vadd.f32 0.0, %v7636
        %7638 = vmatmul.bf16.gmra.mxu0 %v7610
        %v7639 = vpop.f32.mrf.mxu0
        %v7640 = vadd.f32 0.0, %v7639
        %v7641 = vpop.f32.mrf.mxu0
        %v7642 = vadd.f32 0.0, %v7641
        %7643 = vmatmul.bf16.gmra.mxu0 %v5100
        %v7644 = vpop.f32.mrf.mxu0
        %v7645 = vadd.f32 0.0, %v7644
        %v7646 = vpop.f32.mrf.mxu0
        %v7647 = vadd.f32 0.0, %v7646
        %7648 = vmatmul.bf16.gmra.mxu0 %v5103
        %v7649 = vpop.f32.mrf.mxu0
        %v7650 = vadd.f32 0.0, %v7649
        %v7651 = vpop.f32.mrf.mxu0
        %v7652 = vadd.f32 0.0, %v7651
        %7653 = vmatmul.bf16.gmra.mxu0 %v6557
        %v7654 = vpop.f32.mrf.mxu0
        %v7655 = vadd.f32 0.0, %v7654
        %v7656 = vpop.f32.mrf.mxu0
        %v7657 = vadd.f32 0.0, %v7656
        %7658 = vmatmul.bf16.gmra.mxu0 %v7613
        %v7659 = vpop.f32.mrf.mxu0
        %v7660 = vadd.f32 0.0, %v7659
        %v7661 = vpop.f32.mrf.mxu0
        %v7662 = vadd.f32 0.0, %v7661
        %7663 = vdwg.mxu0
        %v7664 = vadd.f32 %v7562, %v7625
        %v7665 = vadd.f32 %v7563, %v7627
        %v7666 = vadd.f32 %v7564, %v7630
        %v7667 = vadd.f32 %v7565, %v7632
        %v7668 = vadd.f32 %v7566, %v7635
        %v7669 = vadd.f32 %v7567, %v7637
        %v7670 = vadd.f32 %v7568, %v7640
        %v7671 = vadd.f32 %v7569, %v7642
        %v7672 = vadd.f32 %v7570, %v7645
        %v7673 = vadd.f32 %v7571, %v7647
        %v7674 = vadd.f32 %v7572, %v7650
        %v7675 = vadd.f32 %v7573, %v7652
        %v7676 = vadd.f32 %v7574, %v7655
        %v7677 = vadd.f32 %v7575, %v7657
        %v7678 = vadd.f32 %v7576, %v7660
        %v7679 = vadd.f32 %v7577, %v7662
        %v7680 = vrot.slane %v7459, 5
        %v7681 = vrot.slane %v7462, 6
        %v7682 = vor.u32 %v7680, %v7681
        %v7683 = vrot.slane %v7682, 4
        %v7684 = vshrl.u32 %v4461, 16
        %v7686 = vrot.slane %v7684, 5
        %v7687 = vrot.slane %v7468, 6
        %v7688 = vor.u32 %v7686, %v7687
        %v7689 = vsel %vm5172, %v7683, %v7688
        %v7690 = vrot.slane %v7473, 5
        %v7691 = vrot.slane %v7476, 6
        %v7692 = vor.u32 %v7690, %v7691
        %v7693 = vrot.slane %v7692, 4
        %v7694 = vshrl.u32 %v4485, 16
        %v7696 = vrot.slane %v7694, 5
        %v7697 = vrot.slane %v7482, 6
        %v7698 = vor.u32 %v7696, %v7697
        %v7699 = vsel %vm5172, %v7693, %v7698
        %s7700 = scalar_lea.vmem %s4, 368
        %v7701 = vld [vmem:[%s7700] sm:$0xf]
        %v7702 = vld [vmem:[%s7700 + $0x4] sm:$0xf]
        %v7703 = vld [vmem:[%s7700 + $0x8] sm:$0xf]
        %v7704 = vld [vmem:[%s7700 + $0xc] sm:$0xf]
        %v7705 = vunpack.c.l.b16 %v7689
        %v7706 = vunpack.c.l.b16 %v7699
        %v7707 = vpack.c.b16 %v7705, %v7177
        %v7708 = vpack.c.b16 %v7706, %v7178
        %v7713 = vunpack.c.l.b16 %v7701
        %v7714 = vunpack.c.l.b16 %v7702
        %v7715 = vunpack.c.l.b16 %v7703
        %v7716 = vunpack.c.l.b16 %v7704
        %v7717 = vpack.c.b16 %v7714, %v7713
        %v7718 = vpack.c.b16 %v7716, %v7715
        %v7722 = vsel %vm4758, %v7707, 0
        %v7725 = vsel %vm4758, %v7708, 0
        %7727 = vmatpush.bf16.msra.mxu0 0
        %7728 = vmatpush.bf16.msra.mxu0 0
        %7729 = vmatpush.bf16.msra.mxu0 0
        %7730 = vmatpush.bf16.msra.mxu0 0
        %7731 = vmatpush.bf16.msra.mxu0 0
        %7732 = vmatpush.bf16.msra.mxu0 0
        %7733 = vmatpush.bf16.msra.mxu0 %v7718
        %7734 = vmatpush.bf16.msra.mxu0 %v7717
        %7735 = vmatmul.bf16.gmra.mxu0 %v5381
        %v7736 = vpop.f32.mrf.mxu0
        %v7737 = vadd.f32 0.0, %v7736
        %v7738 = vpop.f32.mrf.mxu0
        %v7739 = vadd.f32 0.0, %v7738
        %7740 = vmatmul.bf16.gmra.mxu0 %v5384
        %v7741 = vpop.f32.mrf.mxu0
        %v7742 = vadd.f32 0.0, %v7741
        %v7743 = vpop.f32.mrf.mxu0
        %v7744 = vadd.f32 0.0, %v7743
        %7745 = vmatmul.bf16.gmra.mxu0 %v6666
        %v7746 = vpop.f32.mrf.mxu0
        %v7747 = vadd.f32 0.0, %v7746
        %v7748 = vpop.f32.mrf.mxu0
        %v7749 = vadd.f32 0.0, %v7748
        %7750 = vmatmul.bf16.gmra.mxu0 %v7722
        %v7751 = vpop.f32.mrf.mxu0
        %v7752 = vadd.f32 0.0, %v7751
        %v7753 = vpop.f32.mrf.mxu0
        %v7754 = vadd.f32 0.0, %v7753
        %7755 = vmatmul.bf16.gmra.mxu0 %v5393
        %v7756 = vpop.f32.mrf.mxu0
        %v7757 = vadd.f32 0.0, %v7756
        %v7758 = vpop.f32.mrf.mxu0
        %v7759 = vadd.f32 0.0, %v7758
        %7760 = vmatmul.bf16.gmra.mxu0 %v5396
        %v7761 = vpop.f32.mrf.mxu0
        %v7762 = vadd.f32 0.0, %v7761
        %v7763 = vpop.f32.mrf.mxu0
        %v7764 = vadd.f32 0.0, %v7763
        %7765 = vmatmul.bf16.gmra.mxu0 %v6669
        %v7766 = vpop.f32.mrf.mxu0
        %v7767 = vadd.f32 0.0, %v7766
        %v7768 = vpop.f32.mrf.mxu0
        %v7769 = vadd.f32 0.0, %v7768
        %7770 = vmatmul.bf16.gmra.mxu0 %v7725
        %v7771 = vpop.f32.mrf.mxu0
        %v7772 = vadd.f32 0.0, %v7771
        %v7773 = vpop.f32.mrf.mxu0
        %v7774 = vadd.f32 0.0, %v7773
        %7775 = vdwg.mxu0
        %v7776 = vadd.f32 %v7664, %v7737
        %v7777 = vadd.f32 %v7665, %v7739
        %v7778 = vadd.f32 %v7666, %v7742
        %v7779 = vadd.f32 %v7667, %v7744
        %v7780 = vadd.f32 %v7668, %v7747
        %v7781 = vadd.f32 %v7669, %v7749
        %v7782 = vadd.f32 %v7670, %v7752
        %v7783 = vadd.f32 %v7671, %v7754
        %v7784 = vadd.f32 %v7672, %v7757
        %v7785 = vadd.f32 %v7673, %v7759
        %v7786 = vadd.f32 %v7674, %v7762
        %v7787 = vadd.f32 %v7675, %v7764
        %v7788 = vadd.f32 %v7676, %v7767
        %v7789 = vadd.f32 %v7677, %v7769
        %v7790 = vadd.f32 %v7678, %v7772
        %v7791 = vadd.f32 %v7679, %v7774
        %v7792 = vrot.slane %v4460, 6
        %v7793 = vrot.slane %v7792, 4
        %v7794 = vrot.slane %v4461, 6
        %v7795 = vsel %vm5465, %v7793, %v7794
        %v7796 = vrot.slane %v4484, 6
        %v7797 = vrot.slane %v7796, 4
        %v7798 = vrot.slane %v4485, 6
        %v7799 = vsel %vm5465, %v7797, %v7798
        %s7800 = scalar_lea.vmem %s4, 384
        %v7801 = vld [vmem:[%s7800] sm:$0xf]
        %v7802 = vld [vmem:[%s7800 + $0x4] sm:$0xf]
        %v7803 = vld [vmem:[%s7800 + $0x8] sm:$0xf]
        %v7804 = vld [vmem:[%s7800 + $0xc] sm:$0xf]
        %v7805 = vunpack.c.l.b16 %v7795
        %v7806 = vunpack.c.l.b16 %v7799
        %v7807 = vpack.c.b16 %v7805, %v7277
        %v7808 = vpack.c.b16 %v7806, %v7278
        %v7813 = vunpack.c.l.b16 %v7801
        %v7814 = vunpack.c.l.b16 %v7802
        %v7815 = vunpack.c.l.b16 %v7803
        %v7816 = vunpack.c.l.b16 %v7804
        %v7817 = vpack.c.b16 %v7814, %v7813
        %v7818 = vpack.c.b16 %v7816, %v7815
        %v7822 = vsel %vm4758, %v7807, 0
        %v7825 = vsel %vm4758, %v7808, 0
        %7827 = vmatpush.bf16.msra.mxu0 0
        %7828 = vmatpush.bf16.msra.mxu0 0
        %7829 = vmatpush.bf16.msra.mxu0 0
        %7830 = vmatpush.bf16.msra.mxu0 0
        %7831 = vmatpush.bf16.msra.mxu0 0
        %7832 = vmatpush.bf16.msra.mxu0 0
        %7833 = vmatpush.bf16.msra.mxu0 %v7818
        %7834 = vmatpush.bf16.msra.mxu0 %v7817
        %7835 = vmatmul.bf16.gmra.mxu0 %v5578
        %v7836 = vpop.f32.mrf.mxu0
        %v7837 = vadd.f32 0.0, %v7836
        %v7838 = vpop.f32.mrf.mxu0
        %v7839 = vadd.f32 0.0, %v7838
        %7840 = vmatmul.bf16.gmra.mxu0 %v5581
        %v7841 = vpop.f32.mrf.mxu0
        %v7842 = vadd.f32 0.0, %v7841
        %v7843 = vpop.f32.mrf.mxu0
        %v7844 = vadd.f32 0.0, %v7843
        %7845 = vmatmul.bf16.gmra.mxu0 %v6766
        %v7846 = vpop.f32.mrf.mxu0
        %v7847 = vadd.f32 0.0, %v7846
        %v7848 = vpop.f32.mrf.mxu0
        %v7849 = vadd.f32 0.0, %v7848
        %7850 = vmatmul.bf16.gmra.mxu0 %v7822
        %v7851 = vpop.f32.mrf.mxu0
        %v7852 = vadd.f32 0.0, %v7851
        %v7853 = vpop.f32.mrf.mxu0
        %v7854 = vadd.f32 0.0, %v7853
        %7855 = vmatmul.bf16.gmra.mxu0 %v5590
        %v7856 = vpop.f32.mrf.mxu0
        %v7857 = vadd.f32 0.0, %v7856
        %v7858 = vpop.f32.mrf.mxu0
        %v7859 = vadd.f32 0.0, %v7858
        %7860 = vmatmul.bf16.gmra.mxu0 %v5593
        %v7861 = vpop.f32.mrf.mxu0
        %v7862 = vadd.f32 0.0, %v7861
        %v7863 = vpop.f32.mrf.mxu0
        %v7864 = vadd.f32 0.0, %v7863
        %7865 = vmatmul.bf16.gmra.mxu0 %v6769
        %v7866 = vpop.f32.mrf.mxu0
        %v7867 = vadd.f32 0.0, %v7866
        %v7868 = vpop.f32.mrf.mxu0
        %v7869 = vadd.f32 0.0, %v7868
        %7870 = vmatmul.bf16.gmra.mxu0 %v7825
        %v7871 = vpop.f32.mrf.mxu0
        %v7872 = vadd.f32 0.0, %v7871
        %v7873 = vpop.f32.mrf.mxu0
        %v7874 = vadd.f32 0.0, %v7873
        %7875 = vdwg.mxu0
        %v7876 = vadd.f32 %v7776, %v7837
        %v7877 = vadd.f32 %v7777, %v7839
        %v7878 = vadd.f32 %v7778, %v7842
        %v7879 = vadd.f32 %v7779, %v7844
        %v7880 = vadd.f32 %v7780, %v7847
        %v7881 = vadd.f32 %v7781, %v7849
        %v7882 = vadd.f32 %v7782, %v7852
        %v7883 = vadd.f32 %v7783, %v7854
        %v7884 = vadd.f32 %v7784, %v7857
        %v7885 = vadd.f32 %v7785, %v7859
        %v7886 = vadd.f32 %v7786, %v7862
        %v7887 = vadd.f32 %v7787, %v7864
        %v7888 = vadd.f32 %v7788, %v7867
        %v7889 = vadd.f32 %v7789, %v7869
        %v7890 = vadd.f32 %v7790, %v7872
        %v7891 = vadd.f32 %v7791, %v7874
        %v7892 = vld [vmem:[#allocation6] sm:$0x1]
        %vm7893 = vcmask 523264
        %v7894 = vsel %vm7893, %v7876, 0.0
        %v7895 = vsel %vm7893, %v7877, 0.0
        %v7896 = vadd.f32 %v7894, %v7895
        %v7897 = vsel %vm7893, %v7878, 0.0
        %v7898 = vadd.f32 %v7896, %v7897
        %v7899 = vsel %vm7893, %v7879, 0.0
        %v7900 = vadd.f32 %v7898, %v7899
        %v7901 = vsel %vm7893, %v7880, 0.0
        %v7902 = vadd.f32 %v7900, %v7901
        %v7903 = vsel %vm7893, %v7881, 0.0
        %v7904 = vadd.f32 %v7902, %v7903
        %v7905 = vsel %vm7893, %v7882, 0.0
        %v7906 = vadd.f32 %v7904, %v7905
        %v7907 = vsel %vm7893, %v7883, 0.0
        %v7908 = vadd.f32 %v7906, %v7907
        %v7909 = vsel %vm7893, %v7884, 0.0
        %v7910 = vadd.f32 %v7908, %v7909
        %v7911 = vsel %vm7893, %v7885, 0.0
        %v7912 = vadd.f32 %v7910, %v7911
        %v7913 = vsel %vm7893, %v7886, 0.0
        %v7914 = vadd.f32 %v7912, %v7913
        %v7915 = vsel %vm7893, %v7887, 0.0
        %v7916 = vadd.f32 %v7914, %v7915
        %v7917 = vsel %vm7893, %v7888, 0.0
        %v7918 = vadd.f32 %v7916, %v7917
        %v7919 = vsel %vm7893, %v7889, 0.0
        %v7920 = vadd.f32 %v7918, %v7919
        %v7921 = vsel %vm7893, %v7890, 0.0
        %v7922 = vadd.f32 %v7920, %v7921
        %v7923 = vsel %vm7893, %v7891, 0.0
        %v7924 = vadd.f32 %v7922, %v7923
        %v7925 = vrot.slane %v7924, 4
        %v7926 = vadd.f32 %v7924, %v7925
        %v7927 = vrot.slane %v7926, 2
        %v7928 = vadd.f32 %v7926, %v7927
        %v7929 = vrot.slane %v7928, 1
        %v7930 = vadd.f32 %v7928, %v7929
        %v7931 = vadd.f32 %v7892, %v7930
        %vm7932 = vcmask 516096
        %7933 = vst.msk [vmem:[#allocation6] sm:$0x1] %vm7932, %v7931
        %v7934 = vld [vmem:[#allocation7] sm:$0x1]
        %v7935 = vmul.f32 %v7876, %v7876
        %v7936 = vmul.f32 %v7877, %v7877
        %v7937 = vmul.f32 %v7878, %v7878
        %v7938 = vmul.f32 %v7879, %v7879
        %v7939 = vmul.f32 %v7880, %v7880
        %v7940 = vmul.f32 %v7881, %v7881
        %v7941 = vmul.f32 %v7882, %v7882
        %v7942 = vmul.f32 %v7883, %v7883
        %v7943 = vmul.f32 %v7884, %v7884
        %v7944 = vmul.f32 %v7885, %v7885
        %v7945 = vmul.f32 %v7886, %v7886
        %v7946 = vmul.f32 %v7887, %v7887
        %v7947 = vmul.f32 %v7888, %v7888
        %v7948 = vmul.f32 %v7889, %v7889
        %v7949 = vmul.f32 %v7890, %v7890
        %v7950 = vmul.f32 %v7891, %v7891
        %v7951 = vsel %vm7893, %v7935, 0.0
        %v7952 = vsel %vm7893, %v7936, 0.0
        %v7953 = vadd.f32 %v7951, %v7952
        %v7954 = vsel %vm7893, %v7937, 0.0
        %v7955 = vadd.f32 %v7953, %v7954
        %v7956 = vsel %vm7893, %v7938, 0.0
        %v7957 = vadd.f32 %v7955, %v7956
        %v7958 = vsel %vm7893, %v7939, 0.0
        %v7959 = vadd.f32 %v7957, %v7958
        %v7960 = vsel %vm7893, %v7940, 0.0
        %v7961 = vadd.f32 %v7959, %v7960
        %v7962 = vsel %vm7893, %v7941, 0.0
        %v7963 = vadd.f32 %v7961, %v7962
        %v7964 = vsel %vm7893, %v7942, 0.0
        %v7965 = vadd.f32 %v7963, %v7964
        %v7966 = vsel %vm7893, %v7943, 0.0
        %v7967 = vadd.f32 %v7965, %v7966
        %v7968 = vsel %vm7893, %v7944, 0.0
        %v7969 = vadd.f32 %v7967, %v7968
        %v7970 = vsel %vm7893, %v7945, 0.0
        %v7971 = vadd.f32 %v7969, %v7970
        %v7972 = vsel %vm7893, %v7946, 0.0
        %v7973 = vadd.f32 %v7971, %v7972
        %v7974 = vsel %vm7893, %v7947, 0.0
        %v7975 = vadd.f32 %v7973, %v7974
        %v7976 = vsel %vm7893, %v7948, 0.0
        %v7977 = vadd.f32 %v7975, %v7976
        %v7978 = vsel %vm7893, %v7949, 0.0
        %v7979 = vadd.f32 %v7977, %v7978
        %v7980 = vsel %vm7893, %v7950, 0.0
        %v7981 = vadd.f32 %v7979, %v7980
        %v7982 = vrot.slane %v7981, 4
        %v7983 = vadd.f32 %v7981, %v7982
        %v7984 = vrot.slane %v7983, 2
        %v7985 = vadd.f32 %v7983, %v7984
        %v7986 = vrot.slane %v7985, 1
        %v7987 = vadd.f32 %v7985, %v7986
        %v7988 = vadd.f32 %v7934, %v7987
        %7989 = vst.msk [vmem:[#allocation7] sm:$0x1] %vm7932, %v7988
        %s7990 = smul.u32 %s373, 64
        %s7991 = scalar_lea.vmem [#allocation3], %s7990
        %7992 = vst.msk [vmem:[%s7991] sm:$0xff] %vm7893, %v7876
        %7993 = vst.msk [vmem:[%s7991 + $0x8] sm:$0xff] %vm7893, %v7877
        %7994 = vst.msk [vmem:[%s7991 + $0x10] sm:$0xff] %vm7893, %v7878
        %7995 = vst.msk [vmem:[%s7991 + $0x18] sm:$0xff] %vm7893, %v7879
        %7996 = vst.msk [vmem:[%s7991 + $0x20] sm:$0xff] %vm7893, %v7880
        %7997 = vst.msk [vmem:[%s7991 + $0x28] sm:$0xff] %vm7893, %v7881
        %7998 = vst.msk [vmem:[%s7991 + $0x30] sm:$0xff] %vm7893, %v7882
        %7999 = vst.msk [vmem:[%s7991 + $0x38] sm:$0xff] %vm7893, %v7883
        %8000 = vst.msk [vmem:[%s7991 + $0x40] sm:$0xff] %vm7893, %v7884
        %8001 = vst.msk [vmem:[%s7991 + $0x48] sm:$0xff] %vm7893, %v7885
        %8002 = vst.msk [vmem:[%s7991 + $0x50] sm:$0xff] %vm7893, %v7886
        %8003 = vst.msk [vmem:[%s7991 + $0x58] sm:$0xff] %vm7893, %v7887
        %8004 = vst.msk [vmem:[%s7991 + $0x60] sm:$0xff] %vm7893, %v7888
        %8005 = vst.msk [vmem:[%s7991 + $0x68] sm:$0xff] %vm7893, %v7889
        %8006 = vst.msk [vmem:[%s7991 + $0x70] sm:$0xff] %vm7893, %v7890
        %8007 = vst.msk [vmem:[%s7991 + $0x78] sm:$0xff] %vm7893, %v7891
      $region68: #{qzd_forward.1} parent=55 // pred_fallthru
        _
      %p8008 = scmp.eq.s32.totalorder %s24, 2
      // Predicated region
      $region69: #{qzd_forward.1} parent=55 // pred_check
        %p8009 = pneg %p8008
      $region70: #{qzd_forward.1} parent=55 // pred_check_branch
        %8011 = sbr.rel (%p8009) target = $region72
      $region71: #{qzd_forward.1} parent=55 // pred_region
        %v8012 = vld [vmem:[#allocation6] sm:$0x1]
        %v8013 = vmul.f32 %v8012, 0.0078125
        %v8014 = vld [vmem:[#allocation7] sm:$0x1]
        %v8015 = vmul.f32 %v8014, 0.0078125
        %v8016 = vmul.f32 %v8013, %v8013
        %v8017 = vsub.f32 %v8015, %v8016
        %v8018 = vmax.f32 %v8017, 0.0
        %v8019 = vld [vmem:[%s5] sm:$0x1]
        %v8020 = vadd.f32 %v8018, 1e-05
        %v8021 = vrsqrt.pop %v8020
        %v8022 = vmul.f32 %v8021, %v8020
        %v8023 = vmul.f32 %v8022, %v8021
        %v8024 = vmul.f32 0.5, %v8023
        %v8025 = vsub.f32 1.5, %v8024
        %v8026 = vmul.f32 %v8021, %v8025
        %vm8027 = vweird.f32 %v8020
        %vm8028 = vweird.f32 %v8021
        %vm8029 = vmor %vm8027, %vm8028
        %v8030 = vsel %vm8029, %v8021, %v8026
        %v8031 = vmul.f32 %v8019, %v8030
        %v8032 = vld [vmem:[%s6] sm:$0x1]
        %v8033 = vmul.f32 %v8013, %v8031
        %v8034 = vsub.f32 %v8032, %v8033
        %s8035 = smul.u32 %s373, 64
        %s8036 = scalar_lea.vmem [#allocation3], %s8035
        %v8037 = vld [vmem:[%s8036] sm:$0xff]
        %v8038 = vld [vmem:[%s8036 + $0x8] sm:$0xff]
        %v8039 = vld [vmem:[%s8036 + $0x10] sm:$0xff]
        %v8040 = vld [vmem:[%s8036 + $0x18] sm:$0xff]
        %v8041 = vld [vmem:[%s8036 + $0x20] sm:$0xff]
        %v8042 = vld [vmem:[%s8036 + $0x28] sm:$0xff]
        %v8043 = vld [vmem:[%s8036 + $0x30] sm:$0xff]
        %v8044 = vld [vmem:[%s8036 + $0x38] sm:$0xff]
        %v8045 = vld [vmem:[%s8036 + $0x40] sm:$0xff]
        %v8046 = vld [vmem:[%s8036 + $0x48] sm:$0xff]
        %v8047 = vld [vmem:[%s8036 + $0x50] sm:$0xff]
        %v8048 = vld [vmem:[%s8036 + $0x58] sm:$0xff]
        %v8049 = vld [vmem:[%s8036 + $0x60] sm:$0xff]
        %v8050 = vld [vmem:[%s8036 + $0x68] sm:$0xff]
        %v8051 = vld [vmem:[%s8036 + $0x70] sm:$0xff]
        %v8052 = vld [vmem:[%s8036 + $0x78] sm:$0xff]
        %v8054 = vperm.slane %v8031, 0
        %v8056 = vmul.f32 %v8037, %v8054
        %v8057 = vmul.f32 %v8038, %v8054
        %v8058 = vmul.f32 %v8039, %v8054
        %v8059 = vmul.f32 %v8040, %v8054
        %v8060 = vmul.f32 %v8041, %v8054
        %v8061 = vmul.f32 %v8042, %v8054
        %v8062 = vmul.f32 %v8043, %v8054
        %v8063 = vmul.f32 %v8044, %v8054
        %v8064 = vmul.f32 %v8045, %v8054
        %v8065 = vmul.f32 %v8046, %v8054
        %v8066 = vmul.f32 %v8047, %v8054
        %v8067 = vmul.f32 %v8048, %v8054
        %v8068 = vmul.f32 %v8049, %v8054
        %v8069 = vmul.f32 %v8050, %v8054
        %v8070 = vmul.f32 %v8051, %v8054
        %v8071 = vmul.f32 %v8052, %v8054
        %v8073 = vperm.slane %v8034, 0
        %v8075 = vadd.f32 %v8056, %v8073
        %v8076 = vadd.f32 %v8057, %v8073
        %v8077 = vadd.f32 %v8058, %v8073
        %v8078 = vadd.f32 %v8059, %v8073
        %v8079 = vadd.f32 %v8060, %v8073
        %v8080 = vadd.f32 %v8061, %v8073
        %v8081 = vadd.f32 %v8062, %v8073
        %v8082 = vadd.f32 %v8063, %v8073
        %v8083 = vadd.f32 %v8064, %v8073
        %v8084 = vadd.f32 %v8065, %v8073
        %v8085 = vadd.f32 %v8066, %v8073
        %v8086 = vadd.f32 %v8067, %v8073
        %v8087 = vadd.f32 %v8068, %v8073
        %v8088 = vadd.f32 %v8069, %v8073
        %v8089 = vadd.f32 %v8070, %v8073
        %v8090 = vadd.f32 %v8071, %v8073
        %v8091 = vmax.f32 %v8075, 0.0
        %v8092 = vmax.f32 %v8076, 0.0
        %v8093 = vmax.f32 %v8077, 0.0
        %v8094 = vmax.f32 %v8078, 0.0
        %v8095 = vmax.f32 %v8079, 0.0
        %v8096 = vmax.f32 %v8080, 0.0
        %v8097 = vmax.f32 %v8081, 0.0
        %v8098 = vmax.f32 %v8082, 0.0
        %v8099 = vmax.f32 %v8083, 0.0
        %v8100 = vmax.f32 %v8084, 0.0
        %v8101 = vmax.f32 %v8085, 0.0
        %v8102 = vmax.f32 %v8086, 0.0
        %v8103 = vmax.f32 %v8087, 0.0
        %v8104 = vmax.f32 %v8088, 0.0
        %v8105 = vmax.f32 %v8089, 0.0
        %v8106 = vmax.f32 %v8090, 0.0
        %v8107 = vmax.f32 %v8091, %v8092
        %v8108 = vmax.f32 %v8093, %v8094
        %v8109 = vmax.f32 %v8095, %v8096
        %v8110 = vmax.f32 %v8097, %v8098
        %v8111 = vmax.f32 %v8099, %v8100
        %v8112 = vmax.f32 %v8101, %v8102
        %v8113 = vmax.f32 %v8103, %v8104
        %v8114 = vmax.f32 %v8105, %v8106
        %v8123 = vrot.slane %v8107, 1
        %v8124 = vrot.slane %v8108, 1
        %v8125 = vrot.slane %v8109, 1
        %v8126 = vrot.slane %v8110, 1
        %v8127 = vrot.slane %v8111, 1
        %v8128 = vrot.slane %v8112, 1
        %v8129 = vrot.slane %v8113, 1
        %v8130 = vrot.slane %v8114, 1
        %v8139 = vrot.slane %v8107, 2
        %v8140 = vrot.slane %v8108, 2
        %v8141 = vrot.slane %v8109, 2
        %v8142 = vrot.slane %v8110, 2
        %v8143 = vrot.slane %v8111, 2
        %v8144 = vrot.slane %v8112, 2
        %v8145 = vrot.slane %v8113, 2
        %v8146 = vrot.slane %v8114, 2
        %v8155 = vrot.slane %v8107, 3
        %v8156 = vrot.slane %v8108, 3
        %v8157 = vrot.slane %v8109, 3
        %v8158 = vrot.slane %v8110, 3
        %v8159 = vrot.slane %v8111, 3
        %v8160 = vrot.slane %v8112, 3
        %v8161 = vrot.slane %v8113, 3
        %v8162 = vrot.slane %v8114, 3
        %vm8171 = vcmask 1040384
        %v8172 = vsel %vm8171, %v8107, %v8123
        %v8173 = vsel %vm8171, %v8108, %v8124
        %v8174 = vsel %vm8171, %v8109, %v8125
        %v8175 = vsel %vm8171, %v8110, %v8126
        %v8176 = vsel %vm8171, %v8111, %v8127
        %v8177 = vsel %vm8171, %v8112, %v8128
        %v8178 = vsel %vm8171, %v8113, %v8129
        %v8179 = vsel %vm8171, %v8114, %v8130
        %vm8180 = vcmask 1041408
        %v8181 = vsel %vm8180, %v8172, %v8139
        %v8182 = vsel %vm8180, %v8173, %v8140
        %v8183 = vsel %vm8180, %v8174, %v8141
        %v8184 = vsel %vm8180, %v8175, %v8142
        %v8185 = vsel %vm8180, %v8176, %v8143
        %v8186 = vsel %vm8180, %v8177, %v8144
        %v8187 = vsel %vm8180, %v8178, %v8145
        %v8188 = vsel %vm8180, %v8179, %v8146
        %vm8189 = vcmask 1042432
        %v8190 = vsel %vm8189, %v8181, %v8155
        %v8191 = vsel %vm8189, %v8182, %v8156
        %v8192 = vsel %vm8189, %v8183, %v8157
        %v8193 = vsel %vm8189, %v8184, %v8158
        %v8194 = vsel %vm8189, %v8185, %v8159
        %v8195 = vsel %vm8189, %v8186, %v8160
        %v8196 = vsel %vm8189, %v8187, %v8161
        %v8197 = vsel %vm8189, %v8188, %v8162
        %v8198 = vrot.slane %v8107, 4
        %v8199 = vrot.slane %v8108, 4
        %v8200 = vrot.slane %v8109, 4
        %v8201 = vrot.slane %v8110, 4
        %v8202 = vrot.slane %v8111, 4
        %v8203 = vrot.slane %v8112, 4
        %v8204 = vrot.slane %v8113, 4
        %v8205 = vrot.slane %v8114, 4
        %v8214 = vsel %vm8171, %v8123, %v8139
        %v8215 = vsel %vm8171, %v8124, %v8140
        %v8216 = vsel %vm8171, %v8125, %v8141
        %v8217 = vsel %vm8171, %v8126, %v8142
        %v8218 = vsel %vm8171, %v8127, %v8143
        %v8219 = vsel %vm8171, %v8128, %v8144
        %v8220 = vsel %vm8171, %v8129, %v8145
        %v8221 = vsel %vm8171, %v8130, %v8146
        %v8222 = vsel %vm8180, %v8214, %v8155
        %v8223 = vsel %vm8180, %v8215, %v8156
        %v8224 = vsel %vm8180, %v8216, %v8157
        %v8225 = vsel %vm8180, %v8217, %v8158
        %v8226 = vsel %vm8180, %v8218, %v8159
        %v8227 = vsel %vm8180, %v8219, %v8160
        %v8228 = vsel %vm8180, %v8220, %v8161
        %v8229 = vsel %vm8180, %v8221, %v8162
        %v8230 = vsel %vm8189, %v8222, %v8198
        %v8231 = vsel %vm8189, %v8223, %v8199
        %v8232 = vsel %vm8189, %v8224, %v8200
        %v8233 = vsel %vm8189, %v8225, %v8201
        %v8234 = vsel %vm8189, %v8226, %v8202
        %v8235 = vsel %vm8189, %v8227, %v8203
        %v8236 = vsel %vm8189, %v8228, %v8204
        %v8237 = vsel %vm8189, %v8229, %v8205
        %v8238 = vmax.f32 %v8190, %v8230
        %v8239 = vmax.f32 %v8191, %v8231
        %v8240 = vmax.f32 %v8192, %v8232
        %v8241 = vmax.f32 %v8193, %v8233
        %v8242 = vmax.f32 %v8194, %v8234
        %v8243 = vmax.f32 %v8195, %v8235
        %v8244 = vmax.f32 %v8196, %v8236
        %v8245 = vmax.f32 %v8197, %v8237
        %v8246 = vpack.c.bf16 %v8238, %v8238
        %v8247 = vpack.c.bf16 %v8242, %v8242
        %v8248 = vld [vmem:[%s7] sm:$0xf]
        %v8249 = vld [vmem:[%s7 + $0x4] sm:$0xf]
        %v8250 = vld [vmem:[%s7 + $0x8] sm:$0xf]
        %v8251 = vld [vmem:[%s7 + $0xc] sm:$0xf]
        %v8252 = vld [vmem:[%s7 + $0x10] sm:$0xf]
        %v8253 = vld [vmem:[%s7 + $0x14] sm:$0xf]
        %v8254 = vld [vmem:[%s7 + $0x18] sm:$0xf]
        %v8255 = vld [vmem:[%s7 + $0x1c] sm:$0xf]
        %s8256 = scalar_lea.vmem %s7, 32
        %v8257 = vld [vmem:[%s8256] sm:$0xf]
        %v8258 = vld [vmem:[%s8256 + $0x4] sm:$0xf]
        %v8259 = vld [vmem:[%s8256 + $0x8] sm:$0xf]
        %v8260 = vld [vmem:[%s8256 + $0xc] sm:$0xf]
        %v8261 = vld [vmem:[%s8256 + $0x10] sm:$0xf]
        %v8262 = vld [vmem:[%s8256 + $0x14] sm:$0xf]
        %v8263 = vld [vmem:[%s8256 + $0x18] sm:$0xf]
        %v8264 = vld [vmem:[%s8256 + $0x1c] sm:$0xf]
        %v8267 = vunpack.c.l.b16 %v8246
        %v8268 = vunpack.c.l.b16 %v8247
        %v8269 = vrot.slane %v8267, 1
        %vm8270 = vcmask 1041409
        %v8271 = vsel %vm8270, %v8268, %v8269
        %v8272 = vpack.c.b16 %v8271, %v8271
        %v8281 = vunpack.c.l.b16 %v8257
        %v8282 = vunpack.c.l.b16 %v8258
        %v8283 = vunpack.c.l.b16 %v8259
        %v8284 = vunpack.c.l.b16 %v8260
        %v8285 = vunpack.c.l.b16 %v8261
        %v8286 = vunpack.c.l.b16 %v8262
        %v8287 = vunpack.c.l.b16 %v8263
        %v8288 = vunpack.c.l.b16 %v8264
        %v8289 = vpack.c.b16 %v8282, %v8281
        %v8290 = vpack.c.b16 %v8284, %v8283
        %v8291 = vpack.c.b16 %v8286, %v8285
        %v8292 = vpack.c.b16 %v8288, %v8287
        %vm8297 = vcmask 523264
        %v8299 = vsel %vm8297, %v8272, 0
        %8301 = vmatpush.bf16.msra.mxu0 0
        %8302 = vmatpush.bf16.msra.mxu0 0
        %8303 = vmatpush.bf16.msra.mxu0 0
        %8304 = vmatpush.bf16.msra.mxu0 0
        %8305 = vmatpush.bf16.msra.mxu0 %v8292
        %8306 = vmatpush.bf16.msra.mxu0 %v8291
        %8307 = vmatpush.bf16.msra.mxu0 %v8290
        %8308 = vmatpush.bf16.msra.mxu0 %v8289
        %8309 = vmatmul.bf16.gmra.mxu0 %v8299
        %v8310 = vpop.f32.mrf.mxu0
        %v8311 = vadd.f32 0.0, %v8310
        %v8312 = vpop.f32.mrf.mxu0
        %8313 = vdwg.mxu0
        %v8314 = vrot.slane %v8268, 7
        %v8315 = vsel %vm8270, %v8314, %v8267
        %v8316 = vpack.c.b16 %v8315, %v8315
        %v8325 = vunpack.c.l.b16 %v8248
        %v8326 = vunpack.c.l.b16 %v8249
        %v8327 = vunpack.c.l.b16 %v8250
        %v8328 = vunpack.c.l.b16 %v8251
        %v8329 = vunpack.c.l.b16 %v8252
        %v8330 = vunpack.c.l.b16 %v8253
        %v8331 = vunpack.c.l.b16 %v8254
        %v8332 = vunpack.c.l.b16 %v8255
        %v8333 = vpack.c.b16 %v8326, %v8325
        %v8334 = vpack.c.b16 %v8328, %v8327
        %v8335 = vpack.c.b16 %v8330, %v8329
        %v8336 = vpack.c.b16 %v8332, %v8331
        %v8342 = vsel %vm8297, %v8316, 0
        %8344 = vmatpush.bf16.msra.mxu0 0
        %8345 = vmatpush.bf16.msra.mxu0 0
        %8346 = vmatpush.bf16.msra.mxu0 0
        %8347 = vmatpush.bf16.msra.mxu0 0
        %8348 = vmatpush.bf16.msra.mxu0 %v8336
        %8349 = vmatpush.bf16.msra.mxu0 %v8335
        %8350 = vmatpush.bf16.msra.mxu0 %v8334
        %8351 = vmatpush.bf16.msra.mxu0 %v8333
        %8352 = vmatmul.bf16.gmra.mxu0 %v8342
        %v8353 = vpop.f32.mrf.mxu0
        %v8354 = vadd.f32 %v8311, %v8353
        %v8355 = vpop.f32.mrf.mxu0
        %8356 = vdwg.mxu0
        %s8357 = scalar_lea.vmem %s7, 64
        %v8358 = vld [vmem:[%s8357] sm:$0xf]
        %v8359 = vld [vmem:[%s8357 + $0x4] sm:$0xf]
        %v8360 = vld [vmem:[%s8357 + $0x8] sm:$0xf]
        %v8361 = vld [vmem:[%s8357 + $0xc] sm:$0xf]
        %v8362 = vld [vmem:[%s8357 + $0x10] sm:$0xf]
        %v8363 = vld [vmem:[%s8357 + $0x14] sm:$0xf]
        %v8364 = vld [vmem:[%s8357 + $0x18] sm:$0xf]
        %v8365 = vld [vmem:[%s8357 + $0x1c] sm:$0xf]
        %v8366 = vrot.slane %v8267, 2
        %v8367 = vrot.slane %v8268, 1
        %v8368 = vsel %vm8270, %v8367, %v8366
        %v8369 = vpack.c.b16 %v8368, %v8368
        %v8378 = vunpack.c.l.b16 %v8358
        %v8379 = vunpack.c.l.b16 %v8359
        %v8380 = vunpack.c.l.b16 %v8360
        %v8381 = vunpack.c.l.b16 %v8361
        %v8382 = vunpack.c.l.b16 %v8362
        %v8383 = vunpack.c.l.b16 %v8363
        %v8384 = vunpack.c.l.b16 %v8364
        %v8385 = vunpack.c.l.b16 %v8365
        %v8386 = vpack.c.b16 %v8379, %v8378
        %v8387 = vpack.c.b16 %v8381, %v8380
        %v8388 = vpack.c.b16 %v8383, %v8382
        %v8389 = vpack.c.b16 %v8385, %v8384
        %v8395 = vsel %vm8297, %v8369, 0
        %8397 = vmatpush.bf16.msra.mxu0 0
        %8398 = vmatpush.bf16.msra.mxu0 0
        %8399 = vmatpush.bf16.msra.mxu0 0
        %8400 = vmatpush.bf16.msra.mxu0 0
        %8401 = vmatpush.bf16.msra.mxu0 %v8389
        %8402 = vmatpush.bf16.msra.mxu0 %v8388
        %8403 = vmatpush.bf16.msra.mxu0 %v8387
        %8404 = vmatpush.bf16.msra.mxu0 %v8386
        %8405 = vmatmul.bf16.gmra.mxu0 %v8395
        %v8406 = vpop.f32.mrf.mxu0
        %v8407 = vadd.f32 0.0, %v8406
        %v8408 = vpop.f32.mrf.mxu0
        %8409 = vdwg.mxu0
        %v8410 = vadd.f32 %v8354, %v8407
        %s8411 = scalar_lea.vmem %s7, 96
        %v8412 = vld [vmem:[%s8411] sm:$0xf]
        %v8413 = vld [vmem:[%s8411 + $0x4] sm:$0xf]
        %v8414 = vld [vmem:[%s8411 + $0x8] sm:$0xf]
        %v8415 = vld [vmem:[%s8411 + $0xc] sm:$0xf]
        %v8416 = vld [vmem:[%s8411 + $0x10] sm:$0xf]
        %v8417 = vld [vmem:[%s8411 + $0x14] sm:$0xf]
        %v8418 = vld [vmem:[%s8411 + $0x18] sm:$0xf]
        %v8419 = vld [vmem:[%s8411 + $0x1c] sm:$0xf]
        %v8420 = vrot.slane %v8267, 3
        %v8421 = vrot.slane %v8268, 2
        %v8422 = vsel %vm8270, %v8421, %v8420
        %v8423 = vpack.c.b16 %v8422, %v8422
        %v8432 = vunpack.c.l.b16 %v8412
        %v8433 = vunpack.c.l.b16 %v8413
        %v8434 = vunpack.c.l.b16 %v8414
        %v8435 = vunpack.c.l.b16 %v8415
        %v8436 = vunpack.c.l.b16 %v8416
        %v8437 = vunpack.c.l.b16 %v8417
        %v8438 = vunpack.c.l.b16 %v8418
        %v8439 = vunpack.c.l.b16 %v8419
        %v8440 = vpack.c.b16 %v8433, %v8432
        %v8441 = vpack.c.b16 %v8435, %v8434
        %v8442 = vpack.c.b16 %v8437, %v8436
        %v8443 = vpack.c.b16 %v8439, %v8438
        %v8449 = vsel %vm8297, %v8423, 0
        %8451 = vmatpush.bf16.msra.mxu0 0
        %8452 = vmatpush.bf16.msra.mxu0 0
        %8453 = vmatpush.bf16.msra.mxu0 0
        %8454 = vmatpush.bf16.msra.mxu0 0
        %8455 = vmatpush.bf16.msra.mxu0 %v8443
        %8456 = vmatpush.bf16.msra.mxu0 %v8442
        %8457 = vmatpush.bf16.msra.mxu0 %v8441
        %8458 = vmatpush.bf16.msra.mxu0 %v8440
        %8459 = vmatmul.bf16.gmra.mxu0 %v8449
        %v8460 = vpop.f32.mrf.mxu0
        %v8461 = vadd.f32 0.0, %v8460
        %v8462 = vpop.f32.mrf.mxu0
        %8463 = vdwg.mxu0
        %v8464 = vadd.f32 %v8410, %v8461
        %v8465 = vpack.c.bf16 %v8239, %v8239
        %v8466 = vpack.c.bf16 %v8243, %v8243
        %s8467 = scalar_lea.vmem %s7, 128
        %v8468 = vld [vmem:[%s8467] sm:$0xf]
        %v8469 = vld [vmem:[%s8467 + $0x4] sm:$0xf]
        %v8470 = vld [vmem:[%s8467 + $0x8] sm:$0xf]
        %v8471 = vld [vmem:[%s8467 + $0xc] sm:$0xf]
        %v8472 = vld [vmem:[%s8467 + $0x10] sm:$0xf]
        %v8473 = vld [vmem:[%s8467 + $0x14] sm:$0xf]
        %v8474 = vld [vmem:[%s8467 + $0x18] sm:$0xf]
        %v8475 = vld [vmem:[%s8467 + $0x1c] sm:$0xf]
        %v8478 = vunpack.c.l.b16 %v8465
        %v8479 = vunpack.c.l.b16 %v8466
        %v8480 = vrot.slane %v8479, 7
        %v8481 = vsel %vm8270, %v8480, %v8478
        %v8482 = vpack.c.b16 %v8481, %v8481
        %v8491 = vunpack.c.l.b16 %v8468
        %v8492 = vunpack.c.l.b16 %v8469
        %v8493 = vunpack.c.l.b16 %v8470
        %v8494 = vunpack.c.l.b16 %v8471
        %v8495 = vunpack.c.l.b16 %v8472
        %v8496 = vunpack.c.l.b16 %v8473
        %v8497 = vunpack.c.l.b16 %v8474
        %v8498 = vunpack.c.l.b16 %v8475
        %v8499 = vpack.c.b16 %v8492, %v8491
        %v8500 = vpack.c.b16 %v8494, %v8493
        %v8501 = vpack.c.b16 %v8496, %v8495
        %v8502 = vpack.c.b16 %v8498, %v8497
        %v8508 = vsel %vm8297, %v8482, 0
        %8510 = vmatpush.bf16.msra.mxu0 0
        %8511 = vmatpush.bf16.msra.mxu0 0
        %8512 = vmatpush.bf16.msra.mxu0 0
        %8513 = vmatpush.bf16.msra.mxu0 0
        %8514 = vmatpush.bf16.msra.mxu0 %v8502
        %8515 = vmatpush.bf16.msra.mxu0 %v8501
        %8516 = vmatpush.bf16.msra.mxu0 %v8500
        %8517 = vmatpush.bf16.msra.mxu0 %v8499
        %8518 = vmatmul.bf16.gmra.mxu0 %v8508
        %v8519 = vpop.f32.mrf.mxu0
        %v8520 = vadd.f32 0.0, %v8519
        %v8521 = vpop.f32.mrf.mxu0
        %8522 = vdwg.mxu0
        %v8523 = vadd.f32 %v8464, %v8520
        %s8524 = scalar_lea.vmem %s7, 160
        %v8525 = vld [vmem:[%s8524] sm:$0xf]
        %v8526 = vld [vmem:[%s8524 + $0x4] sm:$0xf]
        %v8527 = vld [vmem:[%s8524 + $0x8] sm:$0xf]
        %v8528 = vld [vmem:[%s8524 + $0xc] sm:$0xf]
        %v8529 = vld [vmem:[%s8524 + $0x10] sm:$0xf]
        %v8530 = vld [vmem:[%s8524 + $0x14] sm:$0xf]
        %v8531 = vld [vmem:[%s8524 + $0x18] sm:$0xf]
        %v8532 = vld [vmem:[%s8524 + $0x1c] sm:$0xf]
        %v8533 = vrot.slane %v8478, 1
        %v8534 = vsel %vm8270, %v8479, %v8533
        %v8535 = vpack.c.b16 %v8534, %v8534
        %v8544 = vunpack.c.l.b16 %v8525
        %v8545 = vunpack.c.l.b16 %v8526
        %v8546 = vunpack.c.l.b16 %v8527
        %v8547 = vunpack.c.l.b16 %v8528
        %v8548 = vunpack.c.l.b16 %v8529
        %v8549 = vunpack.c.l.b16 %v8530
        %v8550 = vunpack.c.l.b16 %v8531
        %v8551 = vunpack.c.l.b16 %v8532
        %v8552 = vpack.c.b16 %v8545, %v8544
        %v8553 = vpack.c.b16 %v8547, %v8546
        %v8554 = vpack.c.b16 %v8549, %v8548
        %v8555 = vpack.c.b16 %v8551, %v8550
        %v8561 = vsel %vm8297, %v8535, 0
        %8563 = vmatpush.bf16.msra.mxu0 0
        %8564 = vmatpush.bf16.msra.mxu0 0
        %8565 = vmatpush.bf16.msra.mxu0 0
        %8566 = vmatpush.bf16.msra.mxu0 0
        %8567 = vmatpush.bf16.msra.mxu0 %v8555
        %8568 = vmatpush.bf16.msra.mxu0 %v8554
        %8569 = vmatpush.bf16.msra.mxu0 %v8553
        %8570 = vmatpush.bf16.msra.mxu0 %v8552
        %8571 = vmatmul.bf16.gmra.mxu0 %v8561
        %v8572 = vpop.f32.mrf.mxu0
        %v8573 = vadd.f32 0.0, %v8572
        %v8574 = vpop.f32.mrf.mxu0
        %8575 = vdwg.mxu0
        %v8576 = vadd.f32 %v8523, %v8573
        %s8577 = scalar_lea.vmem %s7, 192
        %v8578 = vld [vmem:[%s8577] sm:$0xf]
        %v8579 = vld [vmem:[%s8577 + $0x4] sm:$0xf]
        %v8580 = vld [vmem:[%s8577 + $0x8] sm:$0xf]
        %v8581 = vld [vmem:[%s8577 + $0xc] sm:$0xf]
        %v8582 = vld [vmem:[%s8577 + $0x10] sm:$0xf]
        %v8583 = vld [vmem:[%s8577 + $0x14] sm:$0xf]
        %v8584 = vld [vmem:[%s8577 + $0x18] sm:$0xf]
        %v8585 = vld [vmem:[%s8577 + $0x1c] sm:$0xf]
        %v8586 = vrot.slane %v8478, 2
        %v8587 = vrot.slane %v8479, 1
        %v8588 = vsel %vm8270, %v8587, %v8586
        %v8589 = vpack.c.b16 %v8588, %v8588
        %v8598 = vunpack.c.l.b16 %v8578
        %v8599 = vunpack.c.l.b16 %v8579
        %v8600 = vunpack.c.l.b16 %v8580
        %v8601 = vunpack.c.l.b16 %v8581
        %v8602 = vunpack.c.l.b16 %v8582
        %v8603 = vunpack.c.l.b16 %v8583
        %v8604 = vunpack.c.l.b16 %v8584
        %v8605 = vunpack.c.l.b16 %v8585
        %v8606 = vpack.c.b16 %v8599, %v8598
        %v8607 = vpack.c.b16 %v8601, %v8600
        %v8608 = vpack.c.b16 %v8603, %v8602
        %v8609 = vpack.c.b16 %v8605, %v8604
        %v8615 = vsel %vm8297, %v8589, 0
        %8617 = vmatpush.bf16.msra.mxu0 0
        %8618 = vmatpush.bf16.msra.mxu0 0
        %8619 = vmatpush.bf16.msra.mxu0 0
        %8620 = vmatpush.bf16.msra.mxu0 0
        %8621 = vmatpush.bf16.msra.mxu0 %v8609
        %8622 = vmatpush.bf16.msra.mxu0 %v8608
        %8623 = vmatpush.bf16.msra.mxu0 %v8607
        %8624 = vmatpush.bf16.msra.mxu0 %v8606
        %8625 = vmatmul.bf16.gmra.mxu0 %v8615
        %v8626 = vpop.f32.mrf.mxu0
        %v8627 = vadd.f32 0.0, %v8626
        %v8628 = vpop.f32.mrf.mxu0
        %8629 = vdwg.mxu0
        %v8630 = vadd.f32 %v8576, %v8627
        %s8631 = scalar_lea.vmem %s7, 224
        %v8632 = vld [vmem:[%s8631] sm:$0xf]
        %v8633 = vld [vmem:[%s8631 + $0x4] sm:$0xf]
        %v8634 = vld [vmem:[%s8631 + $0x8] sm:$0xf]
        %v8635 = vld [vmem:[%s8631 + $0xc] sm:$0xf]
        %v8636 = vld [vmem:[%s8631 + $0x10] sm:$0xf]
        %v8637 = vld [vmem:[%s8631 + $0x14] sm:$0xf]
        %v8638 = vld [vmem:[%s8631 + $0x18] sm:$0xf]
        %v8639 = vld [vmem:[%s8631 + $0x1c] sm:$0xf]
        %v8640 = vrot.slane %v8478, 3
        %v8641 = vrot.slane %v8479, 2
        %v8642 = vsel %vm8270, %v8641, %v8640
        %v8643 = vpack.c.b16 %v8642, %v8642
        %v8652 = vunpack.c.l.b16 %v8632
        %v8653 = vunpack.c.l.b16 %v8633
        %v8654 = vunpack.c.l.b16 %v8634
        %v8655 = vunpack.c.l.b16 %v8635
        %v8656 = vunpack.c.l.b16 %v8636
        %v8657 = vunpack.c.l.b16 %v8637
        %v8658 = vunpack.c.l.b16 %v8638
        %v8659 = vunpack.c.l.b16 %v8639
        %v8660 = vpack.c.b16 %v8653, %v8652
        %v8661 = vpack.c.b16 %v8655, %v8654
        %v8662 = vpack.c.b16 %v8657, %v8656
        %v8663 = vpack.c.b16 %v8659, %v8658
        %v8669 = vsel %vm8297, %v8643, 0
        %8671 = vmatpush.bf16.msra.mxu0 0
        %8672 = vmatpush.bf16.msra.mxu0 0
        %8673 = vmatpush.bf16.msra.mxu0 0
        %8674 = vmatpush.bf16.msra.mxu0 0
        %8675 = vmatpush.bf16.msra.mxu0 %v8663
        %8676 = vmatpush.bf16.msra.mxu0 %v8662
        %8677 = vmatpush.bf16.msra.mxu0 %v8661
        %8678 = vmatpush.bf16.msra.mxu0 %v8660
        %8679 = vmatmul.bf16.gmra.mxu0 %v8669
        %v8680 = vpop.f32.mrf.mxu0
        %v8681 = vadd.f32 0.0, %v8680
        %v8682 = vpop.f32.mrf.mxu0
        %8683 = vdwg.mxu0
        %v8684 = vadd.f32 %v8630, %v8681
        %v8685 = vpack.c.bf16 %v8240, %v8240
        %v8686 = vpack.c.bf16 %v8244, %v8244
        %s8687 = scalar_lea.vmem %s7, 256
        %v8688 = vld [vmem:[%s8687] sm:$0xf]
        %v8689 = vld [vmem:[%s8687 + $0x4] sm:$0xf]
        %v8690 = vld [vmem:[%s8687 + $0x8] sm:$0xf]
        %v8691 = vld [vmem:[%s8687 + $0xc] sm:$0xf]
        %v8692 = vld [vmem:[%s8687 + $0x10] sm:$0xf]
        %v8693 = vld [vmem:[%s8687 + $0x14] sm:$0xf]
        %v8694 = vld [vmem:[%s8687 + $0x18] sm:$0xf]
        %v8695 = vld [vmem:[%s8687 + $0x1c] sm:$0xf]
        %v8698 = vunpack.c.l.b16 %v8685
        %v8699 = vunpack.c.l.b16 %v8686
        %v8700 = vrot.slane %v8699, 7
        %v8701 = vsel %vm8270, %v8700, %v8698
        %v8702 = vpack.c.b16 %v8701, %v8701
        %v8711 = vunpack.c.l.b16 %v8688
        %v8712 = vunpack.c.l.b16 %v8689
        %v8713 = vunpack.c.l.b16 %v8690
        %v8714 = vunpack.c.l.b16 %v8691
        %v8715 = vunpack.c.l.b16 %v8692
        %v8716 = vunpack.c.l.b16 %v8693
        %v8717 = vunpack.c.l.b16 %v8694
        %v8718 = vunpack.c.l.b16 %v8695
        %v8719 = vpack.c.b16 %v8712, %v8711
        %v8720 = vpack.c.b16 %v8714, %v8713
        %v8721 = vpack.c.b16 %v8716, %v8715
        %v8722 = vpack.c.b16 %v8718, %v8717
        %v8728 = vsel %vm8297, %v8702, 0
        %8730 = vmatpush.bf16.msra.mxu0 0
        %8731 = vmatpush.bf16.msra.mxu0 0
        %8732 = vmatpush.bf16.msra.mxu0 0
        %8733 = vmatpush.bf16.msra.mxu0 0
        %8734 = vmatpush.bf16.msra.mxu0 %v8722
        %8735 = vmatpush.bf16.msra.mxu0 %v8721
        %8736 = vmatpush.bf16.msra.mxu0 %v8720
        %8737 = vmatpush.bf16.msra.mxu0 %v8719
        %8738 = vmatmul.bf16.gmra.mxu0 %v8728
        %v8739 = vpop.f32.mrf.mxu0
        %v8740 = vadd.f32 0.0, %v8739
        %v8741 = vpop.f32.mrf.mxu0
        %8742 = vdwg.mxu0
        %v8743 = vadd.f32 %v8684, %v8740
        %s8744 = scalar_lea.vmem %s7, 288
        %v8745 = vld [vmem:[%s8744] sm:$0xf]
        %v8746 = vld [vmem:[%s8744 + $0x4] sm:$0xf]
        %v8747 = vld [vmem:[%s8744 + $0x8] sm:$0xf]
        %v8748 = vld [vmem:[%s8744 + $0xc] sm:$0xf]
        %v8749 = vld [vmem:[%s8744 + $0x10] sm:$0xf]
        %v8750 = vld [vmem:[%s8744 + $0x14] sm:$0xf]
        %v8751 = vld [vmem:[%s8744 + $0x18] sm:$0xf]
        %v8752 = vld [vmem:[%s8744 + $0x1c] sm:$0xf]
        %v8753 = vrot.slane %v8698, 1
        %v8754 = vsel %vm8270, %v8699, %v8753
        %v8755 = vpack.c.b16 %v8754, %v8754
        %v8764 = vunpack.c.l.b16 %v8745
        %v8765 = vunpack.c.l.b16 %v8746
        %v8766 = vunpack.c.l.b16 %v8747
        %v8767 = vunpack.c.l.b16 %v8748
        %v8768 = vunpack.c.l.b16 %v8749
        %v8769 = vunpack.c.l.b16 %v8750
        %v8770 = vunpack.c.l.b16 %v8751
        %v8771 = vunpack.c.l.b16 %v8752
        %v8772 = vpack.c.b16 %v8765, %v8764
        %v8773 = vpack.c.b16 %v8767, %v8766
        %v8774 = vpack.c.b16 %v8769, %v8768
        %v8775 = vpack.c.b16 %v8771, %v8770
        %v8781 = vsel %vm8297, %v8755, 0
        %8783 = vmatpush.bf16.msra.mxu0 0
        %8784 = vmatpush.bf16.msra.mxu0 0
        %8785 = vmatpush.bf16.msra.mxu0 0
        %8786 = vmatpush.bf16.msra.mxu0 0
        %8787 = vmatpush.bf16.msra.mxu0 %v8775
        %8788 = vmatpush.bf16.msra.mxu0 %v8774
        %8789 = vmatpush.bf16.msra.mxu0 %v8773
        %8790 = vmatpush.bf16.msra.mxu0 %v8772
        %8791 = vmatmul.bf16.gmra.mxu0 %v8781
        %v8792 = vpop.f32.mrf.mxu0
        %v8793 = vadd.f32 0.0, %v8792
        %v8794 = vpop.f32.mrf.mxu0
        %8795 = vdwg.mxu0
        %v8796 = vadd.f32 %v8743, %v8793
        %s8797 = scalar_lea.vmem %s7, 320
        %v8798 = vld [vmem:[%s8797] sm:$0xf]
        %v8799 = vld [vmem:[%s8797 + $0x4] sm:$0xf]
        %v8800 = vld [vmem:[%s8797 + $0x8] sm:$0xf]
        %v8801 = vld [vmem:[%s8797 + $0xc] sm:$0xf]
        %v8802 = vld [vmem:[%s8797 + $0x10] sm:$0xf]
        %v8803 = vld [vmem:[%s8797 + $0x14] sm:$0xf]
        %v8804 = vld [vmem:[%s8797 + $0x18] sm:$0xf]
        %v8805 = vld [vmem:[%s8797 + $0x1c] sm:$0xf]
        %v8806 = vrot.slane %v8698, 2
        %v8807 = vrot.slane %v8699, 1
        %v8808 = vsel %vm8270, %v8807, %v8806
        %v8809 = vpack.c.b16 %v8808, %v8808
        %v8818 = vunpack.c.l.b16 %v8798
        %v8819 = vunpack.c.l.b16 %v8799
        %v8820 = vunpack.c.l.b16 %v8800
        %v8821 = vunpack.c.l.b16 %v8801
        %v8822 = vunpack.c.l.b16 %v8802
        %v8823 = vunpack.c.l.b16 %v8803
        %v8824 = vunpack.c.l.b16 %v8804
        %v8825 = vunpack.c.l.b16 %v8805
        %v8826 = vpack.c.b16 %v8819, %v8818
        %v8827 = vpack.c.b16 %v8821, %v8820
        %v8828 = vpack.c.b16 %v8823, %v8822
        %v8829 = vpack.c.b16 %v8825, %v8824
        %v8835 = vsel %vm8297, %v8809, 0
        %8837 = vmatpush.bf16.msra.mxu0 0
        %8838 = vmatpush.bf16.msra.mxu0 0
        %8839 = vmatpush.bf16.msra.mxu0 0
        %8840 = vmatpush.bf16.msra.mxu0 0
        %8841 = vmatpush.bf16.msra.mxu0 %v8829
        %8842 = vmatpush.bf16.msra.mxu0 %v8828
        %8843 = vmatpush.bf16.msra.mxu0 %v8827
        %8844 = vmatpush.bf16.msra.mxu0 %v8826
        %8845 = vmatmul.bf16.gmra.mxu0 %v8835
        %v8846 = vpop.f32.mrf.mxu0
        %v8847 = vadd.f32 0.0, %v8846
        %v8848 = vpop.f32.mrf.mxu0
        %8849 = vdwg.mxu0
        %v8850 = vadd.f32 %v8796, %v8847
        %s8851 = scalar_lea.vmem %s7, 352
        %v8852 = vld [vmem:[%s8851] sm:$0xf]
        %v8853 = vld [vmem:[%s8851 + $0x4] sm:$0xf]
        %v8854 = vld [vmem:[%s8851 + $0x8] sm:$0xf]
        %v8855 = vld [vmem:[%s8851 + $0xc] sm:$0xf]
        %v8856 = vld [vmem:[%s8851 + $0x10] sm:$0xf]
        %v8857 = vld [vmem:[%s8851 + $0x14] sm:$0xf]
        %v8858 = vld [vmem:[%s8851 + $0x18] sm:$0xf]
        %v8859 = vld [vmem:[%s8851 + $0x1c] sm:$0xf]
        %v8860 = vrot.slane %v8698, 3
        %v8861 = vrot.slane %v8699, 2
        %v8862 = vsel %vm8270, %v8861, %v8860
        %v8863 = vpack.c.b16 %v8862, %v8862
        %v8872 = vunpack.c.l.b16 %v8852
        %v8873 = vunpack.c.l.b16 %v8853
        %v8874 = vunpack.c.l.b16 %v8854
        %v8875 = vunpack.c.l.b16 %v8855
        %v8876 = vunpack.c.l.b16 %v8856
        %v8877 = vunpack.c.l.b16 %v8857
        %v8878 = vunpack.c.l.b16 %v8858
        %v8879 = vunpack.c.l.b16 %v8859
        %v8880 = vpack.c.b16 %v8873, %v8872
        %v8881 = vpack.c.b16 %v8875, %v8874
        %v8882 = vpack.c.b16 %v8877, %v8876
        %v8883 = vpack.c.b16 %v8879, %v8878
        %v8889 = vsel %vm8297, %v8863, 0
        %8891 = vmatpush.bf16.msra.mxu0 0
        %8892 = vmatpush.bf16.msra.mxu0 0
        %8893 = vmatpush.bf16.msra.mxu0 0
        %8894 = vmatpush.bf16.msra.mxu0 0
        %8895 = vmatpush.bf16.msra.mxu0 %v8883
        %8896 = vmatpush.bf16.msra.mxu0 %v8882
        %8897 = vmatpush.bf16.msra.mxu0 %v8881
        %8898 = vmatpush.bf16.msra.mxu0 %v8880
        %8899 = vmatmul.bf16.gmra.mxu0 %v8889
        %v8900 = vpop.f32.mrf.mxu0
        %v8901 = vadd.f32 0.0, %v8900
        %v8902 = vpop.f32.mrf.mxu0
        %8903 = vdwg.mxu0
        %v8904 = vadd.f32 %v8850, %v8901
        %v8905 = vpack.c.bf16 %v8241, %v8241
        %v8906 = vpack.c.bf16 %v8245, %v8245
        %s8907 = scalar_lea.vmem %s7, 384
        %v8908 = vld [vmem:[%s8907] sm:$0xf]
        %v8909 = vld [vmem:[%s8907 + $0x4] sm:$0xf]
        %v8910 = vld [vmem:[%s8907 + $0x8] sm:$0xf]
        %v8911 = vld [vmem:[%s8907 + $0xc] sm:$0xf]
        %v8912 = vld [vmem:[%s8907 + $0x10] sm:$0xf]
        %v8913 = vld [vmem:[%s8907 + $0x14] sm:$0xf]
        %v8914 = vld [vmem:[%s8907 + $0x18] sm:$0xf]
        %v8915 = vld [vmem:[%s8907 + $0x1c] sm:$0xf]
        %v8918 = vunpack.c.l.b16 %v8905
        %v8919 = vunpack.c.l.b16 %v8906
        %v8920 = vrot.slane %v8919, 7
        %v8921 = vsel %vm8270, %v8920, %v8918
        %v8922 = vpack.c.b16 %v8921, %v8921
        %v8931 = vunpack.c.l.b16 %v8908
        %v8932 = vunpack.c.l.b16 %v8909
        %v8933 = vunpack.c.l.b16 %v8910
        %v8934 = vunpack.c.l.b16 %v8911
        %v8935 = vunpack.c.l.b16 %v8912
        %v8936 = vunpack.c.l.b16 %v8913
        %v8937 = vunpack.c.l.b16 %v8914
        %v8938 = vunpack.c.l.b16 %v8915
        %v8939 = vpack.c.b16 %v8932, %v8931
        %v8940 = vpack.c.b16 %v8934, %v8933
        %v8941 = vpack.c.b16 %v8936, %v8935
        %v8942 = vpack.c.b16 %v8938, %v8937
        %v8948 = vsel %vm8297, %v8922, 0
        %8950 = vmatpush.bf16.msra.mxu0 0
        %8951 = vmatpush.bf16.msra.mxu0 0
        %8952 = vmatpush.bf16.msra.mxu0 0
        %8953 = vmatpush.bf16.msra.mxu0 0
        %8954 = vmatpush.bf16.msra.mxu0 %v8942
        %8955 = vmatpush.bf16.msra.mxu0 %v8941
        %8956 = vmatpush.bf16.msra.mxu0 %v8940
        %8957 = vmatpush.bf16.msra.mxu0 %v8939
        %8958 = vmatmul.bf16.gmra.mxu0 %v8948
        %v8959 = vpop.f32.mrf.mxu0
        %v8960 = vadd.f32 0.0, %v8959
        %v8961 = vpop.f32.mrf.mxu0
        %8962 = vdwg.mxu0
        %v8963 = vadd.f32 %v8904, %v8960
        %s8964 = scalar_lea.vmem %s7, 416
        %v8965 = vld [vmem:[%s8964] sm:$0xf]
        %v8966 = vld [vmem:[%s8964 + $0x4] sm:$0xf]
        %v8967 = vld [vmem:[%s8964 + $0x8] sm:$0xf]
        %v8968 = vld [vmem:[%s8964 + $0xc] sm:$0xf]
        %v8969 = vld [vmem:[%s8964 + $0x10] sm:$0xf]
        %v8970 = vld [vmem:[%s8964 + $0x14] sm:$0xf]
        %v8971 = vld [vmem:[%s8964 + $0x18] sm:$0xf]
        %v8972 = vld [vmem:[%s8964 + $0x1c] sm:$0xf]
        %v8973 = vrot.slane %v8918, 1
        %v8974 = vsel %vm8270, %v8919, %v8973
        %v8975 = vpack.c.b16 %v8974, %v8974
        %v8984 = vunpack.c.l.b16 %v8965
        %v8985 = vunpack.c.l.b16 %v8966
        %v8986 = vunpack.c.l.b16 %v8967
        %v8987 = vunpack.c.l.b16 %v8968
        %v8988 = vunpack.c.l.b16 %v8969
        %v8989 = vunpack.c.l.b16 %v8970
        %v8990 = vunpack.c.l.b16 %v8971
        %v8991 = vunpack.c.l.b16 %v8972
        %v8992 = vpack.c.b16 %v8985, %v8984
        %v8993 = vpack.c.b16 %v8987, %v8986
        %v8994 = vpack.c.b16 %v8989, %v8988
        %v8995 = vpack.c.b16 %v8991, %v8990
        %v9001 = vsel %vm8297, %v8975, 0
        %9003 = vmatpush.bf16.msra.mxu0 0
        %9004 = vmatpush.bf16.msra.mxu0 0
        %9005 = vmatpush.bf16.msra.mxu0 0
        %9006 = vmatpush.bf16.msra.mxu0 0
        %9007 = vmatpush.bf16.msra.mxu0 %v8995
        %9008 = vmatpush.bf16.msra.mxu0 %v8994
        %9009 = vmatpush.bf16.msra.mxu0 %v8993
        %9010 = vmatpush.bf16.msra.mxu0 %v8992
        %9011 = vmatmul.bf16.gmra.mxu0 %v9001
        %v9012 = vpop.f32.mrf.mxu0
        %v9013 = vadd.f32 0.0, %v9012
        %v9014 = vpop.f32.mrf.mxu0
        %9015 = vdwg.mxu0
        %v9016 = vadd.f32 %v8963, %v9013
        %s9017 = scalar_lea.vmem %s7, 448
        %v9018 = vld [vmem:[%s9017] sm:$0xf]
        %v9019 = vld [vmem:[%s9017 + $0x4] sm:$0xf]
        %v9020 = vld [vmem:[%s9017 + $0x8] sm:$0xf]
        %v9021 = vld [vmem:[%s9017 + $0xc] sm:$0xf]
        %v9022 = vld [vmem:[%s9017 + $0x10] sm:$0xf]
        %v9023 = vld [vmem:[%s9017 + $0x14] sm:$0xf]
        %v9024 = vld [vmem:[%s9017 + $0x18] sm:$0xf]
        %v9025 = vld [vmem:[%s9017 + $0x1c] sm:$0xf]
        %v9026 = vrot.slane %v8918, 2
        %v9027 = vrot.slane %v8919, 1
        %v9028 = vsel %vm8270, %v9027, %v9026
        %v9029 = vpack.c.b16 %v9028, %v9028
        %v9038 = vunpack.c.l.b16 %v9018
        %v9039 = vunpack.c.l.b16 %v9019
        %v9040 = vunpack.c.l.b16 %v9020
        %v9041 = vunpack.c.l.b16 %v9021
        %v9042 = vunpack.c.l.b16 %v9022
        %v9043 = vunpack.c.l.b16 %v9023
        %v9044 = vunpack.c.l.b16 %v9024
        %v9045 = vunpack.c.l.b16 %v9025
        %v9046 = vpack.c.b16 %v9039, %v9038
        %v9047 = vpack.c.b16 %v9041, %v9040
        %v9048 = vpack.c.b16 %v9043, %v9042
        %v9049 = vpack.c.b16 %v9045, %v9044
        %v9055 = vsel %vm8297, %v9029, 0
        %9057 = vmatpush.bf16.msra.mxu0 0
        %9058 = vmatpush.bf16.msra.mxu0 0
        %9059 = vmatpush.bf16.msra.mxu0 0
        %9060 = vmatpush.bf16.msra.mxu0 0
        %9061 = vmatpush.bf16.msra.mxu0 %v9049
        %9062 = vmatpush.bf16.msra.mxu0 %v9048
        %9063 = vmatpush.bf16.msra.mxu0 %v9047
        %9064 = vmatpush.bf16.msra.mxu0 %v9046
        %9065 = vmatmul.bf16.gmra.mxu0 %v9055
        %v9066 = vpop.f32.mrf.mxu0
        %v9067 = vadd.f32 0.0, %v9066
        %v9068 = vpop.f32.mrf.mxu0
        %9069 = vdwg.mxu0
        %v9070 = vadd.f32 %v9016, %v9067
        %s9071 = scalar_lea.vmem %s7, 480
        %v9072 = vld [vmem:[%s9071] sm:$0xf]
        %v9073 = vld [vmem:[%s9071 + $0x4] sm:$0xf]
        %v9074 = vld [vmem:[%s9071 + $0x8] sm:$0xf]
        %v9075 = vld [vmem:[%s9071 + $0xc] sm:$0xf]
        %v9076 = vld [vmem:[%s9071 + $0x10] sm:$0xf]
        %v9077 = vld [vmem:[%s9071 + $0x14] sm:$0xf]
        %v9078 = vld [vmem:[%s9071 + $0x18] sm:$0xf]
        %v9079 = vld [vmem:[%s9071 + $0x1c] sm:$0xf]
        %v9080 = vrot.slane %v8918, 3
        %v9081 = vrot.slane %v8919, 2
        %v9082 = vsel %vm8270, %v9081, %v9080
        %v9083 = vpack.c.b16 %v9082, %v9082
        %v9092 = vunpack.c.l.b16 %v9072
        %v9093 = vunpack.c.l.b16 %v9073
        %v9094 = vunpack.c.l.b16 %v9074
        %v9095 = vunpack.c.l.b16 %v9075
        %v9096 = vunpack.c.l.b16 %v9076
        %v9097 = vunpack.c.l.b16 %v9077
        %v9098 = vunpack.c.l.b16 %v9078
        %v9099 = vunpack.c.l.b16 %v9079
        %v9100 = vpack.c.b16 %v9093, %v9092
        %v9101 = vpack.c.b16 %v9095, %v9094
        %v9102 = vpack.c.b16 %v9097, %v9096
        %v9103 = vpack.c.b16 %v9099, %v9098
        %v9109 = vsel %vm8297, %v9083, 0
        %9111 = vmatpush.bf16.msra.mxu0 0
        %9112 = vmatpush.bf16.msra.mxu0 0
        %9113 = vmatpush.bf16.msra.mxu0 0
        %9114 = vmatpush.bf16.msra.mxu0 0
        %9115 = vmatpush.bf16.msra.mxu0 %v9103
        %9116 = vmatpush.bf16.msra.mxu0 %v9102
        %9117 = vmatpush.bf16.msra.mxu0 %v9101
        %9118 = vmatpush.bf16.msra.mxu0 %v9100
        %9119 = vmatmul.bf16.gmra.mxu0 %v9109
        %v9120 = vpop.f32.mrf.mxu0
        %v9121 = vadd.f32 0.0, %v9120
        %v9122 = vpop.f32.mrf.mxu0
        %9123 = vdwg.mxu0
        %v9124 = vadd.f32 %v9070, %v9121
        %v9125 = vld [vmem:[%s8] sm:$0x1]
        %v9127 = vperm.slane %v9125, 0
        %v9129 = vadd.f32 %v9124, %v9127
        %v9130 = vlaneseq
        %v9131 = vand.u32 %v9130, 127
        %vm9132 = vcmp.gt.f32.partialorder %v9129, 20.0
        %v9133 = vmin.f32 %v9129, 20.0
        %v9134 = vmul.f32 %v9133, 1.442695
        %v9135 = vpow.pop %v9134
        %v9136 = vadd.f32 %v9135, 1.0
        %v9137 = vlog2.pop %v9136
        %v9138 = vmul.f32 %v9137, 0.6931472
        %v9139 = vmul.f32 -0.5, %v9135
        %v9140 = vadd.f32 %v9139, 1.0
        %v9141 = vmul.f32 %v9140, %v9135
        %v9142 = vand.u32 2147483647, %v9135
        %vm9143 = vcmp.lt.f32.partialorder %v9142, 0.0004427343
        %v9144 = vsel %vm9143, %v9141, %v9138
        %v9145 = vsel %vm9132, %v9129, %v9144
        %vm9146 = vcmp.ge.s32.totalorder %v9131, 32
        %v9147 = vadd.f32 %v9145, 1e-07
        %v9148 = vsel %vm9146, %v9147, %v9129
        %9149 = vst [vmem:[%s369] sm:$0x3] %v9148
      $region72: #{qzd_forward.1} parent=55 // pred_fallthru
        _
      %p9150 = scmp.eq.s32.totalorder %s24, 2
      %s9151 = scalar_select %p9150, %s25, 0
      %p9152 = scmp.lt.s32.totalorder %s9151, 0
      %s9153 = scalar_select %p9152, %s9151, 0
      %s9154 = smul.addr %s9153, 2
      %s9155 = scalar_lea.vmem %s9, %s9154
      // Predicated region
      $region73: #{qzd_forward.1} parent=55 // pred_check
        %p9156 = pneg %p252
      $region74: #{qzd_forward.1} parent=55 // pred_check_branch
        %9158 = sbr.rel (%p9156) target = $region76
      $region75: #{qzd_forward.1} parent=55 // pred_region
        %p9159 = scmp.eq.s32.totalorder %s24, 2
        %s9160 = scalar_select %p9159, %s25, 0
      $region76: #{qzd_forward.1} parent=55 // pred_fallthru
        _
    $region56: #{qzd_forward.1} parent=5 // pred_fallthru
      _
    %p9161 = scmp.le.s32.totalorder 2, %s15
    // Predicated region
    $region77: #{qzd_forward.1} parent=5 // pred_check
      %p9162 = pneg %p9161
    $region78: #{qzd_forward.1} parent=5 // pred_check_branch
      %9164 = sbr.rel (%p9162) target = $region80
    $region79: #{qzd_forward.1} parent=5 // pred_region
      %s9165 = ssub.s32 %s15, 2
      // Predicated region
      $region81: #{qzd_forward.1} parent=79 // pred_check
        %p9166 = pneg %p258
      $region82: #{qzd_forward.1} parent=79 // pred_check_branch
        %9168 = sbr.rel (%p9166) target = $region84
      $region83: #{qzd_forward.1} parent=79 // pred_region
        %p9169 = scmp.eq.s32.totalorder %s26, 2
        %s9170 = scalar_select %p9169, %s27, 0
        %p9171 = scmp.lt.s32.totalorder %s9170, 0
        %s9172 = scalar_select %p9171, %s9170, 0
        %s9173 = smul.addr %s9172, 2
        %s9174 = scalar_lea.vmem %s9, %s9173
      $region84: #{qzd_forward.1} parent=79 // pred_fallthru
        _
    $region80: #{qzd_forward.1} parent=5 // pred_fallthru
      _
  $region6: #{qzd_forward.1} parent=0 // loop_footer
    %s19 = sadd.s32 1, %s15
  $region7: #{qzd_forward.1} parent=0 // loop_footer_branch
    %14 = sbr.rel target = $region3
  $region8: #{qzd_forward.1} parent=0 // loop_exit
    _

</llo_original>
